<compile_context>
chip_gen: v7x
topology: tpu7x:2x2x1
jax: 0.10.0
libtpu: 0.0.40
codegen_flags: <defaults>
</compile_context>

<pallas_src>
import math
from functools import partial

import jax
import jax.numpy as jnp
import numpy as np
from jax.experimental import pallas as pl
from jax.experimental.pallas import tpu as pltpu

EPS = 1e-5

# Cross-attention S chunk for the in-kernel online softmax.
#   v7x : 512 (64 MiB VMEM, keep transient logits ~4 MiB)
#   v5e/v6e : 1024-2048 is fine (128 MiB VMEM) together with a higher vmem limit.
CROSS_ATTN_S_CHUNK = 512

# Scoped VMEM budget.  48 MiB fits v7x's 64 MiB physical VMEM with headroom
# (weights double-buffered ~2.6 MiB + mem/memp blocks + carry scratch + per-chunk
# attention temps ~25-30 MiB at real 3detr shapes).  Raise toward ~100 MiB on
# v5e/v6e if using larger S chunks / batch tiles.
VMEM_LIMIT_BYTES = 48 * 1024 * 1024


# ----------------------------------------------------------------------------
# Helpers injected into the shared math so the identical code runs both inside
# the Pallas kernel (pltpu/pl primitives) and in the pure-JAX reference.
# ----------------------------------------------------------------------------
def _pallas_split_heads(x, nhead):          # (N, C) -> (H, N, hd)
    n, c = x.shape
    return pltpu.einshape("nhd->hnd", x.reshape(n, nhead, c // nhead))


def _pallas_merge_heads(x):                 # (H, N, hd) -> (N, C)
    h, n, d = x.shape
    return pltpu.einshape("hnd->nhd", x).reshape(n, h * d)


def _pallas_recip(x):
    # Exact reciprocal: with deferred normalization this touches only (H, T)
    # elements, so exactness is free and keeps closer parity with torch softmax.
    return pl.reciprocal(x, approx=False)


def _jnp_split_heads(x, nhead):
    n, c = x.shape
    return jnp.swapaxes(x.reshape(n, nhead, c // nhead), 0, 1)


def _jnp_merge_heads(x):
    h, n, d = x.shape
    return jnp.swapaxes(x, 0, 1).reshape(n, h * d)


def _jnp_recip(x):
    return 1.0 / x


def _layernorm(x, w, b):
    # x: (..., C);  w, b: (1, C)
    mu = jnp.mean(x, axis=-1, keepdims=True)
    var = jnp.mean(jnp.square(x - mu), axis=-1, keepdims=True)
    return (x - mu) * jax.lax.rsqrt(var + EPS) * w + b


def _chunk_spans(total, chunk):
    """Static (start, size) spans covering [0, total)."""
    if chunk is None or chunk >= total:
        return [(0, total)]
    spans, start = [], 0
    while start < total:
        size = min(chunk, total - start)
        spans.append((start, size))
        start += size
    return spans


def _attn_core(qh, kh, vh, s_chunk, recip):
    """softmax(Q K^T) V with S-chunked online softmax and deferred normalization.

    qh: (H, T, hd) f32 (scale already folded into the Q projection)
    kh, vh: (H, S, hd) f32.  Returns (H, T, hd) f32.
    NOTE: hd << MXU width, so these matmuls are never MXU-bound; the point of
    this routine is to minimize VPU/EUP passes and transient VMEM.
    """
    S = kh.shape[1]
    qh = qh.astype(jnp.bfloat16)
    kh = kh.astype(jnp.bfloat16)
    vh = vh.astype(jnp.bfloat16)

    def block(start, size):
        kc = jax.lax.slice_in_dim(kh, start, start + size, axis=1)
        vc = jax.lax.slice_in_dim(vh, start, start + size, axis=1)
        logits = jnp.einsum("htd,hsd->hts", qh, kc,
                            preferred_element_type=jnp.float32)
        m = jnp.max(logits, axis=-1, keepdims=True)
        p = jnp.exp(logits - m)                      # unnormalized
        l = jnp.sum(p, axis=-1, keepdims=True)
        o = jnp.einsum("hts,hsd->htd", p.astype(jnp.bfloat16), vc,
                       preferred_element_type=jnp.float32)
        return m, l, o

    spans = _chunk_spans(S, s_chunk)
    m, l, acc = block(*spans[0])
    for start, size in spans[1:]:
        m2, l2, o2 = block(start, size)
        m_new = jnp.maximum(m, m2)
        a1 = jnp.exp(m - m_new)
        a2 = jnp.exp(m2 - m_new)
        l = a1 * l + a2 * l2
        acc = a1 * acc + a2 * o2
        m = m_new
    return acc * recip(l)                            # deferred normalization


# Packed per-layer vector rows (width C), see init_params():
#   0..3  : SA q(scaled)/k/v/out biases      4..7 : CA q(scaled)/k/v/out biases
#   8..13 : norm1 w,b / norm2 w,b / norm3 w,b
#   14    : linear2 bias                     15   : padding
def _layer_math(tgt, mem, memp, qpos,
                sa_w, ca_w, vec, lin1_w, lin1_b, lin2_w,
                nhead, s_chunk, *, split, merge, recip):
    """One 3detr TransformerDecoderLayer (forward_pre, eval mode: dropout = id).

    tgt/qpos: (T, C) f32; mem/memp: (S, C) bf16; sa_w/ca_w: (4, C, C) bf16
    (Wq*scale, Wk, Wv, Wo in x@W form); vec: (16, C) f32; lin*: bf16.
    """
    bf16 = jnp.bfloat16

    # -- self attention: q = k = norm1(tgt) + query_pos, v = norm1(tgt)
    t2 = _layernorm(tgt, vec[8:9], vec[9:10])
    qk = (t2 + qpos).astype(bf16)                    # shared cast for Q and K
    v_in = t2.astype(bf16)
    q = jnp.dot(qk, sa_w[0], preferred_element_type=jnp.float32) + vec[0:1]
    k = jnp.dot(qk, sa_w[1], preferred_element_type=jnp.float32) + vec[1:2]
    v = jnp.dot(v_in, sa_w[2], preferred_element_type=jnp.float32) + vec[2:3]
    o = _attn_core(split(q, nhead), split(k, nhead), split(v, nhead),
                   s_chunk=None, recip=recip)        # T is small -> single block
    sa = jnp.dot(merge(o).astype(bf16), sa_w[3],
                 preferred_element_type=jnp.float32) + vec[3:4]
    tgt = tgt + sa

    # -- cross attention: q = norm2(tgt) + query_pos, k = memory + pos, v = memory
    t2 = _layernorm(tgt, vec[10:11], vec[11:12])
    q = jnp.dot((t2 + qpos).astype(bf16), ca_w[0],
                preferred_element_type=jnp.float32) + vec[4:5]
    k = jnp.dot(memp, ca_w[1], preferred_element_type=jnp.float32) + vec[5:6]
    v = jnp.dot(mem, ca_w[2], preferred_element_type=jnp.float32) + vec[6:7]
    o = _attn_core(split(q, nhead), split(k, nhead), split(v, nhead),
                   s_chunk=s_chunk, recip=recip)     # S-chunked online softmax
    ca = jnp.dot(merge(o).astype(bf16), ca_w[3],
                 preferred_element_type=jnp.float32) + vec[7:8]
    tgt = tgt + ca

    # -- FFN with relu
    t2 = _layernorm(tgt, vec[12:13], vec[13:14])
    h = jnp.maximum(jnp.dot(t2.astype(bf16), lin1_w,
                            preferred_element_type=jnp.float32) + lin1_b, 0.0)
    ff = jnp.dot(h.astype(bf16), lin2_w,
                 preferred_element_type=jnp.float32) + vec[14:15]
    return tgt + ff


# ----------------------------------------------------------------------------
# Fused decoder kernel: grid = (batch_tiles, layers)
# ----------------------------------------------------------------------------
def _decoder_kernel(nhead, n_bt, t_len, s_len, s_chunk, emit_all, apply_final_norm,
                    tgt_ref, mem_ref, memp_ref, qpos_ref,
                    sa_w_ref, ca_w_ref, lin1_w_ref, lin1_b_ref, lin2_w_ref,
                    vec_ref, fn_ref,
                    out_ref, acc_ref):
    layer = pl.program_id(1)

    # first layer for this batch tile: load queries into the VMEM-resident carry
    @pl.when(layer == 0)
    def _init():
        acc_ref[...] = tgt_ref[...]

    # per-layer weights are streamed once per grid step; the batch-tile loop
    # below amortizes that DMA over n_bt batch elements.
    sa_w = sa_w_ref[...]
    ca_w = ca_w_ref[...]
    lin1_w = lin1_w_ref[...]
    lin1_b = lin1_b_ref[...]
    lin2_w = lin2_w_ref[...]
    vec = vec_ref[...]

    for bt in range(n_bt):                            # static, small
        rt = pl.ds(bt * t_len, t_len)
        rs = pl.ds(bt * s_len, s_len)
        new_tgt = _layer_math(
            acc_ref[rt, :], mem_ref[rs, :], memp_ref[rs, :], qpos_ref[rt, :],
            sa_w, ca_w, vec, lin1_w, lin1_b, lin2_w,
            nhead, s_chunk,
            split=_pallas_split_heads, merge=_pallas_merge_heads,
            recip=_pallas_recip)
        acc_ref[rt, :] = new_tgt

    fn = fn_ref[...]
    if emit_all:
        # return_intermediate: every layer emits norm(output) straight from the
        # fused kernel (no per-layer pallas_calls / HBM round trips).
        out_ref[...] = _layernorm(acc_ref[...], fn[0:1], fn[1:2]).astype(out_ref.dtype)
    else:
        @pl.when(layer == pl.num_programs(1) - 1)
        def _finalize():
            y = acc_ref[...]
            if apply_final_norm:                      # final LayerNorm fused
                y = _layernorm(y, fn[0:1], fn[1:2])
            out_ref[...] = y.astype(out_ref.dtype)


def _decoder_pallas(tgt_f, mem_f, memp_f, qpos_f, sp, fn, nhead, *,
                    batch, t_len, s_len, batch_tile, s_chunk,
                    emit_all, apply_final_norm, out_dtype):
    B, T, S = batch, t_len, s_len
    C = tgt_f.shape[-1]
    L = sp["sa_w"].shape[0]
    FF = sp["lin1_w"].shape[-1]
    BT = batch_tile
    assert B % BT == 0, (B, BT)
    nb = B // BT

    def aspec(rows):  # flattened lane-dense activation blocks, contiguous per tile
        return pl.BlockSpec((BT * rows, C), lambda b, l: (b, 0))

    def wspec(shape):  # per-layer weight blocks, streamed by layer id
        nd = len(shape)
        return pl.BlockSpec((None,) + tuple(shape),
                            lambda b, l, _nd=nd: (l,) + (0,) * _nd)

    in_specs = [
        aspec(T),                                    # tgt (f32)
        aspec(S),                                    # memory (bf16)
        aspec(S),                                    # memory + pos (bf16)
        aspec(T),                                    # query_pos (f32)
        wspec((4, C, C)),                            # SA Wq*scale / Wk / Wv / Wo
        wspec((4, C, C)),                            # CA Wq*scale / Wk / Wv / Wo
        wspec((C, FF)),                              # linear1 W
        wspec((1, FF)),                              # linear1 b
        wspec((FF, C)),                              # linear2 W
        wspec((16, C)),                              # packed biases + norms
        pl.BlockSpec((2, C), lambda b, l: (0, 0)),   # final norm (w, b)
    ]

    if emit_all:
        out_shape = jax.ShapeDtypeStruct((L, B * T, C), out_dtype)
        out_spec = pl.BlockSpec((None, BT * T, C), lambda b, l: (l, b, 0))
    else:
        out_shape = jax.ShapeDtypeStruct((B * T, C), out_dtype)
        out_spec = pl.BlockSpec((BT * T, C), lambda b, l: (b, 0))

    kernel = partial(_decoder_kernel, nhead, BT, T, S, s_chunk,
                     emit_all, apply_final_norm)

    return pl.pallas_call(
        kernel,
        out_shape=out_shape,
        grid=(nb, L),                                # layer axis innermost (carry)
        in_specs=in_specs,
        out_specs=out_spec,
        scratch_shapes=[pltpu.VMEM((BT * T, C), jnp.float32)],
        compiler_params=pltpu.CompilerParams(
            dimension_semantics=("parallel", "arbitrary"),
            vmem_limit_bytes=VMEM_LIMIT_BYTES),
    )(tgt_f, mem_f, memp_f, qpos_f,
      sp["sa_w"], sp["ca_w"], sp["lin1_w"], sp["lin1_b"], sp["lin2_w"],
      sp["vec"], fn)


def _default_batch_tile(batch):
    # 2-4 is a good default on v5e/v6e, 1-2 on v7x (smaller VMEM, 2 TCs share HBM).
    for bt in (4, 2, 1):
        if batch % bt == 0:
            return bt
    return 1


# ----------------------------------------------------------------------------
# TransformerDecoder wrapper (mirrors the PyTorch module's forward)
# ----------------------------------------------------------------------------
def transformer_decoder_forward(params, tgt, memory, nhead,
                                pos=None, query_pos=None,
                                transpose_swap=False, return_intermediate=False,
                                batch_tile=None, s_chunk=CROSS_ATTN_S_CHUNK):
    if transpose_swap:
        bs, c, h, w = memory.shape
        memory = memory.reshape(bs, c, h * w).transpose(2, 0, 1)
        if pos is not None:
            pos = pos.reshape(bs, c, h * w).transpose(2, 0, 1)
    if query_pos is None:
        query_pos = jnp.zeros_like(tgt)
    if pos is None:
        pos = jnp.zeros_like(memory)

    T, B, C = tgt.shape
    S = memory.shape[0]
    if batch_tile is None:
        batch_tile = _default_batch_tile(B)

    # batch-major, flattened (rows, C) layout -> each per-tile block is one
    # contiguous, lane-dense HBM slab.
    def flat(x, n):  # (n, B, C) -> (B*n, C)
        return jnp.transpose(x, (1, 0, 2)).reshape(B * n, C)

    tgt_f = flat(tgt, T)
    qpos_f = flat(query_pos, T)
    mem_f32 = flat(memory, S)
    pos_f = flat(pos, S)
    memp_f = (mem_f32 + pos_f).astype(jnp.bfloat16)  # key input (layer-invariant)
    mem_f = mem_f32.astype(jnp.bfloat16)             # value input (matmul-only)

    sp = params["stacked"]
    fn = params["final_norm"]

    out = _decoder_pallas(tgt_f, mem_f, memp_f, qpos_f, sp, fn, nhead,
                          batch=B, t_len=T, s_len=S, batch_tile=batch_tile,
                          s_chunk=s_chunk, emit_all=return_intermediate,
                          apply_final_norm=True, out_dtype=tgt.dtype)

    if return_intermediate:
        L = sp["sa_w"].shape[0]
        out = out.reshape(L, B, T, C)
        return jnp.transpose(out, (0, 2, 1, 3)), []   # (L, T, B, C)
    out = out.reshape(B, T, C)
    return jnp.transpose(out, (1, 0, 2)), []          # (T, B, C)


# ----------------------------------------------------------------------------
# Deterministic parameter init (xavier_uniform for >1-dim params, like
# _reset_parameters).  Weights are stored pre-transposed (x @ W form), stacked
# over layers, bf16 for the MXU; the 1/sqrt(hd) attention scale (and Q bias)
# is folded into the Q projection.
# ----------------------------------------------------------------------------
def _xavier(key, shape):
    fan_out, fan_in = shape
    a = math.sqrt(6.0 / (fan_in + fan_out))
    return jax.random.uniform(key, shape, jnp.float32, -a, a)


def init_params(key, num_layers, d_model, nhead, dim_ff):
    C, FF = d_model, dim_ff
    scale = 1.0 / math.sqrt(C // nhead)
    layer_keys = jax.random.split(key, num_layers)

    sa_w, ca_w, lin1_w, lin1_b, lin2_w, vec = [], [], [], [], [], []
    zeros_c = jnp.zeros((C,), jnp.float32)
    ones_c = jnp.ones((C,), jnp.float32)
    for lk in layer_keys:
        ks = jax.random.split(lk, 8)
        sa_in = _xavier(ks[0], (3 * C, C))   # PyTorch in_proj_weight layout
        sa_out = _xavier(ks[1], (C, C))
        ca_in = _xavier(ks[2], (3 * C, C))
        ca_out = _xavier(ks[3], (C, C))
        l1 = _xavier(ks[4], (FF, C))
        l2 = _xavier(ks[5], (C, FF))
        l1b = jax.random.uniform(ks[6], (FF,), jnp.float32, -0.05, 0.05)
        l2b = jax.random.uniform(ks[7], (C,), jnp.float32, -0.05, 0.05)

        # x @ W form; attention scale folded into the Q projection weight.
        sa_w.append(jnp.stack([sa_in[0:C].T * scale, sa_in[C:2 * C].T,
                               sa_in[2 * C:].T, sa_out.T]))
        ca_w.append(jnp.stack([ca_in[0:C].T * scale, ca_in[C:2 * C].T,
                               ca_in[2 * C:].T, ca_out.T]))
        lin1_w.append(l1.T)
        lin2_w.append(l2.T)
        lin1_b.append(l1b[None, :])

        # NOTE: the Q bias rows (0 and 4) must also be pre-scaled by `scale`
        # when loading real (nonzero) torch biases; they are zeros here.
        vec.append(jnp.stack([
            zeros_c, zeros_c, zeros_c, zeros_c,     # SA q/k/v/out biases
            zeros_c, zeros_c, zeros_c, zeros_c,     # CA q/k/v/out biases
            ones_c, zeros_c,                        # norm1 w, b
            ones_c, zeros_c,                        # norm2 w, b
            ones_c, zeros_c,                        # norm3 w, b
            l2b,                                    # linear2 bias
            zeros_c,                                # padding row
        ]))

    stacked = dict(
        sa_w=jnp.stack(sa_w).astype(jnp.bfloat16),
        ca_w=jnp.stack(ca_w).astype(jnp.bfloat16),
        lin1_w=jnp.stack(lin1_w).astype(jnp.bfloat16),
        lin2_w=jnp.stack(lin2_w).astype(jnp.bfloat16),
        lin1_b=jnp.stack(lin1_b),
        vec=jnp.stack(vec),
    )
    final_norm = jnp.stack([ones_c, zeros_c])       # (2, C): weight, bias
    return dict(stacked=stacked, final_norm=final_norm)


# ----------------------------------------------------------------------------
# Pure-JAX reference (identical math, no Pallas) for a correctness check
# ----------------------------------------------------------------------------
def reference_forward(params, tgt, memory, nhead, pos, query_pos):
    sp = params["stacked"]
    fn = params["final_norm"]
    L = sp["sa_w"].shape[0]
    B = tgt.shape[1]
    memp = (memory + pos).astype(jnp.bfloat16)
    mem = memory.astype(jnp.bfloat16)
    out = tgt
    inters = []
    for l in range(L):
        cols = [
            _layer_math(out[:, b], mem[:, b], memp[:, b], query_pos[:, b],
                        sp["sa_w"][l], sp["ca_w"][l], sp["vec"][l],
                        sp["lin1_w"][l], sp["lin1_b"][l], sp["lin2_w"][l],
                        nhead, None,
                        split=_jnp_split_heads, merge=_jnp_merge_heads,
                        recip=_jnp_recip)
            for b in range(B)
        ]
        out = jnp.stack(cols, axis=1)
        inters.append(_layernorm(out, fn[0:1], fn[1:2]))
    return _layernorm(out, fn[0:1], fn[1:2]), jnp.stack(inters)


if __name__ == "__main__":
    # NOTE: these are deliberately tiny smoke-test shapes; benchmark / tune only
    # with production shapes (C=256, T=256, S~1024-2048, FF=256, L=8).
    d_model, nhead, dim_ff, num_layers = 32, 4, 64, 2
    T, S, B = 8, 16, 2          # T = num queries, S = memory length

    key = jax.random.PRNGKey(0)
    k1, k2, k3, k4, kp = jax.random.split(key, 5)
    tgt = jax.random.normal(k1, (T, B, d_model), jnp.float32)
    memory = jax.random.normal(k2, (S, B, d_model), jnp.float32)
    query_pos = jax.random.normal(k3, (T, B, d_model), jnp.float32)
    pos = jax.random.normal(k4, (S, B, d_model), jnp.float32)

    params = init_params(kp, num_layers, d_model, nhead, dim_ff)

    out, attns = transformer_decoder_forward(
        params, tgt, memory, nhead, pos=pos, query_pos=query_pos)
    out = jax.block_until_ready(out)
    assert out.shape == (T, B, d_model), out.shape
    assert bool(jnp.all(jnp.isfinite(out)))

    ref_final, ref_inters = reference_forward(params, tgt, memory, nhead, pos, query_pos)
    np.testing.assert_allclose(np.asarray(out), np.asarray(ref_final),
                               atol=2e-2, rtol=2e-2)

    # exercise the multi-batch-tile grid (batch_tile=1 -> grid (B, L))
    out_bt1, _ = transformer_decoder_forward(
        params, tgt, memory, nhead, pos=pos, query_pos=query_pos, batch_tile=1)
    out_bt1 = jax.block_until_ready(out_bt1)
    np.testing.assert_allclose(np.asarray(out_bt1), np.asarray(ref_final),
                               atol=2e-2, rtol=2e-2)

    # fused return_intermediate path (one kernel, per-layer normalized outputs)
    inter, _ = transformer_decoder_forward(
        params, tgt, memory, nhead, pos=pos, query_pos=query_pos,
        return_intermediate=True)
    inter = jax.block_until_ready(inter)
    assert inter.shape == (num_layers, T, B, d_model), inter.shape
    np.testing.assert_allclose(np.asarray(inter[-1]), np.asarray(out),
                               atol=2e-2, rtol=2e-2)
    np.testing.assert_allclose(np.asarray(inter), np.asarray(ref_inters),
                               atol=2e-2, rtol=2e-2)

    print("KERNEL_OK")
</pallas_src>

<mosaic_0001>
module attributes {stable_mosaic.version = 11 : i64} {
  func.func @_decoder_kernel(%arg0: i32, %arg1: i32, %arg2: memref<16x32xf32, #tpu.memory_space<vmem>>, %arg3: memref<32x32xbf16, #tpu.memory_space<vmem>>, %arg4: memref<32x32xbf16, #tpu.memory_space<vmem>>, %arg5: memref<16x32xf32, #tpu.memory_space<vmem>>, %arg6: memref<1x4x32x32xbf16, #tpu.memory_space<vmem>>, %arg7: memref<1x4x32x32xbf16, #tpu.memory_space<vmem>>, %arg8: memref<1x32x64xbf16, #tpu.memory_space<vmem>>, %arg9: memref<1x1x64xf32, #tpu.memory_space<vmem>>, %arg10: memref<1x64x32xbf16, #tpu.memory_space<vmem>>, %arg11: memref<1x16x32xf32, #tpu.memory_space<vmem>>, %arg12: memref<2x32xf32, #tpu.memory_space<vmem>>, %arg13: memref<16x32xf32, #tpu.memory_space<vmem>>, %arg14: memref<16x32xf32, #tpu.memory_space<vmem>>) attributes {dimension_semantics = [#tpu.dimension_semantics<parallel>, #tpu.dimension_semantics<arbitrary>], iteration_bounds = array<i64: 1, 2>, scalar_prefetch = 0 : i64, scratch_operands = 1 : i64, tpu.core_type = #tpu.core_type<tc>, window_params = [{transform_indices = @transform_0, window_bounds = array<i64: 16, 32>}, {transform_indices = @transform_1, window_bounds = array<i64: 32, 32>}, {transform_indices = @transform_2, window_bounds = array<i64: 32, 32>}, {transform_indices = @transform_3, window_bounds = array<i64: 16, 32>}, {transform_indices = @transform_4, window_bounds = array<i64: 1, 4, 32, 32>}, {transform_indices = @transform_5, window_bounds = array<i64: 1, 4, 32, 32>}, {transform_indices = @transform_6, window_bounds = array<i64: 1, 32, 64>}, {transform_indices = @transform_7, window_bounds = array<i64: 1, 1, 64>}, {transform_indices = @transform_8, window_bounds = array<i64: 1, 64, 32>}, {transform_indices = @transform_9, window_bounds = array<i64: 1, 16, 32>}, {pipeline_mode = #tpu.pipeline_mode<synchronous>, transform_indices = @transform_10, window_bounds = array<i64: 2, 32>}, {transform_indices = @transform_11, window_bounds = array<i64: 16, 32>}]} {
    %c0_i32 = arith.constant 0 : i32
    %0 = arith.cmpi eq, %arg1, %c0_i32 : i32
    %1 = arith.extui %0 : i1 to i32
    %c0_i32_0 = arith.constant 0 : i32
    %2 = arith.cmpi ne, %1, %c0_i32_0 : i32
    scf.if %2 {
      %c0_108 = arith.constant 0 : index
      %c0_109 = arith.constant 0 : index
      %415 = vector.load %arg2[%c0_108, %c0_109] : memref<16x32xf32, #tpu.memory_space<vmem>>, vector<16x32xf32>
      %c0_110 = arith.constant 0 : index
      %c0_111 = arith.constant 0 : index
      %416 = vector.load %arg14[%c0_110, %c0_111] : memref<16x32xf32, #tpu.memory_space<vmem>>, vector<16x32xf32>
      tpu.vector_store %arg14[%c0_110, %c0_111], %415 {strides = array<i32>} : memref<16x32xf32, #tpu.memory_space<vmem>>, vector<16x32xf32>,
    } else {
    }
    %c0 = arith.constant 0 : index
    %c0_1 = arith.constant 0 : index
    %c0_2 = arith.constant 0 : index
    %c0_3 = arith.constant 0 : index
    %3 = vector.load %arg6[%c0, %c0_1, %c0_2, %c0_3] : memref<1x4x32x32xbf16, #tpu.memory_space<vmem>>, vector<1x4x32x32xbf16>
    %4 = vector.shape_cast %3 : vector<1x4x32x32xbf16> to vector<4x32x32xbf16>
    %c0_4 = arith.constant 0 : index
    %c0_5 = arith.constant 0 : index
    %c0_6 = arith.constant 0 : index
    %c0_7 = arith.constant 0 : index
    %5 = vector.load %arg7[%c0_4, %c0_5, %c0_6, %c0_7] : memref<1x4x32x32xbf16, #tpu.memory_space<vmem>>, vector<1x4x32x32xbf16>
    %6 = vector.shape_cast %5 : vector<1x4x32x32xbf16> to vector<4x32x32xbf16>
    %c0_8 = arith.constant 0 : index
    %c0_9 = arith.constant 0 : index
    %c0_10 = arith.constant 0 : index
    %7 = vector.load %arg8[%c0_8, %c0_9, %c0_10] : memref<1x32x64xbf16, #tpu.memory_space<vmem>>, vector<1x32x64xbf16>
    %8 = vector.shape_cast %7 : vector<1x32x64xbf16> to vector<32x64xbf16>
    %c0_11 = arith.constant 0 : index
    %c0_12 = arith.constant 0 : index
    %c0_13 = arith.constant 0 : index
    %9 = vector.load %arg9[%c0_11, %c0_12, %c0_13] : memref<1x1x64xf32, #tpu.memory_space<vmem>>, vector<1x1x64xf32>
    %10 = vector.shape_cast %9 : vector<1x1x64xf32> to vector<1x64xf32>
    %c0_14 = arith.constant 0 : index
    %c0_15 = arith.constant 0 : index
    %c0_16 = arith.constant 0 : index
    %11 = vector.load %arg10[%c0_14, %c0_15, %c0_16] : memref<1x64x32xbf16, #tpu.memory_space<vmem>>, vector<1x64x32xbf16>
    %12 = vector.shape_cast %11 : vector<1x64x32xbf16> to vector<64x32xbf16>
    %c0_17 = arith.constant 0 : index
    %c0_18 = arith.constant 0 : index
    %c0_19 = arith.constant 0 : index
    %13 = vector.load %arg11[%c0_17, %c0_18, %c0_19] : memref<1x16x32xf32, #tpu.memory_space<vmem>>, vector<1x16x32xf32>
    %14 = vector.shape_cast %13 : vector<1x16x32xf32> to vector<16x32xf32>
    %c0_20 = arith.constant 0 : index
    %c0_21 = arith.constant 0 : index
    %15 = vector.load %arg14[%c0_20, %c0_21] : memref<16x32xf32, #tpu.memory_space<vmem>>, vector<8x32xf32>
    %c0_22 = arith.constant 0 : index
    %c0_23 = arith.constant 0 : index
    %16 = vector.load %arg3[%c0_22, %c0_23] : memref<32x32xbf16, #tpu.memory_space<vmem>>, vector<16x32xbf16>
    %c0_24 = arith.constant 0 : index
    %c0_25 = arith.constant 0 : index
    %17 = vector.load %arg4[%c0_24, %c0_25] : memref<32x32xbf16, #tpu.memory_space<vmem>>, vector<16x32xbf16>
    %c0_26 = arith.constant 0 : index
    %c0_27 = arith.constant 0 : index
    %18 = vector.load %arg5[%c0_26, %c0_27] : memref<16x32xf32, #tpu.memory_space<vmem>>, vector<8x32xf32>
    %19 = vector.extract_strided_slice %14 {offsets = [8, 0], sizes = [1, 32], strides = [1, 1]} : vector<16x32xf32> to vector<1x32xf32>
    %20 = vector.extract_strided_slice %14 {offsets = [9, 0], sizes = [1, 32], strides = [1, 1]} : vector<16x32xf32> to vector<1x32xf32>
    %cst = arith.constant dense<0.000000e+00> : vector<8xf32>
    %21 = vector.multi_reduction <add>, %15, %cst [1] : vector<8x32xf32> to vector<8xf32>
    %22 = vector.shape_cast %21 : vector<8xf32> to vector<8x1xf32>
    %cst_28 = arith.constant 3.200000e+01 : f32
    %23 = vector.broadcast %cst_28 : f32 to vector<8x1xf32>
    %24 = arith.divf %22, %23 : vector<8x1xf32>
    %25 = vector.broadcast %24 : vector<8x1xf32> to vector<8x32xf32>
    %26 = arith.subf %15, %25 : vector<8x32xf32>
    %27 = arith.mulf %26, %26 : vector<8x32xf32>
    %cst_29 = arith.constant dense<0.000000e+00> : vector<8xf32>
    %28 = vector.multi_reduction <add>, %27, %cst_29 [1] : vector<8x32xf32> to vector<8xf32>
    %29 = vector.shape_cast %28 : vector<8xf32> to vector<8x1xf32>
    %cst_30 = arith.constant 3.200000e+01 : f32
    %30 = vector.broadcast %cst_30 : f32 to vector<8x1xf32>
    %31 = arith.divf %29, %30 : vector<8x1xf32>
    %32 = vector.broadcast %24 : vector<8x1xf32> to vector<8x32xf32>
    %33 = arith.subf %15, %32 : vector<8x32xf32>
    %cst_31 = arith.constant 9.99999974E-6 : f32
    %34 = vector.broadcast %cst_31 : f32 to vector<8x1xf32>
    %35 = arith.addf %31, %34 : vector<8x1xf32>
    %36 = math.rsqrt %35 : vector<8x1xf32>
    %37 = vector.broadcast %36 : vector<8x1xf32> to vector<8x32xf32>
    %38 = arith.mulf %33, %37 : vector<8x32xf32>
    %39 = vector.broadcast %19 : vector<1x32xf32> to vector<8x32xf32>
    %40 = arith.mulf %38, %39 : vector<8x32xf32>
    %41 = vector.broadcast %20 : vector<1x32xf32> to vector<8x32xf32>
    %42 = arith.addf %40, %41 : vector<8x32xf32>
    %43 = arith.addf %42, %18 : vector<8x32xf32>
    %44 = arith.truncf %43 : vector<8x32xf32> to vector<8x32xbf16>
    %45 = arith.truncf %42 : vector<8x32xf32> to vector<8x32xbf16>
    %46 = vector.extract_strided_slice %4 {offsets = [0, 0, 0], sizes = [1, 32, 32], strides = [1, 1, 1]} : vector<4x32x32xbf16> to vector<1x32x32xbf16>
    %47 = vector.shape_cast %46 : vector<1x32x32xbf16> to vector<32x32xbf16>
    %cst_32 = arith.constant dense<0.000000e+00> : vector<8x32xf32>
    %48 = tpu.matmul %44, %47, %cst_32 {dimension_numbers = #tpu.dot_dimension_numbers<[1], [0], [0], [1], [0, 0, 1, 1], [], []>} : vector<8x32xbf16>, vector<32x32xbf16>, vector<8x32xf32> -> vector<8x32xf32>
    %49 = vector.extract_strided_slice %14 {offsets = [0, 0], sizes = [1, 32], strides = [1, 1]} : vector<16x32xf32> to vector<1x32xf32>
    %50 = vector.broadcast %49 : vector<1x32xf32> to vector<8x32xf32>
    %51 = arith.addf %48, %50 : vector<8x32xf32>
    %52 = vector.extract_strided_slice %4 {offsets = [1, 0, 0], sizes = [1, 32, 32], strides = [1, 1, 1]} : vector<4x32x32xbf16> to vector<1x32x32xbf16>
    %53 = vector.shape_cast %52 : vector<1x32x32xbf16> to vector<32x32xbf16>
    %cst_33 = arith.constant dense<0.000000e+00> : vector<8x32xf32>
    %54 = tpu.matmul %44, %53, %cst_33 {dimension_numbers = #tpu.dot_dimension_numbers<[1], [0], [0], [1], [0, 0, 1, 1], [], []>} : vector<8x32xbf16>, vector<32x32xbf16>, vector<8x32xf32> -> vector<8x32xf32>
    %55 = vector.extract_strided_slice %14 {offsets = [1, 0], sizes = [1, 32], strides = [1, 1]} : vector<16x32xf32> to vector<1x32xf32>
    %56 = vector.broadcast %55 : vector<1x32xf32> to vector<8x32xf32>
    %57 = arith.addf %54, %56 : vector<8x32xf32>
    %58 = vector.extract_strided_slice %4 {offsets = [2, 0, 0], sizes = [1, 32, 32], strides = [1, 1, 1]} : vector<4x32x32xbf16> to vector<1x32x32xbf16>
    %59 = vector.shape_cast %58 : vector<1x32x32xbf16> to vector<32x32xbf16>
    %cst_34 = arith.constant dense<0.000000e+00> : vector<8x32xf32>
    %60 = tpu.matmul %45, %59, %cst_34 {dimension_numbers = #tpu.dot_dimension_numbers<[1], [0], [0], [1], [0, 0, 1, 1], [], []>} : vector<8x32xbf16>, vector<32x32xbf16>, vector<8x32xf32> -> vector<8x32xf32>
    %61 = vector.extract_strided_slice %14 {offsets = [2, 0], sizes = [1, 32], strides = [1, 1]} : vector<16x32xf32> to vector<1x32xf32>
    %62 = vector.broadcast %61 : vector<1x32xf32> to vector<8x32xf32>
    %63 = arith.addf %60, %62 : vector<8x32xf32>
    %64 = vector.shape_cast %51 : vector<8x32xf32> to vector<8x4x8xf32>
    %65 = tpu.transpose %64, [1, 0, 2] : vector<8x4x8xf32> -> vector<4x8x8xf32>
    %66 = vector.shape_cast %57 : vector<8x32xf32> to vector<8x4x8xf32>
    %67 = tpu.transpose %66, [1, 0, 2] : vector<8x4x8xf32> -> vector<4x8x8xf32>
    %68 = vector.shape_cast %63 : vector<8x32xf32> to vector<8x4x8xf32>
    %69 = tpu.transpose %68, [1, 0, 2] : vector<8x4x8xf32> -> vector<4x8x8xf32>
    %70 = arith.truncf %65 : vector<4x8x8xf32> to vector<4x8x8xbf16>
    %71 = arith.truncf %67 : vector<4x8x8xf32> to vector<4x8x8xbf16>
    %72 = arith.truncf %69 : vector<4x8x8xf32> to vector<4x8x8xbf16>
    %73 = vector.extract_strided_slice %71 {offsets = [0, 0, 0], sizes = [4, 8, 8], strides = [1, 1, 1]} : vector<4x8x8xbf16> to vector<4x8x8xbf16>
    %74 = vector.extract_strided_slice %72 {offsets = [0, 0, 0], sizes = [4, 8, 8], strides = [1, 1, 1]} : vector<4x8x8xbf16> to vector<4x8x8xbf16>
    "tpu.trace_start"() <{level = 10 : i32, message = "htd,hsd->hts"}> : () -> ()
    %cst_35 = arith.constant dense<0.000000e+00> : vector<4x8x8xf32>
    %75 = tpu.matmul %70, %73, %cst_35 {dimension_numbers = #tpu.dot_dimension_numbers<[2], [2], [1], [1], [0, 0, 0, 1, 1, 1], [0], [0]>} : vector<4x8x8xbf16>, vector<4x8x8xbf16>, vector<4x8x8xf32> -> vector<4x8x8xf32>
    "tpu.trace_stop"() : () -> ()
    %cst_36 = arith.constant dense<0xFF800000> : vector<4x8xf32>
    %76 = vector.multi_reduction <maximumf>, %75, %cst_36 [2] : vector<4x8x8xf32> to vector<4x8xf32>
    %77 = vector.shape_cast %76 : vector<4x8xf32> to vector<4x8x1xf32>
    %78 = vector.broadcast %77 : vector<4x8x1xf32> to vector<4x8x8xf32>
    %79 = arith.subf %75, %78 : vector<4x8x8xf32>
    %80 = math.exp %79 : vector<4x8x8xf32>
    %cst_37 = arith.constant dense<0.000000e+00> : vector<4x8xf32>
    %81 = vector.multi_reduction <add>, %80, %cst_37 [2] : vector<4x8x8xf32> to vector<4x8xf32>
    %82 = vector.shape_cast %81 : vector<4x8xf32> to vector<4x8x1xf32>
    %83 = arith.truncf %80 : vector<4x8x8xf32> to vector<4x8x8xbf16>
    "tpu.trace_start"() <{level = 10 : i32, message = "hts,hsd->htd"}> : () -> ()
    %cst_38 = arith.constant dense<0.000000e+00> : vector<4x8x8xf32>
    %84 = tpu.matmul %83, %74, %cst_38 {dimension_numbers = #tpu.dot_dimension_numbers<[2], [1], [1], [2], [0, 0, 0, 1, 1, 2], [0], [0]>} : vector<4x8x8xbf16>, vector<4x8x8xbf16>, vector<4x8x8xf32> -> vector<4x8x8xf32>
    "tpu.trace_stop"() : () -> ()
    %85 = tpu.reciprocal %82 : vector<4x8x1xf32> -> vector<4x8x1xf32>
    %86 = vector.broadcast %85 : vector<4x8x1xf32> to vector<4x8x8xf32>
    %87 = arith.mulf %84, %86 : vector<4x8x8xf32>
    %88 = tpu.transpose %87, [1, 0, 2] : vector<4x8x8xf32> -> vector<8x4x8xf32>
    %89 = vector.shape_cast %88 : vector<8x4x8xf32> to vector<8x32xf32>
    %90 = arith.truncf %89 : vector<8x32xf32> to vector<8x32xbf16>
    %91 = vector.extract_strided_slice %4 {offsets = [3, 0, 0], sizes = [1, 32, 32], strides = [1, 1, 1]} : vector<4x32x32xbf16> to vector<1x32x32xbf16>
    %92 = vector.shape_cast %91 : vector<1x32x32xbf16> to vector<32x32xbf16>
    %cst_39 = arith.constant dense<0.000000e+00> : vector<8x32xf32>
    %93 = tpu.matmul %90, %92, %cst_39 {dimension_numbers = #tpu.dot_dimension_numbers<[1], [0], [0], [1], [0, 0, 1, 1], [], []>} : vector<8x32xbf16>, vector<32x32xbf16>, vector<8x32xf32> -> vector<8x32xf32>
    %94 = vector.extract_strided_slice %14 {offsets = [3, 0], sizes = [1, 32], strides = [1, 1]} : vector<16x32xf32> to vector<1x32xf32>
    %95 = vector.broadcast %94 : vector<1x32xf32> to vector<8x32xf32>
    %96 = arith.addf %93, %95 : vector<8x32xf32>
    %97 = arith.addf %15, %96 : vector<8x32xf32>
    %98 = vector.extract_strided_slice %14 {offsets = [10, 0], sizes = [1, 32], strides = [1, 1]} : vector<16x32xf32> to vector<1x32xf32>
    %99 = vector.extract_strided_slice %14 {offsets = [11, 0], sizes = [1, 32], strides = [1, 1]} : vector<16x32xf32> to vector<1x32xf32>
    %cst_40 = arith.constant dense<0.000000e+00> : vector<8xf32>
    %100 = vector.multi_reduction <add>, %97, %cst_40 [1] : vector<8x32xf32> to vector<8xf32>
    %101 = vector.shape_cast %100 : vector<8xf32> to vector<8x1xf32>
    %cst_41 = arith.constant 3.200000e+01 : f32
    %102 = vector.broadcast %cst_41 : f32 to vector<8x1xf32>
    %103 = arith.divf %101, %102 : vector<8x1xf32>
    %104 = vector.broadcast %103 : vector<8x1xf32> to vector<8x32xf32>
    %105 = arith.subf %97, %104 : vector<8x32xf32>
    %106 = arith.mulf %105, %105 : vector<8x32xf32>
    %cst_42 = arith.constant dense<0.000000e+00> : vector<8xf32>
    %107 = vector.multi_reduction <add>, %106, %cst_42 [1] : vector<8x32xf32> to vector<8xf32>
    %108 = vector.shape_cast %107 : vector<8xf32> to vector<8x1xf32>
    %cst_43 = arith.constant 3.200000e+01 : f32
    %109 = vector.broadcast %cst_43 : f32 to vector<8x1xf32>
    %110 = arith.divf %108, %109 : vector<8x1xf32>
    %111 = vector.broadcast %103 : vector<8x1xf32> to vector<8x32xf32>
    %112 = arith.subf %97, %111 : vector<8x32xf32>
    %cst_44 = arith.constant 9.99999974E-6 : f32
    %113 = vector.broadcast %cst_44 : f32 to vector<8x1xf32>
    %114 = arith.addf %110, %113 : vector<8x1xf32>
    %115 = math.rsqrt %114 : vector<8x1xf32>
    %116 = vector.broadcast %115 : vector<8x1xf32> to vector<8x32xf32>
    %117 = arith.mulf %112, %116 : vector<8x32xf32>
    %118 = vector.broadcast %98 : vector<1x32xf32> to vector<8x32xf32>
    %119 = arith.mulf %117, %118 : vector<8x32xf32>
    %120 = vector.broadcast %99 : vector<1x32xf32> to vector<8x32xf32>
    %121 = arith.addf %119, %120 : vector<8x32xf32>
    %122 = arith.addf %121, %18 : vector<8x32xf32>
    %123 = arith.truncf %122 : vector<8x32xf32> to vector<8x32xbf16>
    %124 = vector.extract_strided_slice %6 {offsets = [0, 0, 0], sizes = [1, 32, 32], strides = [1, 1, 1]} : vector<4x32x32xbf16> to vector<1x32x32xbf16>
    %125 = vector.shape_cast %124 : vector<1x32x32xbf16> to vector<32x32xbf16>
    %cst_45 = arith.constant dense<0.000000e+00> : vector<8x32xf32>
    %126 = tpu.matmul %123, %125, %cst_45 {dimension_numbers = #tpu.dot_dimension_numbers<[1], [0], [0], [1], [0, 0, 1, 1], [], []>} : vector<8x32xbf16>, vector<32x32xbf16>, vector<8x32xf32> -> vector<8x32xf32>
    %127 = vector.extract_strided_slice %14 {offsets = [4, 0], sizes = [1, 32], strides = [1, 1]} : vector<16x32xf32> to vector<1x32xf32>
    %128 = vector.broadcast %127 : vector<1x32xf32> to vector<8x32xf32>
    %129 = arith.addf %126, %128 : vector<8x32xf32>
    %130 = vector.extract_strided_slice %6 {offsets = [1, 0, 0], sizes = [1, 32, 32], strides = [1, 1, 1]} : vector<4x32x32xbf16> to vector<1x32x32xbf16>
    %131 = vector.shape_cast %130 : vector<1x32x32xbf16> to vector<32x32xbf16>
    %cst_46 = arith.constant dense<0.000000e+00> : vector<16x32xf32>
    %132 = tpu.matmul %17, %131, %cst_46 {dimension_numbers = #tpu.dot_dimension_numbers<[1], [0], [0], [1], [0, 0, 1, 1], [], []>} : vector<16x32xbf16>, vector<32x32xbf16>, vector<16x32xf32> -> vector<16x32xf32>
    %133 = vector.extract_strided_slice %14 {offsets = [5, 0], sizes = [1, 32], strides = [1, 1]} : vector<16x32xf32> to vector<1x32xf32>
    %134 = vector.broadcast %133 : vector<1x32xf32> to vector<16x32xf32>
    %135 = arith.addf %132, %134 : vector<16x32xf32>
    %136 = vector.extract_strided_slice %6 {offsets = [2, 0, 0], sizes = [1, 32, 32], strides = [1, 1, 1]} : vector<4x32x32xbf16> to vector<1x32x32xbf16>
    %137 = vector.shape_cast %136 : vector<1x32x32xbf16> to vector<32x32xbf16>
    %cst_47 = arith.constant dense<0.000000e+00> : vector<16x32xf32>
    %138 = tpu.matmul %16, %137, %cst_47 {dimension_numbers = #tpu.dot_dimension_numbers<[1], [0], [0], [1], [0, 0, 1, 1], [], []>} : vector<16x32xbf16>, vector<32x32xbf16>, vector<16x32xf32> -> vector<16x32xf32>
    %139 = vector.extract_strided_slice %14 {offsets = [6, 0], sizes = [1, 32], strides = [1, 1]} : vector<16x32xf32> to vector<1x32xf32>
    %140 = vector.broadcast %139 : vector<1x32xf32> to vector<16x32xf32>
    %141 = arith.addf %138, %140 : vector<16x32xf32>
    %142 = vector.shape_cast %129 : vector<8x32xf32> to vector<8x4x8xf32>
    %143 = tpu.transpose %142, [1, 0, 2] : vector<8x4x8xf32> -> vector<4x8x8xf32>
    %144 = vector.shape_cast %135 : vector<16x32xf32> to vector<16x4x8xf32>
    %145 = tpu.transpose %144, [1, 0, 2] : vector<16x4x8xf32> -> vector<4x16x8xf32>
    %146 = vector.shape_cast %141 : vector<16x32xf32> to vector<16x4x8xf32>
    %147 = tpu.transpose %146, [1, 0, 2] : vector<16x4x8xf32> -> vector<4x16x8xf32>
    %148 = arith.truncf %143 : vector<4x8x8xf32> to vector<4x8x8xbf16>
    %149 = arith.truncf %145 : vector<4x16x8xf32> to vector<4x16x8xbf16>
    %150 = arith.truncf %147 : vector<4x16x8xf32> to vector<4x16x8xbf16>
    %151 = vector.extract_strided_slice %149 {offsets = [0, 0, 0], sizes = [4, 16, 8], strides = [1, 1, 1]} : vector<4x16x8xbf16> to vector<4x16x8xbf16>
    %152 = vector.extract_strided_slice %150 {offsets = [0, 0, 0], sizes = [4, 16, 8], strides = [1, 1, 1]} : vector<4x16x8xbf16> to vector<4x16x8xbf16>
    "tpu.trace_start"() <{level = 10 : i32, message = "htd,hsd->hts"}> : () -> ()
    %cst_48 = arith.constant dense<0.000000e+00> : vector<4x8x16xf32>
    %153 = tpu.matmul %148, %151, %cst_48 {dimension_numbers = #tpu.dot_dimension_numbers<[2], [2], [1], [1], [0, 0, 0, 1, 1, 1], [0], [0]>} : vector<4x8x8xbf16>, vector<4x16x8xbf16>, vector<4x8x16xf32> -> vector<4x8x16xf32>
    "tpu.trace_stop"() : () -> ()
    %cst_49 = arith.constant dense<0xFF800000> : vector<4x8xf32>
    %154 = vector.multi_reduction <maximumf>, %153, %cst_49 [2] : vector<4x8x16xf32> to vector<4x8xf32>
    %155 = vector.shape_cast %154 : vector<4x8xf32> to vector<4x8x1xf32>
    %156 = vector.broadcast %155 : vector<4x8x1xf32> to vector<4x8x16xf32>
    %157 = arith.subf %153, %156 : vector<4x8x16xf32>
    %158 = math.exp %157 : vector<4x8x16xf32>
    %cst_50 = arith.constant dense<0.000000e+00> : vector<4x8xf32>
    %159 = vector.multi_reduction <add>, %158, %cst_50 [2] : vector<4x8x16xf32> to vector<4x8xf32>
    %160 = vector.shape_cast %159 : vector<4x8xf32> to vector<4x8x1xf32>
    %161 = arith.truncf %158 : vector<4x8x16xf32> to vector<4x8x16xbf16>
    "tpu.trace_start"() <{level = 10 : i32, message = "hts,hsd->htd"}> : () -> ()
    %cst_51 = arith.constant dense<0.000000e+00> : vector<4x8x8xf32>
    %162 = tpu.matmul %161, %152, %cst_51 {dimension_numbers = #tpu.dot_dimension_numbers<[2], [1], [1], [2], [0, 0, 0, 1, 1, 2], [0], [0]>} : vector<4x8x16xbf16>, vector<4x16x8xbf16>, vector<4x8x8xf32> -> vector<4x8x8xf32>
    "tpu.trace_stop"() : () -> ()
    %163 = tpu.reciprocal %160 : vector<4x8x1xf32> -> vector<4x8x1xf32>
    %164 = vector.broadcast %163 : vector<4x8x1xf32> to vector<4x8x8xf32>
    %165 = arith.mulf %162, %164 : vector<4x8x8xf32>
    %166 = tpu.transpose %165, [1, 0, 2] : vector<4x8x8xf32> -> vector<8x4x8xf32>
    %167 = vector.shape_cast %166 : vector<8x4x8xf32> to vector<8x32xf32>
    %168 = arith.truncf %167 : vector<8x32xf32> to vector<8x32xbf16>
    %169 = vector.extract_strided_slice %6 {offsets = [3, 0, 0], sizes = [1, 32, 32], strides = [1, 1, 1]} : vector<4x32x32xbf16> to vector<1x32x32xbf16>
    %170 = vector.shape_cast %169 : vector<1x32x32xbf16> to vector<32x32xbf16>
    %cst_52 = arith.constant dense<0.000000e+00> : vector<8x32xf32>
    %171 = tpu.matmul %168, %170, %cst_52 {dimension_numbers = #tpu.dot_dimension_numbers<[1], [0], [0], [1], [0, 0, 1, 1], [], []>} : vector<8x32xbf16>, vector<32x32xbf16>, vector<8x32xf32> -> vector<8x32xf32>
    %172 = vector.extract_strided_slice %14 {offsets = [7, 0], sizes = [1, 32], strides = [1, 1]} : vector<16x32xf32> to vector<1x32xf32>
    %173 = vector.broadcast %172 : vector<1x32xf32> to vector<8x32xf32>
    %174 = arith.addf %171, %173 : vector<8x32xf32>
    %175 = arith.addf %97, %174 : vector<8x32xf32>
    %176 = vector.extract_strided_slice %14 {offsets = [12, 0], sizes = [1, 32], strides = [1, 1]} : vector<16x32xf32> to vector<1x32xf32>
    %177 = vector.extract_strided_slice %14 {offsets = [13, 0], sizes = [1, 32], strides = [1, 1]} : vector<16x32xf32> to vector<1x32xf32>
    %cst_53 = arith.constant dense<0.000000e+00> : vector<8xf32>
    %178 = vector.multi_reduction <add>, %175, %cst_53 [1] : vector<8x32xf32> to vector<8xf32>
    %179 = vector.shape_cast %178 : vector<8xf32> to vector<8x1xf32>
    %cst_54 = arith.constant 3.200000e+01 : f32
    %180 = vector.broadcast %cst_54 : f32 to vector<8x1xf32>
    %181 = arith.divf %179, %180 : vector<8x1xf32>
    %182 = vector.broadcast %181 : vector<8x1xf32> to vector<8x32xf32>
    %183 = arith.subf %175, %182 : vector<8x32xf32>
    %184 = arith.mulf %183, %183 : vector<8x32xf32>
    %cst_55 = arith.constant dense<0.000000e+00> : vector<8xf32>
    %185 = vector.multi_reduction <add>, %184, %cst_55 [1] : vector<8x32xf32> to vector<8xf32>
    %186 = vector.shape_cast %185 : vector<8xf32> to vector<8x1xf32>
    %cst_56 = arith.constant 3.200000e+01 : f32
    %187 = vector.broadcast %cst_56 : f32 to vector<8x1xf32>
    %188 = arith.divf %186, %187 : vector<8x1xf32>
    %189 = vector.broadcast %181 : vector<8x1xf32> to vector<8x32xf32>
    %190 = arith.subf %175, %189 : vector<8x32xf32>
    %cst_57 = arith.constant 9.99999974E-6 : f32
    %191 = vector.broadcast %cst_57 : f32 to vector<8x1xf32>
    %192 = arith.addf %188, %191 : vector<8x1xf32>
    %193 = math.rsqrt %192 : vector<8x1xf32>
    %194 = vector.broadcast %193 : vector<8x1xf32> to vector<8x32xf32>
    %195 = arith.mulf %190, %194 : vector<8x32xf32>
    %196 = vector.broadcast %176 : vector<1x32xf32> to vector<8x32xf32>
    %197 = arith.mulf %195, %196 : vector<8x32xf32>
    %198 = vector.broadcast %177 : vector<1x32xf32> to vector<8x32xf32>
    %199 = arith.addf %197, %198 : vector<8x32xf32>
    %200 = arith.truncf %199 : vector<8x32xf32> to vector<8x32xbf16>
    %cst_58 = arith.constant dense<0.000000e+00> : vector<8x64xf32>
    %201 = tpu.matmul %200, %8, %cst_58 {dimension_numbers = #tpu.dot_dimension_numbers<[1], [0], [0], [1], [0, 0, 1, 1], [], []>} : vector<8x32xbf16>, vector<32x64xbf16>, vector<8x64xf32> -> vector<8x64xf32>
    %202 = vector.broadcast %10 : vector<1x64xf32> to vector<8x64xf32>
    %203 = arith.addf %201, %202 : vector<8x64xf32>
    %cst_59 = arith.constant 0.000000e+00 : f32
    %204 = vector.broadcast %cst_59 : f32 to vector<8x64xf32>
    %205 = arith.maximumf %203, %204 : vector<8x64xf32>
    %206 = arith.truncf %205 : vector<8x64xf32> to vector<8x64xbf16>
    %cst_60 = arith.constant dense<0.000000e+00> : vector<8x32xf32>
    %207 = tpu.matmul %206, %12, %cst_60 {dimension_numbers = #tpu.dot_dimension_numbers<[1], [0], [0], [1], [0, 0, 1, 1], [], []>} : vector<8x64xbf16>, vector<64x32xbf16>, vector<8x32xf32> -> vector<8x32xf32>
    %208 = vector.extract_strided_slice %14 {offsets = [14, 0], sizes = [1, 32], strides = [1, 1]} : vector<16x32xf32> to vector<1x32xf32>
    %209 = vector.broadcast %208 : vector<1x32xf32> to vector<8x32xf32>
    %210 = arith.addf %207, %209 : vector<8x32xf32>
    %211 = arith.addf %175, %210 : vector<8x32xf32>
    %c0_61 = arith.constant 0 : index
    %c0_62 = arith.constant 0 : index
    %212 = vector.load %arg14[%c0_61, %c0_62] : memref<16x32xf32, #tpu.memory_space<vmem>>, vector<8x32xf32>
    tpu.vector_store %arg14[%c0_61, %c0_62], %211 {strides = array<i32>} : memref<16x32xf32, #tpu.memory_space<vmem>>, vector<8x32xf32>,
    %c8 = arith.constant 8 : index
    %c0_63 = arith.constant 0 : index
    %213 = vector.load %arg14[%c8, %c0_63] : memref<16x32xf32, #tpu.memory_space<vmem>>, vector<8x32xf32>
    %c16 = arith.constant 16 : index
    %c0_64 = arith.constant 0 : index
    %214 = vector.load %arg3[%c16, %c0_64] : memref<32x32xbf16, #tpu.memory_space<vmem>>, vector<16x32xbf16>
    %c16_65 = arith.constant 16 : index
    %c0_66 = arith.constant 0 : index
    %215 = vector.load %arg4[%c16_65, %c0_66] : memref<32x32xbf16, #tpu.memory_space<vmem>>, vector<16x32xbf16>
    %c8_67 = arith.constant 8 : index
    %c0_68 = arith.constant 0 : index
    %216 = vector.load %arg5[%c8_67, %c0_68] : memref<16x32xf32, #tpu.memory_space<vmem>>, vector<8x32xf32>
    %217 = vector.extract_strided_slice %14 {offsets = [8, 0], sizes = [1, 32], strides = [1, 1]} : vector<16x32xf32> to vector<1x32xf32>
    %218 = vector.extract_strided_slice %14 {offsets = [9, 0], sizes = [1, 32], strides = [1, 1]} : vector<16x32xf32> to vector<1x32xf32>
    %cst_69 = arith.constant dense<0.000000e+00> : vector<8xf32>
    %219 = vector.multi_reduction <add>, %213, %cst_69 [1] : vector<8x32xf32> to vector<8xf32>
    %220 = vector.shape_cast %219 : vector<8xf32> to vector<8x1xf32>
    %cst_70 = arith.constant 3.200000e+01 : f32
    %221 = vector.broadcast %cst_70 : f32 to vector<8x1xf32>
    %222 = arith.divf %220, %221 : vector<8x1xf32>
    %223 = vector.broadcast %222 : vector<8x1xf32> to vector<8x32xf32>
    %224 = arith.subf %213, %223 : vector<8x32xf32>
    %225 = arith.mulf %224, %224 : vector<8x32xf32>
    %cst_71 = arith.constant dense<0.000000e+00> : vector<8xf32>
    %226 = vector.multi_reduction <add>, %225, %cst_71 [1] : vector<8x32xf32> to vector<8xf32>
    %227 = vector.shape_cast %226 : vector<8xf32> to vector<8x1xf32>
    %cst_72 = arith.constant 3.200000e+01 : f32
    %228 = vector.broadcast %cst_72 : f32 to vector<8x1xf32>
    %229 = arith.divf %227, %228 : vector<8x1xf32>
    %230 = vector.broadcast %222 : vector<8x1xf32> to vector<8x32xf32>
    %231 = arith.subf %213, %230 : vector<8x32xf32>
    %cst_73 = arith.constant 9.99999974E-6 : f32
    %232 = vector.broadcast %cst_73 : f32 to vector<8x1xf32>
    %233 = arith.addf %229, %232 : vector<8x1xf32>
    %234 = math.rsqrt %233 : vector<8x1xf32>
    %235 = vector.broadcast %234 : vector<8x1xf32> to vector<8x32xf32>
    %236 = arith.mulf %231, %235 : vector<8x32xf32>
    %237 = vector.broadcast %217 : vector<1x32xf32> to vector<8x32xf32>
    %238 = arith.mulf %236, %237 : vector<8x32xf32>
    %239 = vector.broadcast %218 : vector<1x32xf32> to vector<8x32xf32>
    %240 = arith.addf %238, %239 : vector<8x32xf32>
    %241 = arith.addf %240, %216 : vector<8x32xf32>
    %242 = arith.truncf %241 : vector<8x32xf32> to vector<8x32xbf16>
    %243 = arith.truncf %240 : vector<8x32xf32> to vector<8x32xbf16>
    %244 = vector.extract_strided_slice %4 {offsets = [0, 0, 0], sizes = [1, 32, 32], strides = [1, 1, 1]} : vector<4x32x32xbf16> to vector<1x32x32xbf16>
    %245 = vector.shape_cast %244 : vector<1x32x32xbf16> to vector<32x32xbf16>
    %cst_74 = arith.constant dense<0.000000e+00> : vector<8x32xf32>
    %246 = tpu.matmul %242, %245, %cst_74 {dimension_numbers = #tpu.dot_dimension_numbers<[1], [0], [0], [1], [0, 0, 1, 1], [], []>} : vector<8x32xbf16>, vector<32x32xbf16>, vector<8x32xf32> -> vector<8x32xf32>
    %247 = vector.extract_strided_slice %14 {offsets = [0, 0], sizes = [1, 32], strides = [1, 1]} : vector<16x32xf32> to vector<1x32xf32>
    %248 = vector.broadcast %247 : vector<1x32xf32> to vector<8x32xf32>
    %249 = arith.addf %246, %248 : vector<8x32xf32>
    %250 = vector.extract_strided_slice %4 {offsets = [1, 0, 0], sizes = [1, 32, 32], strides = [1, 1, 1]} : vector<4x32x32xbf16> to vector<1x32x32xbf16>
    %251 = vector.shape_cast %250 : vector<1x32x32xbf16> to vector<32x32xbf16>
    %cst_75 = arith.constant dense<0.000000e+00> : vector<8x32xf32>
    %252 = tpu.matmul %242, %251, %cst_75 {dimension_numbers = #tpu.dot_dimension_numbers<[1], [0], [0], [1], [0, 0, 1, 1], [], []>} : vector<8x32xbf16>, vector<32x32xbf16>, vector<8x32xf32> -> vector<8x32xf32>
    %253 = vector.extract_strided_slice %14 {offsets = [1, 0], sizes = [1, 32], strides = [1, 1]} : vector<16x32xf32> to vector<1x32xf32>
    %254 = vector.broadcast %253 : vector<1x32xf32> to vector<8x32xf32>
    %255 = arith.addf %252, %254 : vector<8x32xf32>
    %256 = vector.extract_strided_slice %4 {offsets = [2, 0, 0], sizes = [1, 32, 32], strides = [1, 1, 1]} : vector<4x32x32xbf16> to vector<1x32x32xbf16>
    %257 = vector.shape_cast %256 : vector<1x32x32xbf16> to vector<32x32xbf16>
    %cst_76 = arith.constant dense<0.000000e+00> : vector<8x32xf32>
    %258 = tpu.matmul %243, %257, %cst_76 {dimension_numbers = #tpu.dot_dimension_numbers<[1], [0], [0], [1], [0, 0, 1, 1], [], []>} : vector<8x32xbf16>, vector<32x32xbf16>, vector<8x32xf32> -> vector<8x32xf32>
    %259 = vector.extract_strided_slice %14 {offsets = [2, 0], sizes = [1, 32], strides = [1, 1]} : vector<16x32xf32> to vector<1x32xf32>
    %260 = vector.broadcast %259 : vector<1x32xf32> to vector<8x32xf32>
    %261 = arith.addf %258, %260 : vector<8x32xf32>
    %262 = vector.shape_cast %249 : vector<8x32xf32> to vector<8x4x8xf32>
    %263 = tpu.transpose %262, [1, 0, 2] : vector<8x4x8xf32> -> vector<4x8x8xf32>
    %264 = vector.shape_cast %255 : vector<8x32xf32> to vector<8x4x8xf32>
    %265 = tpu.transpose %264, [1, 0, 2] : vector<8x4x8xf32> -> vector<4x8x8xf32>
    %266 = vector.shape_cast %261 : vector<8x32xf32> to vector<8x4x8xf32>
    %267 = tpu.transpose %266, [1, 0, 2] : vector<8x4x8xf32> -> vector<4x8x8xf32>
    %268 = arith.truncf %263 : vector<4x8x8xf32> to vector<4x8x8xbf16>
    %269 = arith.truncf %265 : vector<4x8x8xf32> to vector<4x8x8xbf16>
    %270 = arith.truncf %267 : vector<4x8x8xf32> to vector<4x8x8xbf16>
    %271 = vector.extract_strided_slice %269 {offsets = [0, 0, 0], sizes = [4, 8, 8], strides = [1, 1, 1]} : vector<4x8x8xbf16> to vector<4x8x8xbf16>
    %272 = vector.extract_strided_slice %270 {offsets = [0, 0, 0], sizes = [4, 8, 8], strides = [1, 1, 1]} : vector<4x8x8xbf16> to vector<4x8x8xbf16>
    "tpu.trace_start"() <{level = 10 : i32, message = "htd,hsd->hts"}> : () -> ()
    %cst_77 = arith.constant dense<0.000000e+00> : vector<4x8x8xf32>
    %273 = tpu.matmul %268, %271, %cst_77 {dimension_numbers = #tpu.dot_dimension_numbers<[2], [2], [1], [1], [0, 0, 0, 1, 1, 1], [0], [0]>} : vector<4x8x8xbf16>, vector<4x8x8xbf16>, vector<4x8x8xf32> -> vector<4x8x8xf32>
    "tpu.trace_stop"() : () -> ()
    %cst_78 = arith.constant dense<0xFF800000> : vector<4x8xf32>
    %274 = vector.multi_reduction <maximumf>, %273, %cst_78 [2] : vector<4x8x8xf32> to vector<4x8xf32>
    %275 = vector.shape_cast %274 : vector<4x8xf32> to vector<4x8x1xf32>
    %276 = vector.broadcast %275 : vector<4x8x1xf32> to vector<4x8x8xf32>
    %277 = arith.subf %273, %276 : vector<4x8x8xf32>
    %278 = math.exp %277 : vector<4x8x8xf32>
    %cst_79 = arith.constant dense<0.000000e+00> : vector<4x8xf32>
    %279 = vector.multi_reduction <add>, %278, %cst_79 [2] : vector<4x8x8xf32> to vector<4x8xf32>
    %280 = vector.shape_cast %279 : vector<4x8xf32> to vector<4x8x1xf32>
    %281 = arith.truncf %278 : vector<4x8x8xf32> to vector<4x8x8xbf16>
    "tpu.trace_start"() <{level = 10 : i32, message = "hts,hsd->htd"}> : () -> ()
    %cst_80 = arith.constant dense<0.000000e+00> : vector<4x8x8xf32>
    %282 = tpu.matmul %281, %272, %cst_80 {dimension_numbers = #tpu.dot_dimension_numbers<[2], [1], [1], [2], [0, 0, 0, 1, 1, 2], [0], [0]>} : vector<4x8x8xbf16>, vector<4x8x8xbf16>, vector<4x8x8xf32> -> vector<4x8x8xf32>
    "tpu.trace_stop"() : () -> ()
    %283 = tpu.reciprocal %280 : vector<4x8x1xf32> -> vector<4x8x1xf32>
    %284 = vector.broadcast %283 : vector<4x8x1xf32> to vector<4x8x8xf32>
    %285 = arith.mulf %282, %284 : vector<4x8x8xf32>
    %286 = tpu.transpose %285, [1, 0, 2] : vector<4x8x8xf32> -> vector<8x4x8xf32>
    %287 = vector.shape_cast %286 : vector<8x4x8xf32> to vector<8x32xf32>
    %288 = arith.truncf %287 : vector<8x32xf32> to vector<8x32xbf16>
    %289 = vector.extract_strided_slice %4 {offsets = [3, 0, 0], sizes = [1, 32, 32], strides = [1, 1, 1]} : vector<4x32x32xbf16> to vector<1x32x32xbf16>
    %290 = vector.shape_cast %289 : vector<1x32x32xbf16> to vector<32x32xbf16>
    %cst_81 = arith.constant dense<0.000000e+00> : vector<8x32xf32>
    %291 = tpu.matmul %288, %290, %cst_81 {dimension_numbers = #tpu.dot_dimension_numbers<[1], [0], [0], [1], [0, 0, 1, 1], [], []>} : vector<8x32xbf16>, vector<32x32xbf16>, vector<8x32xf32> -> vector<8x32xf32>
    %292 = vector.extract_strided_slice %14 {offsets = [3, 0], sizes = [1, 32], strides = [1, 1]} : vector<16x32xf32> to vector<1x32xf32>
    %293 = vector.broadcast %292 : vector<1x32xf32> to vector<8x32xf32>
    %294 = arith.addf %291, %293 : vector<8x32xf32>
    %295 = arith.addf %213, %294 : vector<8x32xf32>
    %296 = vector.extract_strided_slice %14 {offsets = [10, 0], sizes = [1, 32], strides = [1, 1]} : vector<16x32xf32> to vector<1x32xf32>
    %297 = vector.extract_strided_slice %14 {offsets = [11, 0], sizes = [1, 32], strides = [1, 1]} : vector<16x32xf32> to vector<1x32xf32>
    %cst_82 = arith.constant dense<0.000000e+00> : vector<8xf32>
    %298 = vector.multi_reduction <add>, %295, %cst_82 [1] : vector<8x32xf32> to vector<8xf32>
    %299 = vector.shape_cast %298 : vector<8xf32> to vector<8x1xf32>
    %cst_83 = arith.constant 3.200000e+01 : f32
    %300 = vector.broadcast %cst_83 : f32 to vector<8x1xf32>
    %301 = arith.divf %299, %300 : vector<8x1xf32>
    %302 = vector.broadcast %301 : vector<8x1xf32> to vector<8x32xf32>
    %303 = arith.subf %295, %302 : vector<8x32xf32>
    %304 = arith.mulf %303, %303 : vector<8x32xf32>
    %cst_84 = arith.constant dense<0.000000e+00> : vector<8xf32>
    %305 = vector.multi_reduction <add>, %304, %cst_84 [1] : vector<8x32xf32> to vector<8xf32>
    %306 = vector.shape_cast %305 : vector<8xf32> to vector<8x1xf32>
    %cst_85 = arith.constant 3.200000e+01 : f32
    %307 = vector.broadcast %cst_85 : f32 to vector<8x1xf32>
    %308 = arith.divf %306, %307 : vector<8x1xf32>
    %309 = vector.broadcast %301 : vector<8x1xf32> to vector<8x32xf32>
    %310 = arith.subf %295, %309 : vector<8x32xf32>
    %cst_86 = arith.constant 9.99999974E-6 : f32
    %311 = vector.broadcast %cst_86 : f32 to vector<8x1xf32>
    %312 = arith.addf %308, %311 : vector<8x1xf32>
    %313 = math.rsqrt %312 : vector<8x1xf32>
    %314 = vector.broadcast %313 : vector<8x1xf32> to vector<8x32xf32>
    %315 = arith.mulf %310, %314 : vector<8x32xf32>
    %316 = vector.broadcast %296 : vector<1x32xf32> to vector<8x32xf32>
    %317 = arith.mulf %315, %316 : vector<8x32xf32>
    %318 = vector.broadcast %297 : vector<1x32xf32> to vector<8x32xf32>
    %319 = arith.addf %317, %318 : vector<8x32xf32>
    %320 = arith.addf %319, %216 : vector<8x32xf32>
    %321 = arith.truncf %320 : vector<8x32xf32> to vector<8x32xbf16>
    %322 = vector.extract_strided_slice %6 {offsets = [0, 0, 0], sizes = [1, 32, 32], strides = [1, 1, 1]} : vector<4x32x32xbf16> to vector<1x32x32xbf16>
    %323 = vector.shape_cast %322 : vector<1x32x32xbf16> to vector<32x32xbf16>
    %cst_87 = arith.constant dense<0.000000e+00> : vector<8x32xf32>
    %324 = tpu.matmul %321, %323, %cst_87 {dimension_numbers = #tpu.dot_dimension_numbers<[1], [0], [0], [1], [0, 0, 1, 1], [], []>} : vector<8x32xbf16>, vector<32x32xbf16>, vector<8x32xf32> -> vector<8x32xf32>
    %325 = vector.extract_strided_slice %14 {offsets = [4, 0], sizes = [1, 32], strides = [1, 1]} : vector<16x32xf32> to vector<1x32xf32>
    %326 = vector.broadcast %325 : vector<1x32xf32> to vector<8x32xf32>
    %327 = arith.addf %324, %326 : vector<8x32xf32>
    %328 = vector.extract_strided_slice %6 {offsets = [1, 0, 0], sizes = [1, 32, 32], strides = [1, 1, 1]} : vector<4x32x32xbf16> to vector<1x32x32xbf16>
    %329 = vector.shape_cast %328 : vector<1x32x32xbf16> to vector<32x32xbf16>
    %cst_88 = arith.constant dense<0.000000e+00> : vector<16x32xf32>
    %330 = tpu.matmul %215, %329, %cst_88 {dimension_numbers = #tpu.dot_dimension_numbers<[1], [0], [0], [1], [0, 0, 1, 1], [], []>} : vector<16x32xbf16>, vector<32x32xbf16>, vector<16x32xf32> -> vector<16x32xf32>
    %331 = vector.extract_strided_slice %14 {offsets = [5, 0], sizes = [1, 32], strides = [1, 1]} : vector<16x32xf32> to vector<1x32xf32>
    %332 = vector.broadcast %331 : vector<1x32xf32> to vector<16x32xf32>
    %333 = arith.addf %330, %332 : vector<16x32xf32>
    %334 = vector.extract_strided_slice %6 {offsets = [2, 0, 0], sizes = [1, 32, 32], strides = [1, 1, 1]} : vector<4x32x32xbf16> to vector<1x32x32xbf16>
    %335 = vector.shape_cast %334 : vector<1x32x32xbf16> to vector<32x32xbf16>
    %cst_89 = arith.constant dense<0.000000e+00> : vector<16x32xf32>
    %336 = tpu.matmul %214, %335, %cst_89 {dimension_numbers = #tpu.dot_dimension_numbers<[1], [0], [0], [1], [0, 0, 1, 1], [], []>} : vector<16x32xbf16>, vector<32x32xbf16>, vector<16x32xf32> -> vector<16x32xf32>
    %337 = vector.extract_strided_slice %14 {offsets = [6, 0], sizes = [1, 32], strides = [1, 1]} : vector<16x32xf32> to vector<1x32xf32>
    %338 = vector.broadcast %337 : vector<1x32xf32> to vector<16x32xf32>
    %339 = arith.addf %336, %338 : vector<16x32xf32>
    %340 = vector.shape_cast %327 : vector<8x32xf32> to vector<8x4x8xf32>
    %341 = tpu.transpose %340, [1, 0, 2] : vector<8x4x8xf32> -> vector<4x8x8xf32>
    %342 = vector.shape_cast %333 : vector<16x32xf32> to vector<16x4x8xf32>
    %343 = tpu.transpose %342, [1, 0, 2] : vector<16x4x8xf32> -> vector<4x16x8xf32>
    %344 = vector.shape_cast %339 : vector<16x32xf32> to vector<16x4x8xf32>
    %345 = tpu.transpose %344, [1, 0, 2] : vector<16x4x8xf32> -> vector<4x16x8xf32>
    %346 = arith.truncf %341 : vector<4x8x8xf32> to vector<4x8x8xbf16>
    %347 = arith.truncf %343 : vector<4x16x8xf32> to vector<4x16x8xbf16>
    %348 = arith.truncf %345 : vector<4x16x8xf32> to vector<4x16x8xbf16>
    %349 = vector.extract_strided_slice %347 {offsets = [0, 0, 0], sizes = [4, 16, 8], strides = [1, 1, 1]} : vector<4x16x8xbf16> to vector<4x16x8xbf16>
    %350 = vector.extract_strided_slice %348 {offsets = [0, 0, 0], sizes = [4, 16, 8], strides = [1, 1, 1]} : vector<4x16x8xbf16> to vector<4x16x8xbf16>
    "tpu.trace_start"() <{level = 10 : i32, message = "htd,hsd->hts"}> : () -> ()
    %cst_90 = arith.constant dense<0.000000e+00> : vector<4x8x16xf32>
    %351 = tpu.matmul %346, %349, %cst_90 {dimension_numbers = #tpu.dot_dimension_numbers<[2], [2], [1], [1], [0, 0, 0, 1, 1, 1], [0], [0]>} : vector<4x8x8xbf16>, vector<4x16x8xbf16>, vector<4x8x16xf32> -> vector<4x8x16xf32>
    "tpu.trace_stop"() : () -> ()
    %cst_91 = arith.constant dense<0xFF800000> : vector<4x8xf32>
    %352 = vector.multi_reduction <maximumf>, %351, %cst_91 [2] : vector<4x8x16xf32> to vector<4x8xf32>
    %353 = vector.shape_cast %352 : vector<4x8xf32> to vector<4x8x1xf32>
    %354 = vector.broadcast %353 : vector<4x8x1xf32> to vector<4x8x16xf32>
    %355 = arith.subf %351, %354 : vector<4x8x16xf32>
    %356 = math.exp %355 : vector<4x8x16xf32>
    %cst_92 = arith.constant dense<0.000000e+00> : vector<4x8xf32>
    %357 = vector.multi_reduction <add>, %356, %cst_92 [2] : vector<4x8x16xf32> to vector<4x8xf32>
    %358 = vector.shape_cast %357 : vector<4x8xf32> to vector<4x8x1xf32>
    %359 = arith.truncf %356 : vector<4x8x16xf32> to vector<4x8x16xbf16>
    "tpu.trace_start"() <{level = 10 : i32, message = "hts,hsd->htd"}> : () -> ()
    %cst_93 = arith.constant dense<0.000000e+00> : vector<4x8x8xf32>
    %360 = tpu.matmul %359, %350, %cst_93 {dimension_numbers = #tpu.dot_dimension_numbers<[2], [1], [1], [2], [0, 0, 0, 1, 1, 2], [0], [0]>} : vector<4x8x16xbf16>, vector<4x16x8xbf16>, vector<4x8x8xf32> -> vector<4x8x8xf32>
    "tpu.trace_stop"() : () -> ()
    %361 = tpu.reciprocal %358 : vector<4x8x1xf32> -> vector<4x8x1xf32>
    %362 = vector.broadcast %361 : vector<4x8x1xf32> to vector<4x8x8xf32>
    %363 = arith.mulf %360, %362 : vector<4x8x8xf32>
    %364 = tpu.transpose %363, [1, 0, 2] : vector<4x8x8xf32> -> vector<8x4x8xf32>
    %365 = vector.shape_cast %364 : vector<8x4x8xf32> to vector<8x32xf32>
    %366 = arith.truncf %365 : vector<8x32xf32> to vector<8x32xbf16>
    %367 = vector.extract_strided_slice %6 {offsets = [3, 0, 0], sizes = [1, 32, 32], strides = [1, 1, 1]} : vector<4x32x32xbf16> to vector<1x32x32xbf16>
    %368 = vector.shape_cast %367 : vector<1x32x32xbf16> to vector<32x32xbf16>
    %cst_94 = arith.constant dense<0.000000e+00> : vector<8x32xf32>
    %369 = tpu.matmul %366, %368, %cst_94 {dimension_numbers = #tpu.dot_dimension_numbers<[1], [0], [0], [1], [0, 0, 1, 1], [], []>} : vector<8x32xbf16>, vector<32x32xbf16>, vector<8x32xf32> -> vector<8x32xf32>
    %370 = vector.extract_strided_slice %14 {offsets = [7, 0], sizes = [1, 32], strides = [1, 1]} : vector<16x32xf32> to vector<1x32xf32>
    %371 = vector.broadcast %370 : vector<1x32xf32> to vector<8x32xf32>
    %372 = arith.addf %369, %371 : vector<8x32xf32>
    %373 = arith.addf %295, %372 : vector<8x32xf32>
    %374 = vector.extract_strided_slice %14 {offsets = [12, 0], sizes = [1, 32], strides = [1, 1]} : vector<16x32xf32> to vector<1x32xf32>
    %375 = vector.extract_strided_slice %14 {offsets = [13, 0], sizes = [1, 32], strides = [1, 1]} : vector<16x32xf32> to vector<1x32xf32>
    %cst_95 = arith.constant dense<0.000000e+00> : vector<8xf32>
    %376 = vector.multi_reduction <add>, %373, %cst_95 [1] : vector<8x32xf32> to vector<8xf32>
    %377 = vector.shape_cast %376 : vector<8xf32> to vector<8x1xf32>
    %cst_96 = arith.constant 3.200000e+01 : f32
    %378 = vector.broadcast %cst_96 : f32 to vector<8x1xf32>
    %379 = arith.divf %377, %378 : vector<8x1xf32>
    %380 = vector.broadcast %379 : vector<8x1xf32> to vector<8x32xf32>
    %381 = arith.subf %373, %380 : vector<8x32xf32>
    %382 = arith.mulf %381, %381 : vector<8x32xf32>
    %cst_97 = arith.constant dense<0.000000e+00> : vector<8xf32>
    %383 = vector.multi_reduction <add>, %382, %cst_97 [1] : vector<8x32xf32> to vector<8xf32>
    %384 = vector.shape_cast %383 : vector<8xf32> to vector<8x1xf32>
    %cst_98 = arith.constant 3.200000e+01 : f32
    %385 = vector.broadcast %cst_98 : f32 to vector<8x1xf32>
    %386 = arith.divf %384, %385 : vector<8x1xf32>
    %387 = vector.broadcast %379 : vector<8x1xf32> to vector<8x32xf32>
    %388 = arith.subf %373, %387 : vector<8x32xf32>
    %cst_99 = arith.constant 9.99999974E-6 : f32
    %389 = vector.broadcast %cst_99 : f32 to vector<8x1xf32>
    %390 = arith.addf %386, %389 : vector<8x1xf32>
    %391 = math.rsqrt %390 : vector<8x1xf32>
    %392 = vector.broadcast %391 : vector<8x1xf32> to vector<8x32xf32>
    %393 = arith.mulf %388, %392 : vector<8x32xf32>
    %394 = vector.broadcast %374 : vector<1x32xf32> to vector<8x32xf32>
    %395 = arith.mulf %393, %394 : vector<8x32xf32>
    %396 = vector.broadcast %375 : vector<1x32xf32> to vector<8x32xf32>
    %397 = arith.addf %395, %396 : vector<8x32xf32>
    %398 = arith.truncf %397 : vector<8x32xf32> to vector<8x32xbf16>
    %cst_100 = arith.constant dense<0.000000e+00> : vector<8x64xf32>
    %399 = tpu.matmul %398, %8, %cst_100 {dimension_numbers = #tpu.dot_dimension_numbers<[1], [0], [0], [1], [0, 0, 1, 1], [], []>} : vector<8x32xbf16>, vector<32x64xbf16>, vector<8x64xf32> -> vector<8x64xf32>
    %400 = vector.broadcast %10 : vector<1x64xf32> to vector<8x64xf32>
    %401 = arith.addf %399, %400 : vector<8x64xf32>
    %cst_101 = arith.constant 0.000000e+00 : f32
    %402 = vector.broadcast %cst_101 : f32 to vector<8x64xf32>
    %403 = arith.maximumf %401, %402 : vector<8x64xf32>
    %404 = arith.truncf %403 : vector<8x64xf32> to vector<8x64xbf16>
    %cst_102 = arith.constant dense<0.000000e+00> : vector<8x32xf32>
    %405 = tpu.matmul %404, %12, %cst_102 {dimension_numbers = #tpu.dot_dimension_numbers<[1], [0], [0], [1], [0, 0, 1, 1], [], []>} : vector<8x64xbf16>, vector<64x32xbf16>, vector<8x32xf32> -> vector<8x32xf32>
    %406 = vector.extract_strided_slice %14 {offsets = [14, 0], sizes = [1, 32], strides = [1, 1]} : vector<16x32xf32> to vector<1x32xf32>
    %407 = vector.broadcast %406 : vector<1x32xf32> to vector<8x32xf32>
    %408 = arith.addf %405, %407 : vector<8x32xf32>
    %409 = arith.addf %373, %408 : vector<8x32xf32>
    %c8_103 = arith.constant 8 : index
    %c0_104 = arith.constant 0 : index
    %410 = vector.load %arg14[%c8_103, %c0_104] : memref<16x32xf32, #tpu.memory_space<vmem>>, vector<8x32xf32>
    tpu.vector_store %arg14[%c8_103, %c0_104], %409 {strides = array<i32>} : memref<16x32xf32, #tpu.memory_space<vmem>>, vector<8x32xf32>,
    %c0_105 = arith.constant 0 : index
    %c0_106 = arith.constant 0 : index
    %411 = vector.load %arg12[%c0_105, %c0_106] : memref<2x32xf32, #tpu.memory_space<vmem>>, vector<2x32xf32>
    %c1_i32 = arith.constant 1 : i32
    %412 = arith.cmpi eq, %arg1, %c1_i32 : i32
    %413 = arith.extui %412 : i1 to i32
    %c0_i32_107 = arith.constant 0 : i32
    %414 = arith.cmpi ne, %413, %c0_i32_107 : i32
    scf.if %414 {
      %c0_108 = arith.constant 0 : index
      %c0_109 = arith.constant 0 : index
      %415 = vector.load %arg14[%c0_108, %c0_109] : memref<16x32xf32, #tpu.memory_space<vmem>>, vector<16x32xf32>
      %416 = vector.extract_strided_slice %411 {offsets = [0, 0], sizes = [1, 32], strides = [1, 1]} : vector<2x32xf32> to vector<1x32xf32>
      %417 = vector.extract_strided_slice %411 {offsets = [1, 0], sizes = [1, 32], strides = [1, 1]} : vector<2x32xf32> to vector<1x32xf32>
      %cst_110 = arith.constant dense<0.000000e+00> : vector<16xf32>
      %418 = vector.multi_reduction <add>, %415, %cst_110 [1] : vector<16x32xf32> to vector<16xf32>
      %419 = vector.shape_cast %418 : vector<16xf32> to vector<16x1xf32>
      %cst_111 = arith.constant 3.200000e+01 : f32
      %420 = vector.broadcast %cst_111 : f32 to vector<16x1xf32>
      %421 = arith.divf %419, %420 : vector<16x1xf32>
      %422 = vector.broadcast %421 : vector<16x1xf32> to vector<16x32xf32>
      %423 = arith.subf %415, %422 : vector<16x32xf32>
      %424 = arith.mulf %423, %423 : vector<16x32xf32>
      %cst_112 = arith.constant dense<0.000000e+00> : vector<16xf32>
      %425 = vector.multi_reduction <add>, %424, %cst_112 [1] : vector<16x32xf32> to vector<16xf32>
      %426 = vector.shape_cast %425 : vector<16xf32> to vector<16x1xf32>
      %cst_113 = arith.constant 3.200000e+01 : f32
      %427 = vector.broadcast %cst_113 : f32 to vector<16x1xf32>
      %428 = arith.divf %426, %427 : vector<16x1xf32>
      %429 = vector.broadcast %421 : vector<16x1xf32> to vector<16x32xf32>
      %430 = arith.subf %415, %429 : vector<16x32xf32>
      %cst_114 = arith.constant 9.99999974E-6 : f32
      %431 = vector.broadcast %cst_114 : f32 to vector<16x1xf32>
      %432 = arith.addf %428, %431 : vector<16x1xf32>
      %433 = math.rsqrt %432 : vector<16x1xf32>
      %434 = vector.broadcast %433 : vector<16x1xf32> to vector<16x32xf32>
      %435 = arith.mulf %430, %434 : vector<16x32xf32>
      %436 = vector.broadcast %416 : vector<1x32xf32> to vector<16x32xf32>
      %437 = arith.mulf %435, %436 : vector<16x32xf32>
      %438 = vector.broadcast %417 : vector<1x32xf32> to vector<16x32xf32>
      %439 = arith.addf %437, %438 : vector<16x32xf32>
      %c0_115 = arith.constant 0 : index
      %c0_116 = arith.constant 0 : index
      %440 = vector.load %arg13[%c0_115, %c0_116] : memref<16x32xf32, #tpu.memory_space<vmem>>, vector<16x32xf32>
      tpu.vector_store %arg13[%c0_115, %c0_116], %439 {strides = array<i32>} : memref<16x32xf32, #tpu.memory_space<vmem>>, vector<16x32xf32>,
    } else {
    }
    return
  }
  func.func @transform_0(%arg0: i32, %arg1: i32) -> (i32, i32) {
    %c0_i32 = arith.constant 0 : i32
    %c0_i32_0 = arith.constant 0 : i32
    return %arg0, %c0_i32 : i32, i32
  }
  func.func @transform_1(%arg0: i32, %arg1: i32) -> (i32, i32) {
    %c0_i32 = arith.constant 0 : i32
    %c0_i32_0 = arith.constant 0 : i32
    return %arg0, %c0_i32 : i32, i32
  }
  func.func @transform_2(%arg0: i32, %arg1: i32) -> (i32, i32) {
    %c0_i32 = arith.constant 0 : i32
    %c0_i32_0 = arith.constant 0 : i32
    return %arg0, %c0_i32 : i32, i32
  }
  func.func @transform_3(%arg0: i32, %arg1: i32) -> (i32, i32) {
    %c0_i32 = arith.constant 0 : i32
    %c0_i32_0 = arith.constant 0 : i32
    return %arg0, %c0_i32 : i32, i32
  }
  func.func @transform_4(%arg0: i32, %arg1: i32) -> (i32, i32, i32, i32) {
    %c0_i32 = arith.constant 0 : i32
    %c0_i32_0 = arith.constant 0 : i32
    %c0_i32_1 = arith.constant 0 : i32
    %c0_i32_2 = arith.constant 0 : i32
    return %arg1, %c0_i32, %c0_i32_0, %c0_i32_1 : i32, i32, i32, i32
  }
  func.func @transform_5(%arg0: i32, %arg1: i32) -> (i32, i32, i32, i32) {
    %c0_i32 = arith.constant 0 : i32
    %c0_i32_0 = arith.constant 0 : i32
    %c0_i32_1 = arith.constant 0 : i32
    %c0_i32_2 = arith.constant 0 : i32
    return %arg1, %c0_i32, %c0_i32_0, %c0_i32_1 : i32, i32, i32, i32
  }
  func.func @transform_6(%arg0: i32, %arg1: i32) -> (i32, i32, i32) {
    %c0_i32 = arith.constant 0 : i32
    %c0_i32_0 = arith.constant 0 : i32
    %c0_i32_1 = arith.constant 0 : i32
    return %arg1, %c0_i32, %c0_i32_0 : i32, i32, i32
  }
  func.func @transform_7(%arg0: i32, %arg1: i32) -> (i32, i32, i32) {
    %c0_i32 = arith.constant 0 : i32
    %c0_i32_0 = arith.constant 0 : i32
    %c0_i32_1 = arith.constant 0 : i32
    return %arg1, %c0_i32, %c0_i32_0 : i32, i32, i32
  }
  func.func @transform_8(%arg0: i32, %arg1: i32) -> (i32, i32, i32) {
    %c0_i32 = arith.constant 0 : i32
    %c0_i32_0 = arith.constant 0 : i32
    %c0_i32_1 = arith.constant 0 : i32
    return %arg1, %c0_i32, %c0_i32_0 : i32, i32, i32
  }
  func.func @transform_9(%arg0: i32, %arg1: i32) -> (i32, i32, i32) {
    %c0_i32 = arith.constant 0 : i32
    %c0_i32_0 = arith.constant 0 : i32
    %c0_i32_1 = arith.constant 0 : i32
    return %arg1, %c0_i32, %c0_i32_0 : i32, i32, i32
  }
  func.func @transform_10(%arg0: i32, %arg1: i32) -> (i32, i32) {
    %c0_i32 = arith.constant 0 : i32
    %c0_i32_0 = arith.constant 0 : i32
    %c0_i32_1 = arith.constant 0 : i32
    return %c0_i32, %c0_i32_0 : i32, i32
  }
  func.func @transform_11(%arg0: i32, %arg1: i32) -> (i32, i32) {
    %c0_i32 = arith.constant 0 : i32
    %c0_i32_0 = arith.constant 0 : i32
    return %arg0, %c0_i32 : i32, i32
  }
}

</mosaic_0001>

<llo_original>
// kernel: tpu_custom_call.1
$region0: #{tpu_custom_call.1}
  #allocation0 [shape = 'u32[]', space=smem, size = 0x4, offset = 0x4, fixed_abs, tag = 'smem constant byte address 0x4 - core index']
  #allocation1 [shape = 'u32[144,128]{1,0:T(1,128)}', space=vmem, size = 0x12000, scoped, tag = 'internal scratch']
  #allocation2 [shape = 'f32[16,32]{1,0:T(8,128)}', space=vmem, size = 0x2000, scoped, tag = 'scratch operand']
  %s0 = inlined_call_operand.vmem [shape: f32[16,32], index: 0, kind: input, shape index: {}]
  %s1 = inlined_call_operand.vmem [shape: bf16[32,32], index: 1, kind: input, shape index: {}]
  %s2 = inlined_call_operand.hbm [shape: bf16[32,32], index: 2, kind: input, shape index: {}]
  %s3 = inlined_call_operand.hbm [shape: f32[16,32], index: 3, kind: input, shape index: {}]
  %s4 = inlined_call_operand.hbm [shape: bf16[2,4,32,32], index: 4, kind: input, shape index: {}]
  %s5 = inlined_call_operand.hbm [shape: bf16[2,4,32,32], index: 5, kind: input, shape index: {}]
  %s6 = inlined_call_operand.vmem [shape: bf16[2,32,64], index: 6, kind: input, shape index: {}]
  %s7 = inlined_call_operand.vmem [shape: f32[2,1,64], index: 7, kind: input, shape index: {}]
  %s8 = inlined_call_operand.vmem [shape: bf16[2,64,32], index: 8, kind: input, shape index: {}]
  %s9 = inlined_call_operand.vmem [shape: f32[2,16,32], index: 9, kind: input, shape index: {}]
  %s10 = inlined_call_operand.vmem [shape: f32[2,32], index: 10, kind: input, shape index: {}]
  %s11 = inlined_call_operand.hbm [shape: f32[16,32], index: 11, kind: output, shape index: {}]
  %s12 = sld [smem:[#allocation0]]
  $region101: #{tpu_custom_call.1} parent=0
    _
  %s14 = ssub.s32 1, %s12
  %s15 = scalar_select 0, %s14, %s12
  $region1: #{tpu_custom_call.1} parent=0
    #allocation3 [shape = 'u8[8192]{0}', space=vmem, size = 0x2000, scoped, tag = 'input window, operand 2, single buffered']
    #allocation4 [shape = 's32[2]{0}', space=sflag, size = 0x8, scoped, tag = 'scoped memory for tpu_custom_call.1']
    #allocation5 [shape = 's32[2]{0}', space=sflag, size = 0x8, scoped, tag = 'scoped memory for tpu_custom_call.1']
    #allocation6 [shape = 'u8[8192]{0}', space=vmem, size = 0x2000, scoped, tag = 'input window, operand 3, single buffered']
    #allocation7 [shape = 's32[1]{0}', space=sflag, size = 0x4, scoped, tag = 'scoped memory for tpu_custom_call.1']
    #allocation8 [shape = 'u8[65536]{0}', space=vmem, size = 0x10000, scoped, tag = 'input window, operand 4']
    #allocation9 [shape = 'u8[65536]{0}', space=vmem, size = 0x10000, scoped, tag = 'input window, operand 5']
    #allocation10 [shape = 'u8[8192]{0}', space=vmem, size = 0x2000, scoped, tag = 'output window, operand 0, single buffered']
    %16 = vsyncpa [#allocation4], 0
    %17 = vsyncpa [#allocation7], 0
    %18 = vsyncpa [#allocation5], 0
    loop: start=0, step=1, limit=4
    $region2: #{tpu_custom_call.1} parent=1 // loop_pre_header
      _
    $region3: #{tpu_custom_call.1} parent=1 // loop_header
      %s20 = sphi 0, %s24
      %p21 = scmp.ge.s32.totalorder %s20, 4
      %s27 = sphi 0, %s39
      %s28 = sphi 0, %s35
      %s29 = sphi 0, %s27
      %s30 = sphi 0, %s28
      %s31 = sphi 0, %s29
      %s32 = sphi 0, %s30
      %s42 = sphi 0, %s44
      %s45 = sphi 0, %s42
      %s46 = sphi 0, %s45
      %s62 = sphi 0, %s46
      %s68 = sphi 0, %s70
      %s71 = sphi 0, %s68
      %s72 = sphi 0, %s71
      %s88 = sphi 0, %s72
      %s94 = sphi 0, %s96
      %s97 = sphi 0, %s94
      %s98 = sphi 0, %s97
      %s114 = sphi 0, %s98
      %s120 = sphi 0, %s122
      %s123 = sphi 0, %s120
      %s124 = sphi 0, %s123
      %s140 = sphi 0, %s124
      %s146 = sphi 0, %s148
      %s149 = sphi 0, %s146
      %s150 = sphi 0, %s149
      %s166 = sphi 0, %s150
      %s172 = sphi 0, %s174
      %s175 = sphi 0, %s172
      %s176 = sphi 0, %s175
      %s192 = sphi 0, %s176
      %s198 = sphi 0, %s200
      %s201 = sphi 0, %s198
      %s202 = sphi 0, %s201
      %s218 = sphi 0, %s202
      %s224 = sphi 0, %s226
      %s227 = sphi 0, %s224
      %s228 = sphi 0, %s227
      %s244 = sphi 0, %s228
      %s250 = sphi 0, %s252
      %s253 = sphi 0, %s250
      %s254 = sphi 0, %s253
      %s270 = sphi 0, %s254
      %s276 = sphi 0, %s278
      %s279 = sphi 0, %s276
      %s280 = sphi 0, %s279
      %s296 = sphi 0, %s280
      %s300 = sphi 0, %s300
      %s302 = sphi 0, %s300
      %s303 = sphi 0, %s302
      %s317 = sphi 0, %s303
      %s323 = sphi 0, %s325
      %s326 = sphi 0, %s323
      %s327 = sphi 0, %s326
      %s343 = sphi 0, %s327
    $region4: #{tpu_custom_call.1} parent=1 // loop_header_branch
      %23 = sbr.rel (%p21) target = $region8
    $region5: #{tpu_custom_call.1} parent=1 // loop_body
      %s25 = ssub.s32 %s20, 1
      %s26 = ssub.s32 %s20, 2
      %s33 = sadd.s32 1, %s28
      %p34 = scmp.ge.s32.totalorder %s33, 2
      %s35 = scalar_select %p34, 0, %s33
      %s36 = sadd.s32 1, %s27
      %s37 = scalar_select %p34, %s36, %s27
      %p38 = scmp.ge.s32.totalorder %s37, 1
      %s39 = scalar_select %p38, 0, %s37
      %s40 = ssub.s32 %s27, %s39
      %p41 = scmp.eq.s32.totalorder %s40, 0
      %s43 = sadd.s32 %s42, 1
      %s44 = scalar_select %p41, %s42, %s43
      %p47 = pneg %p41
      %p48 = scmp.eq.s32.totalorder %s20, 1
      %p49 = por %p47, %p48
      %p50 = scmp.ne.s32.totalorder %s42, %s45
      %p51 = scmp.eq.s32.totalorder %s20, 0
      %p52 = por %p50, %p51
      %p53 = scmp.ne.s32.totalorder %s42, %s45
      %p54 = scmp.eq.s32.totalorder %s25, 1
      %p55 = por %p53, %p54
      %p56 = scmp.ne.s32.totalorder %s45, %s46
      %p57 = scmp.eq.s32.totalorder %s25, 0
      %p58 = por %p56, %p57
      %p59 = scmp.ne.s32.totalorder %s45, %s46
      %p60 = scmp.eq.s32.totalorder %s26, 1
      %p61 = por %p59, %p60
      %p63 = scmp.ne.s32.totalorder %s46, %s62
      %p64 = scmp.eq.s32.totalorder %s26, 0
      %p65 = por %p63, %p64
      %s66 = ssub.s32 %s27, %s39
      %p67 = scmp.eq.s32.totalorder %s66, 0
      %s69 = sadd.s32 %s68, 1
      %s70 = scalar_select %p67, %s68, %s69
      %p73 = pneg %p67
      %p74 = scmp.eq.s32.totalorder %s20, 1
      %p75 = por %p73, %p74
      %p76 = scmp.ne.s32.totalorder %s68, %s71
      %p77 = scmp.eq.s32.totalorder %s20, 0
      %p78 = por %p76, %p77
      %p79 = scmp.ne.s32.totalorder %s68, %s71
      %p80 = scmp.eq.s32.totalorder %s25, 1
      %p81 = por %p79, %p80
      %p82 = scmp.ne.s32.totalorder %s71, %s72
      %p83 = scmp.eq.s32.totalorder %s25, 0
      %p84 = por %p82, %p83
      %p85 = scmp.ne.s32.totalorder %s71, %s72
      %p86 = scmp.eq.s32.totalorder %s26, 1
      %p87 = por %p85, %p86
      %p89 = scmp.ne.s32.totalorder %s72, %s88
      %p90 = scmp.eq.s32.totalorder %s26, 0
      %p91 = por %p89, %p90
      %s92 = ssub.s32 %s27, %s39
      %p93 = scmp.eq.s32.totalorder %s92, 0
      %s95 = sadd.s32 %s94, 1
      %s96 = scalar_select %p93, %s94, %s95
      %p99 = pneg %p93
      %p100 = scmp.eq.s32.totalorder %s20, 1
      %p101 = por %p99, %p100
      %p102 = scmp.ne.s32.totalorder %s94, %s97
      %p103 = scmp.eq.s32.totalorder %s20, 0
      %p104 = por %p102, %p103
      %p105 = scmp.ne.s32.totalorder %s94, %s97
      %p106 = scmp.eq.s32.totalorder %s25, 1
      %p107 = por %p105, %p106
      %p108 = scmp.ne.s32.totalorder %s97, %s98
      %p109 = scmp.eq.s32.totalorder %s25, 0
      %p110 = por %p108, %p109
      %p111 = scmp.ne.s32.totalorder %s97, %s98
      %p112 = scmp.eq.s32.totalorder %s26, 1
      %p113 = por %p111, %p112
      %p115 = scmp.ne.s32.totalorder %s98, %s114
      %p116 = scmp.eq.s32.totalorder %s26, 0
      %p117 = por %p115, %p116
      %s118 = ssub.s32 %s27, %s39
      %p119 = scmp.eq.s32.totalorder %s118, 0
      %s121 = sadd.s32 %s120, 1
      %s122 = scalar_select %p119, %s120, %s121
      %p125 = pneg %p119
      %p126 = scmp.eq.s32.totalorder %s20, 1
      %p127 = por %p125, %p126
      %p128 = scmp.ne.s32.totalorder %s120, %s123
      %p129 = scmp.eq.s32.totalorder %s20, 0
      %p130 = por %p128, %p129
      %p131 = scmp.ne.s32.totalorder %s120, %s123
      %p132 = scmp.eq.s32.totalorder %s25, 1
      %p133 = por %p131, %p132
      %p134 = scmp.ne.s32.totalorder %s123, %s124
      %p135 = scmp.eq.s32.totalorder %s25, 0
      %p136 = por %p134, %p135
      %p137 = scmp.ne.s32.totalorder %s123, %s124
      %p138 = scmp.eq.s32.totalorder %s26, 1
      %p139 = por %p137, %p138
      %p141 = scmp.ne.s32.totalorder %s124, %s140
      %p142 = scmp.eq.s32.totalorder %s26, 0
      %p143 = por %p141, %p142
      %s144 = ssub.s32 %s28, %s35
      %p145 = scmp.eq.s32.totalorder %s144, 0
      %s147 = sadd.s32 %s146, 1
      %s148 = scalar_select %p145, %s146, %s147
      %p151 = pneg %p145
      %p152 = scmp.eq.s32.totalorder %s20, 1
      %p153 = por %p151, %p152
      %p154 = scmp.ne.s32.totalorder %s146, %s149
      %p155 = scmp.eq.s32.totalorder %s20, 0
      %p156 = por %p154, %p155
      %p157 = scmp.ne.s32.totalorder %s146, %s149
      %p158 = scmp.eq.s32.totalorder %s25, 1
      %p159 = por %p157, %p158
      %p160 = scmp.ne.s32.totalorder %s149, %s150
      %p161 = scmp.eq.s32.totalorder %s25, 0
      %p162 = por %p160, %p161
      %p163 = scmp.ne.s32.totalorder %s149, %s150
      %p164 = scmp.eq.s32.totalorder %s26, 1
      %p165 = por %p163, %p164
      %p167 = scmp.ne.s32.totalorder %s150, %s166
      %p168 = scmp.eq.s32.totalorder %s26, 0
      %p169 = por %p167, %p168
      %s170 = ssub.s32 %s28, %s35
      %p171 = scmp.eq.s32.totalorder %s170, 0
      %s173 = sadd.s32 %s172, 1
      %s174 = scalar_select %p171, %s172, %s173
      %p177 = pneg %p171
      %p178 = scmp.eq.s32.totalorder %s20, 1
      %p179 = por %p177, %p178
      %p180 = scmp.ne.s32.totalorder %s172, %s175
      %p181 = scmp.eq.s32.totalorder %s20, 0
      %p182 = por %p180, %p181
      %p183 = scmp.ne.s32.totalorder %s172, %s175
      %p184 = scmp.eq.s32.totalorder %s25, 1
      %p185 = por %p183, %p184
      %p186 = scmp.ne.s32.totalorder %s175, %s176
      %p187 = scmp.eq.s32.totalorder %s25, 0
      %p188 = por %p186, %p187
      %p189 = scmp.ne.s32.totalorder %s175, %s176
      %p190 = scmp.eq.s32.totalorder %s26, 1
      %p191 = por %p189, %p190
      %p193 = scmp.ne.s32.totalorder %s176, %s192
      %p194 = scmp.eq.s32.totalorder %s26, 0
      %p195 = por %p193, %p194
      %s196 = ssub.s32 %s28, %s35
      %p197 = scmp.eq.s32.totalorder %s196, 0
      %s199 = sadd.s32 %s198, 1
      %s200 = scalar_select %p197, %s198, %s199
      %p203 = pneg %p197
      %p204 = scmp.eq.s32.totalorder %s20, 1
      %p205 = por %p203, %p204
      %p206 = scmp.ne.s32.totalorder %s198, %s201
      %p207 = scmp.eq.s32.totalorder %s20, 0
      %p208 = por %p206, %p207
      %p209 = scmp.ne.s32.totalorder %s198, %s201
      %p210 = scmp.eq.s32.totalorder %s25, 1
      %p211 = por %p209, %p210
      %p212 = scmp.ne.s32.totalorder %s201, %s202
      %p213 = scmp.eq.s32.totalorder %s25, 0
      %p214 = por %p212, %p213
      %p215 = scmp.ne.s32.totalorder %s201, %s202
      %p216 = scmp.eq.s32.totalorder %s26, 1
      %p217 = por %p215, %p216
      %p219 = scmp.ne.s32.totalorder %s202, %s218
      %p220 = scmp.eq.s32.totalorder %s26, 0
      %p221 = por %p219, %p220
      %s222 = ssub.s32 %s28, %s35
      %p223 = scmp.eq.s32.totalorder %s222, 0
      %s225 = sadd.s32 %s224, 1
      %s226 = scalar_select %p223, %s224, %s225
      %p229 = pneg %p223
      %p230 = scmp.eq.s32.totalorder %s20, 1
      %p231 = por %p229, %p230
      %p232 = scmp.ne.s32.totalorder %s224, %s227
      %p233 = scmp.eq.s32.totalorder %s20, 0
      %p234 = por %p232, %p233
      %p235 = scmp.ne.s32.totalorder %s224, %s227
      %p236 = scmp.eq.s32.totalorder %s25, 1
      %p237 = por %p235, %p236
      %p238 = scmp.ne.s32.totalorder %s227, %s228
      %p239 = scmp.eq.s32.totalorder %s25, 0
      %p240 = por %p238, %p239
      %p241 = scmp.ne.s32.totalorder %s227, %s228
      %p242 = scmp.eq.s32.totalorder %s26, 1
      %p243 = por %p241, %p242
      %p245 = scmp.ne.s32.totalorder %s228, %s244
      %p246 = scmp.eq.s32.totalorder %s26, 0
      %p247 = por %p245, %p246
      %s248 = ssub.s32 %s28, %s35
      %p249 = scmp.eq.s32.totalorder %s248, 0
      %s251 = sadd.s32 %s250, 1
      %s252 = scalar_select %p249, %s250, %s251
      %p255 = pneg %p249
      %p256 = scmp.eq.s32.totalorder %s20, 1
      %p257 = por %p255, %p256
      %p258 = scmp.ne.s32.totalorder %s250, %s253
      %p259 = scmp.eq.s32.totalorder %s20, 0
      %p260 = por %p258, %p259
      %p261 = scmp.ne.s32.totalorder %s250, %s253
      %p262 = scmp.eq.s32.totalorder %s25, 1
      %p263 = por %p261, %p262
      %p264 = scmp.ne.s32.totalorder %s253, %s254
      %p265 = scmp.eq.s32.totalorder %s25, 0
      %p266 = por %p264, %p265
      %p267 = scmp.ne.s32.totalorder %s253, %s254
      %p268 = scmp.eq.s32.totalorder %s26, 1
      %p269 = por %p267, %p268
      %p271 = scmp.ne.s32.totalorder %s254, %s270
      %p272 = scmp.eq.s32.totalorder %s26, 0
      %p273 = por %p271, %p272
      %s274 = ssub.s32 %s28, %s35
      %p275 = scmp.eq.s32.totalorder %s274, 0
      %s277 = sadd.s32 %s276, 1
      %s278 = scalar_select %p275, %s276, %s277
      %p281 = pneg %p275
      %p282 = scmp.eq.s32.totalorder %s20, 1
      %p283 = por %p281, %p282
      %p284 = scmp.ne.s32.totalorder %s276, %s279
      %p285 = scmp.eq.s32.totalorder %s20, 0
      %p286 = por %p284, %p285
      %p287 = scmp.ne.s32.totalorder %s276, %s279
      %p288 = scmp.eq.s32.totalorder %s25, 1
      %p289 = por %p287, %p288
      %p290 = scmp.ne.s32.totalorder %s279, %s280
      %p291 = scmp.eq.s32.totalorder %s25, 0
      %p292 = por %p290, %p291
      %p293 = scmp.ne.s32.totalorder %s279, %s280
      %p294 = scmp.eq.s32.totalorder %s26, 1
      %p295 = por %p293, %p294
      %p297 = scmp.ne.s32.totalorder %s280, %s296
      %p298 = scmp.eq.s32.totalorder %s26, 0
      %p299 = por %p297, %p298
      %s301 = sadd.s32 %s300, 1
      %p304 = scmp.eq.s32.totalorder %s20, 1
      %p305 = scmp.ne.s32.totalorder %s300, %s302
      %p306 = scmp.eq.s32.totalorder %s20, 0
      %p307 = por %p305, %p306
      %p308 = scmp.ne.s32.totalorder %s300, %s302
      %p309 = scmp.eq.s32.totalorder %s25, 1
      %p310 = por %p308, %p309
      %p311 = scmp.ne.s32.totalorder %s302, %s303
      %p312 = scmp.eq.s32.totalorder %s25, 0
      %p313 = por %p311, %p312
      %p314 = scmp.ne.s32.totalorder %s302, %s303
      %p315 = scmp.eq.s32.totalorder %s26, 1
      %p316 = por %p314, %p315
      %p318 = scmp.ne.s32.totalorder %s303, %s317
      %p319 = scmp.eq.s32.totalorder %s26, 0
      %p320 = por %p318, %p319
      %s321 = ssub.s32 %s27, %s39
      %p322 = scmp.eq.s32.totalorder %s321, 0
      %s324 = sadd.s32 %s323, 1
      %s325 = scalar_select %p322, %s323, %s324
      %p328 = pneg %p322
      %p329 = scmp.eq.s32.totalorder %s20, 1
      %p330 = por %p328, %p329
      %p331 = scmp.ne.s32.totalorder %s323, %s326
      %p332 = scmp.eq.s32.totalorder %s20, 0
      %p333 = por %p331, %p332
      %p334 = scmp.ne.s32.totalorder %s323, %s326
      %p335 = scmp.eq.s32.totalorder %s25, 1
      %p336 = por %p334, %p335
      %p337 = scmp.ne.s32.totalorder %s326, %s327
      %p338 = scmp.eq.s32.totalorder %s25, 0
      %p339 = por %p337, %p338
      %p340 = scmp.ne.s32.totalorder %s326, %s327
      %p341 = scmp.eq.s32.totalorder %s26, 1
      %p342 = por %p340, %p341
      %p344 = scmp.ne.s32.totalorder %s327, %s343
      %p345 = scmp.eq.s32.totalorder %s26, 0
      %p346 = por %p344, %p345
      %p347 = scmp.le.s32.totalorder 1, %s20
      %p348 = scmp.lt.s32.totalorder %s20, 3
      %p349 = pnand %p347, %p348
      %p350 = pneg %p349
      // Predicated region
      $region9: #{tpu_custom_call.1} parent=5 // pred_check
        _
      $region10: #{tpu_custom_call.1} parent=5 // pred_check_branch
        %352 = sbr.rel (%p349) target = $region12
      $region11: #{tpu_custom_call.1} parent=5 // pred_region
        %s353 = ssub.s32 %s20, 1
        // Predicated region
        $region13: #{tpu_custom_call.1} parent=11 // pred_check
          %p354 = pneg %p58
        $region14: #{tpu_custom_call.1} parent=11 // pred_check_branch
          %356 = sbr.rel (%p354) target = $region16
        $region15: #{tpu_custom_call.1} parent=11 // pred_region
          %s357 = smul.u32 2, %s29
          %p358 = scmp.lt.s32.totalorder %s357, 1
          %s359 = scalar_select %p358, %s357, 1
          %s360 = smul.addr %s359, 8
          %s361 = scalar_lea.vmem %s0, %s360
          %s362 = smul.u32 2, %s29
        $region16: #{tpu_custom_call.1} parent=11 // pred_fallthru
          _
        // Predicated region
        $region17: #{tpu_custom_call.1} parent=11 // pred_check
          %p363 = pneg %p84
        $region18: #{tpu_custom_call.1} parent=11 // pred_check_branch
          %365 = sbr.rel (%p363) target = $region20
        $region19: #{tpu_custom_call.1} parent=11 // pred_region
          %s366 = smul.u32 4, %s29
          %p367 = scmp.lt.s32.totalorder %s366, 3
          %s368 = scalar_select %p367, %s366, 3
          %s369 = smul.addr %s368, 4
          %s370 = scalar_lea.vmem %s1, %s369
          %s371 = smul.u32 4, %s29
        $region20: #{tpu_custom_call.1} parent=11 // pred_fallthru
          _
        // Predicated region
        $region21: #{tpu_custom_call.1} parent=11 // pred_check
          %p372 = pneg %p110
        $region22: #{tpu_custom_call.1} parent=11 // pred_check_branch
          %374 = sbr.rel (%p372) target = $region24
        $region23: #{tpu_custom_call.1} parent=11 // pred_region
          %s375 = smul.u32 4, %s29
          %s377 = ssub.s32 256, 256
          %378 = vsyncadd [#allocation4], %s377
          %s379 = smul.addr %s375, 64
          %s380 = scalar_lea.hbm %s2, %s379
          %s381 = sshll.u32 [#allocation3], 4
          %s382 = int_to_ptr.vmem [resolvable:$true] %s381
          %387 = dma.hbm_to_vmem [thread:$0]  %s380, 256, %s382, [#allocation4], 64, 64, 4
        $region24: #{tpu_custom_call.1} parent=11 // pred_fallthru
          _
        // Predicated region
        $region25: #{tpu_custom_call.1} parent=11 // pred_check
          %p388 = pneg %p136
        $region26: #{tpu_custom_call.1} parent=11 // pred_check_branch
          %390 = sbr.rel (%p388) target = $region28
        $region27: #{tpu_custom_call.1} parent=11 // pred_region
          %s391 = smul.u32 2, %s29
          %s393 = ssub.s32 256, 256
          %394 = vsyncadd [#allocation7], %s393
          %s395 = smul.addr %s391, 128
          %s396 = scalar_lea.hbm %s3, %s395
          %s397 = sshll.u32 [#allocation6], 4
          %s398 = int_to_ptr.vmem [resolvable:$true] %s397
          %403 = dma.hbm_to_vmem [thread:$0]  %s396, 256, %s398, [#allocation7], 128, 128, 8
        $region28: #{tpu_custom_call.1} parent=11 // pred_fallthru
          _
        // Predicated region
        $region29: #{tpu_custom_call.1} parent=11 // pred_check
          %p404 = pneg %p313
        $region30: #{tpu_custom_call.1} parent=11 // pred_check_branch
          %406 = sbr.rel (%p404) target = $region32
        $region31: #{tpu_custom_call.1} parent=11 // pred_region
          _
        $region32: #{tpu_custom_call.1} parent=11 // pred_fallthru
          _
      $region12: #{tpu_custom_call.1} parent=5 // pred_fallthru
        _
      %p407 = scmp.lt.s32.totalorder %s20, 2
      // Predicated region
      $region33: #{tpu_custom_call.1} parent=5 // pred_check
        %p408 = pneg %p407
      $region34: #{tpu_custom_call.1} parent=5 // pred_check_branch
        %410 = sbr.rel (%p408) target = $region36
      $region35: #{tpu_custom_call.1} parent=5 // pred_region
        // Predicated region
        $region37: #{tpu_custom_call.1} parent=35 // pred_check
          %p411 = pneg %p156
        $region38: #{tpu_custom_call.1} parent=35 // pred_check_branch
          %413 = sbr.rel (%p411) target = $region40
        $region39: #{tpu_custom_call.1} parent=35 // pred_region
          %s414 = sand.u32 %s20, 1
          %s415 = scalar_lea.sflag [#allocation4], %s414
          %s416 = sand.u32 %s146, 1
          %s417 = smul.addr %s416, 64
          %s418 = scalar_lea.vmem [#allocation8], %s417
          %s420 = ssub.s32 1024, 1024
          %421 = vsyncadd %s415, %s420
          %s422 = smul.addr %s28, 16
          %s423 = smul.addr %s422, 64
          %s424 = scalar_lea.hbm %s4, %s423
          %s425 = sshll.u32 %s418, 4
          %s426 = int_to_ptr.vmem [resolvable:$true] %s425
          %431 = dma.hbm_to_vmem [thread:$0]  %s424, 1024, %s426, %s415, 64, 64, 4
        $region40: #{tpu_custom_call.1} parent=35 // pred_fallthru
          _
        // Predicated region
        $region41: #{tpu_custom_call.1} parent=35 // pred_check
          %p432 = pneg %p182
        $region42: #{tpu_custom_call.1} parent=35 // pred_check_branch
          %434 = sbr.rel (%p432) target = $region44
        $region43: #{tpu_custom_call.1} parent=35 // pred_region
          %s435 = sand.u32 %s20, 1
          %s436 = scalar_lea.sflag [#allocation4], %s435
          %s437 = sand.u32 %s172, 1
          %s438 = smul.addr %s437, 64
          %s439 = scalar_lea.vmem [#allocation9], %s438
          %s441 = ssub.s32 1024, 1024
          %442 = vsyncadd %s436, %s441
          %s443 = smul.addr %s28, 16
          %s444 = smul.addr %s443, 64
          %s445 = scalar_lea.hbm %s5, %s444
          %s446 = sshll.u32 %s439, 4
          %s447 = int_to_ptr.vmem [resolvable:$true] %s446
          %452 = dma.hbm_to_vmem [thread:$0]  %s445, 1024, %s447, %s436, 64, 64, 4
        $region44: #{tpu_custom_call.1} parent=35 // pred_fallthru
          _
        // Predicated region
        $region45: #{tpu_custom_call.1} parent=35 // pred_check
          %p453 = pneg %p208
        $region46: #{tpu_custom_call.1} parent=35 // pred_check_branch
          %455 = sbr.rel (%p453) target = $region48
        $region47: #{tpu_custom_call.1} parent=35 // pred_region
          %p456 = scmp.lt.s32.totalorder %s28, 1
          %s457 = scalar_select %p456, %s28, 1
          %s458 = smul.addr %s457, 4
          %s459 = smul.addr %s458, 4
          %s460 = scalar_lea.vmem %s6, %s459
        $region48: #{tpu_custom_call.1} parent=35 // pred_fallthru
          _
        // Predicated region
        $region49: #{tpu_custom_call.1} parent=35 // pred_check
          %p461 = pneg %p234
        $region50: #{tpu_custom_call.1} parent=35 // pred_check_branch
          %463 = sbr.rel (%p461) target = $region52
        $region51: #{tpu_custom_call.1} parent=35 // pred_region
          %p464 = scmp.lt.s32.totalorder %s28, 1
          %s465 = scalar_select %p464, %s28, 1
          %s466 = scalar_lea.vmem %s7, %s465
        $region52: #{tpu_custom_call.1} parent=35 // pred_fallthru
          _
        // Predicated region
        $region53: #{tpu_custom_call.1} parent=35 // pred_check
          %p467 = pneg %p260
        $region54: #{tpu_custom_call.1} parent=35 // pred_check_branch
          %469 = sbr.rel (%p467) target = $region56
        $region55: #{tpu_custom_call.1} parent=35 // pred_region
          %p470 = scmp.lt.s32.totalorder %s28, 1
          %s471 = scalar_select %p470, %s28, 1
          %s472 = smul.addr %s471, 8
          %s473 = smul.addr %s472, 4
          %s474 = scalar_lea.vmem %s8, %s473
        $region56: #{tpu_custom_call.1} parent=35 // pred_fallthru
          _
        // Predicated region
        $region57: #{tpu_custom_call.1} parent=35 // pred_check
          %p475 = pneg %p286
        $region58: #{tpu_custom_call.1} parent=35 // pred_check_branch
          %477 = sbr.rel (%p475) target = $region60
        $region59: #{tpu_custom_call.1} parent=35 // pred_region
          %p478 = scmp.lt.s32.totalorder %s28, 1
          %s479 = scalar_select %p478, %s28, 1
          %s480 = smul.addr %s479, 2
          %s481 = smul.addr %s480, 8
          %s482 = scalar_lea.vmem %s9, %s481
        $region60: #{tpu_custom_call.1} parent=35 // pred_fallthru
          _
      $region36: #{tpu_custom_call.1} parent=5 // pred_fallthru
        _
      %p483 = scmp.le.s32.totalorder 1, %s20
      %p484 = scmp.lt.s32.totalorder %s20, 3
      %p485 = pnand %p483, %p484
      %p486 = pneg %p485
      // Predicated region
      $region61: #{tpu_custom_call.1} parent=5 // pred_check
        _
      $region62: #{tpu_custom_call.1} parent=5 // pred_check_branch
        %488 = sbr.rel (%p485) target = $region64
      $region63: #{tpu_custom_call.1} parent=5 // pred_region
        %s489 = ssub.s32 %s20, 1
        // Predicated region
        $region65: #{tpu_custom_call.1} parent=63 // pred_check
          %p490 = pneg %p110
        $region66: #{tpu_custom_call.1} parent=63 // pred_check_branch
          %492 = sbr.rel (%p490) target = $region68
        $region67: #{tpu_custom_call.1} parent=63 // pred_region
          %493 = dma.done [#allocation4], 256
        $region68: #{tpu_custom_call.1} parent=63 // pred_fallthru
          _
        // Predicated region
        $region69: #{tpu_custom_call.1} parent=63 // pred_check
          %p494 = pneg %p136
        $region70: #{tpu_custom_call.1} parent=63 // pred_check_branch
          %496 = sbr.rel (%p494) target = $region72
        $region71: #{tpu_custom_call.1} parent=63 // pred_region
          %497 = dma.done [#allocation7], 256
        $region72: #{tpu_custom_call.1} parent=63 // pred_fallthru
          _
        %s498 = sand.u32 %s25, 1
        %s499 = scalar_lea.sflag [#allocation4], %s498
        %s500 = sand.u32 %s149, 1
        %s501 = smul.addr %s500, 64
        %s502 = scalar_lea.vmem [#allocation8], %s501
        // Predicated region
        $region73: #{tpu_custom_call.1} parent=63 // pred_check
          %p503 = pneg %p162
        $region74: #{tpu_custom_call.1} parent=63 // pred_check_branch
          %505 = sbr.rel (%p503) target = $region76
        $region75: #{tpu_custom_call.1} parent=63 // pred_region
          %506 = dma.done %s499, 1024
        $region76: #{tpu_custom_call.1} parent=63 // pred_fallthru
          _
        %s507 = sand.u32 %s25, 1
        %s508 = scalar_lea.sflag [#allocation4], %s507
        %s509 = sand.u32 %s175, 1
        %s510 = smul.addr %s509, 64
        %s511 = scalar_lea.vmem [#allocation9], %s510
        // Predicated region
        $region77: #{tpu_custom_call.1} parent=63 // pred_check
          %p512 = pneg %p188
        $region78: #{tpu_custom_call.1} parent=63 // pred_check_branch
          %514 = sbr.rel (%p512) target = $region80
        $region79: #{tpu_custom_call.1} parent=63 // pred_region
          %515 = dma.done %s508, 1024
        $region80: #{tpu_custom_call.1} parent=63 // pred_fallthru
          _
        %s516 = smul.u32 2, %s29
        %p517 = scmp.lt.s32.totalorder %s516, 1
        %s518 = scalar_select %p517, %s516, 1
        %s519 = smul.addr %s518, 8
        %s520 = scalar_lea.vmem %s0, %s519
        %p521 = pneg %p58
        %p522 = pneg %p55
        %s523 = smul.u32 4, %s29
        %p524 = scmp.lt.s32.totalorder %s523, 3
        %s525 = scalar_select %p524, %s523, 3
        %s526 = smul.addr %s525, 4
        %s527 = scalar_lea.vmem %s1, %s526
        %p528 = pneg %p84
        %p529 = pneg %p81
        %p530 = pneg %p110
        %p531 = pneg %p107
        %p532 = pneg %p136
        %p533 = pneg %p133
        %s534 = sand.u32 %s25, 1
        %s535 = scalar_lea.sflag [#allocation4], %s534
        %s536 = sand.u32 %s149, 1
        %s537 = smul.addr %s536, 64
        %s538 = scalar_lea.vmem [#allocation8], %s537
        %p539 = pneg %p162
        %p540 = pneg %p159
        %s541 = sand.u32 %s25, 1
        %s542 = scalar_lea.sflag [#allocation4], %s541
        %s543 = sand.u32 %s175, 1
        %s544 = smul.addr %s543, 64
        %s545 = scalar_lea.vmem [#allocation9], %s544
        %p546 = pneg %p188
        %p547 = pneg %p185
        %p548 = scmp.lt.s32.totalorder %s30, 1
        %s549 = scalar_select %p548, %s30, 1
        %s550 = smul.addr %s549, 4
        %s551 = smul.addr %s550, 4
        %s552 = scalar_lea.vmem %s6, %s551
        %p553 = pneg %p214
        %p554 = pneg %p211
        %p555 = scmp.lt.s32.totalorder %s30, 1
        %s556 = scalar_select %p555, %s30, 1
        %s557 = scalar_lea.vmem %s7, %s556
        %p558 = pneg %p240
        %p559 = pneg %p237
        %p560 = scmp.lt.s32.totalorder %s30, 1
        %s561 = scalar_select %p560, %s30, 1
        %s562 = smul.addr %s561, 8
        %s563 = smul.addr %s562, 4
        %s564 = scalar_lea.vmem %s8, %s563
        %p565 = pneg %p266
        %p566 = pneg %p263
        %p567 = scmp.lt.s32.totalorder %s30, 1
        %s568 = scalar_select %p567, %s30, 1
        %s569 = smul.addr %s568, 2
        %s570 = smul.addr %s569, 8
        %s571 = scalar_lea.vmem %s9, %s570
        %p572 = pneg %p292
        %p573 = pneg %p289
        %p574 = pneg %p313
        %p575 = pneg %p310
        %p576 = pneg %p339
        %p577 = pneg %p336
        %s578 = smul.u32 2, %s29
        %p579 = scmp.lt.s32.totalorder %s578, 1
        %s580 = scalar_select %p579, %s578, 1
        %s581 = smul.addr %s580, 8
        %s582 = scalar_lea.vmem %s0, %s581
        %s583 = smul.u32 2, %s29
        %s584 = smul.u32 4, %s29
        %p585 = scmp.lt.s32.totalorder %s584, 3
        %s586 = scalar_select %p585, %s584, 3
        %s587 = smul.addr %s586, 4
        %s588 = scalar_lea.vmem %s1, %s587
        %s589 = smul.u32 4, %s29
        %s590 = smul.u32 4, %s29
        %s591 = smul.u32 2, %s29
        %p592 = scmp.lt.s32.totalorder %s30, 1
        %s593 = scalar_select %p592, %s30, 1
        %s594 = smul.addr %s593, 4
        %s595 = smul.addr %s594, 4
        %s596 = scalar_lea.vmem %s6, %s595
        %p597 = scmp.lt.s32.totalorder %s30, 1
        %s598 = scalar_select %p597, %s30, 1
        %s599 = scalar_lea.vmem %s7, %s598
        %p600 = scmp.lt.s32.totalorder %s30, 1
        %s601 = scalar_select %p600, %s30, 1
        %s602 = smul.addr %s601, 8
        %s603 = smul.addr %s602, 4
        %s604 = scalar_lea.vmem %s8, %s603
        %p605 = scmp.lt.s32.totalorder %s30, 1
        %s606 = scalar_select %p605, %s30, 1
        %s607 = smul.addr %s606, 2
        %s608 = smul.addr %s607, 8
        %s609 = scalar_lea.vmem %s9, %s608
        %s610 = smul.u32 2, %s29
        %p612 = scmp.eq.s32.totalorder %s30, 0
        // Predicated region
        $region81: #{tpu_custom_call.1} parent=63 // pred_check
          %p613 = pneg %p612
        $region82: #{tpu_custom_call.1} parent=63 // pred_check_branch
          %615 = sbr.rel (%p613) target = $region84
        $region83: #{tpu_custom_call.1} parent=63 // pred_region
          %v616 = vld [vmem:[%s582] sm:$0xff]
          %v617 = vld [vmem:[%s582 + $0x8] sm:$0xff]
          %vm618 = vcmask 261120
          %619 = vst.msk [vmem:[#allocation2] sm:$0xff] %vm618, %v616
          %620 = vst.msk [vmem:[#allocation2 + $0x8] sm:$0xff] %vm618, %v617
        $region84: #{tpu_custom_call.1} parent=63 // pred_fallthru
          _
        %v621 = vld [vmem:[%s502] sm:$0xf]
        %v622 = vld [vmem:[%s502 + $0x4] sm:$0xf]
        %v623 = vld [vmem:[%s502 + $0x8] sm:$0xf]
        %v624 = vld [vmem:[%s502 + $0xc] sm:$0xf]
        %v625 = vld [vmem:[%s502 + $0x10] sm:$0xf]
        %v626 = vld [vmem:[%s502 + $0x14] sm:$0xf]
        %v627 = vld [vmem:[%s502 + $0x18] sm:$0xf]
        %v628 = vld [vmem:[%s502 + $0x1c] sm:$0xf]
        %v629 = vld [vmem:[%s502 + $0x20] sm:$0xf]
        %v630 = vld [vmem:[%s502 + $0x24] sm:$0xf]
        %v631 = vld [vmem:[%s502 + $0x28] sm:$0xf]
        %v632 = vld [vmem:[%s502 + $0x2c] sm:$0xf]
        %v633 = vld [vmem:[%s502 + $0x30] sm:$0xf]
        %v634 = vld [vmem:[%s502 + $0x34] sm:$0xf]
        %v635 = vld [vmem:[%s502 + $0x38] sm:$0xf]
        %v636 = vld [vmem:[%s502 + $0x3c] sm:$0xf]
        %v637 = vld [vmem:[%s511] sm:$0xf]
        %v638 = vld [vmem:[%s511 + $0x4] sm:$0xf]
        %v639 = vld [vmem:[%s511 + $0x8] sm:$0xf]
        %v640 = vld [vmem:[%s511 + $0xc] sm:$0xf]
        %v641 = vld [vmem:[%s511 + $0x10] sm:$0xf]
        %v642 = vld [vmem:[%s511 + $0x14] sm:$0xf]
        %v643 = vld [vmem:[%s511 + $0x18] sm:$0xf]
        %v644 = vld [vmem:[%s511 + $0x1c] sm:$0xf]
        %v645 = vld [vmem:[%s511 + $0x20] sm:$0xf]
        %v646 = vld [vmem:[%s511 + $0x24] sm:$0xf]
        %v647 = vld [vmem:[%s511 + $0x28] sm:$0xf]
        %v648 = vld [vmem:[%s511 + $0x2c] sm:$0xf]
        %v649 = vld [vmem:[%s511 + $0x30] sm:$0xf]
        %v650 = vld [vmem:[%s511 + $0x34] sm:$0xf]
        %v651 = vld [vmem:[%s511 + $0x38] sm:$0xf]
        %v652 = vld [vmem:[%s511 + $0x3c] sm:$0xf]
        %v653 = vld [vmem:[%s596] sm:$0xf]
        %v654 = vld [vmem:[%s596 + $0x4] sm:$0xf]
        %v655 = vld [vmem:[%s596 + $0x8] sm:$0xf]
        %v656 = vld [vmem:[%s596 + $0xc] sm:$0xf]
        %v657 = vld [vmem:[%s599] sm:$0x1]
        %v658 = vld [vmem:[%s604] sm:$0xf]
        %v659 = vld [vmem:[%s604 + $0x4] sm:$0xf]
        %v660 = vld [vmem:[%s604 + $0x8] sm:$0xf]
        %v661 = vld [vmem:[%s604 + $0xc] sm:$0xf]
        %v662 = vld [vmem:[%s604 + $0x10] sm:$0xf]
        %v663 = vld [vmem:[%s604 + $0x14] sm:$0xf]
        %v664 = vld [vmem:[%s604 + $0x18] sm:$0xf]
        %v665 = vld [vmem:[%s604 + $0x1c] sm:$0xf]
        %v666 = vld [vmem:[%s609] sm:$0xff]
        %v667 = vld [vmem:[%s609 + $0x8] sm:$0xff]
        %v668 = vld [vmem:[#allocation2] sm:$0xff]
        %v669 = vld [vmem:[%s588] sm:$0xf]
        %v670 = vld [vmem:[%s588 + $0x4] sm:$0xf]
        %v671 = vld [vmem:[#allocation3] sm:$0xf]
        %v672 = vld [vmem:[#allocation3 + $0x4] sm:$0xf]
        %v673 = vld [vmem:[#allocation6] sm:$0xff]
        %vm674 = vcmask 261120
        %v675 = vsel %vm674, %v668, 0.0
        %676 = vadd.xlane.f32.xlu0 %v675
        %v677 = vpop.xlane.xlu0 %676
        %v678 = vrcp.pop 32.0
        %v679 = vmul.f32 %v677, %v678
        %v680 = vsub.f32 %v668, %v679
        %v681 = vmul.f32 %v680, %v680
        %v682 = vsel %vm674, %v681, 0.0
        %683 = vadd.xlane.f32.xlu0 %v682
        %v684 = vpop.xlane.xlu0 %683
        %v685 = vmul.f32 %v684, %v678
        %v686 = vadd.f32 %v685, 1e-05
        %v687 = vrsqrt.pop %v686
        %v688 = vmul.f32 %v680, %v687
        %v689 = vlaneseq
        %v690 = vshrl.u32 %v689, 7
        %v691 = vsub.s32 0, %v690
        %v692 = vrot.slane %v667, %v691
        %v693 = vmul.f32 %v688, %v692
        %v694 = vlaneseq
        %v695 = vshrl.u32 %v694, 7
        %v696 = vsub.s32 1, %v695
        %v697 = vrot.slane %v667, %v696
        %v698 = vadd.f32 %v693, %v697
        %v699 = vadd.f32 %v698, %v673
        %v700 = vpack.c.bf16 %v699, %v699
        %v701 = vpack.c.bf16 %v698, %v698
        %v702 = vlaneseq
        %v703 = vshrl.u32 %v702, 7
        %v704 = vsub.s32 0, %v703
        %v705 = vrot.slane %v666, %v704
        %v710 = vunpack.c.l.b16 %v621
        %v711 = vunpack.c.l.b16 %v622
        %v712 = vunpack.c.l.b16 %v623
        %v713 = vunpack.c.l.b16 %v624
        %v714 = vpack.c.b16 %v711, %v710
        %v715 = vpack.c.b16 %v713, %v712
        %v719 = vsel %vm674, %v700, 0
        %721 = vmatprep.subr.bf16.mxu0 0
        %722 = vmatpush1.bf16.msra.mxu0 %v714
        %723 = vmatprep.subr.bf16.mxu0 0
        %724 = vmatpush1.bf16.msra.mxu0 %v715
        %725 = vmatprep.subr.bf16.mxu0 0
        %726 = vmatpush1.bf16.msra.mxu0 0
        %727 = vmatprep.subr.bf16.mxu0 0
        %728 = vmatpush1.bf16.msra.mxu0 0
        %729 = vmatprep.subr.bf16.mxu0 0
        %730 = vmatpush1.bf16.msra.mxu0 0
        %731 = vmatprep.subr.bf16.mxu0 0
        %732 = vmatpush1.bf16.msra.mxu0 0
        %733 = vmatprep.subr.bf16.mxu0 0
        %734 = vmatpush1.bf16.msra.mxu0 0
        %735 = vmatprep.subr.bf16.mxu0 0
        %736 = vmatpush1.bf16.msra.mxu0 0
        %737 = vmatprep.subr.bf16.mxu0 0
        %738 = vmatpush1.bf16.msra.mxu0 0
        %739 = vmatprep.subr.bf16.mxu0 0
        %740 = vmatpush1.bf16.msra.mxu0 0
        %741 = vmatprep.subr.bf16.mxu0 0
        %742 = vmatpush1.bf16.msra.mxu0 0
        %743 = vmatprep.subr.bf16.mxu0 0
        %744 = vmatpush1.bf16.msra.mxu0 0
        %745 = vmatprep.subr.bf16.mxu0 0
        %746 = vmatpush1.bf16.msra.mxu0 0
        %747 = vmatprep.subr.bf16.mxu0 0
        %748 = vmatpush1.bf16.msra.mxu0 0
        %749 = vmatprep.subr.bf16.mxu0 0
        %750 = vmatpush1.bf16.msra.mxu0 0
        %751 = vmatprep.subr.bf16.mxu0 0
        %752 = vmatpush1.bf16.msra.mxu0 0
        %753 = vmatprep.mubr.bf16.mxu0 0
        %754 = vmatmul.mubr.bf16.gmra.mrb[0].mxu0 %v719
        %v755 = vpop.f32.mrb[0].mxu0
        %v756 = vadd.f32 %v705, %v755
        %v757 = vpop.f32.mrb[0].mxu0
        %v758 = vpop.f32.mrb[0].mxu0
        %v759 = vpop.f32.mrb[0].mxu0
        %760 = vdwg.mxu0
        %v761 = vlaneseq
        %v762 = vshrl.u32 %v761, 7
        %v763 = vsub.s32 1, %v762
        %v764 = vrot.slane %v666, %v763
        %v769 = vunpack.c.l.b16 %v625
        %v770 = vunpack.c.l.b16 %v626
        %v771 = vunpack.c.l.b16 %v627
        %v772 = vunpack.c.l.b16 %v628
        %v773 = vpack.c.b16 %v770, %v769
        %v774 = vpack.c.b16 %v772, %v771
        %777 = vmatprep.subr.bf16.mxu0 0
        %778 = vmatpush1.bf16.msra.mxu0 %v773
        %779 = vmatprep.subr.bf16.mxu0 0
        %780 = vmatpush1.bf16.msra.mxu0 %v774
        %781 = vmatprep.subr.bf16.mxu0 0
        %782 = vmatpush1.bf16.msra.mxu0 0
        %783 = vmatprep.subr.bf16.mxu0 0
        %784 = vmatpush1.bf16.msra.mxu0 0
        %785 = vmatprep.subr.bf16.mxu0 0
        %786 = vmatpush1.bf16.msra.mxu0 0
        %787 = vmatprep.subr.bf16.mxu0 0
        %788 = vmatpush1.bf16.msra.mxu0 0
        %789 = vmatprep.subr.bf16.mxu0 0
        %790 = vmatpush1.bf16.msra.mxu0 0
        %791 = vmatprep.subr.bf16.mxu0 0
        %792 = vmatpush1.bf16.msra.mxu0 0
        %793 = vmatprep.subr.bf16.mxu0 0
        %794 = vmatpush1.bf16.msra.mxu0 0
        %795 = vmatprep.subr.bf16.mxu0 0
        %796 = vmatpush1.bf16.msra.mxu0 0
        %797 = vmatprep.subr.bf16.mxu0 0
        %798 = vmatpush1.bf16.msra.mxu0 0
        %799 = vmatprep.subr.bf16.mxu0 0
        %800 = vmatpush1.bf16.msra.mxu0 0
        %801 = vmatprep.subr.bf16.mxu0 0
        %802 = vmatpush1.bf16.msra.mxu0 0
        %803 = vmatprep.subr.bf16.mxu0 0
        %804 = vmatpush1.bf16.msra.mxu0 0
        %805 = vmatprep.subr.bf16.mxu0 0
        %806 = vmatpush1.bf16.msra.mxu0 0
        %807 = vmatprep.subr.bf16.mxu0 0
        %808 = vmatpush1.bf16.msra.mxu0 0
        %809 = vmatprep.mubr.bf16.mxu0 0
        %810 = vmatmul.mubr.bf16.gmra.mrb[0].mxu0 %v719
        %v811 = vpop.f32.mrb[0].mxu0
        %v812 = vadd.f32 %v764, %v811
        %v813 = vpop.f32.mrb[0].mxu0
        %v814 = vpop.f32.mrb[0].mxu0
        %v815 = vpop.f32.mrb[0].mxu0
        %816 = vdwg.mxu0
        %v817 = vlaneseq
        %v818 = vshrl.u32 %v817, 7
        %v819 = vsub.s32 2, %v818
        %v820 = vrot.slane %v666, %v819
        %v825 = vunpack.c.l.b16 %v629
        %v826 = vunpack.c.l.b16 %v630
        %v827 = vunpack.c.l.b16 %v631
        %v828 = vunpack.c.l.b16 %v632
        %v829 = vpack.c.b16 %v826, %v825
        %v830 = vpack.c.b16 %v828, %v827
        %v834 = vsel %vm674, %v701, 0
        %836 = vmatprep.subr.bf16.mxu0 0
        %837 = vmatpush1.bf16.msra.mxu0 %v829
        %838 = vmatprep.subr.bf16.mxu0 0
        %839 = vmatpush1.bf16.msra.mxu0 %v830
        %840 = vmatprep.subr.bf16.mxu0 0
        %841 = vmatpush1.bf16.msra.mxu0 0
        %842 = vmatprep.subr.bf16.mxu0 0
        %843 = vmatpush1.bf16.msra.mxu0 0
        %844 = vmatprep.subr.bf16.mxu0 0
        %845 = vmatpush1.bf16.msra.mxu0 0
        %846 = vmatprep.subr.bf16.mxu0 0
        %847 = vmatpush1.bf16.msra.mxu0 0
        %848 = vmatprep.subr.bf16.mxu0 0
        %849 = vmatpush1.bf16.msra.mxu0 0
        %850 = vmatprep.subr.bf16.mxu0 0
        %851 = vmatpush1.bf16.msra.mxu0 0
        %852 = vmatprep.subr.bf16.mxu0 0
        %853 = vmatpush1.bf16.msra.mxu0 0
        %854 = vmatprep.subr.bf16.mxu0 0
        %855 = vmatpush1.bf16.msra.mxu0 0
        %856 = vmatprep.subr.bf16.mxu0 0
        %857 = vmatpush1.bf16.msra.mxu0 0
        %858 = vmatprep.subr.bf16.mxu0 0
        %859 = vmatpush1.bf16.msra.mxu0 0
        %860 = vmatprep.subr.bf16.mxu0 0
        %861 = vmatpush1.bf16.msra.mxu0 0
        %862 = vmatprep.subr.bf16.mxu0 0
        %863 = vmatpush1.bf16.msra.mxu0 0
        %864 = vmatprep.subr.bf16.mxu0 0
        %865 = vmatpush1.bf16.msra.mxu0 0
        %866 = vmatprep.subr.bf16.mxu0 0
        %867 = vmatpush1.bf16.msra.mxu0 0
        %868 = vmatprep.mubr.bf16.mxu0 0
        %869 = vmatmul.mubr.bf16.gmra.mrb[0].mxu0 %v834
        %v870 = vpop.f32.mrb[0].mxu0
        %v871 = vadd.f32 %v820, %v870
        %v872 = vpop.f32.mrb[0].mxu0
        %v873 = vpop.f32.mrb[0].mxu0
        %v874 = vpop.f32.mrb[0].mxu0
        %875 = vdwg.mxu0
        %877 = vrot.lane.b32.xlu0 %v756, 120
        %v878 = vpop.permute.xlu0 %877
        %880 = vrot.lane.b32.xlu0 %v756, 112
        %v881 = vpop.permute.xlu0 %880
        %883 = vrot.lane.b32.xlu0 %v756, 104
        %v884 = vpop.permute.xlu0 %883
        %v886 = vcombine.low %v756, %v881
        %v887 = vcombine.high %v756, %v881
        %v889 = vunpack.c.l.s4 1983009808
        %v890 = vunpack.c.0.s8 %v889
        %v891 = vlaneseq
        %v892 = vshrl.u32 %v891, 7
        %v893 = vsub.s32 %v890, %v892
        %v894 = vrot.slane %v886, %v893
        %v896 = vunpack.c.l.s4 1983009808
        %v897 = vunpack.c.0.s8 %v896
        %v898 = vlaneseq
        %v899 = vshrl.u32 %v898, 7
        %v900 = vsub.s32 %v897, %v899
        %v901 = vrot.slane %v887, %v900
        %v902 = vcombine.low %v878, %v884
        %v903 = vcombine.high %v878, %v884
        %v905 = vunpack.c.l.s4 1983009808
        %v906 = vunpack.c.0.s8 %v905
        %v907 = vlaneseq
        %v908 = vshrl.u32 %v907, 7
        %v909 = vsub.s32 %v906, %v908
        %v910 = vrot.slane %v902, %v909
        %v912 = vunpack.c.l.s4 1983009808
        %v913 = vunpack.c.0.s8 %v912
        %v914 = vlaneseq
        %v915 = vshrl.u32 %v914, 7
        %v916 = vsub.s32 %v913, %v915
        %v917 = vrot.slane %v903, %v916
        %v918 = vcombine.low %v894, %v910
        %v919 = vcombine.high %v894, %v910
        %v921 = vunpack.c.l.s4 1934713408
        %v922 = vunpack.c.0.s8 %v921
        %v923 = vlaneseq
        %v924 = vshrl.u32 %v923, 7
        %v925 = vsub.s32 %v922, %v924
        %v926 = vrot.slane %v918, %v925
        %v928 = vunpack.c.l.s4 1934713408
        %v929 = vunpack.c.0.s8 %v928
        %v930 = vlaneseq
        %v931 = vshrl.u32 %v930, 7
        %v932 = vsub.s32 %v929, %v931
        %v933 = vrot.slane %v919, %v932
        %v934 = vcombine.low %v901, %v917
        %v935 = vcombine.high %v901, %v917
        %v937 = vunpack.c.l.s4 1934713408
        %v938 = vunpack.c.0.s8 %v937
        %v939 = vlaneseq
        %v940 = vshrl.u32 %v939, 7
        %v941 = vsub.s32 %v938, %v940
        %v942 = vrot.slane %v934, %v941
        %v944 = vunpack.c.l.s4 1934713408
        %v945 = vunpack.c.0.s8 %v944
        %v946 = vlaneseq
        %v947 = vshrl.u32 %v946, 7
        %v948 = vsub.s32 %v945, %v947
        %v949 = vrot.slane %v935, %v948
        %v950 = vcombine.high %v926, 0.0
        %v951 = vcombine.high %v933, 0.0
        %v952 = vcombine.high %v942, 0.0
        %v953 = vcombine.high %v949, 0.0
        %v954 = vcombine.low %v926, %v933
        %v956 = vunpack.c.l.s4 1983009808
        %v957 = vunpack.c.0.s8 %v956
        %v958 = vlaneseq
        %v959 = vshrl.u32 %v958, 7
        %v960 = vsub.s32 %v957, %v959
        %v961 = vrot.slane %v954, %v960
        %v962 = vcombine.low %v950, %v951
        %v964 = vunpack.c.l.s4 1983009808
        %v965 = vunpack.c.0.s8 %v964
        %v966 = vlaneseq
        %v967 = vshrl.u32 %v966, 7
        %v968 = vsub.s32 %v965, %v967
        %v969 = vrot.slane %v962, %v968
        %v970 = vcombine.low %v942, %v949
        %v972 = vunpack.c.l.s4 1983009808
        %v973 = vunpack.c.0.s8 %v972
        %v974 = vlaneseq
        %v975 = vshrl.u32 %v974, 7
        %v976 = vsub.s32 %v973, %v975
        %v977 = vrot.slane %v970, %v976
        %v978 = vcombine.low %v952, %v953
        %v980 = vunpack.c.l.s4 1983009808
        %v981 = vunpack.c.0.s8 %v980
        %v982 = vlaneseq
        %v983 = vshrl.u32 %v982, 7
        %v984 = vsub.s32 %v981, %v983
        %v985 = vrot.slane %v978, %v984
        %v986 = vcombine.low %v961, %v969
        %v987 = vcombine.high %v961, %v969
        %v989 = vunpack.c.l.s4 1934713408
        %v990 = vunpack.c.0.s8 %v989
        %v991 = vlaneseq
        %v992 = vshrl.u32 %v991, 7
        %v993 = vsub.s32 %v990, %v992
        %v994 = vrot.slane %v986, %v993
        %v996 = vunpack.c.l.s4 1934713408
        %v997 = vunpack.c.0.s8 %v996
        %v998 = vlaneseq
        %v999 = vshrl.u32 %v998, 7
        %v1000 = vsub.s32 %v997, %v999
        %v1001 = vrot.slane %v987, %v1000
        %v1002 = vcombine.low %v977, %v985
        %v1003 = vcombine.high %v977, %v985
        %v1005 = vunpack.c.l.s4 1934713408
        %v1006 = vunpack.c.0.s8 %v1005
        %v1007 = vlaneseq
        %v1008 = vshrl.u32 %v1007, 7
        %v1009 = vsub.s32 %v1006, %v1008
        %v1010 = vrot.slane %v1002, %v1009
        %v1012 = vunpack.c.l.s4 1934713408
        %v1013 = vunpack.c.0.s8 %v1012
        %v1014 = vlaneseq
        %v1015 = vshrl.u32 %v1014, 7
        %v1016 = vsub.s32 %v1013, %v1015
        %v1017 = vrot.slane %v1003, %v1016
        %v1018 = vcombine.low %v994, %v1010
        %v1019 = vcombine.high %v994, %v1010
        %v1020 = vcombine.low %v1001, %v1017
        %v1021 = vcombine.high %v1001, %v1017
        %1023 = vrot.lane.b32.xlu0 %v812, 120
        %v1024 = vpop.permute.xlu0 %1023
        %1026 = vrot.lane.b32.xlu0 %v812, 112
        %v1027 = vpop.permute.xlu0 %1026
        %1029 = vrot.lane.b32.xlu0 %v812, 104
        %v1030 = vpop.permute.xlu0 %1029
        %v1032 = vcombine.low %v812, %v1027
        %v1033 = vcombine.high %v812, %v1027
        %v1035 = vunpack.c.l.s4 1983009808
        %v1036 = vunpack.c.0.s8 %v1035
        %v1037 = vlaneseq
        %v1038 = vshrl.u32 %v1037, 7
        %v1039 = vsub.s32 %v1036, %v1038
        %v1040 = vrot.slane %v1032, %v1039
        %v1042 = vunpack.c.l.s4 1983009808
        %v1043 = vunpack.c.0.s8 %v1042
        %v1044 = vlaneseq
        %v1045 = vshrl.u32 %v1044, 7
        %v1046 = vsub.s32 %v1043, %v1045
        %v1047 = vrot.slane %v1033, %v1046
        %v1048 = vcombine.low %v1024, %v1030
        %v1049 = vcombine.high %v1024, %v1030
        %v1051 = vunpack.c.l.s4 1983009808
        %v1052 = vunpack.c.0.s8 %v1051
        %v1053 = vlaneseq
        %v1054 = vshrl.u32 %v1053, 7
        %v1055 = vsub.s32 %v1052, %v1054
        %v1056 = vrot.slane %v1048, %v1055
        %v1058 = vunpack.c.l.s4 1983009808
        %v1059 = vunpack.c.0.s8 %v1058
        %v1060 = vlaneseq
        %v1061 = vshrl.u32 %v1060, 7
        %v1062 = vsub.s32 %v1059, %v1061
        %v1063 = vrot.slane %v1049, %v1062
        %v1064 = vcombine.low %v1040, %v1056
        %v1065 = vcombine.high %v1040, %v1056
        %v1067 = vunpack.c.l.s4 1934713408
        %v1068 = vunpack.c.0.s8 %v1067
        %v1069 = vlaneseq
        %v1070 = vshrl.u32 %v1069, 7
        %v1071 = vsub.s32 %v1068, %v1070
        %v1072 = vrot.slane %v1064, %v1071
        %v1074 = vunpack.c.l.s4 1934713408
        %v1075 = vunpack.c.0.s8 %v1074
        %v1076 = vlaneseq
        %v1077 = vshrl.u32 %v1076, 7
        %v1078 = vsub.s32 %v1075, %v1077
        %v1079 = vrot.slane %v1065, %v1078
        %v1080 = vcombine.low %v1047, %v1063
        %v1081 = vcombine.high %v1047, %v1063
        %v1083 = vunpack.c.l.s4 1934713408
        %v1084 = vunpack.c.0.s8 %v1083
        %v1085 = vlaneseq
        %v1086 = vshrl.u32 %v1085, 7
        %v1087 = vsub.s32 %v1084, %v1086
        %v1088 = vrot.slane %v1080, %v1087
        %v1090 = vunpack.c.l.s4 1934713408
        %v1091 = vunpack.c.0.s8 %v1090
        %v1092 = vlaneseq
        %v1093 = vshrl.u32 %v1092, 7
        %v1094 = vsub.s32 %v1091, %v1093
        %v1095 = vrot.slane %v1081, %v1094
        %v1096 = vcombine.high %v1072, 0.0
        %v1097 = vcombine.high %v1079, 0.0
        %v1098 = vcombine.high %v1088, 0.0
        %v1099 = vcombine.high %v1095, 0.0
        %v1100 = vcombine.low %v1072, %v1079
        %v1102 = vunpack.c.l.s4 1983009808
        %v1103 = vunpack.c.0.s8 %v1102
        %v1104 = vlaneseq
        %v1105 = vshrl.u32 %v1104, 7
        %v1106 = vsub.s32 %v1103, %v1105
        %v1107 = vrot.slane %v1100, %v1106
        %v1108 = vcombine.low %v1096, %v1097
        %v1110 = vunpack.c.l.s4 1983009808
        %v1111 = vunpack.c.0.s8 %v1110
        %v1112 = vlaneseq
        %v1113 = vshrl.u32 %v1112, 7
        %v1114 = vsub.s32 %v1111, %v1113
        %v1115 = vrot.slane %v1108, %v1114
        %v1116 = vcombine.low %v1088, %v1095
        %v1118 = vunpack.c.l.s4 1983009808
        %v1119 = vunpack.c.0.s8 %v1118
        %v1120 = vlaneseq
        %v1121 = vshrl.u32 %v1120, 7
        %v1122 = vsub.s32 %v1119, %v1121
        %v1123 = vrot.slane %v1116, %v1122
        %v1124 = vcombine.low %v1098, %v1099
        %v1126 = vunpack.c.l.s4 1983009808
        %v1127 = vunpack.c.0.s8 %v1126
        %v1128 = vlaneseq
        %v1129 = vshrl.u32 %v1128, 7
        %v1130 = vsub.s32 %v1127, %v1129
        %v1131 = vrot.slane %v1124, %v1130
        %v1132 = vcombine.low %v1107, %v1115
        %v1133 = vcombine.high %v1107, %v1115
        %v1135 = vunpack.c.l.s4 1934713408
        %v1136 = vunpack.c.0.s8 %v1135
        %v1137 = vlaneseq
        %v1138 = vshrl.u32 %v1137, 7
        %v1139 = vsub.s32 %v1136, %v1138
        %v1140 = vrot.slane %v1132, %v1139
        %v1142 = vunpack.c.l.s4 1934713408
        %v1143 = vunpack.c.0.s8 %v1142
        %v1144 = vlaneseq
        %v1145 = vshrl.u32 %v1144, 7
        %v1146 = vsub.s32 %v1143, %v1145
        %v1147 = vrot.slane %v1133, %v1146
        %v1148 = vcombine.low %v1123, %v1131
        %v1149 = vcombine.high %v1123, %v1131
        %v1151 = vunpack.c.l.s4 1934713408
        %v1152 = vunpack.c.0.s8 %v1151
        %v1153 = vlaneseq
        %v1154 = vshrl.u32 %v1153, 7
        %v1155 = vsub.s32 %v1152, %v1154
        %v1156 = vrot.slane %v1148, %v1155
        %v1158 = vunpack.c.l.s4 1934713408
        %v1159 = vunpack.c.0.s8 %v1158
        %v1160 = vlaneseq
        %v1161 = vshrl.u32 %v1160, 7
        %v1162 = vsub.s32 %v1159, %v1161
        %v1163 = vrot.slane %v1149, %v1162
        %v1164 = vcombine.low %v1140, %v1156
        %v1165 = vcombine.high %v1140, %v1156
        %v1166 = vcombine.low %v1147, %v1163
        %v1167 = vcombine.high %v1147, %v1163
        %1169 = vrot.lane.b32.xlu0 %v871, 120
        %v1170 = vpop.permute.xlu0 %1169
        %1172 = vrot.lane.b32.xlu0 %v871, 112
        %v1173 = vpop.permute.xlu0 %1172
        %1175 = vrot.lane.b32.xlu0 %v871, 104
        %v1176 = vpop.permute.xlu0 %1175
        %v1178 = vcombine.low %v871, %v1173
        %v1179 = vcombine.high %v871, %v1173
        %v1181 = vunpack.c.l.s4 1983009808
        %v1182 = vunpack.c.0.s8 %v1181
        %v1183 = vlaneseq
        %v1184 = vshrl.u32 %v1183, 7
        %v1185 = vsub.s32 %v1182, %v1184
        %v1186 = vrot.slane %v1178, %v1185
        %v1188 = vunpack.c.l.s4 1983009808
        %v1189 = vunpack.c.0.s8 %v1188
        %v1190 = vlaneseq
        %v1191 = vshrl.u32 %v1190, 7
        %v1192 = vsub.s32 %v1189, %v1191
        %v1193 = vrot.slane %v1179, %v1192
        %v1194 = vcombine.low %v1170, %v1176
        %v1195 = vcombine.high %v1170, %v1176
        %v1197 = vunpack.c.l.s4 1983009808
        %v1198 = vunpack.c.0.s8 %v1197
        %v1199 = vlaneseq
        %v1200 = vshrl.u32 %v1199, 7
        %v1201 = vsub.s32 %v1198, %v1200
        %v1202 = vrot.slane %v1194, %v1201
        %v1204 = vunpack.c.l.s4 1983009808
        %v1205 = vunpack.c.0.s8 %v1204
        %v1206 = vlaneseq
        %v1207 = vshrl.u32 %v1206, 7
        %v1208 = vsub.s32 %v1205, %v1207
        %v1209 = vrot.slane %v1195, %v1208
        %v1210 = vcombine.low %v1186, %v1202
        %v1211 = vcombine.high %v1186, %v1202
        %v1213 = vunpack.c.l.s4 1934713408
        %v1214 = vunpack.c.0.s8 %v1213
        %v1215 = vlaneseq
        %v1216 = vshrl.u32 %v1215, 7
        %v1217 = vsub.s32 %v1214, %v1216
        %v1218 = vrot.slane %v1210, %v1217
        %v1220 = vunpack.c.l.s4 1934713408
        %v1221 = vunpack.c.0.s8 %v1220
        %v1222 = vlaneseq
        %v1223 = vshrl.u32 %v1222, 7
        %v1224 = vsub.s32 %v1221, %v1223
        %v1225 = vrot.slane %v1211, %v1224
        %v1226 = vcombine.low %v1193, %v1209
        %v1227 = vcombine.high %v1193, %v1209
        %v1229 = vunpack.c.l.s4 1934713408
        %v1230 = vunpack.c.0.s8 %v1229
        %v1231 = vlaneseq
        %v1232 = vshrl.u32 %v1231, 7
        %v1233 = vsub.s32 %v1230, %v1232
        %v1234 = vrot.slane %v1226, %v1233
        %v1236 = vunpack.c.l.s4 1934713408
        %v1237 = vunpack.c.0.s8 %v1236
        %v1238 = vlaneseq
        %v1239 = vshrl.u32 %v1238, 7
        %v1240 = vsub.s32 %v1237, %v1239
        %v1241 = vrot.slane %v1227, %v1240
        %v1242 = vcombine.high %v1218, 0.0
        %v1243 = vcombine.high %v1225, 0.0
        %v1244 = vcombine.high %v1234, 0.0
        %v1245 = vcombine.high %v1241, 0.0
        %v1246 = vcombine.low %v1218, %v1225
        %v1248 = vunpack.c.l.s4 1983009808
        %v1249 = vunpack.c.0.s8 %v1248
        %v1250 = vlaneseq
        %v1251 = vshrl.u32 %v1250, 7
        %v1252 = vsub.s32 %v1249, %v1251
        %v1253 = vrot.slane %v1246, %v1252
        %v1254 = vcombine.low %v1242, %v1243
        %v1256 = vunpack.c.l.s4 1983009808
        %v1257 = vunpack.c.0.s8 %v1256
        %v1258 = vlaneseq
        %v1259 = vshrl.u32 %v1258, 7
        %v1260 = vsub.s32 %v1257, %v1259
        %v1261 = vrot.slane %v1254, %v1260
        %v1262 = vcombine.low %v1234, %v1241
        %v1264 = vunpack.c.l.s4 1983009808
        %v1265 = vunpack.c.0.s8 %v1264
        %v1266 = vlaneseq
        %v1267 = vshrl.u32 %v1266, 7
        %v1268 = vsub.s32 %v1265, %v1267
        %v1269 = vrot.slane %v1262, %v1268
        %v1270 = vcombine.low %v1244, %v1245
        %v1272 = vunpack.c.l.s4 1983009808
        %v1273 = vunpack.c.0.s8 %v1272
        %v1274 = vlaneseq
        %v1275 = vshrl.u32 %v1274, 7
        %v1276 = vsub.s32 %v1273, %v1275
        %v1277 = vrot.slane %v1270, %v1276
        %v1278 = vcombine.low %v1253, %v1261
        %v1279 = vcombine.high %v1253, %v1261
        %v1281 = vunpack.c.l.s4 1934713408
        %v1282 = vunpack.c.0.s8 %v1281
        %v1283 = vlaneseq
        %v1284 = vshrl.u32 %v1283, 7
        %v1285 = vsub.s32 %v1282, %v1284
        %v1286 = vrot.slane %v1278, %v1285
        %v1288 = vunpack.c.l.s4 1934713408
        %v1289 = vunpack.c.0.s8 %v1288
        %v1290 = vlaneseq
        %v1291 = vshrl.u32 %v1290, 7
        %v1292 = vsub.s32 %v1289, %v1291
        %v1293 = vrot.slane %v1279, %v1292
        %v1294 = vcombine.low %v1269, %v1277
        %v1295 = vcombine.high %v1269, %v1277
        %v1297 = vunpack.c.l.s4 1934713408
        %v1298 = vunpack.c.0.s8 %v1297
        %v1299 = vlaneseq
        %v1300 = vshrl.u32 %v1299, 7
        %v1301 = vsub.s32 %v1298, %v1300
        %v1302 = vrot.slane %v1294, %v1301
        %v1304 = vunpack.c.l.s4 1934713408
        %v1305 = vunpack.c.0.s8 %v1304
        %v1306 = vlaneseq
        %v1307 = vshrl.u32 %v1306, 7
        %v1308 = vsub.s32 %v1305, %v1307
        %v1309 = vrot.slane %v1295, %v1308
        %v1310 = vcombine.low %v1286, %v1302
        %v1311 = vcombine.high %v1286, %v1302
        %v1312 = vcombine.low %v1293, %v1309
        %v1313 = vcombine.high %v1293, %v1309
        %v1314 = vpack.c.bf16 %v1018, %v1018
        %v1315 = vpack.c.bf16 %v1019, %v1019
        %v1316 = vpack.c.bf16 %v1020, %v1020
        %v1317 = vpack.c.bf16 %v1021, %v1021
        %v1318 = vpack.c.bf16 %v1164, %v1164
        %v1319 = vpack.c.bf16 %v1165, %v1165
        %v1320 = vpack.c.bf16 %v1166, %v1166
        %v1321 = vpack.c.bf16 %v1167, %v1167
        %v1322 = vpack.c.bf16 %v1310, %v1310
        %v1323 = vpack.c.bf16 %v1311, %v1311
        %v1324 = vpack.c.bf16 %v1312, %v1312
        %v1325 = vpack.c.bf16 %v1313, %v1313
        %vm1326 = vcmask 64512
        %v1328 = vsel %vm1326, %v1314, 0
        %v1331 = vsel %vm1326, %v1318, 0
        %1333 = vmatprep.subr.bf16.mxu0 0
        %1334 = vmatpush1.bf16.xpose.msra.mxu0 %v1331
        %1335 = vmatprep.subr.bf16.mxu0 0
        %1336 = vmatpush1.bf16.xpose.msra.mxu0 0
        %1337 = vmatprep.subr.bf16.mxu0 0
        %1338 = vmatpush1.bf16.xpose.msra.mxu0 0
        %1339 = vmatprep.subr.bf16.mxu0 0
        %1340 = vmatpush1.bf16.xpose.msra.mxu0 0
        %1341 = vmatprep.subr.bf16.mxu0 0
        %1342 = vmatpush1.bf16.xpose.msra.mxu0 0
        %1343 = vmatprep.subr.bf16.mxu0 0
        %1344 = vmatpush1.bf16.xpose.msra.mxu0 0
        %1345 = vmatprep.subr.bf16.mxu0 0
        %1346 = vmatpush1.bf16.xpose.msra.mxu0 0
        %1347 = vmatprep.subr.bf16.mxu0 0
        %1348 = vmatpush1.bf16.xpose.msra.mxu0 0
        %1349 = vmatprep.subr.bf16.mxu0 0
        %1350 = vmatpush1.bf16.xpose.msra.mxu0 0
        %1351 = vmatprep.subr.bf16.mxu0 0
        %1352 = vmatpush1.bf16.xpose.msra.mxu0 0
        %1353 = vmatprep.subr.bf16.mxu0 0
        %1354 = vmatpush1.bf16.xpose.msra.mxu0 0
        %1355 = vmatprep.subr.bf16.mxu0 0
        %1356 = vmatpush1.bf16.xpose.msra.mxu0 0
        %1357 = vmatprep.subr.bf16.mxu0 0
        %1358 = vmatpush1.bf16.xpose.msra.mxu0 0
        %1359 = vmatprep.subr.bf16.mxu0 0
        %1360 = vmatpush1.bf16.xpose.msra.mxu0 0
        %1361 = vmatprep.subr.bf16.mxu0 0
        %1362 = vmatpush1.bf16.xpose.msra.mxu0 0
        %1363 = vmatprep.subr.bf16.mxu0 0
        %1364 = vmatpush1.bf16.xpose.msra.mxu0 0
        %1365 = vmatprep.mubr.bf16.mxu0 0
        %1366 = vmatmul.mubr.bf16.gmra.mrb[0].mxu0 %v1328
        %v1367 = vpop.f32.mrb[0].mxu0
        %v1368 = vadd.f32 0.0, %v1367
        %v1369 = vpop.f32.mrb[0].mxu0
        %v1370 = vpop.f32.mrb[0].mxu0
        %v1371 = vpop.f32.mrb[0].mxu0
        %1372 = vdwg.mxu0
        %v1374 = vsel %vm1326, %v1315, 0
        %v1377 = vsel %vm1326, %v1319, 0
        %1379 = vmatprep.subr.bf16.mxu0 0
        %1380 = vmatpush1.bf16.xpose.msra.mxu0 %v1377
        %1381 = vmatprep.subr.bf16.mxu0 0
        %1382 = vmatpush1.bf16.xpose.msra.mxu0 0
        %1383 = vmatprep.subr.bf16.mxu0 0
        %1384 = vmatpush1.bf16.xpose.msra.mxu0 0
        %1385 = vmatprep.subr.bf16.mxu0 0
        %1386 = vmatpush1.bf16.xpose.msra.mxu0 0
        %1387 = vmatprep.subr.bf16.mxu0 0
        %1388 = vmatpush1.bf16.xpose.msra.mxu0 0
        %1389 = vmatprep.subr.bf16.mxu0 0
        %1390 = vmatpush1.bf16.xpose.msra.mxu0 0
        %1391 = vmatprep.subr.bf16.mxu0 0
        %1392 = vmatpush1.bf16.xpose.msra.mxu0 0
        %1393 = vmatprep.subr.bf16.mxu0 0
        %1394 = vmatpush1.bf16.xpose.msra.mxu0 0
        %1395 = vmatprep.subr.bf16.mxu0 0
        %1396 = vmatpush1.bf16.xpose.msra.mxu0 0
        %1397 = vmatprep.subr.bf16.mxu0 0
        %1398 = vmatpush1.bf16.xpose.msra.mxu0 0
        %1399 = vmatprep.subr.bf16.mxu0 0
        %1400 = vmatpush1.bf16.xpose.msra.mxu0 0
        %1401 = vmatprep.subr.bf16.mxu0 0
        %1402 = vmatpush1.bf16.xpose.msra.mxu0 0
        %1403 = vmatprep.subr.bf16.mxu0 0
        %1404 = vmatpush1.bf16.xpose.msra.mxu0 0
        %1405 = vmatprep.subr.bf16.mxu0 0
        %1406 = vmatpush1.bf16.xpose.msra.mxu0 0
        %1407 = vmatprep.subr.bf16.mxu0 0
        %1408 = vmatpush1.bf16.xpose.msra.mxu0 0
        %1409 = vmatprep.subr.bf16.mxu0 0
        %1410 = vmatpush1.bf16.xpose.msra.mxu0 0
        %1411 = vmatprep.mubr.bf16.mxu0 0
        %1412 = vmatmul.mubr.bf16.gmra.mrb[0].mxu0 %v1374
        %v1413 = vpop.f32.mrb[0].mxu0
        %v1414 = vadd.f32 0.0, %v1413
        %v1415 = vpop.f32.mrb[0].mxu0
        %v1416 = vpop.f32.mrb[0].mxu0
        %v1417 = vpop.f32.mrb[0].mxu0
        %1418 = vdwg.mxu0
        %v1420 = vsel %vm1326, %v1316, 0
        %v1423 = vsel %vm1326, %v1320, 0
        %1425 = vmatprep.subr.bf16.mxu0 0
        %1426 = vmatpush1.bf16.xpose.msra.mxu0 %v1423
        %1427 = vmatprep.subr.bf16.mxu0 0
        %1428 = vmatpush1.bf16.xpose.msra.mxu0 0
        %1429 = vmatprep.subr.bf16.mxu0 0
        %1430 = vmatpush1.bf16.xpose.msra.mxu0 0
        %1431 = vmatprep.subr.bf16.mxu0 0
        %1432 = vmatpush1.bf16.xpose.msra.mxu0 0
        %1433 = vmatprep.subr.bf16.mxu0 0
        %1434 = vmatpush1.bf16.xpose.msra.mxu0 0
        %1435 = vmatprep.subr.bf16.mxu0 0
        %1436 = vmatpush1.bf16.xpose.msra.mxu0 0
        %1437 = vmatprep.subr.bf16.mxu0 0
        %1438 = vmatpush1.bf16.xpose.msra.mxu0 0
        %1439 = vmatprep.subr.bf16.mxu0 0
        %1440 = vmatpush1.bf16.xpose.msra.mxu0 0
        %1441 = vmatprep.subr.bf16.mxu0 0
        %1442 = vmatpush1.bf16.xpose.msra.mxu0 0
        %1443 = vmatprep.subr.bf16.mxu0 0
        %1444 = vmatpush1.bf16.xpose.msra.mxu0 0
        %1445 = vmatprep.subr.bf16.mxu0 0
        %1446 = vmatpush1.bf16.xpose.msra.mxu0 0
        %1447 = vmatprep.subr.bf16.mxu0 0
        %1448 = vmatpush1.bf16.xpose.msra.mxu0 0
        %1449 = vmatprep.subr.bf16.mxu0 0
        %1450 = vmatpush1.bf16.xpose.msra.mxu0 0
        %1451 = vmatprep.subr.bf16.mxu0 0
        %1452 = vmatpush1.bf16.xpose.msra.mxu0 0
        %1453 = vmatprep.subr.bf16.mxu0 0
        %1454 = vmatpush1.bf16.xpose.msra.mxu0 0
        %1455 = vmatprep.subr.bf16.mxu0 0
        %1456 = vmatpush1.bf16.xpose.msra.mxu0 0
        %1457 = vmatprep.mubr.bf16.mxu0 0
        %1458 = vmatmul.mubr.bf16.gmra.mrb[0].mxu0 %v1420
        %v1459 = vpop.f32.mrb[0].mxu0
        %v1460 = vadd.f32 0.0, %v1459
        %v1461 = vpop.f32.mrb[0].mxu0
        %v1462 = vpop.f32.mrb[0].mxu0
        %v1463 = vpop.f32.mrb[0].mxu0
        %1464 = vdwg.mxu0
        %v1466 = vsel %vm1326, %v1317, 0
        %v1469 = vsel %vm1326, %v1321, 0
        %1471 = vmatprep.subr.bf16.mxu0 0
        %1472 = vmatpush1.bf16.xpose.msra.mxu0 %v1469
        %1473 = vmatprep.subr.bf16.mxu0 0
        %1474 = vmatpush1.bf16.xpose.msra.mxu0 0
        %1475 = vmatprep.subr.bf16.mxu0 0
        %1476 = vmatpush1.bf16.xpose.msra.mxu0 0
        %1477 = vmatprep.subr.bf16.mxu0 0
        %1478 = vmatpush1.bf16.xpose.msra.mxu0 0
        %1479 = vmatprep.subr.bf16.mxu0 0
        %1480 = vmatpush1.bf16.xpose.msra.mxu0 0
        %1481 = vmatprep.subr.bf16.mxu0 0
        %1482 = vmatpush1.bf16.xpose.msra.mxu0 0
        %1483 = vmatprep.subr.bf16.mxu0 0
        %1484 = vmatpush1.bf16.xpose.msra.mxu0 0
        %1485 = vmatprep.subr.bf16.mxu0 0
        %1486 = vmatpush1.bf16.xpose.msra.mxu0 0
        %1487 = vmatprep.subr.bf16.mxu0 0
        %1488 = vmatpush1.bf16.xpose.msra.mxu0 0
        %1489 = vmatprep.subr.bf16.mxu0 0
        %1490 = vmatpush1.bf16.xpose.msra.mxu0 0
        %1491 = vmatprep.subr.bf16.mxu0 0
        %1492 = vmatpush1.bf16.xpose.msra.mxu0 0
        %1493 = vmatprep.subr.bf16.mxu0 0
        %1494 = vmatpush1.bf16.xpose.msra.mxu0 0
        %1495 = vmatprep.subr.bf16.mxu0 0
        %1496 = vmatpush1.bf16.xpose.msra.mxu0 0
        %1497 = vmatprep.subr.bf16.mxu0 0
        %1498 = vmatpush1.bf16.xpose.msra.mxu0 0
        %1499 = vmatprep.subr.bf16.mxu0 0
        %1500 = vmatpush1.bf16.xpose.msra.mxu0 0
        %1501 = vmatprep.subr.bf16.mxu0 0
        %1502 = vmatpush1.bf16.xpose.msra.mxu0 0
        %1503 = vmatprep.mubr.bf16.mxu0 0
        %1504 = vmatmul.mubr.bf16.gmra.mrb[0].mxu0 %v1466
        %v1505 = vpop.f32.mrb[0].mxu0
        %v1506 = vadd.f32 0.0, %v1505
        %v1507 = vpop.f32.mrb[0].mxu0
        %v1508 = vpop.f32.mrb[0].mxu0
        %v1509 = vpop.f32.mrb[0].mxu0
        %1510 = vdwg.mxu0
        %v1511 = vsel %vm1326, %v1368, -inf
        %1512 = vmax.xlane.f32.xlu0 %v1511
        %v1513 = vpop.xlane.xlu0 %1512
        %v1514 = vsel %vm1326, %v1414, -inf
        %1515 = vmax.xlane.f32.xlu0 %v1514
        %v1516 = vpop.xlane.xlu0 %1515
        %v1517 = vsel %vm1326, %v1460, -inf
        %1518 = vmax.xlane.f32.xlu0 %v1517
        %v1519 = vpop.xlane.xlu0 %1518
        %v1520 = vsel %vm1326, %v1506, -inf
        %1521 = vmax.xlane.f32.xlu0 %v1520
        %v1522 = vpop.xlane.xlu0 %1521
        %v1523 = vsub.f32 %v1368, %v1513
        %v1524 = vsub.f32 %v1414, %v1516
        %v1525 = vsub.f32 %v1460, %v1519
        %v1526 = vsub.f32 %v1506, %v1522
        %v1527 = vmul.f32 %v1523, 1.442695
        %v1528 = vpow.pop %v1527
        %v1529 = vmul.f32 %v1524, 1.442695
        %v1530 = vpow.pop %v1529
        %v1531 = vmul.f32 %v1525, 1.442695
        %v1532 = vpow.pop %v1531
        %v1533 = vmul.f32 %v1526, 1.442695
        %v1534 = vpow.pop %v1533
        %v1535 = vsel %vm1326, %v1528, 0.0
        %1536 = vadd.xlane.f32.xlu0 %v1535
        %v1537 = vpop.xlane.xlu0 %1536
        %v1538 = vsel %vm1326, %v1530, 0.0
        %1539 = vadd.xlane.f32.xlu0 %v1538
        %v1540 = vpop.xlane.xlu0 %1539
        %v1541 = vsel %vm1326, %v1532, 0.0
        %1542 = vadd.xlane.f32.xlu0 %v1541
        %v1543 = vpop.xlane.xlu0 %1542
        %v1544 = vsel %vm1326, %v1534, 0.0
        %1545 = vadd.xlane.f32.xlu0 %v1544
        %v1546 = vpop.xlane.xlu0 %1545
        %v1547 = vpack.c.bf16 %v1528, %v1528
        %v1548 = vpack.c.bf16 %v1530, %v1530
        %v1549 = vpack.c.bf16 %v1532, %v1532
        %v1550 = vpack.c.bf16 %v1534, %v1534
        %v1552 = vsel %vm1326, %v1547, 0
        %vm1554 = vcmask 1043456
        %v1556 = vsel %vm1554, %v1322, 0
        %1558 = vmatprep.subr.bf16.mxu0 0
        %1559 = vmatpush1.bf16.msra.mxu0 %v1556
        %1560 = vmatprep.subr.bf16.mxu0 0
        %1561 = vmatpush1.bf16.msra.mxu0 0
        %1562 = vmatprep.subr.bf16.mxu0 0
        %1563 = vmatpush1.bf16.msra.mxu0 0
        %1564 = vmatprep.subr.bf16.mxu0 0
        %1565 = vmatpush1.bf16.msra.mxu0 0
        %1566 = vmatprep.subr.bf16.mxu0 0
        %1567 = vmatpush1.bf16.msra.mxu0 0
        %1568 = vmatprep.subr.bf16.mxu0 0
        %1569 = vmatpush1.bf16.msra.mxu0 0
        %1570 = vmatprep.subr.bf16.mxu0 0
        %1571 = vmatpush1.bf16.msra.mxu0 0
        %1572 = vmatprep.subr.bf16.mxu0 0
        %1573 = vmatpush1.bf16.msra.mxu0 0
        %1574 = vmatprep.subr.bf16.mxu0 0
        %1575 = vmatpush1.bf16.msra.mxu0 0
        %1576 = vmatprep.subr.bf16.mxu0 0
        %1577 = vmatpush1.bf16.msra.mxu0 0
        %1578 = vmatprep.subr.bf16.mxu0 0
        %1579 = vmatpush1.bf16.msra.mxu0 0
        %1580 = vmatprep.subr.bf16.mxu0 0
        %1581 = vmatpush1.bf16.msra.mxu0 0
        %1582 = vmatprep.subr.bf16.mxu0 0
        %1583 = vmatpush1.bf16.msra.mxu0 0
        %1584 = vmatprep.subr.bf16.mxu0 0
        %1585 = vmatpush1.bf16.msra.mxu0 0
        %1586 = vmatprep.subr.bf16.mxu0 0
        %1587 = vmatpush1.bf16.msra.mxu0 0
        %1588 = vmatprep.subr.bf16.mxu0 0
        %1589 = vmatpush1.bf16.msra.mxu0 0
        %1590 = vmatprep.mubr.bf16.mxu0 0
        %1591 = vmatmul.mubr.bf16.gmra.mrb[0].mxu0 %v1552
        %v1592 = vpop.f32.mrb[0].mxu0
        %v1593 = vadd.f32 0.0, %v1592
        %v1594 = vpop.f32.mrb[0].mxu0
        %v1595 = vpop.f32.mrb[0].mxu0
        %v1596 = vpop.f32.mrb[0].mxu0
        %1597 = vdwg.mxu0
        %v1599 = vsel %vm1326, %v1548, 0
        %v1602 = vsel %vm1554, %v1323, 0
        %1604 = vmatprep.subr.bf16.mxu0 0
        %1605 = vmatpush1.bf16.msra.mxu0 %v1602
        %1606 = vmatprep.subr.bf16.mxu0 0
        %1607 = vmatpush1.bf16.msra.mxu0 0
        %1608 = vmatprep.subr.bf16.mxu0 0
        %1609 = vmatpush1.bf16.msra.mxu0 0
        %1610 = vmatprep.subr.bf16.mxu0 0
        %1611 = vmatpush1.bf16.msra.mxu0 0
        %1612 = vmatprep.subr.bf16.mxu0 0
        %1613 = vmatpush1.bf16.msra.mxu0 0
        %1614 = vmatprep.subr.bf16.mxu0 0
        %1615 = vmatpush1.bf16.msra.mxu0 0
        %1616 = vmatprep.subr.bf16.mxu0 0
        %1617 = vmatpush1.bf16.msra.mxu0 0
        %1618 = vmatprep.subr.bf16.mxu0 0
        %1619 = vmatpush1.bf16.msra.mxu0 0
        %1620 = vmatprep.subr.bf16.mxu0 0
        %1621 = vmatpush1.bf16.msra.mxu0 0
        %1622 = vmatprep.subr.bf16.mxu0 0
        %1623 = vmatpush1.bf16.msra.mxu0 0
        %1624 = vmatprep.subr.bf16.mxu0 0
        %1625 = vmatpush1.bf16.msra.mxu0 0
        %1626 = vmatprep.subr.bf16.mxu0 0
        %1627 = vmatpush1.bf16.msra.mxu0 0
        %1628 = vmatprep.subr.bf16.mxu0 0
        %1629 = vmatpush1.bf16.msra.mxu0 0
        %1630 = vmatprep.subr.bf16.mxu0 0
        %1631 = vmatpush1.bf16.msra.mxu0 0
        %1632 = vmatprep.subr.bf16.mxu0 0
        %1633 = vmatpush1.bf16.msra.mxu0 0
        %1634 = vmatprep.subr.bf16.mxu0 0
        %1635 = vmatpush1.bf16.msra.mxu0 0
        %1636 = vmatprep.mubr.bf16.mxu0 0
        %1637 = vmatmul.mubr.bf16.gmra.mrb[0].mxu0 %v1599
        %v1638 = vpop.f32.mrb[0].mxu0
        %v1639 = vadd.f32 0.0, %v1638
        %v1640 = vpop.f32.mrb[0].mxu0
        %v1641 = vpop.f32.mrb[0].mxu0
        %v1642 = vpop.f32.mrb[0].mxu0
        %1643 = vdwg.mxu0
        %v1645 = vsel %vm1326, %v1549, 0
        %v1648 = vsel %vm1554, %v1324, 0
        %1650 = vmatprep.subr.bf16.mxu0 0
        %1651 = vmatpush1.bf16.msra.mxu0 %v1648
        %1652 = vmatprep.subr.bf16.mxu0 0
        %1653 = vmatpush1.bf16.msra.mxu0 0
        %1654 = vmatprep.subr.bf16.mxu0 0
        %1655 = vmatpush1.bf16.msra.mxu0 0
        %1656 = vmatprep.subr.bf16.mxu0 0
        %1657 = vmatpush1.bf16.msra.mxu0 0
        %1658 = vmatprep.subr.bf16.mxu0 0
        %1659 = vmatpush1.bf16.msra.mxu0 0
        %1660 = vmatprep.subr.bf16.mxu0 0
        %1661 = vmatpush1.bf16.msra.mxu0 0
        %1662 = vmatprep.subr.bf16.mxu0 0
        %1663 = vmatpush1.bf16.msra.mxu0 0
        %1664 = vmatprep.subr.bf16.mxu0 0
        %1665 = vmatpush1.bf16.msra.mxu0 0
        %1666 = vmatprep.subr.bf16.mxu0 0
        %1667 = vmatpush1.bf16.msra.mxu0 0
        %1668 = vmatprep.subr.bf16.mxu0 0
        %1669 = vmatpush1.bf16.msra.mxu0 0
        %1670 = vmatprep.subr.bf16.mxu0 0
        %1671 = vmatpush1.bf16.msra.mxu0 0
        %1672 = vmatprep.subr.bf16.mxu0 0
        %1673 = vmatpush1.bf16.msra.mxu0 0
        %1674 = vmatprep.subr.bf16.mxu0 0
        %1675 = vmatpush1.bf16.msra.mxu0 0
        %1676 = vmatprep.subr.bf16.mxu0 0
        %1677 = vmatpush1.bf16.msra.mxu0 0
        %1678 = vmatprep.subr.bf16.mxu0 0
        %1679 = vmatpush1.bf16.msra.mxu0 0
        %1680 = vmatprep.subr.bf16.mxu0 0
        %1681 = vmatpush1.bf16.msra.mxu0 0
        %1682 = vmatprep.mubr.bf16.mxu0 0
        %1683 = vmatmul.mubr.bf16.gmra.mrb[0].mxu0 %v1645
        %v1684 = vpop.f32.mrb[0].mxu0
        %v1685 = vadd.f32 0.0, %v1684
        %v1686 = vpop.f32.mrb[0].mxu0
        %v1687 = vpop.f32.mrb[0].mxu0
        %v1688 = vpop.f32.mrb[0].mxu0
        %1689 = vdwg.mxu0
        %v1691 = vsel %vm1326, %v1550, 0
        %v1694 = vsel %vm1554, %v1325, 0
        %1696 = vmatprep.subr.bf16.mxu0 0
        %1697 = vmatpush1.bf16.msra.mxu0 %v1694
        %1698 = vmatprep.subr.bf16.mxu0 0
        %1699 = vmatpush1.bf16.msra.mxu0 0
        %1700 = vmatprep.subr.bf16.mxu0 0
        %1701 = vmatpush1.bf16.msra.mxu0 0
        %1702 = vmatprep.subr.bf16.mxu0 0
        %1703 = vmatpush1.bf16.msra.mxu0 0
        %1704 = vmatprep.subr.bf16.mxu0 0
        %1705 = vmatpush1.bf16.msra.mxu0 0
        %1706 = vmatprep.subr.bf16.mxu0 0
        %1707 = vmatpush1.bf16.msra.mxu0 0
        %1708 = vmatprep.subr.bf16.mxu0 0
        %1709 = vmatpush1.bf16.msra.mxu0 0
        %1710 = vmatprep.subr.bf16.mxu0 0
        %1711 = vmatpush1.bf16.msra.mxu0 0
        %1712 = vmatprep.subr.bf16.mxu0 0
        %1713 = vmatpush1.bf16.msra.mxu0 0
        %1714 = vmatprep.subr.bf16.mxu0 0
        %1715 = vmatpush1.bf16.msra.mxu0 0
        %1716 = vmatprep.subr.bf16.mxu0 0
        %1717 = vmatpush1.bf16.msra.mxu0 0
        %1718 = vmatprep.subr.bf16.mxu0 0
        %1719 = vmatpush1.bf16.msra.mxu0 0
        %1720 = vmatprep.subr.bf16.mxu0 0
        %1721 = vmatpush1.bf16.msra.mxu0 0
        %1722 = vmatprep.subr.bf16.mxu0 0
        %1723 = vmatpush1.bf16.msra.mxu0 0
        %1724 = vmatprep.subr.bf16.mxu0 0
        %1725 = vmatpush1.bf16.msra.mxu0 0
        %1726 = vmatprep.subr.bf16.mxu0 0
        %1727 = vmatpush1.bf16.msra.mxu0 0
        %1728 = vmatprep.mubr.bf16.mxu0 0
        %1729 = vmatmul.mubr.bf16.gmra.mrb[0].mxu0 %v1691
        %v1730 = vpop.f32.mrb[0].mxu0
        %v1731 = vadd.f32 0.0, %v1730
        %v1732 = vpop.f32.mrb[0].mxu0
        %v1733 = vpop.f32.mrb[0].mxu0
        %v1734 = vpop.f32.mrb[0].mxu0
        %1735 = vdwg.mxu0
        %v1736 = vrcp.pop %v1537
        %v1737 = vrcp.pop %v1540
        %v1738 = vrcp.pop %v1543
        %v1739 = vrcp.pop %v1546
        %v1740 = vmul.f32 %v1593, %v1736
        %v1741 = vmul.f32 %v1639, %v1737
        %v1742 = vmul.f32 %v1685, %v1738
        %v1743 = vmul.f32 %v1731, %v1739
        %v1744 = vcombine.low %v1740, %v1742
        %v1745 = vcombine.high %v1740, %v1742
        %v1747 = vunpack.c.l.s4 1983009808
        %v1748 = vunpack.c.0.s8 %v1747
        %v1749 = vlaneseq
        %v1750 = vshrl.u32 %v1749, 7
        %v1751 = vsub.s32 %v1748, %v1750
        %v1752 = vrot.slane %v1744, %v1751
        %v1754 = vunpack.c.l.s4 1983009808
        %v1755 = vunpack.c.0.s8 %v1754
        %v1756 = vlaneseq
        %v1757 = vshrl.u32 %v1756, 7
        %v1758 = vsub.s32 %v1755, %v1757
        %v1759 = vrot.slane %v1745, %v1758
        %v1760 = vcombine.low %v1741, %v1743
        %v1761 = vcombine.high %v1741, %v1743
        %v1763 = vunpack.c.l.s4 1983009808
        %v1764 = vunpack.c.0.s8 %v1763
        %v1765 = vlaneseq
        %v1766 = vshrl.u32 %v1765, 7
        %v1767 = vsub.s32 %v1764, %v1766
        %v1768 = vrot.slane %v1760, %v1767
        %v1770 = vunpack.c.l.s4 1983009808
        %v1771 = vunpack.c.0.s8 %v1770
        %v1772 = vlaneseq
        %v1773 = vshrl.u32 %v1772, 7
        %v1774 = vsub.s32 %v1771, %v1773
        %v1775 = vrot.slane %v1761, %v1774
        %v1776 = vcombine.low %v1752, %v1768
        %v1777 = vcombine.high %v1752, %v1768
        %v1779 = vunpack.c.l.s4 1934713408
        %v1780 = vunpack.c.0.s8 %v1779
        %v1781 = vlaneseq
        %v1782 = vshrl.u32 %v1781, 7
        %v1783 = vsub.s32 %v1780, %v1782
        %v1784 = vrot.slane %v1776, %v1783
        %v1786 = vunpack.c.l.s4 1934713408
        %v1787 = vunpack.c.0.s8 %v1786
        %v1788 = vlaneseq
        %v1789 = vshrl.u32 %v1788, 7
        %v1790 = vsub.s32 %v1787, %v1789
        %v1791 = vrot.slane %v1777, %v1790
        %v1792 = vcombine.low %v1759, %v1775
        %v1793 = vcombine.high %v1759, %v1775
        %v1795 = vunpack.c.l.s4 1934713408
        %v1796 = vunpack.c.0.s8 %v1795
        %v1797 = vlaneseq
        %v1798 = vshrl.u32 %v1797, 7
        %v1799 = vsub.s32 %v1796, %v1798
        %v1800 = vrot.slane %v1792, %v1799
        %v1802 = vunpack.c.l.s4 1934713408
        %v1803 = vunpack.c.0.s8 %v1802
        %v1804 = vlaneseq
        %v1805 = vshrl.u32 %v1804, 7
        %v1806 = vsub.s32 %v1803, %v1805
        %v1807 = vrot.slane %v1793, %v1806
        %v1808 = vcombine.high %v1784, 0.0
        %v1809 = vcombine.high %v1791, 0.0
        %v1810 = vcombine.high %v1800, 0.0
        %v1811 = vcombine.high %v1807, 0.0
        %v1812 = vcombine.low %v1784, %v1791
        %v1814 = vunpack.c.l.s4 1983009808
        %v1815 = vunpack.c.0.s8 %v1814
        %v1816 = vlaneseq
        %v1817 = vshrl.u32 %v1816, 7
        %v1818 = vsub.s32 %v1815, %v1817
        %v1819 = vrot.slane %v1812, %v1818
        %v1820 = vcombine.low %v1808, %v1809
        %v1822 = vunpack.c.l.s4 1983009808
        %v1823 = vunpack.c.0.s8 %v1822
        %v1824 = vlaneseq
        %v1825 = vshrl.u32 %v1824, 7
        %v1826 = vsub.s32 %v1823, %v1825
        %v1827 = vrot.slane %v1820, %v1826
        %v1828 = vcombine.low %v1800, %v1807
        %v1830 = vunpack.c.l.s4 1983009808
        %v1831 = vunpack.c.0.s8 %v1830
        %v1832 = vlaneseq
        %v1833 = vshrl.u32 %v1832, 7
        %v1834 = vsub.s32 %v1831, %v1833
        %v1835 = vrot.slane %v1828, %v1834
        %v1836 = vcombine.low %v1810, %v1811
        %v1838 = vunpack.c.l.s4 1983009808
        %v1839 = vunpack.c.0.s8 %v1838
        %v1840 = vlaneseq
        %v1841 = vshrl.u32 %v1840, 7
        %v1842 = vsub.s32 %v1839, %v1841
        %v1843 = vrot.slane %v1836, %v1842
        %v1844 = vcombine.low %v1819, %v1827
        %v1845 = vcombine.high %v1819, %v1827
        %v1847 = vunpack.c.l.s4 1934713408
        %v1848 = vunpack.c.0.s8 %v1847
        %v1849 = vlaneseq
        %v1850 = vshrl.u32 %v1849, 7
        %v1851 = vsub.s32 %v1848, %v1850
        %v1852 = vrot.slane %v1844, %v1851
        %v1854 = vunpack.c.l.s4 1934713408
        %v1855 = vunpack.c.0.s8 %v1854
        %v1856 = vlaneseq
        %v1857 = vshrl.u32 %v1856, 7
        %v1858 = vsub.s32 %v1855, %v1857
        %v1859 = vrot.slane %v1845, %v1858
        %v1860 = vcombine.low %v1835, %v1843
        %v1861 = vcombine.high %v1835, %v1843
        %v1863 = vunpack.c.l.s4 1934713408
        %v1864 = vunpack.c.0.s8 %v1863
        %v1865 = vlaneseq
        %v1866 = vshrl.u32 %v1865, 7
        %v1867 = vsub.s32 %v1864, %v1866
        %v1868 = vrot.slane %v1860, %v1867
        %v1870 = vunpack.c.l.s4 1934713408
        %v1871 = vunpack.c.0.s8 %v1870
        %v1872 = vlaneseq
        %v1873 = vshrl.u32 %v1872, 7
        %v1874 = vsub.s32 %v1871, %v1873
        %v1875 = vrot.slane %v1861, %v1874
        %v1876 = vcombine.low %v1852, %v1868
        %v1877 = vcombine.high %v1852, %v1868
        %v1878 = vcombine.low %v1859, %v1875
        %v1879 = vcombine.high %v1859, %v1875
        %1881 = vrot.lane.b32.xlu0 %v1877, 8
        %v1882 = vpop.permute.xlu0 %1881
        %1885 = vrot.lane.b32.xlu0 %v1878, 16
        %v1886 = vpop.permute.xlu0 %1885
        %1889 = vrot.lane.b32.xlu0 %v1879, 24
        %v1890 = vpop.permute.xlu0 %1889
        %v1892 = vsel %vm1326, %v1876, %v1882
        %vm1893 = vcmask 130048
        %v1894 = vsel %vm1893, %v1892, %v1886
        %vm1895 = vcmask 195584
        %v1896 = vsel %vm1895, %v1894, %v1890
        %v1897 = vpack.c.bf16 %v1896, %v1896
        %v1898 = vlaneseq
        %v1899 = vshrl.u32 %v1898, 7
        %v1900 = vsub.s32 3, %v1899
        %v1901 = vrot.slane %v666, %v1900
        %v1906 = vunpack.c.l.b16 %v633
        %v1907 = vunpack.c.l.b16 %v634
        %v1908 = vunpack.c.l.b16 %v635
        %v1909 = vunpack.c.l.b16 %v636
        %v1910 = vpack.c.b16 %v1907, %v1906
        %v1911 = vpack.c.b16 %v1909, %v1908
        %v1915 = vsel %vm674, %v1897, 0
        %1917 = vmatprep.subr.bf16.mxu0 0
        %1918 = vmatpush1.bf16.msra.mxu0 %v1910
        %1919 = vmatprep.subr.bf16.mxu0 0
        %1920 = vmatpush1.bf16.msra.mxu0 %v1911
        %1921 = vmatprep.subr.bf16.mxu0 0
        %1922 = vmatpush1.bf16.msra.mxu0 0
        %1923 = vmatprep.subr.bf16.mxu0 0
        %1924 = vmatpush1.bf16.msra.mxu0 0
        %1925 = vmatprep.subr.bf16.mxu0 0
        %1926 = vmatpush1.bf16.msra.mxu0 0
        %1927 = vmatprep.subr.bf16.mxu0 0
        %1928 = vmatpush1.bf16.msra.mxu0 0
        %1929 = vmatprep.subr.bf16.mxu0 0
        %1930 = vmatpush1.bf16.msra.mxu0 0
        %1931 = vmatprep.subr.bf16.mxu0 0
        %1932 = vmatpush1.bf16.msra.mxu0 0
        %1933 = vmatprep.subr.bf16.mxu0 0
        %1934 = vmatpush1.bf16.msra.mxu0 0
        %1935 = vmatprep.subr.bf16.mxu0 0
        %1936 = vmatpush1.bf16.msra.mxu0 0
        %1937 = vmatprep.subr.bf16.mxu0 0
        %1938 = vmatpush1.bf16.msra.mxu0 0
        %1939 = vmatprep.subr.bf16.mxu0 0
        %1940 = vmatpush1.bf16.msra.mxu0 0
        %1941 = vmatprep.subr.bf16.mxu0 0
        %1942 = vmatpush1.bf16.msra.mxu0 0
        %1943 = vmatprep.subr.bf16.mxu0 0
        %1944 = vmatpush1.bf16.msra.mxu0 0
        %1945 = vmatprep.subr.bf16.mxu0 0
        %1946 = vmatpush1.bf16.msra.mxu0 0
        %1947 = vmatprep.subr.bf16.mxu0 0
        %1948 = vmatpush1.bf16.msra.mxu0 0
        %1949 = vmatprep.mubr.bf16.mxu0 0
        %1950 = vmatmul.mubr.bf16.gmra.mrb[0].mxu0 %v1915
        %v1951 = vpop.f32.mrb[0].mxu0
        %v1952 = vadd.f32 %v1901, %v1951
        %v1953 = vpop.f32.mrb[0].mxu0
        %v1954 = vpop.f32.mrb[0].mxu0
        %v1955 = vpop.f32.mrb[0].mxu0
        %1956 = vdwg.mxu0
        %v1957 = vadd.f32 %v668, %v1952
        %v1958 = vsel %vm674, %v1957, 0.0
        %1959 = vadd.xlane.f32.xlu0 %v1958
        %v1960 = vpop.xlane.xlu0 %1959
        %v1961 = vmul.f32 %v1960, %v678
        %v1962 = vsub.f32 %v1957, %v1961
        %v1963 = vmul.f32 %v1962, %v1962
        %v1964 = vsel %vm674, %v1963, 0.0
        %1965 = vadd.xlane.f32.xlu0 %v1964
        %v1966 = vpop.xlane.xlu0 %1965
        %v1967 = vmul.f32 %v1966, %v678
        %v1968 = vadd.f32 %v1967, 1e-05
        %v1969 = vrsqrt.pop %v1968
        %v1970 = vmul.f32 %v1962, %v1969
        %v1971 = vlaneseq
        %v1972 = vshrl.u32 %v1971, 7
        %v1973 = vsub.s32 2, %v1972
        %v1974 = vrot.slane %v667, %v1973
        %v1975 = vmul.f32 %v1970, %v1974
        %v1976 = vlaneseq
        %v1977 = vshrl.u32 %v1976, 7
        %v1978 = vsub.s32 3, %v1977
        %v1979 = vrot.slane %v667, %v1978
        %v1980 = vadd.f32 %v1975, %v1979
        %v1981 = vadd.f32 %v1980, %v673
        %v1982 = vpack.c.bf16 %v1981, %v1981
        %v1983 = vlaneseq
        %v1984 = vshrl.u32 %v1983, 7
        %v1985 = vsub.s32 4, %v1984
        %v1986 = vrot.slane %v666, %v1985
        %v1991 = vunpack.c.l.b16 %v637
        %v1992 = vunpack.c.l.b16 %v638
        %v1993 = vunpack.c.l.b16 %v639
        %v1994 = vunpack.c.l.b16 %v640
        %v1995 = vpack.c.b16 %v1992, %v1991
        %v1996 = vpack.c.b16 %v1994, %v1993
        %v2000 = vsel %vm674, %v1982, 0
        %2002 = vmatprep.subr.bf16.mxu0 0
        %2003 = vmatpush1.bf16.msra.mxu0 %v1995
        %2004 = vmatprep.subr.bf16.mxu0 0
        %2005 = vmatpush1.bf16.msra.mxu0 %v1996
        %2006 = vmatprep.subr.bf16.mxu0 0
        %2007 = vmatpush1.bf16.msra.mxu0 0
        %2008 = vmatprep.subr.bf16.mxu0 0
        %2009 = vmatpush1.bf16.msra.mxu0 0
        %2010 = vmatprep.subr.bf16.mxu0 0
        %2011 = vmatpush1.bf16.msra.mxu0 0
        %2012 = vmatprep.subr.bf16.mxu0 0
        %2013 = vmatpush1.bf16.msra.mxu0 0
        %2014 = vmatprep.subr.bf16.mxu0 0
        %2015 = vmatpush1.bf16.msra.mxu0 0
        %2016 = vmatprep.subr.bf16.mxu0 0
        %2017 = vmatpush1.bf16.msra.mxu0 0
        %2018 = vmatprep.subr.bf16.mxu0 0
        %2019 = vmatpush1.bf16.msra.mxu0 0
        %2020 = vmatprep.subr.bf16.mxu0 0
        %2021 = vmatpush1.bf16.msra.mxu0 0
        %2022 = vmatprep.subr.bf16.mxu0 0
        %2023 = vmatpush1.bf16.msra.mxu0 0
        %2024 = vmatprep.subr.bf16.mxu0 0
        %2025 = vmatpush1.bf16.msra.mxu0 0
        %2026 = vmatprep.subr.bf16.mxu0 0
        %2027 = vmatpush1.bf16.msra.mxu0 0
        %2028 = vmatprep.subr.bf16.mxu0 0
        %2029 = vmatpush1.bf16.msra.mxu0 0
        %2030 = vmatprep.subr.bf16.mxu0 0
        %2031 = vmatpush1.bf16.msra.mxu0 0
        %2032 = vmatprep.subr.bf16.mxu0 0
        %2033 = vmatpush1.bf16.msra.mxu0 0
        %2034 = vmatprep.mubr.bf16.mxu0 0
        %2035 = vmatmul.mubr.bf16.gmra.mrb[0].mxu0 %v2000
        %v2036 = vpop.f32.mrb[0].mxu0
        %v2037 = vadd.f32 %v1986, %v2036
        %v2038 = vpop.f32.mrb[0].mxu0
        %v2039 = vpop.f32.mrb[0].mxu0
        %v2040 = vpop.f32.mrb[0].mxu0
        %2041 = vdwg.mxu0
        %v2042 = vlaneseq
        %v2043 = vshrl.u32 %v2042, 7
        %v2044 = vsub.s32 5, %v2043
        %v2045 = vrot.slane %v666, %v2044
        %v2048 = vunpack.c.l.b16 %v671
        %v2049 = vunpack.c.l.b16 %v672
        %v2050 = vpack.c.b16 %v2049, %v2048
        %v2055 = vunpack.c.l.b16 %v641
        %v2056 = vunpack.c.l.b16 %v642
        %v2057 = vunpack.c.l.b16 %v643
        %v2058 = vunpack.c.l.b16 %v644
        %v2059 = vpack.c.b16 %v2056, %v2055
        %v2060 = vpack.c.b16 %v2058, %v2057
        %v2064 = vsel %vm674, %v2050, 0
        %2066 = vmatprep.subr.bf16.mxu0 0
        %2067 = vmatpush1.bf16.msra.mxu0 %v2059
        %2068 = vmatprep.subr.bf16.mxu0 0
        %2069 = vmatpush1.bf16.msra.mxu0 %v2060
        %2070 = vmatprep.subr.bf16.mxu0 0
        %2071 = vmatpush1.bf16.msra.mxu0 0
        %2072 = vmatprep.subr.bf16.mxu0 0
        %2073 = vmatpush1.bf16.msra.mxu0 0
        %2074 = vmatprep.subr.bf16.mxu0 0
        %2075 = vmatpush1.bf16.msra.mxu0 0
        %2076 = vmatprep.subr.bf16.mxu0 0
        %2077 = vmatpush1.bf16.msra.mxu0 0
        %2078 = vmatprep.subr.bf16.mxu0 0
        %2079 = vmatpush1.bf16.msra.mxu0 0
        %2080 = vmatprep.subr.bf16.mxu0 0
        %2081 = vmatpush1.bf16.msra.mxu0 0
        %2082 = vmatprep.subr.bf16.mxu0 0
        %2083 = vmatpush1.bf16.msra.mxu0 0
        %2084 = vmatprep.subr.bf16.mxu0 0
        %2085 = vmatpush1.bf16.msra.mxu0 0
        %2086 = vmatprep.subr.bf16.mxu0 0
        %2087 = vmatpush1.bf16.msra.mxu0 0
        %2088 = vmatprep.subr.bf16.mxu0 0
        %2089 = vmatpush1.bf16.msra.mxu0 0
        %2090 = vmatprep.subr.bf16.mxu0 0
        %2091 = vmatpush1.bf16.msra.mxu0 0
        %2092 = vmatprep.subr.bf16.mxu0 0
        %2093 = vmatpush1.bf16.msra.mxu0 0
        %2094 = vmatprep.subr.bf16.mxu0 0
        %2095 = vmatpush1.bf16.msra.mxu0 0
        %2096 = vmatprep.subr.bf16.mxu0 0
        %2097 = vmatpush1.bf16.msra.mxu0 0
        %2098 = vmatprep.mubr.bf16.mxu0 0
        %2099 = vmatmul.mubr.bf16.gmra.mrb[0].mxu0 %v2064
        %v2100 = vpop.f32.mrb[0].mxu0
        %v2101 = vadd.f32 %v2045, %v2100
        %v2102 = vpop.f32.mrb[0].mxu0
        %v2103 = vpop.f32.mrb[0].mxu0
        %v2104 = vadd.f32 %v2045, %v2103
        %v2105 = vpop.f32.mrb[0].mxu0
        %2106 = vdwg.mxu0
        %v2107 = vlaneseq
        %v2108 = vshrl.u32 %v2107, 7
        %v2109 = vsub.s32 6, %v2108
        %v2110 = vrot.slane %v666, %v2109
        %v2113 = vunpack.c.l.b16 %v669
        %v2114 = vunpack.c.l.b16 %v670
        %v2115 = vpack.c.b16 %v2114, %v2113
        %v2120 = vunpack.c.l.b16 %v645
        %v2121 = vunpack.c.l.b16 %v646
        %v2122 = vunpack.c.l.b16 %v647
        %v2123 = vunpack.c.l.b16 %v648
        %v2124 = vpack.c.b16 %v2121, %v2120
        %v2125 = vpack.c.b16 %v2123, %v2122
        %v2129 = vsel %vm674, %v2115, 0
        %2131 = vmatprep.subr.bf16.mxu0 0
        %2132 = vmatpush1.bf16.msra.mxu0 %v2124
        %2133 = vmatprep.subr.bf16.mxu0 0
        %2134 = vmatpush1.bf16.msra.mxu0 %v2125
        %2135 = vmatprep.subr.bf16.mxu0 0
        %2136 = vmatpush1.bf16.msra.mxu0 0
        %2137 = vmatprep.subr.bf16.mxu0 0
        %2138 = vmatpush1.bf16.msra.mxu0 0
        %2139 = vmatprep.subr.bf16.mxu0 0
        %2140 = vmatpush1.bf16.msra.mxu0 0
        %2141 = vmatprep.subr.bf16.mxu0 0
        %2142 = vmatpush1.bf16.msra.mxu0 0
        %2143 = vmatprep.subr.bf16.mxu0 0
        %2144 = vmatpush1.bf16.msra.mxu0 0
        %2145 = vmatprep.subr.bf16.mxu0 0
        %2146 = vmatpush1.bf16.msra.mxu0 0
        %2147 = vmatprep.subr.bf16.mxu0 0
        %2148 = vmatpush1.bf16.msra.mxu0 0
        %2149 = vmatprep.subr.bf16.mxu0 0
        %2150 = vmatpush1.bf16.msra.mxu0 0
        %2151 = vmatprep.subr.bf16.mxu0 0
        %2152 = vmatpush1.bf16.msra.mxu0 0
        %2153 = vmatprep.subr.bf16.mxu0 0
        %2154 = vmatpush1.bf16.msra.mxu0 0
        %2155 = vmatprep.subr.bf16.mxu0 0
        %2156 = vmatpush1.bf16.msra.mxu0 0
        %2157 = vmatprep.subr.bf16.mxu0 0
        %2158 = vmatpush1.bf16.msra.mxu0 0
        %2159 = vmatprep.subr.bf16.mxu0 0
        %2160 = vmatpush1.bf16.msra.mxu0 0
        %2161 = vmatprep.subr.bf16.mxu0 0
        %2162 = vmatpush1.bf16.msra.mxu0 0
        %2163 = vmatprep.mubr.bf16.mxu0 0
        %2164 = vmatmul.mubr.bf16.gmra.mrb[0].mxu0 %v2129
        %v2165 = vpop.f32.mrb[0].mxu0
        %v2166 = vadd.f32 %v2110, %v2165
        %v2167 = vpop.f32.mrb[0].mxu0
        %v2168 = vpop.f32.mrb[0].mxu0
        %v2169 = vadd.f32 %v2110, %v2168
        %v2170 = vpop.f32.mrb[0].mxu0
        %2171 = vdwg.mxu0
        %2173 = vrot.lane.b32.xlu0 %v2037, 120
        %v2174 = vpop.permute.xlu0 %2173
        %2176 = vrot.lane.b32.xlu0 %v2037, 112
        %v2177 = vpop.permute.xlu0 %2176
        %2179 = vrot.lane.b32.xlu0 %v2037, 104
        %v2180 = vpop.permute.xlu0 %2179
        %v2182 = vcombine.low %v2037, %v2177
        %v2183 = vcombine.high %v2037, %v2177
        %v2185 = vunpack.c.l.s4 1983009808
        %v2186 = vunpack.c.0.s8 %v2185
        %v2187 = vlaneseq
        %v2188 = vshrl.u32 %v2187, 7
        %v2189 = vsub.s32 %v2186, %v2188
        %v2190 = vrot.slane %v2182, %v2189
        %v2192 = vunpack.c.l.s4 1983009808
        %v2193 = vunpack.c.0.s8 %v2192
        %v2194 = vlaneseq
        %v2195 = vshrl.u32 %v2194, 7
        %v2196 = vsub.s32 %v2193, %v2195
        %v2197 = vrot.slane %v2183, %v2196
        %v2198 = vcombine.low %v2174, %v2180
        %v2199 = vcombine.high %v2174, %v2180
        %v2201 = vunpack.c.l.s4 1983009808
        %v2202 = vunpack.c.0.s8 %v2201
        %v2203 = vlaneseq
        %v2204 = vshrl.u32 %v2203, 7
        %v2205 = vsub.s32 %v2202, %v2204
        %v2206 = vrot.slane %v2198, %v2205
        %v2208 = vunpack.c.l.s4 1983009808
        %v2209 = vunpack.c.0.s8 %v2208
        %v2210 = vlaneseq
        %v2211 = vshrl.u32 %v2210, 7
        %v2212 = vsub.s32 %v2209, %v2211
        %v2213 = vrot.slane %v2199, %v2212
        %v2214 = vcombine.low %v2190, %v2206
        %v2215 = vcombine.high %v2190, %v2206
        %v2217 = vunpack.c.l.s4 1934713408
        %v2218 = vunpack.c.0.s8 %v2217
        %v2219 = vlaneseq
        %v2220 = vshrl.u32 %v2219, 7
        %v2221 = vsub.s32 %v2218, %v2220
        %v2222 = vrot.slane %v2214, %v2221
        %v2224 = vunpack.c.l.s4 1934713408
        %v2225 = vunpack.c.0.s8 %v2224
        %v2226 = vlaneseq
        %v2227 = vshrl.u32 %v2226, 7
        %v2228 = vsub.s32 %v2225, %v2227
        %v2229 = vrot.slane %v2215, %v2228
        %v2230 = vcombine.low %v2197, %v2213
        %v2231 = vcombine.high %v2197, %v2213
        %v2233 = vunpack.c.l.s4 1934713408
        %v2234 = vunpack.c.0.s8 %v2233
        %v2235 = vlaneseq
        %v2236 = vshrl.u32 %v2235, 7
        %v2237 = vsub.s32 %v2234, %v2236
        %v2238 = vrot.slane %v2230, %v2237
        %v2240 = vunpack.c.l.s4 1934713408
        %v2241 = vunpack.c.0.s8 %v2240
        %v2242 = vlaneseq
        %v2243 = vshrl.u32 %v2242, 7
        %v2244 = vsub.s32 %v2241, %v2243
        %v2245 = vrot.slane %v2231, %v2244
        %v2246 = vcombine.high %v2222, 0.0
        %v2247 = vcombine.high %v2229, 0.0
        %v2248 = vcombine.high %v2238, 0.0
        %v2249 = vcombine.high %v2245, 0.0
        %v2250 = vcombine.low %v2222, %v2229
        %v2252 = vunpack.c.l.s4 1983009808
        %v2253 = vunpack.c.0.s8 %v2252
        %v2254 = vlaneseq
        %v2255 = vshrl.u32 %v2254, 7
        %v2256 = vsub.s32 %v2253, %v2255
        %v2257 = vrot.slane %v2250, %v2256
        %v2258 = vcombine.low %v2246, %v2247
        %v2260 = vunpack.c.l.s4 1983009808
        %v2261 = vunpack.c.0.s8 %v2260
        %v2262 = vlaneseq
        %v2263 = vshrl.u32 %v2262, 7
        %v2264 = vsub.s32 %v2261, %v2263
        %v2265 = vrot.slane %v2258, %v2264
        %v2266 = vcombine.low %v2238, %v2245
        %v2268 = vunpack.c.l.s4 1983009808
        %v2269 = vunpack.c.0.s8 %v2268
        %v2270 = vlaneseq
        %v2271 = vshrl.u32 %v2270, 7
        %v2272 = vsub.s32 %v2269, %v2271
        %v2273 = vrot.slane %v2266, %v2272
        %v2274 = vcombine.low %v2248, %v2249
        %v2276 = vunpack.c.l.s4 1983009808
        %v2277 = vunpack.c.0.s8 %v2276
        %v2278 = vlaneseq
        %v2279 = vshrl.u32 %v2278, 7
        %v2280 = vsub.s32 %v2277, %v2279
        %v2281 = vrot.slane %v2274, %v2280
        %v2282 = vcombine.low %v2257, %v2265
        %v2283 = vcombine.high %v2257, %v2265
        %v2285 = vunpack.c.l.s4 1934713408
        %v2286 = vunpack.c.0.s8 %v2285
        %v2287 = vlaneseq
        %v2288 = vshrl.u32 %v2287, 7
        %v2289 = vsub.s32 %v2286, %v2288
        %v2290 = vrot.slane %v2282, %v2289
        %v2292 = vunpack.c.l.s4 1934713408
        %v2293 = vunpack.c.0.s8 %v2292
        %v2294 = vlaneseq
        %v2295 = vshrl.u32 %v2294, 7
        %v2296 = vsub.s32 %v2293, %v2295
        %v2297 = vrot.slane %v2283, %v2296
        %v2298 = vcombine.low %v2273, %v2281
        %v2299 = vcombine.high %v2273, %v2281
        %v2301 = vunpack.c.l.s4 1934713408
        %v2302 = vunpack.c.0.s8 %v2301
        %v2303 = vlaneseq
        %v2304 = vshrl.u32 %v2303, 7
        %v2305 = vsub.s32 %v2302, %v2304
        %v2306 = vrot.slane %v2298, %v2305
        %v2308 = vunpack.c.l.s4 1934713408
        %v2309 = vunpack.c.0.s8 %v2308
        %v2310 = vlaneseq
        %v2311 = vshrl.u32 %v2310, 7
        %v2312 = vsub.s32 %v2309, %v2311
        %v2313 = vrot.slane %v2299, %v2312
        %v2314 = vcombine.low %v2290, %v2306
        %v2315 = vcombine.high %v2290, %v2306
        %v2316 = vcombine.low %v2297, %v2313
        %v2317 = vcombine.high %v2297, %v2313
        %2320 = vrot.lane.b32.xlu0 %v2101, 120
        %v2321 = vpop.permute.xlu0 %2320
        %2322 = vrot.lane.b32.xlu0 %v2104, 120
        %v2323 = vpop.permute.xlu0 %2322
        %2326 = vrot.lane.b32.xlu0 %v2101, 112
        %v2327 = vpop.permute.xlu0 %2326
        %2328 = vrot.lane.b32.xlu0 %v2104, 112
        %v2329 = vpop.permute.xlu0 %2328
        %2332 = vrot.lane.b32.xlu0 %v2101, 104
        %v2333 = vpop.permute.xlu0 %2332
        %2334 = vrot.lane.b32.xlu0 %v2104, 104
        %v2335 = vpop.permute.xlu0 %2334
        %v2338 = vcombine.low %v2101, %v2327
        %v2339 = vcombine.high %v2101, %v2327
        %v2341 = vunpack.c.l.s4 1983009808
        %v2342 = vunpack.c.0.s8 %v2341
        %v2343 = vlaneseq
        %v2344 = vshrl.u32 %v2343, 7
        %v2345 = vsub.s32 %v2342, %v2344
        %v2346 = vrot.slane %v2338, %v2345
        %v2348 = vunpack.c.l.s4 1983009808
        %v2349 = vunpack.c.0.s8 %v2348
        %v2350 = vlaneseq
        %v2351 = vshrl.u32 %v2350, 7
        %v2352 = vsub.s32 %v2349, %v2351
        %v2353 = vrot.slane %v2339, %v2352
        %v2354 = vcombine.low %v2321, %v2333
        %v2355 = vcombine.high %v2321, %v2333
        %v2357 = vunpack.c.l.s4 1983009808
        %v2358 = vunpack.c.0.s8 %v2357
        %v2359 = vlaneseq
        %v2360 = vshrl.u32 %v2359, 7
        %v2361 = vsub.s32 %v2358, %v2360
        %v2362 = vrot.slane %v2354, %v2361
        %v2364 = vunpack.c.l.s4 1983009808
        %v2365 = vunpack.c.0.s8 %v2364
        %v2366 = vlaneseq
        %v2367 = vshrl.u32 %v2366, 7
        %v2368 = vsub.s32 %v2365, %v2367
        %v2369 = vrot.slane %v2355, %v2368
        %v2370 = vcombine.low %v2346, %v2362
        %v2371 = vcombine.high %v2346, %v2362
        %v2373 = vunpack.c.l.s4 1934713408
        %v2374 = vunpack.c.0.s8 %v2373
        %v2375 = vlaneseq
        %v2376 = vshrl.u32 %v2375, 7
        %v2377 = vsub.s32 %v2374, %v2376
        %v2378 = vrot.slane %v2370, %v2377
        %v2380 = vunpack.c.l.s4 1934713408
        %v2381 = vunpack.c.0.s8 %v2380
        %v2382 = vlaneseq
        %v2383 = vshrl.u32 %v2382, 7
        %v2384 = vsub.s32 %v2381, %v2383
        %v2385 = vrot.slane %v2371, %v2384
        %v2386 = vcombine.low %v2353, %v2369
        %v2387 = vcombine.high %v2353, %v2369
        %v2389 = vunpack.c.l.s4 1934713408
        %v2390 = vunpack.c.0.s8 %v2389
        %v2391 = vlaneseq
        %v2392 = vshrl.u32 %v2391, 7
        %v2393 = vsub.s32 %v2390, %v2392
        %v2394 = vrot.slane %v2386, %v2393
        %v2396 = vunpack.c.l.s4 1934713408
        %v2397 = vunpack.c.0.s8 %v2396
        %v2398 = vlaneseq
        %v2399 = vshrl.u32 %v2398, 7
        %v2400 = vsub.s32 %v2397, %v2399
        %v2401 = vrot.slane %v2387, %v2400
        %v2402 = vcombine.high %v2378, 0.0
        %v2403 = vcombine.high %v2385, 0.0
        %v2404 = vcombine.high %v2394, 0.0
        %v2405 = vcombine.high %v2401, 0.0
        %v2406 = vcombine.low %v2104, %v2329
        %v2407 = vcombine.high %v2104, %v2329
        %v2409 = vunpack.c.l.s4 1983009808
        %v2410 = vunpack.c.0.s8 %v2409
        %v2411 = vlaneseq
        %v2412 = vshrl.u32 %v2411, 7
        %v2413 = vsub.s32 %v2410, %v2412
        %v2414 = vrot.slane %v2406, %v2413
        %v2416 = vunpack.c.l.s4 1983009808
        %v2417 = vunpack.c.0.s8 %v2416
        %v2418 = vlaneseq
        %v2419 = vshrl.u32 %v2418, 7
        %v2420 = vsub.s32 %v2417, %v2419
        %v2421 = vrot.slane %v2407, %v2420
        %v2422 = vcombine.low %v2323, %v2335
        %v2423 = vcombine.high %v2323, %v2335
        %v2425 = vunpack.c.l.s4 1983009808
        %v2426 = vunpack.c.0.s8 %v2425
        %v2427 = vlaneseq
        %v2428 = vshrl.u32 %v2427, 7
        %v2429 = vsub.s32 %v2426, %v2428
        %v2430 = vrot.slane %v2422, %v2429
        %v2432 = vunpack.c.l.s4 1983009808
        %v2433 = vunpack.c.0.s8 %v2432
        %v2434 = vlaneseq
        %v2435 = vshrl.u32 %v2434, 7
        %v2436 = vsub.s32 %v2433, %v2435
        %v2437 = vrot.slane %v2423, %v2436
        %v2438 = vcombine.low %v2414, %v2430
        %v2439 = vcombine.high %v2414, %v2430
        %v2441 = vunpack.c.l.s4 1934713408
        %v2442 = vunpack.c.0.s8 %v2441
        %v2443 = vlaneseq
        %v2444 = vshrl.u32 %v2443, 7
        %v2445 = vsub.s32 %v2442, %v2444
        %v2446 = vrot.slane %v2438, %v2445
        %v2448 = vunpack.c.l.s4 1934713408
        %v2449 = vunpack.c.0.s8 %v2448
        %v2450 = vlaneseq
        %v2451 = vshrl.u32 %v2450, 7
        %v2452 = vsub.s32 %v2449, %v2451
        %v2453 = vrot.slane %v2439, %v2452
        %v2454 = vcombine.low %v2421, %v2437
        %v2455 = vcombine.high %v2421, %v2437
        %v2457 = vunpack.c.l.s4 1934713408
        %v2458 = vunpack.c.0.s8 %v2457
        %v2459 = vlaneseq
        %v2460 = vshrl.u32 %v2459, 7
        %v2461 = vsub.s32 %v2458, %v2460
        %v2462 = vrot.slane %v2454, %v2461
        %v2464 = vunpack.c.l.s4 1934713408
        %v2465 = vunpack.c.0.s8 %v2464
        %v2466 = vlaneseq
        %v2467 = vshrl.u32 %v2466, 7
        %v2468 = vsub.s32 %v2465, %v2467
        %v2469 = vrot.slane %v2455, %v2468
        %v2470 = vcombine.high %v2446, 0.0
        %v2471 = vcombine.high %v2453, 0.0
        %v2472 = vcombine.high %v2462, 0.0
        %v2473 = vcombine.high %v2469, 0.0
        %v2474 = vcombine.low %v2378, %v2385
        %v2476 = vunpack.c.l.s4 1983009808
        %v2477 = vunpack.c.0.s8 %v2476
        %v2478 = vlaneseq
        %v2479 = vshrl.u32 %v2478, 7
        %v2480 = vsub.s32 %v2477, %v2479
        %v2481 = vrot.slane %v2474, %v2480
        %v2482 = vcombine.low %v2402, %v2403
        %v2484 = vunpack.c.l.s4 1983009808
        %v2485 = vunpack.c.0.s8 %v2484
        %v2486 = vlaneseq
        %v2487 = vshrl.u32 %v2486, 7
        %v2488 = vsub.s32 %v2485, %v2487
        %v2489 = vrot.slane %v2482, %v2488
        %v2490 = vcombine.low %v2394, %v2401
        %v2492 = vunpack.c.l.s4 1983009808
        %v2493 = vunpack.c.0.s8 %v2492
        %v2494 = vlaneseq
        %v2495 = vshrl.u32 %v2494, 7
        %v2496 = vsub.s32 %v2493, %v2495
        %v2497 = vrot.slane %v2490, %v2496
        %v2498 = vcombine.low %v2404, %v2405
        %v2500 = vunpack.c.l.s4 1983009808
        %v2501 = vunpack.c.0.s8 %v2500
        %v2502 = vlaneseq
        %v2503 = vshrl.u32 %v2502, 7
        %v2504 = vsub.s32 %v2501, %v2503
        %v2505 = vrot.slane %v2498, %v2504
        %v2506 = vcombine.low %v2481, %v2489
        %v2507 = vcombine.high %v2481, %v2489
        %v2509 = vunpack.c.l.s4 1934713408
        %v2510 = vunpack.c.0.s8 %v2509
        %v2511 = vlaneseq
        %v2512 = vshrl.u32 %v2511, 7
        %v2513 = vsub.s32 %v2510, %v2512
        %v2514 = vrot.slane %v2506, %v2513
        %v2516 = vunpack.c.l.s4 1934713408
        %v2517 = vunpack.c.0.s8 %v2516
        %v2518 = vlaneseq
        %v2519 = vshrl.u32 %v2518, 7
        %v2520 = vsub.s32 %v2517, %v2519
        %v2521 = vrot.slane %v2507, %v2520
        %v2522 = vcombine.low %v2497, %v2505
        %v2523 = vcombine.high %v2497, %v2505
        %v2525 = vunpack.c.l.s4 1934713408
        %v2526 = vunpack.c.0.s8 %v2525
        %v2527 = vlaneseq
        %v2528 = vshrl.u32 %v2527, 7
        %v2529 = vsub.s32 %v2526, %v2528
        %v2530 = vrot.slane %v2522, %v2529
        %v2532 = vunpack.c.l.s4 1934713408
        %v2533 = vunpack.c.0.s8 %v2532
        %v2534 = vlaneseq
        %v2535 = vshrl.u32 %v2534, 7
        %v2536 = vsub.s32 %v2533, %v2535
        %v2537 = vrot.slane %v2523, %v2536
        %v2538 = vcombine.low %v2514, %v2530
        %v2539 = vcombine.high %v2514, %v2530
        %v2540 = vcombine.low %v2521, %v2537
        %v2541 = vcombine.high %v2521, %v2537
        %v2542 = vcombine.low %v2446, %v2453
        %v2544 = vunpack.c.l.s4 1983009808
        %v2545 = vunpack.c.0.s8 %v2544
        %v2546 = vlaneseq
        %v2547 = vshrl.u32 %v2546, 7
        %v2548 = vsub.s32 %v2545, %v2547
        %v2549 = vrot.slane %v2542, %v2548
        %v2550 = vcombine.low %v2470, %v2471
        %v2552 = vunpack.c.l.s4 1983009808
        %v2553 = vunpack.c.0.s8 %v2552
        %v2554 = vlaneseq
        %v2555 = vshrl.u32 %v2554, 7
        %v2556 = vsub.s32 %v2553, %v2555
        %v2557 = vrot.slane %v2550, %v2556
        %v2558 = vcombine.low %v2462, %v2469
        %v2560 = vunpack.c.l.s4 1983009808
        %v2561 = vunpack.c.0.s8 %v2560
        %v2562 = vlaneseq
        %v2563 = vshrl.u32 %v2562, 7
        %v2564 = vsub.s32 %v2561, %v2563
        %v2565 = vrot.slane %v2558, %v2564
        %v2566 = vcombine.low %v2472, %v2473
        %v2568 = vunpack.c.l.s4 1983009808
        %v2569 = vunpack.c.0.s8 %v2568
        %v2570 = vlaneseq
        %v2571 = vshrl.u32 %v2570, 7
        %v2572 = vsub.s32 %v2569, %v2571
        %v2573 = vrot.slane %v2566, %v2572
        %v2574 = vcombine.low %v2549, %v2557
        %v2575 = vcombine.high %v2549, %v2557
        %v2577 = vunpack.c.l.s4 1934713408
        %v2578 = vunpack.c.0.s8 %v2577
        %v2579 = vlaneseq
        %v2580 = vshrl.u32 %v2579, 7
        %v2581 = vsub.s32 %v2578, %v2580
        %v2582 = vrot.slane %v2574, %v2581
        %v2584 = vunpack.c.l.s4 1934713408
        %v2585 = vunpack.c.0.s8 %v2584
        %v2586 = vlaneseq
        %v2587 = vshrl.u32 %v2586, 7
        %v2588 = vsub.s32 %v2585, %v2587
        %v2589 = vrot.slane %v2575, %v2588
        %v2590 = vcombine.low %v2565, %v2573
        %v2591 = vcombine.high %v2565, %v2573
        %v2593 = vunpack.c.l.s4 1934713408
        %v2594 = vunpack.c.0.s8 %v2593
        %v2595 = vlaneseq
        %v2596 = vshrl.u32 %v2595, 7
        %v2597 = vsub.s32 %v2594, %v2596
        %v2598 = vrot.slane %v2590, %v2597
        %v2600 = vunpack.c.l.s4 1934713408
        %v2601 = vunpack.c.0.s8 %v2600
        %v2602 = vlaneseq
        %v2603 = vshrl.u32 %v2602, 7
        %v2604 = vsub.s32 %v2601, %v2603
        %v2605 = vrot.slane %v2591, %v2604
        %v2606 = vcombine.low %v2582, %v2598
        %v2607 = vcombine.high %v2582, %v2598
        %v2608 = vcombine.low %v2589, %v2605
        %v2609 = vcombine.high %v2589, %v2605
        %2612 = vrot.lane.b32.xlu0 %v2166, 120
        %v2613 = vpop.permute.xlu0 %2612
        %2614 = vrot.lane.b32.xlu0 %v2169, 120
        %v2615 = vpop.permute.xlu0 %2614
        %2618 = vrot.lane.b32.xlu0 %v2166, 112
        %v2619 = vpop.permute.xlu0 %2618
        %2620 = vrot.lane.b32.xlu0 %v2169, 112
        %v2621 = vpop.permute.xlu0 %2620
        %2624 = vrot.lane.b32.xlu0 %v2166, 104
        %v2625 = vpop.permute.xlu0 %2624
        %2626 = vrot.lane.b32.xlu0 %v2169, 104
        %v2627 = vpop.permute.xlu0 %2626
        %v2630 = vcombine.low %v2166, %v2619
        %v2631 = vcombine.high %v2166, %v2619
        %v2633 = vunpack.c.l.s4 1983009808
        %v2634 = vunpack.c.0.s8 %v2633
        %v2635 = vlaneseq
        %v2636 = vshrl.u32 %v2635, 7
        %v2637 = vsub.s32 %v2634, %v2636
        %v2638 = vrot.slane %v2630, %v2637
        %v2640 = vunpack.c.l.s4 1983009808
        %v2641 = vunpack.c.0.s8 %v2640
        %v2642 = vlaneseq
        %v2643 = vshrl.u32 %v2642, 7
        %v2644 = vsub.s32 %v2641, %v2643
        %v2645 = vrot.slane %v2631, %v2644
        %v2646 = vcombine.low %v2613, %v2625
        %v2647 = vcombine.high %v2613, %v2625
        %v2649 = vunpack.c.l.s4 1983009808
        %v2650 = vunpack.c.0.s8 %v2649
        %v2651 = vlaneseq
        %v2652 = vshrl.u32 %v2651, 7
        %v2653 = vsub.s32 %v2650, %v2652
        %v2654 = vrot.slane %v2646, %v2653
        %v2656 = vunpack.c.l.s4 1983009808
        %v2657 = vunpack.c.0.s8 %v2656
        %v2658 = vlaneseq
        %v2659 = vshrl.u32 %v2658, 7
        %v2660 = vsub.s32 %v2657, %v2659
        %v2661 = vrot.slane %v2647, %v2660
        %v2662 = vcombine.low %v2638, %v2654
        %v2663 = vcombine.high %v2638, %v2654
        %v2665 = vunpack.c.l.s4 1934713408
        %v2666 = vunpack.c.0.s8 %v2665
        %v2667 = vlaneseq
        %v2668 = vshrl.u32 %v2667, 7
        %v2669 = vsub.s32 %v2666, %v2668
        %v2670 = vrot.slane %v2662, %v2669
        %v2672 = vunpack.c.l.s4 1934713408
        %v2673 = vunpack.c.0.s8 %v2672
        %v2674 = vlaneseq
        %v2675 = vshrl.u32 %v2674, 7
        %v2676 = vsub.s32 %v2673, %v2675
        %v2677 = vrot.slane %v2663, %v2676
        %v2678 = vcombine.low %v2645, %v2661
        %v2679 = vcombine.high %v2645, %v2661
        %v2681 = vunpack.c.l.s4 1934713408
        %v2682 = vunpack.c.0.s8 %v2681
        %v2683 = vlaneseq
        %v2684 = vshrl.u32 %v2683, 7
        %v2685 = vsub.s32 %v2682, %v2684
        %v2686 = vrot.slane %v2678, %v2685
        %v2688 = vunpack.c.l.s4 1934713408
        %v2689 = vunpack.c.0.s8 %v2688
        %v2690 = vlaneseq
        %v2691 = vshrl.u32 %v2690, 7
        %v2692 = vsub.s32 %v2689, %v2691
        %v2693 = vrot.slane %v2679, %v2692
        %v2694 = vcombine.high %v2670, 0.0
        %v2695 = vcombine.high %v2677, 0.0
        %v2696 = vcombine.high %v2686, 0.0
        %v2697 = vcombine.high %v2693, 0.0
        %v2698 = vcombine.low %v2169, %v2621
        %v2699 = vcombine.high %v2169, %v2621
        %v2701 = vunpack.c.l.s4 1983009808
        %v2702 = vunpack.c.0.s8 %v2701
        %v2703 = vlaneseq
        %v2704 = vshrl.u32 %v2703, 7
        %v2705 = vsub.s32 %v2702, %v2704
        %v2706 = vrot.slane %v2698, %v2705
        %v2708 = vunpack.c.l.s4 1983009808
        %v2709 = vunpack.c.0.s8 %v2708
        %v2710 = vlaneseq
        %v2711 = vshrl.u32 %v2710, 7
        %v2712 = vsub.s32 %v2709, %v2711
        %v2713 = vrot.slane %v2699, %v2712
        %v2714 = vcombine.low %v2615, %v2627
        %v2715 = vcombine.high %v2615, %v2627
        %v2717 = vunpack.c.l.s4 1983009808
        %v2718 = vunpack.c.0.s8 %v2717
        %v2719 = vlaneseq
        %v2720 = vshrl.u32 %v2719, 7
        %v2721 = vsub.s32 %v2718, %v2720
        %v2722 = vrot.slane %v2714, %v2721
        %v2724 = vunpack.c.l.s4 1983009808
        %v2725 = vunpack.c.0.s8 %v2724
        %v2726 = vlaneseq
        %v2727 = vshrl.u32 %v2726, 7
        %v2728 = vsub.s32 %v2725, %v2727
        %v2729 = vrot.slane %v2715, %v2728
        %v2730 = vcombine.low %v2706, %v2722
        %v2731 = vcombine.high %v2706, %v2722
        %v2733 = vunpack.c.l.s4 1934713408
        %v2734 = vunpack.c.0.s8 %v2733
        %v2735 = vlaneseq
        %v2736 = vshrl.u32 %v2735, 7
        %v2737 = vsub.s32 %v2734, %v2736
        %v2738 = vrot.slane %v2730, %v2737
        %v2740 = vunpack.c.l.s4 1934713408
        %v2741 = vunpack.c.0.s8 %v2740
        %v2742 = vlaneseq
        %v2743 = vshrl.u32 %v2742, 7
        %v2744 = vsub.s32 %v2741, %v2743
        %v2745 = vrot.slane %v2731, %v2744
        %v2746 = vcombine.low %v2713, %v2729
        %v2747 = vcombine.high %v2713, %v2729
        %v2749 = vunpack.c.l.s4 1934713408
        %v2750 = vunpack.c.0.s8 %v2749
        %v2751 = vlaneseq
        %v2752 = vshrl.u32 %v2751, 7
        %v2753 = vsub.s32 %v2750, %v2752
        %v2754 = vrot.slane %v2746, %v2753
        %v2756 = vunpack.c.l.s4 1934713408
        %v2757 = vunpack.c.0.s8 %v2756
        %v2758 = vlaneseq
        %v2759 = vshrl.u32 %v2758, 7
        %v2760 = vsub.s32 %v2757, %v2759
        %v2761 = vrot.slane %v2747, %v2760
        %v2762 = vcombine.high %v2738, 0.0
        %v2763 = vcombine.high %v2745, 0.0
        %v2764 = vcombine.high %v2754, 0.0
        %v2765 = vcombine.high %v2761, 0.0
        %v2766 = vcombine.low %v2670, %v2677
        %v2768 = vunpack.c.l.s4 1983009808
        %v2769 = vunpack.c.0.s8 %v2768
        %v2770 = vlaneseq
        %v2771 = vshrl.u32 %v2770, 7
        %v2772 = vsub.s32 %v2769, %v2771
        %v2773 = vrot.slane %v2766, %v2772
        %v2774 = vcombine.low %v2694, %v2695
        %v2776 = vunpack.c.l.s4 1983009808
        %v2777 = vunpack.c.0.s8 %v2776
        %v2778 = vlaneseq
        %v2779 = vshrl.u32 %v2778, 7
        %v2780 = vsub.s32 %v2777, %v2779
        %v2781 = vrot.slane %v2774, %v2780
        %v2782 = vcombine.low %v2686, %v2693
        %v2784 = vunpack.c.l.s4 1983009808
        %v2785 = vunpack.c.0.s8 %v2784
        %v2786 = vlaneseq
        %v2787 = vshrl.u32 %v2786, 7
        %v2788 = vsub.s32 %v2785, %v2787
        %v2789 = vrot.slane %v2782, %v2788
        %v2790 = vcombine.low %v2696, %v2697
        %v2792 = vunpack.c.l.s4 1983009808
        %v2793 = vunpack.c.0.s8 %v2792
        %v2794 = vlaneseq
        %v2795 = vshrl.u32 %v2794, 7
        %v2796 = vsub.s32 %v2793, %v2795
        %v2797 = vrot.slane %v2790, %v2796
        %v2798 = vcombine.low %v2773, %v2781
        %v2799 = vcombine.high %v2773, %v2781
        %v2801 = vunpack.c.l.s4 1934713408
        %v2802 = vunpack.c.0.s8 %v2801
        %v2803 = vlaneseq
        %v2804 = vshrl.u32 %v2803, 7
        %v2805 = vsub.s32 %v2802, %v2804
        %v2806 = vrot.slane %v2798, %v2805
        %v2808 = vunpack.c.l.s4 1934713408
        %v2809 = vunpack.c.0.s8 %v2808
        %v2810 = vlaneseq
        %v2811 = vshrl.u32 %v2810, 7
        %v2812 = vsub.s32 %v2809, %v2811
        %v2813 = vrot.slane %v2799, %v2812
        %v2814 = vcombine.low %v2789, %v2797
        %v2815 = vcombine.high %v2789, %v2797
        %v2817 = vunpack.c.l.s4 1934713408
        %v2818 = vunpack.c.0.s8 %v2817
        %v2819 = vlaneseq
        %v2820 = vshrl.u32 %v2819, 7
        %v2821 = vsub.s32 %v2818, %v2820
        %v2822 = vrot.slane %v2814, %v2821
        %v2824 = vunpack.c.l.s4 1934713408
        %v2825 = vunpack.c.0.s8 %v2824
        %v2826 = vlaneseq
        %v2827 = vshrl.u32 %v2826, 7
        %v2828 = vsub.s32 %v2825, %v2827
        %v2829 = vrot.slane %v2815, %v2828
        %v2830 = vcombine.low %v2806, %v2822
        %v2831 = vcombine.high %v2806, %v2822
        %v2832 = vcombine.low %v2813, %v2829
        %v2833 = vcombine.high %v2813, %v2829
        %v2834 = vcombine.low %v2738, %v2745
        %v2836 = vunpack.c.l.s4 1983009808
        %v2837 = vunpack.c.0.s8 %v2836
        %v2838 = vlaneseq
        %v2839 = vshrl.u32 %v2838, 7
        %v2840 = vsub.s32 %v2837, %v2839
        %v2841 = vrot.slane %v2834, %v2840
        %v2842 = vcombine.low %v2762, %v2763
        %v2844 = vunpack.c.l.s4 1983009808
        %v2845 = vunpack.c.0.s8 %v2844
        %v2846 = vlaneseq
        %v2847 = vshrl.u32 %v2846, 7
        %v2848 = vsub.s32 %v2845, %v2847
        %v2849 = vrot.slane %v2842, %v2848
        %v2850 = vcombine.low %v2754, %v2761
        %v2852 = vunpack.c.l.s4 1983009808
        %v2853 = vunpack.c.0.s8 %v2852
        %v2854 = vlaneseq
        %v2855 = vshrl.u32 %v2854, 7
        %v2856 = vsub.s32 %v2853, %v2855
        %v2857 = vrot.slane %v2850, %v2856
        %v2858 = vcombine.low %v2764, %v2765
        %v2860 = vunpack.c.l.s4 1983009808
        %v2861 = vunpack.c.0.s8 %v2860
        %v2862 = vlaneseq
        %v2863 = vshrl.u32 %v2862, 7
        %v2864 = vsub.s32 %v2861, %v2863
        %v2865 = vrot.slane %v2858, %v2864
        %v2866 = vcombine.low %v2841, %v2849
        %v2867 = vcombine.high %v2841, %v2849
        %v2869 = vunpack.c.l.s4 1934713408
        %v2870 = vunpack.c.0.s8 %v2869
        %v2871 = vlaneseq
        %v2872 = vshrl.u32 %v2871, 7
        %v2873 = vsub.s32 %v2870, %v2872
        %v2874 = vrot.slane %v2866, %v2873
        %v2876 = vunpack.c.l.s4 1934713408
        %v2877 = vunpack.c.0.s8 %v2876
        %v2878 = vlaneseq
        %v2879 = vshrl.u32 %v2878, 7
        %v2880 = vsub.s32 %v2877, %v2879
        %v2881 = vrot.slane %v2867, %v2880
        %v2882 = vcombine.low %v2857, %v2865
        %v2883 = vcombine.high %v2857, %v2865
        %v2885 = vunpack.c.l.s4 1934713408
        %v2886 = vunpack.c.0.s8 %v2885
        %v2887 = vlaneseq
        %v2888 = vshrl.u32 %v2887, 7
        %v2889 = vsub.s32 %v2886, %v2888
        %v2890 = vrot.slane %v2882, %v2889
        %v2892 = vunpack.c.l.s4 1934713408
        %v2893 = vunpack.c.0.s8 %v2892
        %v2894 = vlaneseq
        %v2895 = vshrl.u32 %v2894, 7
        %v2896 = vsub.s32 %v2893, %v2895
        %v2897 = vrot.slane %v2883, %v2896
        %v2898 = vcombine.low %v2874, %v2890
        %v2899 = vcombine.high %v2874, %v2890
        %v2900 = vcombine.low %v2881, %v2897
        %v2901 = vcombine.high %v2881, %v2897
        %v2902 = vpack.c.bf16 %v2314, %v2314
        %v2903 = vpack.c.bf16 %v2315, %v2315
        %v2904 = vpack.c.bf16 %v2316, %v2316
        %v2905 = vpack.c.bf16 %v2317, %v2317
        %v2906 = vpack.c.bf16 %v2606, %v2538
        %v2907 = vpack.c.bf16 %v2607, %v2539
        %v2908 = vpack.c.bf16 %v2608, %v2540
        %v2909 = vpack.c.bf16 %v2609, %v2541
        %v2910 = vpack.c.bf16 %v2898, %v2830
        %v2911 = vpack.c.bf16 %v2899, %v2831
        %v2912 = vpack.c.bf16 %v2900, %v2832
        %v2913 = vpack.c.bf16 %v2901, %v2833
        %v2915 = vsel %vm1326, %v2902, 0
        %v2918 = vsel %vm1326, %v2906, 0
        %2920 = vmatprep.subr.bf16.mxu0 0
        %2921 = vmatpush1.bf16.xpose.msra.mxu0 %v2918
        %2922 = vmatprep.subr.bf16.mxu0 0
        %2923 = vmatpush1.bf16.xpose.msra.mxu0 0
        %2924 = vmatprep.subr.bf16.mxu0 0
        %2925 = vmatpush1.bf16.xpose.msra.mxu0 0
        %2926 = vmatprep.subr.bf16.mxu0 0
        %2927 = vmatpush1.bf16.xpose.msra.mxu0 0
        %2928 = vmatprep.subr.bf16.mxu0 0
        %2929 = vmatpush1.bf16.xpose.msra.mxu0 0
        %2930 = vmatprep.subr.bf16.mxu0 0
        %2931 = vmatpush1.bf16.xpose.msra.mxu0 0
        %2932 = vmatprep.subr.bf16.mxu0 0
        %2933 = vmatpush1.bf16.xpose.msra.mxu0 0
        %2934 = vmatprep.subr.bf16.mxu0 0
        %2935 = vmatpush1.bf16.xpose.msra.mxu0 0
        %2936 = vmatprep.subr.bf16.mxu0 0
        %2937 = vmatpush1.bf16.xpose.msra.mxu0 0
        %2938 = vmatprep.subr.bf16.mxu0 0
        %2939 = vmatpush1.bf16.xpose.msra.mxu0 0
        %2940 = vmatprep.subr.bf16.mxu0 0
        %2941 = vmatpush1.bf16.xpose.msra.mxu0 0
        %2942 = vmatprep.subr.bf16.mxu0 0
        %2943 = vmatpush1.bf16.xpose.msra.mxu0 0
        %2944 = vmatprep.subr.bf16.mxu0 0
        %2945 = vmatpush1.bf16.xpose.msra.mxu0 0
        %2946 = vmatprep.subr.bf16.mxu0 0
        %2947 = vmatpush1.bf16.xpose.msra.mxu0 0
        %2948 = vmatprep.subr.bf16.mxu0 0
        %2949 = vmatpush1.bf16.xpose.msra.mxu0 0
        %2950 = vmatprep.subr.bf16.mxu0 0
        %2951 = vmatpush1.bf16.xpose.msra.mxu0 0
        %2952 = vmatprep.mubr.bf16.mxu0 0
        %2953 = vmatmul.mubr.bf16.gmra.mrb[0].mxu0 %v2915
        %v2954 = vpop.f32.mrb[0].mxu0
        %v2955 = vadd.f32 0.0, %v2954
        %v2956 = vpop.f32.mrb[0].mxu0
        %v2957 = vpop.f32.mrb[0].mxu0
        %v2958 = vpop.f32.mrb[0].mxu0
        %2959 = vdwg.mxu0
        %v2961 = vsel %vm1326, %v2903, 0
        %v2964 = vsel %vm1326, %v2907, 0
        %2966 = vmatprep.subr.bf16.mxu0 0
        %2967 = vmatpush1.bf16.xpose.msra.mxu0 %v2964
        %2968 = vmatprep.subr.bf16.mxu0 0
        %2969 = vmatpush1.bf16.xpose.msra.mxu0 0
        %2970 = vmatprep.subr.bf16.mxu0 0
        %2971 = vmatpush1.bf16.xpose.msra.mxu0 0
        %2972 = vmatprep.subr.bf16.mxu0 0
        %2973 = vmatpush1.bf16.xpose.msra.mxu0 0
        %2974 = vmatprep.subr.bf16.mxu0 0
        %2975 = vmatpush1.bf16.xpose.msra.mxu0 0
        %2976 = vmatprep.subr.bf16.mxu0 0
        %2977 = vmatpush1.bf16.xpose.msra.mxu0 0
        %2978 = vmatprep.subr.bf16.mxu0 0
        %2979 = vmatpush1.bf16.xpose.msra.mxu0 0
        %2980 = vmatprep.subr.bf16.mxu0 0
        %2981 = vmatpush1.bf16.xpose.msra.mxu0 0
        %2982 = vmatprep.subr.bf16.mxu0 0
        %2983 = vmatpush1.bf16.xpose.msra.mxu0 0
        %2984 = vmatprep.subr.bf16.mxu0 0
        %2985 = vmatpush1.bf16.xpose.msra.mxu0 0
        %2986 = vmatprep.subr.bf16.mxu0 0
        %2987 = vmatpush1.bf16.xpose.msra.mxu0 0
        %2988 = vmatprep.subr.bf16.mxu0 0
        %2989 = vmatpush1.bf16.xpose.msra.mxu0 0
        %2990 = vmatprep.subr.bf16.mxu0 0
        %2991 = vmatpush1.bf16.xpose.msra.mxu0 0
        %2992 = vmatprep.subr.bf16.mxu0 0
        %2993 = vmatpush1.bf16.xpose.msra.mxu0 0
        %2994 = vmatprep.subr.bf16.mxu0 0
        %2995 = vmatpush1.bf16.xpose.msra.mxu0 0
        %2996 = vmatprep.subr.bf16.mxu0 0
        %2997 = vmatpush1.bf16.xpose.msra.mxu0 0
        %2998 = vmatprep.mubr.bf16.mxu0 0
        %2999 = vmatmul.mubr.bf16.gmra.mrb[0].mxu0 %v2961
        %v3000 = vpop.f32.mrb[0].mxu0
        %v3001 = vadd.f32 0.0, %v3000
        %v3002 = vpop.f32.mrb[0].mxu0
        %v3003 = vpop.f32.mrb[0].mxu0
        %v3004 = vpop.f32.mrb[0].mxu0
        %3005 = vdwg.mxu0
        %v3007 = vsel %vm1326, %v2904, 0
        %v3010 = vsel %vm1326, %v2908, 0
        %3012 = vmatprep.subr.bf16.mxu0 0
        %3013 = vmatpush1.bf16.xpose.msra.mxu0 %v3010
        %3014 = vmatprep.subr.bf16.mxu0 0
        %3015 = vmatpush1.bf16.xpose.msra.mxu0 0
        %3016 = vmatprep.subr.bf16.mxu0 0
        %3017 = vmatpush1.bf16.xpose.msra.mxu0 0
        %3018 = vmatprep.subr.bf16.mxu0 0
        %3019 = vmatpush1.bf16.xpose.msra.mxu0 0
        %3020 = vmatprep.subr.bf16.mxu0 0
        %3021 = vmatpush1.bf16.xpose.msra.mxu0 0
        %3022 = vmatprep.subr.bf16.mxu0 0
        %3023 = vmatpush1.bf16.xpose.msra.mxu0 0
        %3024 = vmatprep.subr.bf16.mxu0 0
        %3025 = vmatpush1.bf16.xpose.msra.mxu0 0
        %3026 = vmatprep.subr.bf16.mxu0 0
        %3027 = vmatpush1.bf16.xpose.msra.mxu0 0
        %3028 = vmatprep.subr.bf16.mxu0 0
        %3029 = vmatpush1.bf16.xpose.msra.mxu0 0
        %3030 = vmatprep.subr.bf16.mxu0 0
        %3031 = vmatpush1.bf16.xpose.msra.mxu0 0
        %3032 = vmatprep.subr.bf16.mxu0 0
        %3033 = vmatpush1.bf16.xpose.msra.mxu0 0
        %3034 = vmatprep.subr.bf16.mxu0 0
        %3035 = vmatpush1.bf16.xpose.msra.mxu0 0
        %3036 = vmatprep.subr.bf16.mxu0 0
        %3037 = vmatpush1.bf16.xpose.msra.mxu0 0
        %3038 = vmatprep.subr.bf16.mxu0 0
        %3039 = vmatpush1.bf16.xpose.msra.mxu0 0
        %3040 = vmatprep.subr.bf16.mxu0 0
        %3041 = vmatpush1.bf16.xpose.msra.mxu0 0
        %3042 = vmatprep.subr.bf16.mxu0 0
        %3043 = vmatpush1.bf16.xpose.msra.mxu0 0
        %3044 = vmatprep.mubr.bf16.mxu0 0
        %3045 = vmatmul.mubr.bf16.gmra.mrb[0].mxu0 %v3007
        %v3046 = vpop.f32.mrb[0].mxu0
        %v3047 = vadd.f32 0.0, %v3046
        %v3048 = vpop.f32.mrb[0].mxu0
        %v3049 = vpop.f32.mrb[0].mxu0
        %v3050 = vpop.f32.mrb[0].mxu0
        %3051 = vdwg.mxu0
        %v3053 = vsel %vm1326, %v2905, 0
        %v3056 = vsel %vm1326, %v2909, 0
        %3058 = vmatprep.subr.bf16.mxu0 0
        %3059 = vmatpush1.bf16.xpose.msra.mxu0 %v3056
        %3060 = vmatprep.subr.bf16.mxu0 0
        %3061 = vmatpush1.bf16.xpose.msra.mxu0 0
        %3062 = vmatprep.subr.bf16.mxu0 0
        %3063 = vmatpush1.bf16.xpose.msra.mxu0 0
        %3064 = vmatprep.subr.bf16.mxu0 0
        %3065 = vmatpush1.bf16.xpose.msra.mxu0 0
        %3066 = vmatprep.subr.bf16.mxu0 0
        %3067 = vmatpush1.bf16.xpose.msra.mxu0 0
        %3068 = vmatprep.subr.bf16.mxu0 0
        %3069 = vmatpush1.bf16.xpose.msra.mxu0 0
        %3070 = vmatprep.subr.bf16.mxu0 0
        %3071 = vmatpush1.bf16.xpose.msra.mxu0 0
        %3072 = vmatprep.subr.bf16.mxu0 0
        %3073 = vmatpush1.bf16.xpose.msra.mxu0 0
        %3074 = vmatprep.subr.bf16.mxu0 0
        %3075 = vmatpush1.bf16.xpose.msra.mxu0 0
        %3076 = vmatprep.subr.bf16.mxu0 0
        %3077 = vmatpush1.bf16.xpose.msra.mxu0 0
        %3078 = vmatprep.subr.bf16.mxu0 0
        %3079 = vmatpush1.bf16.xpose.msra.mxu0 0
        %3080 = vmatprep.subr.bf16.mxu0 0
        %3081 = vmatpush1.bf16.xpose.msra.mxu0 0
        %3082 = vmatprep.subr.bf16.mxu0 0
        %3083 = vmatpush1.bf16.xpose.msra.mxu0 0
        %3084 = vmatprep.subr.bf16.mxu0 0
        %3085 = vmatpush1.bf16.xpose.msra.mxu0 0
        %3086 = vmatprep.subr.bf16.mxu0 0
        %3087 = vmatpush1.bf16.xpose.msra.mxu0 0
        %3088 = vmatprep.subr.bf16.mxu0 0
        %3089 = vmatpush1.bf16.xpose.msra.mxu0 0
        %3090 = vmatprep.mubr.bf16.mxu0 0
        %3091 = vmatmul.mubr.bf16.gmra.mrb[0].mxu0 %v3053
        %v3092 = vpop.f32.mrb[0].mxu0
        %v3093 = vadd.f32 0.0, %v3092
        %v3094 = vpop.f32.mrb[0].mxu0
        %v3095 = vpop.f32.mrb[0].mxu0
        %v3096 = vpop.f32.mrb[0].mxu0
        %3097 = vdwg.mxu0
        %v3098 = vsel %vm1893, %v2955, -inf
        %3099 = vmax.xlane.f32.xlu0 %v3098
        %v3100 = vpop.xlane.xlu0 %3099
        %v3101 = vsel %vm1893, %v3001, -inf
        %3102 = vmax.xlane.f32.xlu0 %v3101
        %v3103 = vpop.xlane.xlu0 %3102
        %v3104 = vsel %vm1893, %v3047, -inf
        %3105 = vmax.xlane.f32.xlu0 %v3104
        %v3106 = vpop.xlane.xlu0 %3105
        %v3107 = vsel %vm1893, %v3093, -inf
        %3108 = vmax.xlane.f32.xlu0 %v3107
        %v3109 = vpop.xlane.xlu0 %3108
        %v3110 = vsub.f32 %v2955, %v3100
        %v3111 = vsub.f32 %v3001, %v3103
        %v3112 = vsub.f32 %v3047, %v3106
        %v3113 = vsub.f32 %v3093, %v3109
        %v3114 = vmul.f32 %v3110, 1.442695
        %v3115 = vpow.pop %v3114
        %v3116 = vmul.f32 %v3111, 1.442695
        %v3117 = vpow.pop %v3116
        %v3118 = vmul.f32 %v3112, 1.442695
        %v3119 = vpow.pop %v3118
        %v3120 = vmul.f32 %v3113, 1.442695
        %v3121 = vpow.pop %v3120
        %v3122 = vsel %vm1893, %v3115, 0.0
        %3123 = vadd.xlane.f32.xlu0 %v3122
        %v3124 = vpop.xlane.xlu0 %3123
        %v3125 = vsel %vm1893, %v3117, 0.0
        %3126 = vadd.xlane.f32.xlu0 %v3125
        %v3127 = vpop.xlane.xlu0 %3126
        %v3128 = vsel %vm1893, %v3119, 0.0
        %3129 = vadd.xlane.f32.xlu0 %v3128
        %v3130 = vpop.xlane.xlu0 %3129
        %v3131 = vsel %vm1893, %v3121, 0.0
        %3132 = vadd.xlane.f32.xlu0 %v3131
        %v3133 = vpop.xlane.xlu0 %3132
        %v3134 = vpack.c.bf16 %v3115, %v3115
        %v3135 = vpack.c.bf16 %v3117, %v3117
        %v3136 = vpack.c.bf16 %v3119, %v3119
        %v3137 = vpack.c.bf16 %v3121, %v3121
        %v3139 = vsel %vm1893, %v3134, 0
        %3141 = vmatprep.subr.bf16.mxu0 0
        %3142 = vmatpush1.bf16.msra.mxu0 %v2910
        %3143 = vmatprep.subr.bf16.mxu0 0
        %3144 = vmatpush1.bf16.msra.mxu0 0
        %3145 = vmatprep.subr.bf16.mxu0 0
        %3146 = vmatpush1.bf16.msra.mxu0 0
        %3147 = vmatprep.subr.bf16.mxu0 0
        %3148 = vmatpush1.bf16.msra.mxu0 0
        %3149 = vmatprep.subr.bf16.mxu0 0
        %3150 = vmatpush1.bf16.msra.mxu0 0
        %3151 = vmatprep.subr.bf16.mxu0 0
        %3152 = vmatpush1.bf16.msra.mxu0 0
        %3153 = vmatprep.subr.bf16.mxu0 0
        %3154 = vmatpush1.bf16.msra.mxu0 0
        %3155 = vmatprep.subr.bf16.mxu0 0
        %3156 = vmatpush1.bf16.msra.mxu0 0
        %3157 = vmatprep.subr.bf16.mxu0 0
        %3158 = vmatpush1.bf16.msra.mxu0 0
        %3159 = vmatprep.subr.bf16.mxu0 0
        %3160 = vmatpush1.bf16.msra.mxu0 0
        %3161 = vmatprep.subr.bf16.mxu0 0
        %3162 = vmatpush1.bf16.msra.mxu0 0
        %3163 = vmatprep.subr.bf16.mxu0 0
        %3164 = vmatpush1.bf16.msra.mxu0 0
        %3165 = vmatprep.subr.bf16.mxu0 0
        %3166 = vmatpush1.bf16.msra.mxu0 0
        %3167 = vmatprep.subr.bf16.mxu0 0
        %3168 = vmatpush1.bf16.msra.mxu0 0
        %3169 = vmatprep.subr.bf16.mxu0 0
        %3170 = vmatpush1.bf16.msra.mxu0 0
        %3171 = vmatprep.subr.bf16.mxu0 0
        %3172 = vmatpush1.bf16.msra.mxu0 0
        %3173 = vmatprep.mubr.bf16.mxu0 0
        %3174 = vmatmul.mubr.bf16.gmra.mrb[0].mxu0 %v3139
        %v3175 = vpop.f32.mrb[0].mxu0
        %v3176 = vadd.f32 0.0, %v3175
        %v3177 = vpop.f32.mrb[0].mxu0
        %v3178 = vpop.f32.mrb[0].mxu0
        %v3179 = vpop.f32.mrb[0].mxu0
        %3180 = vdwg.mxu0
        %v3182 = vsel %vm1893, %v3135, 0
        %3184 = vmatprep.subr.bf16.mxu0 0
        %3185 = vmatpush1.bf16.msra.mxu0 %v2911
        %3186 = vmatprep.subr.bf16.mxu0 0
        %3187 = vmatpush1.bf16.msra.mxu0 0
        %3188 = vmatprep.subr.bf16.mxu0 0
        %3189 = vmatpush1.bf16.msra.mxu0 0
        %3190 = vmatprep.subr.bf16.mxu0 0
        %3191 = vmatpush1.bf16.msra.mxu0 0
        %3192 = vmatprep.subr.bf16.mxu0 0
        %3193 = vmatpush1.bf16.msra.mxu0 0
        %3194 = vmatprep.subr.bf16.mxu0 0
        %3195 = vmatpush1.bf16.msra.mxu0 0
        %3196 = vmatprep.subr.bf16.mxu0 0
        %3197 = vmatpush1.bf16.msra.mxu0 0
        %3198 = vmatprep.subr.bf16.mxu0 0
        %3199 = vmatpush1.bf16.msra.mxu0 0
        %3200 = vmatprep.subr.bf16.mxu0 0
        %3201 = vmatpush1.bf16.msra.mxu0 0
        %3202 = vmatprep.subr.bf16.mxu0 0
        %3203 = vmatpush1.bf16.msra.mxu0 0
        %3204 = vmatprep.subr.bf16.mxu0 0
        %3205 = vmatpush1.bf16.msra.mxu0 0
        %3206 = vmatprep.subr.bf16.mxu0 0
        %3207 = vmatpush1.bf16.msra.mxu0 0
        %3208 = vmatprep.subr.bf16.mxu0 0
        %3209 = vmatpush1.bf16.msra.mxu0 0
        %3210 = vmatprep.subr.bf16.mxu0 0
        %3211 = vmatpush1.bf16.msra.mxu0 0
        %3212 = vmatprep.subr.bf16.mxu0 0
        %3213 = vmatpush1.bf16.msra.mxu0 0
        %3214 = vmatprep.subr.bf16.mxu0 0
        %3215 = vmatpush1.bf16.msra.mxu0 0
        %3216 = vmatprep.mubr.bf16.mxu0 0
        %3217 = vmatmul.mubr.bf16.gmra.mrb[0].mxu0 %v3182
        %v3218 = vpop.f32.mrb[0].mxu0
        %v3219 = vadd.f32 0.0, %v3218
        %v3220 = vpop.f32.mrb[0].mxu0
        %v3221 = vpop.f32.mrb[0].mxu0
        %v3222 = vpop.f32.mrb[0].mxu0
        %3223 = vdwg.mxu0
        %v3225 = vsel %vm1893, %v3136, 0
        %3227 = vmatprep.subr.bf16.mxu0 0
        %3228 = vmatpush1.bf16.msra.mxu0 %v2912
        %3229 = vmatprep.subr.bf16.mxu0 0
        %3230 = vmatpush1.bf16.msra.mxu0 0
        %3231 = vmatprep.subr.bf16.mxu0 0
        %3232 = vmatpush1.bf16.msra.mxu0 0
        %3233 = vmatprep.subr.bf16.mxu0 0
        %3234 = vmatpush1.bf16.msra.mxu0 0
        %3235 = vmatprep.subr.bf16.mxu0 0
        %3236 = vmatpush1.bf16.msra.mxu0 0
        %3237 = vmatprep.subr.bf16.mxu0 0
        %3238 = vmatpush1.bf16.msra.mxu0 0
        %3239 = vmatprep.subr.bf16.mxu0 0
        %3240 = vmatpush1.bf16.msra.mxu0 0
        %3241 = vmatprep.subr.bf16.mxu0 0
        %3242 = vmatpush1.bf16.msra.mxu0 0
        %3243 = vmatprep.subr.bf16.mxu0 0
        %3244 = vmatpush1.bf16.msra.mxu0 0
        %3245 = vmatprep.subr.bf16.mxu0 0
        %3246 = vmatpush1.bf16.msra.mxu0 0
        %3247 = vmatprep.subr.bf16.mxu0 0
        %3248 = vmatpush1.bf16.msra.mxu0 0
        %3249 = vmatprep.subr.bf16.mxu0 0
        %3250 = vmatpush1.bf16.msra.mxu0 0
        %3251 = vmatprep.subr.bf16.mxu0 0
        %3252 = vmatpush1.bf16.msra.mxu0 0
        %3253 = vmatprep.subr.bf16.mxu0 0
        %3254 = vmatpush1.bf16.msra.mxu0 0
        %3255 = vmatprep.subr.bf16.mxu0 0
        %3256 = vmatpush1.bf16.msra.mxu0 0
        %3257 = vmatprep.subr.bf16.mxu0 0
        %3258 = vmatpush1.bf16.msra.mxu0 0
        %3259 = vmatprep.mubr.bf16.mxu0 0
        %3260 = vmatmul.mubr.bf16.gmra.mrb[0].mxu0 %v3225
        %v3261 = vpop.f32.mrb[0].mxu0
        %v3262 = vadd.f32 0.0, %v3261
        %v3263 = vpop.f32.mrb[0].mxu0
        %v3264 = vpop.f32.mrb[0].mxu0
        %v3265 = vpop.f32.mrb[0].mxu0
        %3266 = vdwg.mxu0
        %v3268 = vsel %vm1893, %v3137, 0
        %3270 = vmatprep.subr.bf16.mxu0 0
        %3271 = vmatpush1.bf16.msra.mxu0 %v2913
        %3272 = vmatprep.subr.bf16.mxu0 0
        %3273 = vmatpush1.bf16.msra.mxu0 0
        %3274 = vmatprep.subr.bf16.mxu0 0
        %3275 = vmatpush1.bf16.msra.mxu0 0
        %3276 = vmatprep.subr.bf16.mxu0 0
        %3277 = vmatpush1.bf16.msra.mxu0 0
        %3278 = vmatprep.subr.bf16.mxu0 0
        %3279 = vmatpush1.bf16.msra.mxu0 0
        %3280 = vmatprep.subr.bf16.mxu0 0
        %3281 = vmatpush1.bf16.msra.mxu0 0
        %3282 = vmatprep.subr.bf16.mxu0 0
        %3283 = vmatpush1.bf16.msra.mxu0 0
        %3284 = vmatprep.subr.bf16.mxu0 0
        %3285 = vmatpush1.bf16.msra.mxu0 0
        %3286 = vmatprep.subr.bf16.mxu0 0
        %3287 = vmatpush1.bf16.msra.mxu0 0
        %3288 = vmatprep.subr.bf16.mxu0 0
        %3289 = vmatpush1.bf16.msra.mxu0 0
        %3290 = vmatprep.subr.bf16.mxu0 0
        %3291 = vmatpush1.bf16.msra.mxu0 0
        %3292 = vmatprep.subr.bf16.mxu0 0
        %3293 = vmatpush1.bf16.msra.mxu0 0
        %3294 = vmatprep.subr.bf16.mxu0 0
        %3295 = vmatpush1.bf16.msra.mxu0 0
        %3296 = vmatprep.subr.bf16.mxu0 0
        %3297 = vmatpush1.bf16.msra.mxu0 0
        %3298 = vmatprep.subr.bf16.mxu0 0
        %3299 = vmatpush1.bf16.msra.mxu0 0
        %3300 = vmatprep.subr.bf16.mxu0 0
        %3301 = vmatpush1.bf16.msra.mxu0 0
        %3302 = vmatprep.mubr.bf16.mxu0 0
        %3303 = vmatmul.mubr.bf16.gmra.mrb[0].mxu0 %v3268
        %v3304 = vpop.f32.mrb[0].mxu0
        %v3305 = vadd.f32 0.0, %v3304
        %v3306 = vpop.f32.mrb[0].mxu0
        %v3307 = vpop.f32.mrb[0].mxu0
        %v3308 = vpop.f32.mrb[0].mxu0
        %3309 = vdwg.mxu0
        %v3310 = vrcp.pop %v3124
        %v3311 = vrcp.pop %v3127
        %v3312 = vrcp.pop %v3130
        %v3313 = vrcp.pop %v3133
        %v3314 = vmul.f32 %v3176, %v3310
        %v3315 = vmul.f32 %v3219, %v3311
        %v3316 = vmul.f32 %v3262, %v3312
        %v3317 = vmul.f32 %v3305, %v3313
        %v3318 = vcombine.low %v3314, %v3316
        %v3319 = vcombine.high %v3314, %v3316
        %v3321 = vunpack.c.l.s4 1983009808
        %v3322 = vunpack.c.0.s8 %v3321
        %v3323 = vlaneseq
        %v3324 = vshrl.u32 %v3323, 7
        %v3325 = vsub.s32 %v3322, %v3324
        %v3326 = vrot.slane %v3318, %v3325
        %v3328 = vunpack.c.l.s4 1983009808
        %v3329 = vunpack.c.0.s8 %v3328
        %v3330 = vlaneseq
        %v3331 = vshrl.u32 %v3330, 7
        %v3332 = vsub.s32 %v3329, %v3331
        %v3333 = vrot.slane %v3319, %v3332
        %v3334 = vcombine.low %v3315, %v3317
        %v3335 = vcombine.high %v3315, %v3317
        %v3337 = vunpack.c.l.s4 1983009808
        %v3338 = vunpack.c.0.s8 %v3337
        %v3339 = vlaneseq
        %v3340 = vshrl.u32 %v3339, 7
        %v3341 = vsub.s32 %v3338, %v3340
        %v3342 = vrot.slane %v3334, %v3341
        %v3344 = vunpack.c.l.s4 1983009808
        %v3345 = vunpack.c.0.s8 %v3344
        %v3346 = vlaneseq
        %v3347 = vshrl.u32 %v3346, 7
        %v3348 = vsub.s32 %v3345, %v3347
        %v3349 = vrot.slane %v3335, %v3348
        %v3350 = vcombine.low %v3326, %v3342
        %v3351 = vcombine.high %v3326, %v3342
        %v3353 = vunpack.c.l.s4 1934713408
        %v3354 = vunpack.c.0.s8 %v3353
        %v3355 = vlaneseq
        %v3356 = vshrl.u32 %v3355, 7
        %v3357 = vsub.s32 %v3354, %v3356
        %v3358 = vrot.slane %v3350, %v3357
        %v3360 = vunpack.c.l.s4 1934713408
        %v3361 = vunpack.c.0.s8 %v3360
        %v3362 = vlaneseq
        %v3363 = vshrl.u32 %v3362, 7
        %v3364 = vsub.s32 %v3361, %v3363
        %v3365 = vrot.slane %v3351, %v3364
        %v3366 = vcombine.low %v3333, %v3349
        %v3367 = vcombine.high %v3333, %v3349
        %v3369 = vunpack.c.l.s4 1934713408
        %v3370 = vunpack.c.0.s8 %v3369
        %v3371 = vlaneseq
        %v3372 = vshrl.u32 %v3371, 7
        %v3373 = vsub.s32 %v3370, %v3372
        %v3374 = vrot.slane %v3366, %v3373
        %v3376 = vunpack.c.l.s4 1934713408
        %v3377 = vunpack.c.0.s8 %v3376
        %v3378 = vlaneseq
        %v3379 = vshrl.u32 %v3378, 7
        %v3380 = vsub.s32 %v3377, %v3379
        %v3381 = vrot.slane %v3367, %v3380
        %v3382 = vcombine.high %v3358, 0.0
        %v3383 = vcombine.high %v3365, 0.0
        %v3384 = vcombine.high %v3374, 0.0
        %v3385 = vcombine.high %v3381, 0.0
        %v3386 = vcombine.low %v3358, %v3365
        %v3388 = vunpack.c.l.s4 1983009808
        %v3389 = vunpack.c.0.s8 %v3388
        %v3390 = vlaneseq
        %v3391 = vshrl.u32 %v3390, 7
        %v3392 = vsub.s32 %v3389, %v3391
        %v3393 = vrot.slane %v3386, %v3392
        %v3394 = vcombine.low %v3382, %v3383
        %v3396 = vunpack.c.l.s4 1983009808
        %v3397 = vunpack.c.0.s8 %v3396
        %v3398 = vlaneseq
        %v3399 = vshrl.u32 %v3398, 7
        %v3400 = vsub.s32 %v3397, %v3399
        %v3401 = vrot.slane %v3394, %v3400
        %v3402 = vcombine.low %v3374, %v3381
        %v3404 = vunpack.c.l.s4 1983009808
        %v3405 = vunpack.c.0.s8 %v3404
        %v3406 = vlaneseq
        %v3407 = vshrl.u32 %v3406, 7
        %v3408 = vsub.s32 %v3405, %v3407
        %v3409 = vrot.slane %v3402, %v3408
        %v3410 = vcombine.low %v3384, %v3385
        %v3412 = vunpack.c.l.s4 1983009808
        %v3413 = vunpack.c.0.s8 %v3412
        %v3414 = vlaneseq
        %v3415 = vshrl.u32 %v3414, 7
        %v3416 = vsub.s32 %v3413, %v3415
        %v3417 = vrot.slane %v3410, %v3416
        %v3418 = vcombine.low %v3393, %v3401
        %v3419 = vcombine.high %v3393, %v3401
        %v3421 = vunpack.c.l.s4 1934713408
        %v3422 = vunpack.c.0.s8 %v3421
        %v3423 = vlaneseq
        %v3424 = vshrl.u32 %v3423, 7
        %v3425 = vsub.s32 %v3422, %v3424
        %v3426 = vrot.slane %v3418, %v3425
        %v3428 = vunpack.c.l.s4 1934713408
        %v3429 = vunpack.c.0.s8 %v3428
        %v3430 = vlaneseq
        %v3431 = vshrl.u32 %v3430, 7
        %v3432 = vsub.s32 %v3429, %v3431
        %v3433 = vrot.slane %v3419, %v3432
        %v3434 = vcombine.low %v3409, %v3417
        %v3435 = vcombine.high %v3409, %v3417
        %v3437 = vunpack.c.l.s4 1934713408
        %v3438 = vunpack.c.0.s8 %v3437
        %v3439 = vlaneseq
        %v3440 = vshrl.u32 %v3439, 7
        %v3441 = vsub.s32 %v3438, %v3440
        %v3442 = vrot.slane %v3434, %v3441
        %v3444 = vunpack.c.l.s4 1934713408
        %v3445 = vunpack.c.0.s8 %v3444
        %v3446 = vlaneseq
        %v3447 = vshrl.u32 %v3446, 7
        %v3448 = vsub.s32 %v3445, %v3447
        %v3449 = vrot.slane %v3435, %v3448
        %v3450 = vcombine.low %v3426, %v3442
        %v3451 = vcombine.high %v3426, %v3442
        %v3452 = vcombine.low %v3433, %v3449
        %v3453 = vcombine.high %v3433, %v3449
        %3455 = vrot.lane.b32.xlu0 %v3451, 8
        %v3456 = vpop.permute.xlu0 %3455
        %3459 = vrot.lane.b32.xlu0 %v3452, 16
        %v3460 = vpop.permute.xlu0 %3459
        %3463 = vrot.lane.b32.xlu0 %v3453, 24
        %v3464 = vpop.permute.xlu0 %3463
        %v3466 = vsel %vm1326, %v3450, %v3456
        %v3467 = vsel %vm1893, %v3466, %v3460
        %v3468 = vsel %vm1895, %v3467, %v3464
        %v3469 = vpack.c.bf16 %v3468, %v3468
        %v3470 = vlaneseq
        %v3471 = vshrl.u32 %v3470, 7
        %v3472 = vsub.s32 7, %v3471
        %v3473 = vrot.slane %v666, %v3472
        %v3478 = vunpack.c.l.b16 %v649
        %v3479 = vunpack.c.l.b16 %v650
        %v3480 = vunpack.c.l.b16 %v651
        %v3481 = vunpack.c.l.b16 %v652
        %v3482 = vpack.c.b16 %v3479, %v3478
        %v3483 = vpack.c.b16 %v3481, %v3480
        %v3487 = vsel %vm674, %v3469, 0
        %3489 = vmatprep.subr.bf16.mxu0 0
        %3490 = vmatpush1.bf16.msra.mxu0 %v3482
        %3491 = vmatprep.subr.bf16.mxu0 0
        %3492 = vmatpush1.bf16.msra.mxu0 %v3483
        %3493 = vmatprep.subr.bf16.mxu0 0
        %3494 = vmatpush1.bf16.msra.mxu0 0
        %3495 = vmatprep.subr.bf16.mxu0 0
        %3496 = vmatpush1.bf16.msra.mxu0 0
        %3497 = vmatprep.subr.bf16.mxu0 0
        %3498 = vmatpush1.bf16.msra.mxu0 0
        %3499 = vmatprep.subr.bf16.mxu0 0
        %3500 = vmatpush1.bf16.msra.mxu0 0
        %3501 = vmatprep.subr.bf16.mxu0 0
        %3502 = vmatpush1.bf16.msra.mxu0 0
        %3503 = vmatprep.subr.bf16.mxu0 0
        %3504 = vmatpush1.bf16.msra.mxu0 0
        %3505 = vmatprep.subr.bf16.mxu0 0
        %3506 = vmatpush1.bf16.msra.mxu0 0
        %3507 = vmatprep.subr.bf16.mxu0 0
        %3508 = vmatpush1.bf16.msra.mxu0 0
        %3509 = vmatprep.subr.bf16.mxu0 0
        %3510 = vmatpush1.bf16.msra.mxu0 0
        %3511 = vmatprep.subr.bf16.mxu0 0
        %3512 = vmatpush1.bf16.msra.mxu0 0
        %3513 = vmatprep.subr.bf16.mxu0 0
        %3514 = vmatpush1.bf16.msra.mxu0 0
        %3515 = vmatprep.subr.bf16.mxu0 0
        %3516 = vmatpush1.bf16.msra.mxu0 0
        %3517 = vmatprep.subr.bf16.mxu0 0
        %3518 = vmatpush1.bf16.msra.mxu0 0
        %3519 = vmatprep.subr.bf16.mxu0 0
        %3520 = vmatpush1.bf16.msra.mxu0 0
        %3521 = vmatprep.mubr.bf16.mxu0 0
        %3522 = vmatmul.mubr.bf16.gmra.mrb[0].mxu0 %v3487
        %v3523 = vpop.f32.mrb[0].mxu0
        %v3524 = vadd.f32 %v3473, %v3523
        %v3525 = vpop.f32.mrb[0].mxu0
        %v3526 = vpop.f32.mrb[0].mxu0
        %v3527 = vpop.f32.mrb[0].mxu0
        %3528 = vdwg.mxu0
        %v3529 = vadd.f32 %v1957, %v3524
        %v3530 = vsel %vm674, %v3529, 0.0
        %3531 = vadd.xlane.f32.xlu0 %v3530
        %v3532 = vpop.xlane.xlu0 %3531
        %v3533 = vmul.f32 %v3532, %v678
        %v3534 = vsub.f32 %v3529, %v3533
        %v3535 = vmul.f32 %v3534, %v3534
        %v3536 = vsel %vm674, %v3535, 0.0
        %3537 = vadd.xlane.f32.xlu0 %v3536
        %v3538 = vpop.xlane.xlu0 %3537
        %v3539 = vmul.f32 %v3538, %v678
        %v3540 = vadd.f32 %v3539, 1e-05
        %v3541 = vrsqrt.pop %v3540
        %v3542 = vmul.f32 %v3534, %v3541
        %v3543 = vlaneseq
        %v3544 = vshrl.u32 %v3543, 7
        %v3545 = vsub.s32 4, %v3544
        %v3546 = vrot.slane %v667, %v3545
        %v3547 = vmul.f32 %v3542, %v3546
        %v3548 = vlaneseq
        %v3549 = vshrl.u32 %v3548, 7
        %v3550 = vsub.s32 5, %v3549
        %v3551 = vrot.slane %v667, %v3550
        %v3552 = vadd.f32 %v3547, %v3551
        %v3553 = vpack.c.bf16 %v3552, %v3552
        %v3555 = vlaneseq
        %v3556 = vshrl.u32 %v3555, 7
        %v3557 = vsub.s32 0, %v3556
        %v3558 = vrot.slane %v657, %v3557
        %v3564 = vunpack.c.l.b16 %v653
        %v3565 = vunpack.c.l.b16 %v654
        %v3566 = vunpack.c.l.b16 %v655
        %v3567 = vunpack.c.l.b16 %v656
        %v3568 = vpack.c.b16 %v3565, %v3564
        %v3569 = vpack.c.b16 %v3567, %v3566
        %v3573 = vsel %vm674, %v3553, 0
        %3575 = vmatprep.subr.bf16.mxu0 0
        %3576 = vmatpush1.bf16.msra.mxu0 %v3568
        %3577 = vmatprep.subr.bf16.mxu0 0
        %3578 = vmatpush1.bf16.msra.mxu0 %v3569
        %3579 = vmatprep.subr.bf16.mxu0 0
        %3580 = vmatpush1.bf16.msra.mxu0 0
        %3581 = vmatprep.subr.bf16.mxu0 0
        %3582 = vmatpush1.bf16.msra.mxu0 0
        %3583 = vmatprep.subr.bf16.mxu0 0
        %3584 = vmatpush1.bf16.msra.mxu0 0
        %3585 = vmatprep.subr.bf16.mxu0 0
        %3586 = vmatpush1.bf16.msra.mxu0 0
        %3587 = vmatprep.subr.bf16.mxu0 0
        %3588 = vmatpush1.bf16.msra.mxu0 0
        %3589 = vmatprep.subr.bf16.mxu0 0
        %3590 = vmatpush1.bf16.msra.mxu0 0
        %3591 = vmatprep.subr.bf16.mxu0 0
        %3592 = vmatpush1.bf16.msra.mxu0 0
        %3593 = vmatprep.subr.bf16.mxu0 0
        %3594 = vmatpush1.bf16.msra.mxu0 0
        %3595 = vmatprep.subr.bf16.mxu0 0
        %3596 = vmatpush1.bf16.msra.mxu0 0
        %3597 = vmatprep.subr.bf16.mxu0 0
        %3598 = vmatpush1.bf16.msra.mxu0 0
        %3599 = vmatprep.subr.bf16.mxu0 0
        %3600 = vmatpush1.bf16.msra.mxu0 0
        %3601 = vmatprep.subr.bf16.mxu0 0
        %3602 = vmatpush1.bf16.msra.mxu0 0
        %3603 = vmatprep.subr.bf16.mxu0 0
        %3604 = vmatpush1.bf16.msra.mxu0 0
        %3605 = vmatprep.subr.bf16.mxu0 0
        %3606 = vmatpush1.bf16.msra.mxu0 0
        %3607 = vmatprep.mubr.bf16.mxu0 0
        %3608 = vmatmul.mubr.bf16.gmra.mrb[0].mxu0 %v3573
        %v3609 = vpop.f32.mrb[0].mxu0
        %v3610 = vadd.f32 %v3558, %v3609
        %v3611 = vpop.f32.mrb[0].mxu0
        %v3612 = vpop.f32.mrb[0].mxu0
        %v3613 = vpop.f32.mrb[0].mxu0
        %3614 = vdwg.mxu0
        %v3615 = vmax.f32 %v3610, 0.0
        %v3616 = vpack.c.bf16 %v3615, %v3615
        %v3617 = vlaneseq
        %v3618 = vshrl.u32 %v3617, 7
        %v3619 = vsub.s32 6, %v3618
        %v3620 = vrot.slane %v667, %v3619
        %v3629 = vunpack.c.l.b16 %v658
        %v3630 = vunpack.c.l.b16 %v659
        %v3631 = vunpack.c.l.b16 %v660
        %v3632 = vunpack.c.l.b16 %v661
        %v3633 = vunpack.c.l.b16 %v662
        %v3634 = vunpack.c.l.b16 %v663
        %v3635 = vunpack.c.l.b16 %v664
        %v3636 = vunpack.c.l.b16 %v665
        %v3637 = vpack.c.b16 %v3630, %v3629
        %v3638 = vpack.c.b16 %v3632, %v3631
        %v3639 = vpack.c.b16 %v3634, %v3633
        %v3640 = vpack.c.b16 %v3636, %v3635
        %vm3645 = vcmask 523264
        %v3647 = vsel %vm3645, %v3616, 0
        %3649 = vmatprep.subr.bf16.mxu0 0
        %3650 = vmatpush1.bf16.msra.mxu0 %v3637
        %3651 = vmatprep.subr.bf16.mxu0 0
        %3652 = vmatpush1.bf16.msra.mxu0 %v3638
        %3653 = vmatprep.subr.bf16.mxu0 0
        %3654 = vmatpush1.bf16.msra.mxu0 %v3639
        %3655 = vmatprep.subr.bf16.mxu0 0
        %3656 = vmatpush1.bf16.msra.mxu0 %v3640
        %3657 = vmatprep.subr.bf16.mxu0 0
        %3658 = vmatpush1.bf16.msra.mxu0 0
        %3659 = vmatprep.subr.bf16.mxu0 0
        %3660 = vmatpush1.bf16.msra.mxu0 0
        %3661 = vmatprep.subr.bf16.mxu0 0
        %3662 = vmatpush1.bf16.msra.mxu0 0
        %3663 = vmatprep.subr.bf16.mxu0 0
        %3664 = vmatpush1.bf16.msra.mxu0 0
        %3665 = vmatprep.subr.bf16.mxu0 0
        %3666 = vmatpush1.bf16.msra.mxu0 0
        %3667 = vmatprep.subr.bf16.mxu0 0
        %3668 = vmatpush1.bf16.msra.mxu0 0
        %3669 = vmatprep.subr.bf16.mxu0 0
        %3670 = vmatpush1.bf16.msra.mxu0 0
        %3671 = vmatprep.subr.bf16.mxu0 0
        %3672 = vmatpush1.bf16.msra.mxu0 0
        %3673 = vmatprep.subr.bf16.mxu0 0
        %3674 = vmatpush1.bf16.msra.mxu0 0
        %3675 = vmatprep.subr.bf16.mxu0 0
        %3676 = vmatpush1.bf16.msra.mxu0 0
        %3677 = vmatprep.subr.bf16.mxu0 0
        %3678 = vmatpush1.bf16.msra.mxu0 0
        %3679 = vmatprep.subr.bf16.mxu0 0
        %3680 = vmatpush1.bf16.msra.mxu0 0
        %3681 = vmatprep.mubr.bf16.mxu0 0
        %3682 = vmatmul.mubr.bf16.gmra.mrb[0].mxu0 %v3647
        %v3683 = vpop.f32.mrb[0].mxu0
        %v3684 = vadd.f32 %v3620, %v3683
        %v3685 = vpop.f32.mrb[0].mxu0
        %v3686 = vpop.f32.mrb[0].mxu0
        %v3687 = vpop.f32.mrb[0].mxu0
        %3688 = vdwg.mxu0
        %v3689 = vadd.f32 %v3529, %v3684
        %3690 = vst.msk [vmem:[#allocation2] sm:$0xff] %vm674, %v3689
        %v3691 = vld [vmem:[#allocation2 + $0x8] sm:$0xff]
        %v3692 = vld [vmem:[%s588 + $0x8] sm:$0xf]
        %v3693 = vld [vmem:[%s588 + $0xc] sm:$0xf]
        %v3694 = vld [vmem:[#allocation3 + $0x8] sm:$0xf]
        %v3695 = vld [vmem:[#allocation3 + $0xc] sm:$0xf]
        %v3696 = vld [vmem:[#allocation6 + $0x8] sm:$0xff]
        %v3697 = vsel %vm674, %v3691, 0.0
        %3698 = vadd.xlane.f32.xlu0 %v3697
        %v3699 = vpop.xlane.xlu0 %3698
        %v3700 = vmul.f32 %v3699, %v678
        %v3701 = vsub.f32 %v3691, %v3700
        %v3702 = vmul.f32 %v3701, %v3701
        %v3703 = vsel %vm674, %v3702, 0.0
        %3704 = vadd.xlane.f32.xlu0 %v3703
        %v3705 = vpop.xlane.xlu0 %3704
        %v3706 = vmul.f32 %v3705, %v678
        %v3707 = vadd.f32 %v3706, 1e-05
        %v3708 = vrsqrt.pop %v3707
        %v3709 = vmul.f32 %v3701, %v3708
        %v3710 = vmul.f32 %v3709, %v692
        %v3711 = vadd.f32 %v3710, %v697
        %v3712 = vadd.f32 %v3711, %v3696
        %v3713 = vpack.c.bf16 %v3712, %v3712
        %v3714 = vpack.c.bf16 %v3711, %v3711
        %v3716 = vsel %vm674, %v3713, 0
        %3718 = vmatprep.subr.bf16.mxu0 0
        %3719 = vmatpush1.bf16.msra.mxu0 %v714
        %3720 = vmatprep.subr.bf16.mxu0 0
        %3721 = vmatpush1.bf16.msra.mxu0 %v715
        %3722 = vmatprep.subr.bf16.mxu0 0
        %3723 = vmatpush1.bf16.msra.mxu0 0
        %3724 = vmatprep.subr.bf16.mxu0 0
        %3725 = vmatpush1.bf16.msra.mxu0 0
        %3726 = vmatprep.subr.bf16.mxu0 0
        %3727 = vmatpush1.bf16.msra.mxu0 0
        %3728 = vmatprep.subr.bf16.mxu0 0
        %3729 = vmatpush1.bf16.msra.mxu0 0
        %3730 = vmatprep.subr.bf16.mxu0 0
        %3731 = vmatpush1.bf16.msra.mxu0 0
        %3732 = vmatprep.subr.bf16.mxu0 0
        %3733 = vmatpush1.bf16.msra.mxu0 0
        %3734 = vmatprep.subr.bf16.mxu0 0
        %3735 = vmatpush1.bf16.msra.mxu0 0
        %3736 = vmatprep.subr.bf16.mxu0 0
        %3737 = vmatpush1.bf16.msra.mxu0 0
        %3738 = vmatprep.subr.bf16.mxu0 0
        %3739 = vmatpush1.bf16.msra.mxu0 0
        %3740 = vmatprep.subr.bf16.mxu0 0
        %3741 = vmatpush1.bf16.msra.mxu0 0
        %3742 = vmatprep.subr.bf16.mxu0 0
        %3743 = vmatpush1.bf16.msra.mxu0 0
        %3744 = vmatprep.subr.bf16.mxu0 0
        %3745 = vmatpush1.bf16.msra.mxu0 0
        %3746 = vmatprep.subr.bf16.mxu0 0
        %3747 = vmatpush1.bf16.msra.mxu0 0
        %3748 = vmatprep.subr.bf16.mxu0 0
        %3749 = vmatpush1.bf16.msra.mxu0 0
        %3750 = vmatprep.mubr.bf16.mxu0 0
        %3751 = vmatmul.mubr.bf16.gmra.mrb[0].mxu0 %v3716
        %v3752 = vpop.f32.mrb[0].mxu0
        %v3753 = vadd.f32 %v705, %v3752
        %v3754 = vpop.f32.mrb[0].mxu0
        %v3755 = vpop.f32.mrb[0].mxu0
        %v3756 = vpop.f32.mrb[0].mxu0
        %3757 = vdwg.mxu0
        %3758 = vmatprep.subr.bf16.mxu0 0
        %3759 = vmatpush1.bf16.msra.mxu0 %v773
        %3760 = vmatprep.subr.bf16.mxu0 0
        %3761 = vmatpush1.bf16.msra.mxu0 %v774
        %3762 = vmatprep.subr.bf16.mxu0 0
        %3763 = vmatpush1.bf16.msra.mxu0 0
        %3764 = vmatprep.subr.bf16.mxu0 0
        %3765 = vmatpush1.bf16.msra.mxu0 0
        %3766 = vmatprep.subr.bf16.mxu0 0
        %3767 = vmatpush1.bf16.msra.mxu0 0
        %3768 = vmatprep.subr.bf16.mxu0 0
        %3769 = vmatpush1.bf16.msra.mxu0 0
        %3770 = vmatprep.subr.bf16.mxu0 0
        %3771 = vmatpush1.bf16.msra.mxu0 0
        %3772 = vmatprep.subr.bf16.mxu0 0
        %3773 = vmatpush1.bf16.msra.mxu0 0
        %3774 = vmatprep.subr.bf16.mxu0 0
        %3775 = vmatpush1.bf16.msra.mxu0 0
        %3776 = vmatprep.subr.bf16.mxu0 0
        %3777 = vmatpush1.bf16.msra.mxu0 0
        %3778 = vmatprep.subr.bf16.mxu0 0
        %3779 = vmatpush1.bf16.msra.mxu0 0
        %3780 = vmatprep.subr.bf16.mxu0 0
        %3781 = vmatpush1.bf16.msra.mxu0 0
        %3782 = vmatprep.subr.bf16.mxu0 0
        %3783 = vmatpush1.bf16.msra.mxu0 0
        %3784 = vmatprep.subr.bf16.mxu0 0
        %3785 = vmatpush1.bf16.msra.mxu0 0
        %3786 = vmatprep.subr.bf16.mxu0 0
        %3787 = vmatpush1.bf16.msra.mxu0 0
        %3788 = vmatprep.subr.bf16.mxu0 0
        %3789 = vmatpush1.bf16.msra.mxu0 0
        %3790 = vmatprep.mubr.bf16.mxu0 0
        %3791 = vmatmul.mubr.bf16.gmra.mrb[0].mxu0 %v3716
        %v3792 = vpop.f32.mrb[0].mxu0
        %v3793 = vadd.f32 %v764, %v3792
        %v3794 = vpop.f32.mrb[0].mxu0
        %v3795 = vpop.f32.mrb[0].mxu0
        %v3796 = vpop.f32.mrb[0].mxu0
        %3797 = vdwg.mxu0
        %v3799 = vsel %vm674, %v3714, 0
        %3801 = vmatprep.subr.bf16.mxu0 0
        %3802 = vmatpush1.bf16.msra.mxu0 %v829
        %3803 = vmatprep.subr.bf16.mxu0 0
        %3804 = vmatpush1.bf16.msra.mxu0 %v830
        %3805 = vmatprep.subr.bf16.mxu0 0
        %3806 = vmatpush1.bf16.msra.mxu0 0
        %3807 = vmatprep.subr.bf16.mxu0 0
        %3808 = vmatpush1.bf16.msra.mxu0 0
        %3809 = vmatprep.subr.bf16.mxu0 0
        %3810 = vmatpush1.bf16.msra.mxu0 0
        %3811 = vmatprep.subr.bf16.mxu0 0
        %3812 = vmatpush1.bf16.msra.mxu0 0
        %3813 = vmatprep.subr.bf16.mxu0 0
        %3814 = vmatpush1.bf16.msra.mxu0 0
        %3815 = vmatprep.subr.bf16.mxu0 0
        %3816 = vmatpush1.bf16.msra.mxu0 0
        %3817 = vmatprep.subr.bf16.mxu0 0
        %3818 = vmatpush1.bf16.msra.mxu0 0
        %3819 = vmatprep.subr.bf16.mxu0 0
        %3820 = vmatpush1.bf16.msra.mxu0 0
        %3821 = vmatprep.subr.bf16.mxu0 0
        %3822 = vmatpush1.bf16.msra.mxu0 0
        %3823 = vmatprep.subr.bf16.mxu0 0
        %3824 = vmatpush1.bf16.msra.mxu0 0
        %3825 = vmatprep.subr.bf16.mxu0 0
        %3826 = vmatpush1.bf16.msra.mxu0 0
        %3827 = vmatprep.subr.bf16.mxu0 0
        %3828 = vmatpush1.bf16.msra.mxu0 0
        %3829 = vmatprep.subr.bf16.mxu0 0
        %3830 = vmatpush1.bf16.msra.mxu0 0
        %3831 = vmatprep.subr.bf16.mxu0 0
        %3832 = vmatpush1.bf16.msra.mxu0 0
        %3833 = vmatprep.mubr.bf16.mxu0 0
        %3834 = vmatmul.mubr.bf16.gmra.mrb[0].mxu0 %v3799
        %v3835 = vpop.f32.mrb[0].mxu0
        %v3836 = vadd.f32 %v820, %v3835
        %v3837 = vpop.f32.mrb[0].mxu0
        %v3838 = vpop.f32.mrb[0].mxu0
        %v3839 = vpop.f32.mrb[0].mxu0
        %3840 = vdwg.mxu0
        %3842 = vrot.lane.b32.xlu0 %v3753, 120
        %v3843 = vpop.permute.xlu0 %3842
        %3845 = vrot.lane.b32.xlu0 %v3753, 112
        %v3846 = vpop.permute.xlu0 %3845
        %3848 = vrot.lane.b32.xlu0 %v3753, 104
        %v3849 = vpop.permute.xlu0 %3848
        %v3851 = vcombine.low %v3753, %v3846
        %v3852 = vcombine.high %v3753, %v3846
        %v3854 = vunpack.c.l.s4 1983009808
        %v3855 = vunpack.c.0.s8 %v3854
        %v3856 = vlaneseq
        %v3857 = vshrl.u32 %v3856, 7
        %v3858 = vsub.s32 %v3855, %v3857
        %v3859 = vrot.slane %v3851, %v3858
        %v3861 = vunpack.c.l.s4 1983009808
        %v3862 = vunpack.c.0.s8 %v3861
        %v3863 = vlaneseq
        %v3864 = vshrl.u32 %v3863, 7
        %v3865 = vsub.s32 %v3862, %v3864
        %v3866 = vrot.slane %v3852, %v3865
        %v3867 = vcombine.low %v3843, %v3849
        %v3868 = vcombine.high %v3843, %v3849
        %v3870 = vunpack.c.l.s4 1983009808
        %v3871 = vunpack.c.0.s8 %v3870
        %v3872 = vlaneseq
        %v3873 = vshrl.u32 %v3872, 7
        %v3874 = vsub.s32 %v3871, %v3873
        %v3875 = vrot.slane %v3867, %v3874
        %v3877 = vunpack.c.l.s4 1983009808
        %v3878 = vunpack.c.0.s8 %v3877
        %v3879 = vlaneseq
        %v3880 = vshrl.u32 %v3879, 7
        %v3881 = vsub.s32 %v3878, %v3880
        %v3882 = vrot.slane %v3868, %v3881
        %v3883 = vcombine.low %v3859, %v3875
        %v3884 = vcombine.high %v3859, %v3875
        %v3886 = vunpack.c.l.s4 1934713408
        %v3887 = vunpack.c.0.s8 %v3886
        %v3888 = vlaneseq
        %v3889 = vshrl.u32 %v3888, 7
        %v3890 = vsub.s32 %v3887, %v3889
        %v3891 = vrot.slane %v3883, %v3890
        %v3893 = vunpack.c.l.s4 1934713408
        %v3894 = vunpack.c.0.s8 %v3893
        %v3895 = vlaneseq
        %v3896 = vshrl.u32 %v3895, 7
        %v3897 = vsub.s32 %v3894, %v3896
        %v3898 = vrot.slane %v3884, %v3897
        %v3899 = vcombine.low %v3866, %v3882
        %v3900 = vcombine.high %v3866, %v3882
        %v3902 = vunpack.c.l.s4 1934713408
        %v3903 = vunpack.c.0.s8 %v3902
        %v3904 = vlaneseq
        %v3905 = vshrl.u32 %v3904, 7
        %v3906 = vsub.s32 %v3903, %v3905
        %v3907 = vrot.slane %v3899, %v3906
        %v3909 = vunpack.c.l.s4 1934713408
        %v3910 = vunpack.c.0.s8 %v3909
        %v3911 = vlaneseq
        %v3912 = vshrl.u32 %v3911, 7
        %v3913 = vsub.s32 %v3910, %v3912
        %v3914 = vrot.slane %v3900, %v3913
        %v3915 = vcombine.high %v3891, 0.0
        %v3916 = vcombine.high %v3898, 0.0
        %v3917 = vcombine.high %v3907, 0.0
        %v3918 = vcombine.high %v3914, 0.0
        %v3919 = vcombine.low %v3891, %v3898
        %v3921 = vunpack.c.l.s4 1983009808
        %v3922 = vunpack.c.0.s8 %v3921
        %v3923 = vlaneseq
        %v3924 = vshrl.u32 %v3923, 7
        %v3925 = vsub.s32 %v3922, %v3924
        %v3926 = vrot.slane %v3919, %v3925
        %v3927 = vcombine.low %v3915, %v3916
        %v3929 = vunpack.c.l.s4 1983009808
        %v3930 = vunpack.c.0.s8 %v3929
        %v3931 = vlaneseq
        %v3932 = vshrl.u32 %v3931, 7
        %v3933 = vsub.s32 %v3930, %v3932
        %v3934 = vrot.slane %v3927, %v3933
        %v3935 = vcombine.low %v3907, %v3914
        %v3937 = vunpack.c.l.s4 1983009808
        %v3938 = vunpack.c.0.s8 %v3937
        %v3939 = vlaneseq
        %v3940 = vshrl.u32 %v3939, 7
        %v3941 = vsub.s32 %v3938, %v3940
        %v3942 = vrot.slane %v3935, %v3941
        %v3943 = vcombine.low %v3917, %v3918
        %v3945 = vunpack.c.l.s4 1983009808
        %v3946 = vunpack.c.0.s8 %v3945
        %v3947 = vlaneseq
        %v3948 = vshrl.u32 %v3947, 7
        %v3949 = vsub.s32 %v3946, %v3948
        %v3950 = vrot.slane %v3943, %v3949
        %v3951 = vcombine.low %v3926, %v3934
        %v3952 = vcombine.high %v3926, %v3934
        %v3954 = vunpack.c.l.s4 1934713408
        %v3955 = vunpack.c.0.s8 %v3954
        %v3956 = vlaneseq
        %v3957 = vshrl.u32 %v3956, 7
        %v3958 = vsub.s32 %v3955, %v3957
        %v3959 = vrot.slane %v3951, %v3958
        %v3961 = vunpack.c.l.s4 1934713408
        %v3962 = vunpack.c.0.s8 %v3961
        %v3963 = vlaneseq
        %v3964 = vshrl.u32 %v3963, 7
        %v3965 = vsub.s32 %v3962, %v3964
        %v3966 = vrot.slane %v3952, %v3965
        %v3967 = vcombine.low %v3942, %v3950
        %v3968 = vcombine.high %v3942, %v3950
        %v3970 = vunpack.c.l.s4 1934713408
        %v3971 = vunpack.c.0.s8 %v3970
        %v3972 = vlaneseq
        %v3973 = vshrl.u32 %v3972, 7
        %v3974 = vsub.s32 %v3971, %v3973
        %v3975 = vrot.slane %v3967, %v3974
        %v3977 = vunpack.c.l.s4 1934713408
        %v3978 = vunpack.c.0.s8 %v3977
        %v3979 = vlaneseq
        %v3980 = vshrl.u32 %v3979, 7
        %v3981 = vsub.s32 %v3978, %v3980
        %v3982 = vrot.slane %v3968, %v3981
        %v3983 = vcombine.low %v3959, %v3975
        %v3984 = vcombine.high %v3959, %v3975
        %v3985 = vcombine.low %v3966, %v3982
        %v3986 = vcombine.high %v3966, %v3982
        %3988 = vrot.lane.b32.xlu0 %v3793, 120
        %v3989 = vpop.permute.xlu0 %3988
        %3991 = vrot.lane.b32.xlu0 %v3793, 112
        %v3992 = vpop.permute.xlu0 %3991
        %3994 = vrot.lane.b32.xlu0 %v3793, 104
        %v3995 = vpop.permute.xlu0 %3994
        %v3997 = vcombine.low %v3793, %v3992
        %v3998 = vcombine.high %v3793, %v3992
        %v4000 = vunpack.c.l.s4 1983009808
        %v4001 = vunpack.c.0.s8 %v4000
        %v4002 = vlaneseq
        %v4003 = vshrl.u32 %v4002, 7
        %v4004 = vsub.s32 %v4001, %v4003
        %v4005 = vrot.slane %v3997, %v4004
        %v4007 = vunpack.c.l.s4 1983009808
        %v4008 = vunpack.c.0.s8 %v4007
        %v4009 = vlaneseq
        %v4010 = vshrl.u32 %v4009, 7
        %v4011 = vsub.s32 %v4008, %v4010
        %v4012 = vrot.slane %v3998, %v4011
        %v4013 = vcombine.low %v3989, %v3995
        %v4014 = vcombine.high %v3989, %v3995
        %v4016 = vunpack.c.l.s4 1983009808
        %v4017 = vunpack.c.0.s8 %v4016
        %v4018 = vlaneseq
        %v4019 = vshrl.u32 %v4018, 7
        %v4020 = vsub.s32 %v4017, %v4019
        %v4021 = vrot.slane %v4013, %v4020
        %v4023 = vunpack.c.l.s4 1983009808
        %v4024 = vunpack.c.0.s8 %v4023
        %v4025 = vlaneseq
        %v4026 = vshrl.u32 %v4025, 7
        %v4027 = vsub.s32 %v4024, %v4026
        %v4028 = vrot.slane %v4014, %v4027
        %v4029 = vcombine.low %v4005, %v4021
        %v4030 = vcombine.high %v4005, %v4021
        %v4032 = vunpack.c.l.s4 1934713408
        %v4033 = vunpack.c.0.s8 %v4032
        %v4034 = vlaneseq
        %v4035 = vshrl.u32 %v4034, 7
        %v4036 = vsub.s32 %v4033, %v4035
        %v4037 = vrot.slane %v4029, %v4036
        %v4039 = vunpack.c.l.s4 1934713408
        %v4040 = vunpack.c.0.s8 %v4039
        %v4041 = vlaneseq
        %v4042 = vshrl.u32 %v4041, 7
        %v4043 = vsub.s32 %v4040, %v4042
        %v4044 = vrot.slane %v4030, %v4043
        %v4045 = vcombine.low %v4012, %v4028
        %v4046 = vcombine.high %v4012, %v4028
        %v4048 = vunpack.c.l.s4 1934713408
        %v4049 = vunpack.c.0.s8 %v4048
        %v4050 = vlaneseq
        %v4051 = vshrl.u32 %v4050, 7
        %v4052 = vsub.s32 %v4049, %v4051
        %v4053 = vrot.slane %v4045, %v4052
        %v4055 = vunpack.c.l.s4 1934713408
        %v4056 = vunpack.c.0.s8 %v4055
        %v4057 = vlaneseq
        %v4058 = vshrl.u32 %v4057, 7
        %v4059 = vsub.s32 %v4056, %v4058
        %v4060 = vrot.slane %v4046, %v4059
        %v4061 = vcombine.high %v4037, 0.0
        %v4062 = vcombine.high %v4044, 0.0
        %v4063 = vcombine.high %v4053, 0.0
        %v4064 = vcombine.high %v4060, 0.0
        %v4065 = vcombine.low %v4037, %v4044
        %v4067 = vunpack.c.l.s4 1983009808
        %v4068 = vunpack.c.0.s8 %v4067
        %v4069 = vlaneseq
        %v4070 = vshrl.u32 %v4069, 7
        %v4071 = vsub.s32 %v4068, %v4070
        %v4072 = vrot.slane %v4065, %v4071
        %v4073 = vcombine.low %v4061, %v4062
        %v4075 = vunpack.c.l.s4 1983009808
        %v4076 = vunpack.c.0.s8 %v4075
        %v4077 = vlaneseq
        %v4078 = vshrl.u32 %v4077, 7
        %v4079 = vsub.s32 %v4076, %v4078
        %v4080 = vrot.slane %v4073, %v4079
        %v4081 = vcombine.low %v4053, %v4060
        %v4083 = vunpack.c.l.s4 1983009808
        %v4084 = vunpack.c.0.s8 %v4083
        %v4085 = vlaneseq
        %v4086 = vshrl.u32 %v4085, 7
        %v4087 = vsub.s32 %v4084, %v4086
        %v4088 = vrot.slane %v4081, %v4087
        %v4089 = vcombine.low %v4063, %v4064
        %v4091 = vunpack.c.l.s4 1983009808
        %v4092 = vunpack.c.0.s8 %v4091
        %v4093 = vlaneseq
        %v4094 = vshrl.u32 %v4093, 7
        %v4095 = vsub.s32 %v4092, %v4094
        %v4096 = vrot.slane %v4089, %v4095
        %v4097 = vcombine.low %v4072, %v4080
        %v4098 = vcombine.high %v4072, %v4080
        %v4100 = vunpack.c.l.s4 1934713408
        %v4101 = vunpack.c.0.s8 %v4100
        %v4102 = vlaneseq
        %v4103 = vshrl.u32 %v4102, 7
        %v4104 = vsub.s32 %v4101, %v4103
        %v4105 = vrot.slane %v4097, %v4104
        %v4107 = vunpack.c.l.s4 1934713408
        %v4108 = vunpack.c.0.s8 %v4107
        %v4109 = vlaneseq
        %v4110 = vshrl.u32 %v4109, 7
        %v4111 = vsub.s32 %v4108, %v4110
        %v4112 = vrot.slane %v4098, %v4111
        %v4113 = vcombine.low %v4088, %v4096
        %v4114 = vcombine.high %v4088, %v4096
        %v4116 = vunpack.c.l.s4 1934713408
        %v4117 = vunpack.c.0.s8 %v4116
        %v4118 = vlaneseq
        %v4119 = vshrl.u32 %v4118, 7
        %v4120 = vsub.s32 %v4117, %v4119
        %v4121 = vrot.slane %v4113, %v4120
        %v4123 = vunpack.c.l.s4 1934713408
        %v4124 = vunpack.c.0.s8 %v4123
        %v4125 = vlaneseq
        %v4126 = vshrl.u32 %v4125, 7
        %v4127 = vsub.s32 %v4124, %v4126
        %v4128 = vrot.slane %v4114, %v4127
        %v4129 = vcombine.low %v4105, %v4121
        %v4130 = vcombine.high %v4105, %v4121
        %v4131 = vcombine.low %v4112, %v4128
        %v4132 = vcombine.high %v4112, %v4128
        %4134 = vrot.lane.b32.xlu0 %v3836, 120
        %v4135 = vpop.permute.xlu0 %4134
        %4137 = vrot.lane.b32.xlu0 %v3836, 112
        %v4138 = vpop.permute.xlu0 %4137
        %4140 = vrot.lane.b32.xlu0 %v3836, 104
        %v4141 = vpop.permute.xlu0 %4140
        %v4143 = vcombine.low %v3836, %v4138
        %v4144 = vcombine.high %v3836, %v4138
        %v4146 = vunpack.c.l.s4 1983009808
        %v4147 = vunpack.c.0.s8 %v4146
        %v4148 = vlaneseq
        %v4149 = vshrl.u32 %v4148, 7
        %v4150 = vsub.s32 %v4147, %v4149
        %v4151 = vrot.slane %v4143, %v4150
        %v4153 = vunpack.c.l.s4 1983009808
        %v4154 = vunpack.c.0.s8 %v4153
        %v4155 = vlaneseq
        %v4156 = vshrl.u32 %v4155, 7
        %v4157 = vsub.s32 %v4154, %v4156
        %v4158 = vrot.slane %v4144, %v4157
        %v4159 = vcombine.low %v4135, %v4141
        %v4160 = vcombine.high %v4135, %v4141
        %v4162 = vunpack.c.l.s4 1983009808
        %v4163 = vunpack.c.0.s8 %v4162
        %v4164 = vlaneseq
        %v4165 = vshrl.u32 %v4164, 7
        %v4166 = vsub.s32 %v4163, %v4165
        %v4167 = vrot.slane %v4159, %v4166
        %v4169 = vunpack.c.l.s4 1983009808
        %v4170 = vunpack.c.0.s8 %v4169
        %v4171 = vlaneseq
        %v4172 = vshrl.u32 %v4171, 7
        %v4173 = vsub.s32 %v4170, %v4172
        %v4174 = vrot.slane %v4160, %v4173
        %v4175 = vcombine.low %v4151, %v4167
        %v4176 = vcombine.high %v4151, %v4167
        %v4178 = vunpack.c.l.s4 1934713408
        %v4179 = vunpack.c.0.s8 %v4178
        %v4180 = vlaneseq
        %v4181 = vshrl.u32 %v4180, 7
        %v4182 = vsub.s32 %v4179, %v4181
        %v4183 = vrot.slane %v4175, %v4182
        %v4185 = vunpack.c.l.s4 1934713408
        %v4186 = vunpack.c.0.s8 %v4185
        %v4187 = vlaneseq
        %v4188 = vshrl.u32 %v4187, 7
        %v4189 = vsub.s32 %v4186, %v4188
        %v4190 = vrot.slane %v4176, %v4189
        %v4191 = vcombine.low %v4158, %v4174
        %v4192 = vcombine.high %v4158, %v4174
        %v4194 = vunpack.c.l.s4 1934713408
        %v4195 = vunpack.c.0.s8 %v4194
        %v4196 = vlaneseq
        %v4197 = vshrl.u32 %v4196, 7
        %v4198 = vsub.s32 %v4195, %v4197
        %v4199 = vrot.slane %v4191, %v4198
        %v4201 = vunpack.c.l.s4 1934713408
        %v4202 = vunpack.c.0.s8 %v4201
        %v4203 = vlaneseq
        %v4204 = vshrl.u32 %v4203, 7
        %v4205 = vsub.s32 %v4202, %v4204
        %v4206 = vrot.slane %v4192, %v4205
        %v4207 = vcombine.high %v4183, 0.0
        %v4208 = vcombine.high %v4190, 0.0
        %v4209 = vcombine.high %v4199, 0.0
        %v4210 = vcombine.high %v4206, 0.0
        %v4211 = vcombine.low %v4183, %v4190
        %v4213 = vunpack.c.l.s4 1983009808
        %v4214 = vunpack.c.0.s8 %v4213
        %v4215 = vlaneseq
        %v4216 = vshrl.u32 %v4215, 7
        %v4217 = vsub.s32 %v4214, %v4216
        %v4218 = vrot.slane %v4211, %v4217
        %v4219 = vcombine.low %v4207, %v4208
        %v4221 = vunpack.c.l.s4 1983009808
        %v4222 = vunpack.c.0.s8 %v4221
        %v4223 = vlaneseq
        %v4224 = vshrl.u32 %v4223, 7
        %v4225 = vsub.s32 %v4222, %v4224
        %v4226 = vrot.slane %v4219, %v4225
        %v4227 = vcombine.low %v4199, %v4206
        %v4229 = vunpack.c.l.s4 1983009808
        %v4230 = vunpack.c.0.s8 %v4229
        %v4231 = vlaneseq
        %v4232 = vshrl.u32 %v4231, 7
        %v4233 = vsub.s32 %v4230, %v4232
        %v4234 = vrot.slane %v4227, %v4233
        %v4235 = vcombine.low %v4209, %v4210
        %v4237 = vunpack.c.l.s4 1983009808
        %v4238 = vunpack.c.0.s8 %v4237
        %v4239 = vlaneseq
        %v4240 = vshrl.u32 %v4239, 7
        %v4241 = vsub.s32 %v4238, %v4240
        %v4242 = vrot.slane %v4235, %v4241
        %v4243 = vcombine.low %v4218, %v4226
        %v4244 = vcombine.high %v4218, %v4226
        %v4246 = vunpack.c.l.s4 1934713408
        %v4247 = vunpack.c.0.s8 %v4246
        %v4248 = vlaneseq
        %v4249 = vshrl.u32 %v4248, 7
        %v4250 = vsub.s32 %v4247, %v4249
        %v4251 = vrot.slane %v4243, %v4250
        %v4253 = vunpack.c.l.s4 1934713408
        %v4254 = vunpack.c.0.s8 %v4253
        %v4255 = vlaneseq
        %v4256 = vshrl.u32 %v4255, 7
        %v4257 = vsub.s32 %v4254, %v4256
        %v4258 = vrot.slane %v4244, %v4257
        %v4259 = vcombine.low %v4234, %v4242
        %v4260 = vcombine.high %v4234, %v4242
        %v4262 = vunpack.c.l.s4 1934713408
        %v4263 = vunpack.c.0.s8 %v4262
        %v4264 = vlaneseq
        %v4265 = vshrl.u32 %v4264, 7
        %v4266 = vsub.s32 %v4263, %v4265
        %v4267 = vrot.slane %v4259, %v4266
        %v4269 = vunpack.c.l.s4 1934713408
        %v4270 = vunpack.c.0.s8 %v4269
        %v4271 = vlaneseq
        %v4272 = vshrl.u32 %v4271, 7
        %v4273 = vsub.s32 %v4270, %v4272
        %v4274 = vrot.slane %v4260, %v4273
        %v4275 = vcombine.low %v4251, %v4267
        %v4276 = vcombine.high %v4251, %v4267
        %v4277 = vcombine.low %v4258, %v4274
        %v4278 = vcombine.high %v4258, %v4274
        %v4279 = vpack.c.bf16 %v3983, %v3983
        %v4280 = vpack.c.bf16 %v3984, %v3984
        %v4281 = vpack.c.bf16 %v3985, %v3985
        %v4282 = vpack.c.bf16 %v3986, %v3986
        %v4283 = vpack.c.bf16 %v4129, %v4129
        %v4284 = vpack.c.bf16 %v4130, %v4130
        %v4285 = vpack.c.bf16 %v4131, %v4131
        %v4286 = vpack.c.bf16 %v4132, %v4132
        %v4287 = vpack.c.bf16 %v4275, %v4275
        %v4288 = vpack.c.bf16 %v4276, %v4276
        %v4289 = vpack.c.bf16 %v4277, %v4277
        %v4290 = vpack.c.bf16 %v4278, %v4278
        %v4292 = vsel %vm1326, %v4279, 0
        %v4295 = vsel %vm1326, %v4283, 0
        %4297 = vmatprep.subr.bf16.mxu0 0
        %4298 = vmatpush1.bf16.xpose.msra.mxu0 %v4295
        %4299 = vmatprep.subr.bf16.mxu0 0
        %4300 = vmatpush1.bf16.xpose.msra.mxu0 0
        %4301 = vmatprep.subr.bf16.mxu0 0
        %4302 = vmatpush1.bf16.xpose.msra.mxu0 0
        %4303 = vmatprep.subr.bf16.mxu0 0
        %4304 = vmatpush1.bf16.xpose.msra.mxu0 0
        %4305 = vmatprep.subr.bf16.mxu0 0
        %4306 = vmatpush1.bf16.xpose.msra.mxu0 0
        %4307 = vmatprep.subr.bf16.mxu0 0
        %4308 = vmatpush1.bf16.xpose.msra.mxu0 0
        %4309 = vmatprep.subr.bf16.mxu0 0
        %4310 = vmatpush1.bf16.xpose.msra.mxu0 0
        %4311 = vmatprep.subr.bf16.mxu0 0
        %4312 = vmatpush1.bf16.xpose.msra.mxu0 0
        %4313 = vmatprep.subr.bf16.mxu0 0
        %4314 = vmatpush1.bf16.xpose.msra.mxu0 0
        %4315 = vmatprep.subr.bf16.mxu0 0
        %4316 = vmatpush1.bf16.xpose.msra.mxu0 0
        %4317 = vmatprep.subr.bf16.mxu0 0
        %4318 = vmatpush1.bf16.xpose.msra.mxu0 0
        %4319 = vmatprep.subr.bf16.mxu0 0
        %4320 = vmatpush1.bf16.xpose.msra.mxu0 0
        %4321 = vmatprep.subr.bf16.mxu0 0
        %4322 = vmatpush1.bf16.xpose.msra.mxu0 0
        %4323 = vmatprep.subr.bf16.mxu0 0
        %4324 = vmatpush1.bf16.xpose.msra.mxu0 0
        %4325 = vmatprep.subr.bf16.mxu0 0
        %4326 = vmatpush1.bf16.xpose.msra.mxu0 0
        %4327 = vmatprep.subr.bf16.mxu0 0
        %4328 = vmatpush1.bf16.xpose.msra.mxu0 0
        %4329 = vmatprep.mubr.bf16.mxu0 0
        %4330 = vmatmul.mubr.bf16.gmra.mrb[0].mxu0 %v4292
        %v4331 = vpop.f32.mrb[0].mxu0
        %v4332 = vadd.f32 0.0, %v4331
        %v4333 = vpop.f32.mrb[0].mxu0
        %v4334 = vpop.f32.mrb[0].mxu0
        %v4335 = vpop.f32.mrb[0].mxu0
        %4336 = vdwg.mxu0
        %v4338 = vsel %vm1326, %v4280, 0
        %v4341 = vsel %vm1326, %v4284, 0
        %4343 = vmatprep.subr.bf16.mxu0 0
        %4344 = vmatpush1.bf16.xpose.msra.mxu0 %v4341
        %4345 = vmatprep.subr.bf16.mxu0 0
        %4346 = vmatpush1.bf16.xpose.msra.mxu0 0
        %4347 = vmatprep.subr.bf16.mxu0 0
        %4348 = vmatpush1.bf16.xpose.msra.mxu0 0
        %4349 = vmatprep.subr.bf16.mxu0 0
        %4350 = vmatpush1.bf16.xpose.msra.mxu0 0
        %4351 = vmatprep.subr.bf16.mxu0 0
        %4352 = vmatpush1.bf16.xpose.msra.mxu0 0
        %4353 = vmatprep.subr.bf16.mxu0 0
        %4354 = vmatpush1.bf16.xpose.msra.mxu0 0
        %4355 = vmatprep.subr.bf16.mxu0 0
        %4356 = vmatpush1.bf16.xpose.msra.mxu0 0
        %4357 = vmatprep.subr.bf16.mxu0 0
        %4358 = vmatpush1.bf16.xpose.msra.mxu0 0
        %4359 = vmatprep.subr.bf16.mxu0 0
        %4360 = vmatpush1.bf16.xpose.msra.mxu0 0
        %4361 = vmatprep.subr.bf16.mxu0 0
        %4362 = vmatpush1.bf16.xpose.msra.mxu0 0
        %4363 = vmatprep.subr.bf16.mxu0 0
        %4364 = vmatpush1.bf16.xpose.msra.mxu0 0
        %4365 = vmatprep.subr.bf16.mxu0 0
        %4366 = vmatpush1.bf16.xpose.msra.mxu0 0
        %4367 = vmatprep.subr.bf16.mxu0 0
        %4368 = vmatpush1.bf16.xpose.msra.mxu0 0
        %4369 = vmatprep.subr.bf16.mxu0 0
        %4370 = vmatpush1.bf16.xpose.msra.mxu0 0
        %4371 = vmatprep.subr.bf16.mxu0 0
        %4372 = vmatpush1.bf16.xpose.msra.mxu0 0
        %4373 = vmatprep.subr.bf16.mxu0 0
        %4374 = vmatpush1.bf16.xpose.msra.mxu0 0
        %4375 = vmatprep.mubr.bf16.mxu0 0
        %4376 = vmatmul.mubr.bf16.gmra.mrb[0].mxu0 %v4338
        %v4377 = vpop.f32.mrb[0].mxu0
        %v4378 = vadd.f32 0.0, %v4377
        %v4379 = vpop.f32.mrb[0].mxu0
        %v4380 = vpop.f32.mrb[0].mxu0
        %v4381 = vpop.f32.mrb[0].mxu0
        %4382 = vdwg.mxu0
        %v4384 = vsel %vm1326, %v4281, 0
        %v4387 = vsel %vm1326, %v4285, 0
        %4389 = vmatprep.subr.bf16.mxu0 0
        %4390 = vmatpush1.bf16.xpose.msra.mxu0 %v4387
        %4391 = vmatprep.subr.bf16.mxu0 0
        %4392 = vmatpush1.bf16.xpose.msra.mxu0 0
        %4393 = vmatprep.subr.bf16.mxu0 0
        %4394 = vmatpush1.bf16.xpose.msra.mxu0 0
        %4395 = vmatprep.subr.bf16.mxu0 0
        %4396 = vmatpush1.bf16.xpose.msra.mxu0 0
        %4397 = vmatprep.subr.bf16.mxu0 0
        %4398 = vmatpush1.bf16.xpose.msra.mxu0 0
        %4399 = vmatprep.subr.bf16.mxu0 0
        %4400 = vmatpush1.bf16.xpose.msra.mxu0 0
        %4401 = vmatprep.subr.bf16.mxu0 0
        %4402 = vmatpush1.bf16.xpose.msra.mxu0 0
        %4403 = vmatprep.subr.bf16.mxu0 0
        %4404 = vmatpush1.bf16.xpose.msra.mxu0 0
        %4405 = vmatprep.subr.bf16.mxu0 0
        %4406 = vmatpush1.bf16.xpose.msra.mxu0 0
        %4407 = vmatprep.subr.bf16.mxu0 0
        %4408 = vmatpush1.bf16.xpose.msra.mxu0 0
        %4409 = vmatprep.subr.bf16.mxu0 0
        %4410 = vmatpush1.bf16.xpose.msra.mxu0 0
        %4411 = vmatprep.subr.bf16.mxu0 0
        %4412 = vmatpush1.bf16.xpose.msra.mxu0 0
        %4413 = vmatprep.subr.bf16.mxu0 0
        %4414 = vmatpush1.bf16.xpose.msra.mxu0 0
        %4415 = vmatprep.subr.bf16.mxu0 0
        %4416 = vmatpush1.bf16.xpose.msra.mxu0 0
        %4417 = vmatprep.subr.bf16.mxu0 0
        %4418 = vmatpush1.bf16.xpose.msra.mxu0 0
        %4419 = vmatprep.subr.bf16.mxu0 0
        %4420 = vmatpush1.bf16.xpose.msra.mxu0 0
        %4421 = vmatprep.mubr.bf16.mxu0 0
        %4422 = vmatmul.mubr.bf16.gmra.mrb[0].mxu0 %v4384
        %v4423 = vpop.f32.mrb[0].mxu0
        %v4424 = vadd.f32 0.0, %v4423
        %v4425 = vpop.f32.mrb[0].mxu0
        %v4426 = vpop.f32.mrb[0].mxu0
        %v4427 = vpop.f32.mrb[0].mxu0
        %4428 = vdwg.mxu0
        %v4430 = vsel %vm1326, %v4282, 0
        %v4433 = vsel %vm1326, %v4286, 0
        %4435 = vmatprep.subr.bf16.mxu0 0
        %4436 = vmatpush1.bf16.xpose.msra.mxu0 %v4433
        %4437 = vmatprep.subr.bf16.mxu0 0
        %4438 = vmatpush1.bf16.xpose.msra.mxu0 0
        %4439 = vmatprep.subr.bf16.mxu0 0
        %4440 = vmatpush1.bf16.xpose.msra.mxu0 0
        %4441 = vmatprep.subr.bf16.mxu0 0
        %4442 = vmatpush1.bf16.xpose.msra.mxu0 0
        %4443 = vmatprep.subr.bf16.mxu0 0
        %4444 = vmatpush1.bf16.xpose.msra.mxu0 0
        %4445 = vmatprep.subr.bf16.mxu0 0
        %4446 = vmatpush1.bf16.xpose.msra.mxu0 0
        %4447 = vmatprep.subr.bf16.mxu0 0
        %4448 = vmatpush1.bf16.xpose.msra.mxu0 0
        %4449 = vmatprep.subr.bf16.mxu0 0
        %4450 = vmatpush1.bf16.xpose.msra.mxu0 0
        %4451 = vmatprep.subr.bf16.mxu0 0
        %4452 = vmatpush1.bf16.xpose.msra.mxu0 0
        %4453 = vmatprep.subr.bf16.mxu0 0
        %4454 = vmatpush1.bf16.xpose.msra.mxu0 0
        %4455 = vmatprep.subr.bf16.mxu0 0
        %4456 = vmatpush1.bf16.xpose.msra.mxu0 0
        %4457 = vmatprep.subr.bf16.mxu0 0
        %4458 = vmatpush1.bf16.xpose.msra.mxu0 0
        %4459 = vmatprep.subr.bf16.mxu0 0
        %4460 = vmatpush1.bf16.xpose.msra.mxu0 0
        %4461 = vmatprep.subr.bf16.mxu0 0
        %4462 = vmatpush1.bf16.xpose.msra.mxu0 0
        %4463 = vmatprep.subr.bf16.mxu0 0
        %4464 = vmatpush1.bf16.xpose.msra.mxu0 0
        %4465 = vmatprep.subr.bf16.mxu0 0
        %4466 = vmatpush1.bf16.xpose.msra.mxu0 0
        %4467 = vmatprep.mubr.bf16.mxu0 0
        %4468 = vmatmul.mubr.bf16.gmra.mrb[0].mxu0 %v4430
        %v4469 = vpop.f32.mrb[0].mxu0
        %v4470 = vadd.f32 0.0, %v4469
        %v4471 = vpop.f32.mrb[0].mxu0
        %v4472 = vpop.f32.mrb[0].mxu0
        %v4473 = vpop.f32.mrb[0].mxu0
        %4474 = vdwg.mxu0
        %v4475 = vsel %vm1326, %v4332, -inf
        %4476 = vmax.xlane.f32.xlu0 %v4475
        %v4477 = vpop.xlane.xlu0 %4476
        %v4478 = vsel %vm1326, %v4378, -inf
        %4479 = vmax.xlane.f32.xlu0 %v4478
        %v4480 = vpop.xlane.xlu0 %4479
        %v4481 = vsel %vm1326, %v4424, -inf
        %4482 = vmax.xlane.f32.xlu0 %v4481
        %v4483 = vpop.xlane.xlu0 %4482
        %v4484 = vsel %vm1326, %v4470, -inf
        %4485 = vmax.xlane.f32.xlu0 %v4484
        %v4486 = vpop.xlane.xlu0 %4485
        %v4487 = vsub.f32 %v4332, %v4477
        %v4488 = vsub.f32 %v4378, %v4480
        %v4489 = vsub.f32 %v4424, %v4483
        %v4490 = vsub.f32 %v4470, %v4486
        %v4491 = vmul.f32 %v4487, 1.442695
        %v4492 = vpow.pop %v4491
        %v4493 = vmul.f32 %v4488, 1.442695
        %v4494 = vpow.pop %v4493
        %v4495 = vmul.f32 %v4489, 1.442695
        %v4496 = vpow.pop %v4495
        %v4497 = vmul.f32 %v4490, 1.442695
        %v4498 = vpow.pop %v4497
        %v4499 = vsel %vm1326, %v4492, 0.0
        %4500 = vadd.xlane.f32.xlu0 %v4499
        %v4501 = vpop.xlane.xlu0 %4500
        %v4502 = vsel %vm1326, %v4494, 0.0
        %4503 = vadd.xlane.f32.xlu0 %v4502
        %v4504 = vpop.xlane.xlu0 %4503
        %v4505 = vsel %vm1326, %v4496, 0.0
        %4506 = vadd.xlane.f32.xlu0 %v4505
        %v4507 = vpop.xlane.xlu0 %4506
        %v4508 = vsel %vm1326, %v4498, 0.0
        %4509 = vadd.xlane.f32.xlu0 %v4508
        %v4510 = vpop.xlane.xlu0 %4509
        %v4511 = vpack.c.bf16 %v4492, %v4492
        %v4512 = vpack.c.bf16 %v4494, %v4494
        %v4513 = vpack.c.bf16 %v4496, %v4496
        %v4514 = vpack.c.bf16 %v4498, %v4498
        %v4516 = vsel %vm1326, %v4511, 0
        %v4519 = vsel %vm1554, %v4287, 0
        %4521 = vmatprep.subr.bf16.mxu0 0
        %4522 = vmatpush1.bf16.msra.mxu0 %v4519
        %4523 = vmatprep.subr.bf16.mxu0 0
        %4524 = vmatpush1.bf16.msra.mxu0 0
        %4525 = vmatprep.subr.bf16.mxu0 0
        %4526 = vmatpush1.bf16.msra.mxu0 0
        %4527 = vmatprep.subr.bf16.mxu0 0
        %4528 = vmatpush1.bf16.msra.mxu0 0
        %4529 = vmatprep.subr.bf16.mxu0 0
        %4530 = vmatpush1.bf16.msra.mxu0 0
        %4531 = vmatprep.subr.bf16.mxu0 0
        %4532 = vmatpush1.bf16.msra.mxu0 0
        %4533 = vmatprep.subr.bf16.mxu0 0
        %4534 = vmatpush1.bf16.msra.mxu0 0
        %4535 = vmatprep.subr.bf16.mxu0 0
        %4536 = vmatpush1.bf16.msra.mxu0 0
        %4537 = vmatprep.subr.bf16.mxu0 0
        %4538 = vmatpush1.bf16.msra.mxu0 0
        %4539 = vmatprep.subr.bf16.mxu0 0
        %4540 = vmatpush1.bf16.msra.mxu0 0
        %4541 = vmatprep.subr.bf16.mxu0 0
        %4542 = vmatpush1.bf16.msra.mxu0 0
        %4543 = vmatprep.subr.bf16.mxu0 0
        %4544 = vmatpush1.bf16.msra.mxu0 0
        %4545 = vmatprep.subr.bf16.mxu0 0
        %4546 = vmatpush1.bf16.msra.mxu0 0
        %4547 = vmatprep.subr.bf16.mxu0 0
        %4548 = vmatpush1.bf16.msra.mxu0 0
        %4549 = vmatprep.subr.bf16.mxu0 0
        %4550 = vmatpush1.bf16.msra.mxu0 0
        %4551 = vmatprep.subr.bf16.mxu0 0
        %4552 = vmatpush1.bf16.msra.mxu0 0
        %4553 = vmatprep.mubr.bf16.mxu0 0
        %4554 = vmatmul.mubr.bf16.gmra.mrb[0].mxu0 %v4516
        %v4555 = vpop.f32.mrb[0].mxu0
        %v4556 = vadd.f32 0.0, %v4555
        %v4557 = vpop.f32.mrb[0].mxu0
        %v4558 = vpop.f32.mrb[0].mxu0
        %v4559 = vpop.f32.mrb[0].mxu0
        %4560 = vdwg.mxu0
        %v4562 = vsel %vm1326, %v4512, 0
        %v4565 = vsel %vm1554, %v4288, 0
        %4567 = vmatprep.subr.bf16.mxu0 0
        %4568 = vmatpush1.bf16.msra.mxu0 %v4565
        %4569 = vmatprep.subr.bf16.mxu0 0
        %4570 = vmatpush1.bf16.msra.mxu0 0
        %4571 = vmatprep.subr.bf16.mxu0 0
        %4572 = vmatpush1.bf16.msra.mxu0 0
        %4573 = vmatprep.subr.bf16.mxu0 0
        %4574 = vmatpush1.bf16.msra.mxu0 0
        %4575 = vmatprep.subr.bf16.mxu0 0
        %4576 = vmatpush1.bf16.msra.mxu0 0
        %4577 = vmatprep.subr.bf16.mxu0 0
        %4578 = vmatpush1.bf16.msra.mxu0 0
        %4579 = vmatprep.subr.bf16.mxu0 0
        %4580 = vmatpush1.bf16.msra.mxu0 0
        %4581 = vmatprep.subr.bf16.mxu0 0
        %4582 = vmatpush1.bf16.msra.mxu0 0
        %4583 = vmatprep.subr.bf16.mxu0 0
        %4584 = vmatpush1.bf16.msra.mxu0 0
        %4585 = vmatprep.subr.bf16.mxu0 0
        %4586 = vmatpush1.bf16.msra.mxu0 0
        %4587 = vmatprep.subr.bf16.mxu0 0
        %4588 = vmatpush1.bf16.msra.mxu0 0
        %4589 = vmatprep.subr.bf16.mxu0 0
        %4590 = vmatpush1.bf16.msra.mxu0 0
        %4591 = vmatprep.subr.bf16.mxu0 0
        %4592 = vmatpush1.bf16.msra.mxu0 0
        %4593 = vmatprep.subr.bf16.mxu0 0
        %4594 = vmatpush1.bf16.msra.mxu0 0
        %4595 = vmatprep.subr.bf16.mxu0 0
        %4596 = vmatpush1.bf16.msra.mxu0 0
        %4597 = vmatprep.subr.bf16.mxu0 0
        %4598 = vmatpush1.bf16.msra.mxu0 0
        %4599 = vmatprep.mubr.bf16.mxu0 0
        %4600 = vmatmul.mubr.bf16.gmra.mrb[0].mxu0 %v4562
        %v4601 = vpop.f32.mrb[0].mxu0
        %v4602 = vadd.f32 0.0, %v4601
        %v4603 = vpop.f32.mrb[0].mxu0
        %v4604 = vpop.f32.mrb[0].mxu0
        %v4605 = vpop.f32.mrb[0].mxu0
        %4606 = vdwg.mxu0
        %v4608 = vsel %vm1326, %v4513, 0
        %v4611 = vsel %vm1554, %v4289, 0
        %4613 = vmatprep.subr.bf16.mxu0 0
        %4614 = vmatpush1.bf16.msra.mxu0 %v4611
        %4615 = vmatprep.subr.bf16.mxu0 0
        %4616 = vmatpush1.bf16.msra.mxu0 0
        %4617 = vmatprep.subr.bf16.mxu0 0
        %4618 = vmatpush1.bf16.msra.mxu0 0
        %4619 = vmatprep.subr.bf16.mxu0 0
        %4620 = vmatpush1.bf16.msra.mxu0 0
        %4621 = vmatprep.subr.bf16.mxu0 0
        %4622 = vmatpush1.bf16.msra.mxu0 0
        %4623 = vmatprep.subr.bf16.mxu0 0
        %4624 = vmatpush1.bf16.msra.mxu0 0
        %4625 = vmatprep.subr.bf16.mxu0 0
        %4626 = vmatpush1.bf16.msra.mxu0 0
        %4627 = vmatprep.subr.bf16.mxu0 0
        %4628 = vmatpush1.bf16.msra.mxu0 0
        %4629 = vmatprep.subr.bf16.mxu0 0
        %4630 = vmatpush1.bf16.msra.mxu0 0
        %4631 = vmatprep.subr.bf16.mxu0 0
        %4632 = vmatpush1.bf16.msra.mxu0 0
        %4633 = vmatprep.subr.bf16.mxu0 0
        %4634 = vmatpush1.bf16.msra.mxu0 0
        %4635 = vmatprep.subr.bf16.mxu0 0
        %4636 = vmatpush1.bf16.msra.mxu0 0
        %4637 = vmatprep.subr.bf16.mxu0 0
        %4638 = vmatpush1.bf16.msra.mxu0 0
        %4639 = vmatprep.subr.bf16.mxu0 0
        %4640 = vmatpush1.bf16.msra.mxu0 0
        %4641 = vmatprep.subr.bf16.mxu0 0
        %4642 = vmatpush1.bf16.msra.mxu0 0
        %4643 = vmatprep.subr.bf16.mxu0 0
        %4644 = vmatpush1.bf16.msra.mxu0 0
        %4645 = vmatprep.mubr.bf16.mxu0 0
        %4646 = vmatmul.mubr.bf16.gmra.mrb[0].mxu0 %v4608
        %v4647 = vpop.f32.mrb[0].mxu0
        %v4648 = vadd.f32 0.0, %v4647
        %v4649 = vpop.f32.mrb[0].mxu0
        %v4650 = vpop.f32.mrb[0].mxu0
        %v4651 = vpop.f32.mrb[0].mxu0
        %4652 = vdwg.mxu0
        %v4654 = vsel %vm1326, %v4514, 0
        %v4657 = vsel %vm1554, %v4290, 0
        %4659 = vmatprep.subr.bf16.mxu0 0
        %4660 = vmatpush1.bf16.msra.mxu0 %v4657
        %4661 = vmatprep.subr.bf16.mxu0 0
        %4662 = vmatpush1.bf16.msra.mxu0 0
        %4663 = vmatprep.subr.bf16.mxu0 0
        %4664 = vmatpush1.bf16.msra.mxu0 0
        %4665 = vmatprep.subr.bf16.mxu0 0
        %4666 = vmatpush1.bf16.msra.mxu0 0
        %4667 = vmatprep.subr.bf16.mxu0 0
        %4668 = vmatpush1.bf16.msra.mxu0 0
        %4669 = vmatprep.subr.bf16.mxu0 0
        %4670 = vmatpush1.bf16.msra.mxu0 0
        %4671 = vmatprep.subr.bf16.mxu0 0
        %4672 = vmatpush1.bf16.msra.mxu0 0
        %4673 = vmatprep.subr.bf16.mxu0 0
        %4674 = vmatpush1.bf16.msra.mxu0 0
        %4675 = vmatprep.subr.bf16.mxu0 0
        %4676 = vmatpush1.bf16.msra.mxu0 0
        %4677 = vmatprep.subr.bf16.mxu0 0
        %4678 = vmatpush1.bf16.msra.mxu0 0
        %4679 = vmatprep.subr.bf16.mxu0 0
        %4680 = vmatpush1.bf16.msra.mxu0 0
        %4681 = vmatprep.subr.bf16.mxu0 0
        %4682 = vmatpush1.bf16.msra.mxu0 0
        %4683 = vmatprep.subr.bf16.mxu0 0
        %4684 = vmatpush1.bf16.msra.mxu0 0
        %4685 = vmatprep.subr.bf16.mxu0 0
        %4686 = vmatpush1.bf16.msra.mxu0 0
        %4687 = vmatprep.subr.bf16.mxu0 0
        %4688 = vmatpush1.bf16.msra.mxu0 0
        %4689 = vmatprep.subr.bf16.mxu0 0
        %4690 = vmatpush1.bf16.msra.mxu0 0
        %4691 = vmatprep.mubr.bf16.mxu0 0
        %4692 = vmatmul.mubr.bf16.gmra.mrb[0].mxu0 %v4654
        %v4693 = vpop.f32.mrb[0].mxu0
        %v4694 = vadd.f32 0.0, %v4693
        %v4695 = vpop.f32.mrb[0].mxu0
        %v4696 = vpop.f32.mrb[0].mxu0
        %v4697 = vpop.f32.mrb[0].mxu0
        %4698 = vdwg.mxu0
        %v4699 = vrcp.pop %v4501
        %v4700 = vrcp.pop %v4504
        %v4701 = vrcp.pop %v4507
        %v4702 = vrcp.pop %v4510
        %v4703 = vmul.f32 %v4556, %v4699
        %v4704 = vmul.f32 %v4602, %v4700
        %v4705 = vmul.f32 %v4648, %v4701
        %v4706 = vmul.f32 %v4694, %v4702
        %v4707 = vcombine.low %v4703, %v4705
        %v4708 = vcombine.high %v4703, %v4705
        %v4710 = vunpack.c.l.s4 1983009808
        %v4711 = vunpack.c.0.s8 %v4710
        %v4712 = vlaneseq
        %v4713 = vshrl.u32 %v4712, 7
        %v4714 = vsub.s32 %v4711, %v4713
        %v4715 = vrot.slane %v4707, %v4714
        %v4717 = vunpack.c.l.s4 1983009808
        %v4718 = vunpack.c.0.s8 %v4717
        %v4719 = vlaneseq
        %v4720 = vshrl.u32 %v4719, 7
        %v4721 = vsub.s32 %v4718, %v4720
        %v4722 = vrot.slane %v4708, %v4721
        %v4723 = vcombine.low %v4704, %v4706
        %v4724 = vcombine.high %v4704, %v4706
        %v4726 = vunpack.c.l.s4 1983009808
        %v4727 = vunpack.c.0.s8 %v4726
        %v4728 = vlaneseq
        %v4729 = vshrl.u32 %v4728, 7
        %v4730 = vsub.s32 %v4727, %v4729
        %v4731 = vrot.slane %v4723, %v4730
        %v4733 = vunpack.c.l.s4 1983009808
        %v4734 = vunpack.c.0.s8 %v4733
        %v4735 = vlaneseq
        %v4736 = vshrl.u32 %v4735, 7
        %v4737 = vsub.s32 %v4734, %v4736
        %v4738 = vrot.slane %v4724, %v4737
        %v4739 = vcombine.low %v4715, %v4731
        %v4740 = vcombine.high %v4715, %v4731
        %v4742 = vunpack.c.l.s4 1934713408
        %v4743 = vunpack.c.0.s8 %v4742
        %v4744 = vlaneseq
        %v4745 = vshrl.u32 %v4744, 7
        %v4746 = vsub.s32 %v4743, %v4745
        %v4747 = vrot.slane %v4739, %v4746
        %v4749 = vunpack.c.l.s4 1934713408
        %v4750 = vunpack.c.0.s8 %v4749
        %v4751 = vlaneseq
        %v4752 = vshrl.u32 %v4751, 7
        %v4753 = vsub.s32 %v4750, %v4752
        %v4754 = vrot.slane %v4740, %v4753
        %v4755 = vcombine.low %v4722, %v4738
        %v4756 = vcombine.high %v4722, %v4738
        %v4758 = vunpack.c.l.s4 1934713408
        %v4759 = vunpack.c.0.s8 %v4758
        %v4760 = vlaneseq
        %v4761 = vshrl.u32 %v4760, 7
        %v4762 = vsub.s32 %v4759, %v4761
        %v4763 = vrot.slane %v4755, %v4762
        %v4765 = vunpack.c.l.s4 1934713408
        %v4766 = vunpack.c.0.s8 %v4765
        %v4767 = vlaneseq
        %v4768 = vshrl.u32 %v4767, 7
        %v4769 = vsub.s32 %v4766, %v4768
        %v4770 = vrot.slane %v4756, %v4769
        %v4771 = vcombine.high %v4747, 0.0
        %v4772 = vcombine.high %v4754, 0.0
        %v4773 = vcombine.high %v4763, 0.0
        %v4774 = vcombine.high %v4770, 0.0
        %v4775 = vcombine.low %v4747, %v4754
        %v4777 = vunpack.c.l.s4 1983009808
        %v4778 = vunpack.c.0.s8 %v4777
        %v4779 = vlaneseq
        %v4780 = vshrl.u32 %v4779, 7
        %v4781 = vsub.s32 %v4778, %v4780
        %v4782 = vrot.slane %v4775, %v4781
        %v4783 = vcombine.low %v4771, %v4772
        %v4785 = vunpack.c.l.s4 1983009808
        %v4786 = vunpack.c.0.s8 %v4785
        %v4787 = vlaneseq
        %v4788 = vshrl.u32 %v4787, 7
        %v4789 = vsub.s32 %v4786, %v4788
        %v4790 = vrot.slane %v4783, %v4789
        %v4791 = vcombine.low %v4763, %v4770
        %v4793 = vunpack.c.l.s4 1983009808
        %v4794 = vunpack.c.0.s8 %v4793
        %v4795 = vlaneseq
        %v4796 = vshrl.u32 %v4795, 7
        %v4797 = vsub.s32 %v4794, %v4796
        %v4798 = vrot.slane %v4791, %v4797
        %v4799 = vcombine.low %v4773, %v4774
        %v4801 = vunpack.c.l.s4 1983009808
        %v4802 = vunpack.c.0.s8 %v4801
        %v4803 = vlaneseq
        %v4804 = vshrl.u32 %v4803, 7
        %v4805 = vsub.s32 %v4802, %v4804
        %v4806 = vrot.slane %v4799, %v4805
        %v4807 = vcombine.low %v4782, %v4790
        %v4808 = vcombine.high %v4782, %v4790
        %v4810 = vunpack.c.l.s4 1934713408
        %v4811 = vunpack.c.0.s8 %v4810
        %v4812 = vlaneseq
        %v4813 = vshrl.u32 %v4812, 7
        %v4814 = vsub.s32 %v4811, %v4813
        %v4815 = vrot.slane %v4807, %v4814
        %v4817 = vunpack.c.l.s4 1934713408
        %v4818 = vunpack.c.0.s8 %v4817
        %v4819 = vlaneseq
        %v4820 = vshrl.u32 %v4819, 7
        %v4821 = vsub.s32 %v4818, %v4820
        %v4822 = vrot.slane %v4808, %v4821
        %v4823 = vcombine.low %v4798, %v4806
        %v4824 = vcombine.high %v4798, %v4806
        %v4826 = vunpack.c.l.s4 1934713408
        %v4827 = vunpack.c.0.s8 %v4826
        %v4828 = vlaneseq
        %v4829 = vshrl.u32 %v4828, 7
        %v4830 = vsub.s32 %v4827, %v4829
        %v4831 = vrot.slane %v4823, %v4830
        %v4833 = vunpack.c.l.s4 1934713408
        %v4834 = vunpack.c.0.s8 %v4833
        %v4835 = vlaneseq
        %v4836 = vshrl.u32 %v4835, 7
        %v4837 = vsub.s32 %v4834, %v4836
        %v4838 = vrot.slane %v4824, %v4837
        %v4839 = vcombine.low %v4815, %v4831
        %v4840 = vcombine.high %v4815, %v4831
        %v4841 = vcombine.low %v4822, %v4838
        %v4842 = vcombine.high %v4822, %v4838
        %4844 = vrot.lane.b32.xlu0 %v4840, 8
        %v4845 = vpop.permute.xlu0 %4844
        %4848 = vrot.lane.b32.xlu0 %v4841, 16
        %v4849 = vpop.permute.xlu0 %4848
        %4852 = vrot.lane.b32.xlu0 %v4842, 24
        %v4853 = vpop.permute.xlu0 %4852
        %v4855 = vsel %vm1326, %v4839, %v4845
        %v4856 = vsel %vm1893, %v4855, %v4849
        %v4857 = vsel %vm1895, %v4856, %v4853
        %v4858 = vpack.c.bf16 %v4857, %v4857
        %v4860 = vsel %vm674, %v4858, 0
        %4862 = vmatprep.subr.bf16.mxu0 0
        %4863 = vmatpush1.bf16.msra.mxu0 %v1910
        %4864 = vmatprep.subr.bf16.mxu0 0
        %4865 = vmatpush1.bf16.msra.mxu0 %v1911
        %4866 = vmatprep.subr.bf16.mxu0 0
        %4867 = vmatpush1.bf16.msra.mxu0 0
        %4868 = vmatprep.subr.bf16.mxu0 0
        %4869 = vmatpush1.bf16.msra.mxu0 0
        %4870 = vmatprep.subr.bf16.mxu0 0
        %4871 = vmatpush1.bf16.msra.mxu0 0
        %4872 = vmatprep.subr.bf16.mxu0 0
        %4873 = vmatpush1.bf16.msra.mxu0 0
        %4874 = vmatprep.subr.bf16.mxu0 0
        %4875 = vmatpush1.bf16.msra.mxu0 0
        %4876 = vmatprep.subr.bf16.mxu0 0
        %4877 = vmatpush1.bf16.msra.mxu0 0
        %4878 = vmatprep.subr.bf16.mxu0 0
        %4879 = vmatpush1.bf16.msra.mxu0 0
        %4880 = vmatprep.subr.bf16.mxu0 0
        %4881 = vmatpush1.bf16.msra.mxu0 0
        %4882 = vmatprep.subr.bf16.mxu0 0
        %4883 = vmatpush1.bf16.msra.mxu0 0
        %4884 = vmatprep.subr.bf16.mxu0 0
        %4885 = vmatpush1.bf16.msra.mxu0 0
        %4886 = vmatprep.subr.bf16.mxu0 0
        %4887 = vmatpush1.bf16.msra.mxu0 0
        %4888 = vmatprep.subr.bf16.mxu0 0
        %4889 = vmatpush1.bf16.msra.mxu0 0
        %4890 = vmatprep.subr.bf16.mxu0 0
        %4891 = vmatpush1.bf16.msra.mxu0 0
        %4892 = vmatprep.subr.bf16.mxu0 0
        %4893 = vmatpush1.bf16.msra.mxu0 0
        %4894 = vmatprep.mubr.bf16.mxu0 0
        %4895 = vmatmul.mubr.bf16.gmra.mrb[0].mxu0 %v4860
        %v4896 = vpop.f32.mrb[0].mxu0
        %v4897 = vadd.f32 %v1901, %v4896
        %v4898 = vpop.f32.mrb[0].mxu0
        %v4899 = vpop.f32.mrb[0].mxu0
        %v4900 = vpop.f32.mrb[0].mxu0
        %4901 = vdwg.mxu0
        %v4902 = vadd.f32 %v3691, %v4897
        %v4903 = vsel %vm674, %v4902, 0.0
        %4904 = vadd.xlane.f32.xlu0 %v4903
        %v4905 = vpop.xlane.xlu0 %4904
        %v4906 = vmul.f32 %v4905, %v678
        %v4907 = vsub.f32 %v4902, %v4906
        %v4908 = vmul.f32 %v4907, %v4907
        %v4909 = vsel %vm674, %v4908, 0.0
        %4910 = vadd.xlane.f32.xlu0 %v4909
        %v4911 = vpop.xlane.xlu0 %4910
        %v4912 = vmul.f32 %v4911, %v678
        %v4913 = vadd.f32 %v4912, 1e-05
        %v4914 = vrsqrt.pop %v4913
        %v4915 = vmul.f32 %v4907, %v4914
        %v4916 = vmul.f32 %v4915, %v1974
        %v4917 = vadd.f32 %v4916, %v1979
        %v4918 = vadd.f32 %v4917, %v3696
        %v4919 = vpack.c.bf16 %v4918, %v4918
        %v4921 = vsel %vm674, %v4919, 0
        %4923 = vmatprep.subr.bf16.mxu0 0
        %4924 = vmatpush1.bf16.msra.mxu0 %v1995
        %4925 = vmatprep.subr.bf16.mxu0 0
        %4926 = vmatpush1.bf16.msra.mxu0 %v1996
        %4927 = vmatprep.subr.bf16.mxu0 0
        %4928 = vmatpush1.bf16.msra.mxu0 0
        %4929 = vmatprep.subr.bf16.mxu0 0
        %4930 = vmatpush1.bf16.msra.mxu0 0
        %4931 = vmatprep.subr.bf16.mxu0 0
        %4932 = vmatpush1.bf16.msra.mxu0 0
        %4933 = vmatprep.subr.bf16.mxu0 0
        %4934 = vmatpush1.bf16.msra.mxu0 0
        %4935 = vmatprep.subr.bf16.mxu0 0
        %4936 = vmatpush1.bf16.msra.mxu0 0
        %4937 = vmatprep.subr.bf16.mxu0 0
        %4938 = vmatpush1.bf16.msra.mxu0 0
        %4939 = vmatprep.subr.bf16.mxu0 0
        %4940 = vmatpush1.bf16.msra.mxu0 0
        %4941 = vmatprep.subr.bf16.mxu0 0
        %4942 = vmatpush1.bf16.msra.mxu0 0
        %4943 = vmatprep.subr.bf16.mxu0 0
        %4944 = vmatpush1.bf16.msra.mxu0 0
        %4945 = vmatprep.subr.bf16.mxu0 0
        %4946 = vmatpush1.bf16.msra.mxu0 0
        %4947 = vmatprep.subr.bf16.mxu0 0
        %4948 = vmatpush1.bf16.msra.mxu0 0
        %4949 = vmatprep.subr.bf16.mxu0 0
        %4950 = vmatpush1.bf16.msra.mxu0 0
        %4951 = vmatprep.subr.bf16.mxu0 0
        %4952 = vmatpush1.bf16.msra.mxu0 0
        %4953 = vmatprep.subr.bf16.mxu0 0
        %4954 = vmatpush1.bf16.msra.mxu0 0
        %4955 = vmatprep.mubr.bf16.mxu0 0
        %4956 = vmatmul.mubr.bf16.gmra.mrb[0].mxu0 %v4921
        %v4957 = vpop.f32.mrb[0].mxu0
        %v4958 = vadd.f32 %v1986, %v4957
        %v4959 = vpop.f32.mrb[0].mxu0
        %v4960 = vpop.f32.mrb[0].mxu0
        %v4961 = vpop.f32.mrb[0].mxu0
        %4962 = vdwg.mxu0
        %v4965 = vunpack.c.l.b16 %v3694
        %v4966 = vunpack.c.l.b16 %v3695
        %v4967 = vpack.c.b16 %v4966, %v4965
        %v4969 = vsel %vm674, %v4967, 0
        %4971 = vmatprep.subr.bf16.mxu0 0
        %4972 = vmatpush1.bf16.msra.mxu0 %v2059
        %4973 = vmatprep.subr.bf16.mxu0 0
        %4974 = vmatpush1.bf16.msra.mxu0 %v2060
        %4975 = vmatprep.subr.bf16.mxu0 0
        %4976 = vmatpush1.bf16.msra.mxu0 0
        %4977 = vmatprep.subr.bf16.mxu0 0
        %4978 = vmatpush1.bf16.msra.mxu0 0
        %4979 = vmatprep.subr.bf16.mxu0 0
        %4980 = vmatpush1.bf16.msra.mxu0 0
        %4981 = vmatprep.subr.bf16.mxu0 0
        %4982 = vmatpush1.bf16.msra.mxu0 0
        %4983 = vmatprep.subr.bf16.mxu0 0
        %4984 = vmatpush1.bf16.msra.mxu0 0
        %4985 = vmatprep.subr.bf16.mxu0 0
        %4986 = vmatpush1.bf16.msra.mxu0 0
        %4987 = vmatprep.subr.bf16.mxu0 0
        %4988 = vmatpush1.bf16.msra.mxu0 0
        %4989 = vmatprep.subr.bf16.mxu0 0
        %4990 = vmatpush1.bf16.msra.mxu0 0
        %4991 = vmatprep.subr.bf16.mxu0 0
        %4992 = vmatpush1.bf16.msra.mxu0 0
        %4993 = vmatprep.subr.bf16.mxu0 0
        %4994 = vmatpush1.bf16.msra.mxu0 0
        %4995 = vmatprep.subr.bf16.mxu0 0
        %4996 = vmatpush1.bf16.msra.mxu0 0
        %4997 = vmatprep.subr.bf16.mxu0 0
        %4998 = vmatpush1.bf16.msra.mxu0 0
        %4999 = vmatprep.subr.bf16.mxu0 0
        %5000 = vmatpush1.bf16.msra.mxu0 0
        %5001 = vmatprep.subr.bf16.mxu0 0
        %5002 = vmatpush1.bf16.msra.mxu0 0
        %5003 = vmatprep.mubr.bf16.mxu0 0
        %5004 = vmatmul.mubr.bf16.gmra.mrb[0].mxu0 %v4969
        %v5005 = vpop.f32.mrb[0].mxu0
        %v5006 = vadd.f32 %v2045, %v5005
        %v5007 = vpop.f32.mrb[0].mxu0
        %v5008 = vpop.f32.mrb[0].mxu0
        %v5009 = vadd.f32 %v2045, %v5008
        %v5010 = vpop.f32.mrb[0].mxu0
        %5011 = vdwg.mxu0
        %v5014 = vunpack.c.l.b16 %v3692
        %v5015 = vunpack.c.l.b16 %v3693
        %v5016 = vpack.c.b16 %v5015, %v5014
        %v5018 = vsel %vm674, %v5016, 0
        %5020 = vmatprep.subr.bf16.mxu0 0
        %5021 = vmatpush1.bf16.msra.mxu0 %v2124
        %5022 = vmatprep.subr.bf16.mxu0 0
        %5023 = vmatpush1.bf16.msra.mxu0 %v2125
        %5024 = vmatprep.subr.bf16.mxu0 0
        %5025 = vmatpush1.bf16.msra.mxu0 0
        %5026 = vmatprep.subr.bf16.mxu0 0
        %5027 = vmatpush1.bf16.msra.mxu0 0
        %5028 = vmatprep.subr.bf16.mxu0 0
        %5029 = vmatpush1.bf16.msra.mxu0 0
        %5030 = vmatprep.subr.bf16.mxu0 0
        %5031 = vmatpush1.bf16.msra.mxu0 0
        %5032 = vmatprep.subr.bf16.mxu0 0
        %5033 = vmatpush1.bf16.msra.mxu0 0
        %5034 = vmatprep.subr.bf16.mxu0 0
        %5035 = vmatpush1.bf16.msra.mxu0 0
        %5036 = vmatprep.subr.bf16.mxu0 0
        %5037 = vmatpush1.bf16.msra.mxu0 0
        %5038 = vmatprep.subr.bf16.mxu0 0
        %5039 = vmatpush1.bf16.msra.mxu0 0
        %5040 = vmatprep.subr.bf16.mxu0 0
        %5041 = vmatpush1.bf16.msra.mxu0 0
        %5042 = vmatprep.subr.bf16.mxu0 0
        %5043 = vmatpush1.bf16.msra.mxu0 0
        %5044 = vmatprep.subr.bf16.mxu0 0
        %5045 = vmatpush1.bf16.msra.mxu0 0
        %5046 = vmatprep.subr.bf16.mxu0 0
        %5047 = vmatpush1.bf16.msra.mxu0 0
        %5048 = vmatprep.subr.bf16.mxu0 0
        %5049 = vmatpush1.bf16.msra.mxu0 0
        %5050 = vmatprep.subr.bf16.mxu0 0
        %5051 = vmatpush1.bf16.msra.mxu0 0
        %5052 = vmatprep.mubr.bf16.mxu0 0
        %5053 = vmatmul.mubr.bf16.gmra.mrb[0].mxu0 %v5018
        %v5054 = vpop.f32.mrb[0].mxu0
        %v5055 = vadd.f32 %v2110, %v5054
        %v5056 = vpop.f32.mrb[0].mxu0
        %v5057 = vpop.f32.mrb[0].mxu0
        %v5058 = vadd.f32 %v2110, %v5057
        %v5059 = vpop.f32.mrb[0].mxu0
        %5060 = vdwg.mxu0
        %5062 = vrot.lane.b32.xlu0 %v4958, 120
        %v5063 = vpop.permute.xlu0 %5062
        %5065 = vrot.lane.b32.xlu0 %v4958, 112
        %v5066 = vpop.permute.xlu0 %5065
        %5068 = vrot.lane.b32.xlu0 %v4958, 104
        %v5069 = vpop.permute.xlu0 %5068
        %v5071 = vcombine.low %v4958, %v5066
        %v5072 = vcombine.high %v4958, %v5066
        %v5074 = vunpack.c.l.s4 1983009808
        %v5075 = vunpack.c.0.s8 %v5074
        %v5076 = vlaneseq
        %v5077 = vshrl.u32 %v5076, 7
        %v5078 = vsub.s32 %v5075, %v5077
        %v5079 = vrot.slane %v5071, %v5078
        %v5081 = vunpack.c.l.s4 1983009808
        %v5082 = vunpack.c.0.s8 %v5081
        %v5083 = vlaneseq
        %v5084 = vshrl.u32 %v5083, 7
        %v5085 = vsub.s32 %v5082, %v5084
        %v5086 = vrot.slane %v5072, %v5085
        %v5087 = vcombine.low %v5063, %v5069
        %v5088 = vcombine.high %v5063, %v5069
        %v5090 = vunpack.c.l.s4 1983009808
        %v5091 = vunpack.c.0.s8 %v5090
        %v5092 = vlaneseq
        %v5093 = vshrl.u32 %v5092, 7
        %v5094 = vsub.s32 %v5091, %v5093
        %v5095 = vrot.slane %v5087, %v5094
        %v5097 = vunpack.c.l.s4 1983009808
        %v5098 = vunpack.c.0.s8 %v5097
        %v5099 = vlaneseq
        %v5100 = vshrl.u32 %v5099, 7
        %v5101 = vsub.s32 %v5098, %v5100
        %v5102 = vrot.slane %v5088, %v5101
        %v5103 = vcombine.low %v5079, %v5095
        %v5104 = vcombine.high %v5079, %v5095
        %v5106 = vunpack.c.l.s4 1934713408
        %v5107 = vunpack.c.0.s8 %v5106
        %v5108 = vlaneseq
        %v5109 = vshrl.u32 %v5108, 7
        %v5110 = vsub.s32 %v5107, %v5109
        %v5111 = vrot.slane %v5103, %v5110
        %v5113 = vunpack.c.l.s4 1934713408
        %v5114 = vunpack.c.0.s8 %v5113
        %v5115 = vlaneseq
        %v5116 = vshrl.u32 %v5115, 7
        %v5117 = vsub.s32 %v5114, %v5116
        %v5118 = vrot.slane %v5104, %v5117
        %v5119 = vcombine.low %v5086, %v5102
        %v5120 = vcombine.high %v5086, %v5102
        %v5122 = vunpack.c.l.s4 1934713408
        %v5123 = vunpack.c.0.s8 %v5122
        %v5124 = vlaneseq
        %v5125 = vshrl.u32 %v5124, 7
        %v5126 = vsub.s32 %v5123, %v5125
        %v5127 = vrot.slane %v5119, %v5126
        %v5129 = vunpack.c.l.s4 1934713408
        %v5130 = vunpack.c.0.s8 %v5129
        %v5131 = vlaneseq
        %v5132 = vshrl.u32 %v5131, 7
        %v5133 = vsub.s32 %v5130, %v5132
        %v5134 = vrot.slane %v5120, %v5133
        %v5135 = vcombine.high %v5111, 0.0
        %v5136 = vcombine.high %v5118, 0.0
        %v5137 = vcombine.high %v5127, 0.0
        %v5138 = vcombine.high %v5134, 0.0
        %v5139 = vcombine.low %v5111, %v5118
        %v5141 = vunpack.c.l.s4 1983009808
        %v5142 = vunpack.c.0.s8 %v5141
        %v5143 = vlaneseq
        %v5144 = vshrl.u32 %v5143, 7
        %v5145 = vsub.s32 %v5142, %v5144
        %v5146 = vrot.slane %v5139, %v5145
        %v5147 = vcombine.low %v5135, %v5136
        %v5149 = vunpack.c.l.s4 1983009808
        %v5150 = vunpack.c.0.s8 %v5149
        %v5151 = vlaneseq
        %v5152 = vshrl.u32 %v5151, 7
        %v5153 = vsub.s32 %v5150, %v5152
        %v5154 = vrot.slane %v5147, %v5153
        %v5155 = vcombine.low %v5127, %v5134
        %v5157 = vunpack.c.l.s4 1983009808
        %v5158 = vunpack.c.0.s8 %v5157
        %v5159 = vlaneseq
        %v5160 = vshrl.u32 %v5159, 7
        %v5161 = vsub.s32 %v5158, %v5160
        %v5162 = vrot.slane %v5155, %v5161
        %v5163 = vcombine.low %v5137, %v5138
        %v5165 = vunpack.c.l.s4 1983009808
        %v5166 = vunpack.c.0.s8 %v5165
        %v5167 = vlaneseq
        %v5168 = vshrl.u32 %v5167, 7
        %v5169 = vsub.s32 %v5166, %v5168
        %v5170 = vrot.slane %v5163, %v5169
        %v5171 = vcombine.low %v5146, %v5154
        %v5172 = vcombine.high %v5146, %v5154
        %v5174 = vunpack.c.l.s4 1934713408
        %v5175 = vunpack.c.0.s8 %v5174
        %v5176 = vlaneseq
        %v5177 = vshrl.u32 %v5176, 7
        %v5178 = vsub.s32 %v5175, %v5177
        %v5179 = vrot.slane %v5171, %v5178
        %v5181 = vunpack.c.l.s4 1934713408
        %v5182 = vunpack.c.0.s8 %v5181
        %v5183 = vlaneseq
        %v5184 = vshrl.u32 %v5183, 7
        %v5185 = vsub.s32 %v5182, %v5184
        %v5186 = vrot.slane %v5172, %v5185
        %v5187 = vcombine.low %v5162, %v5170
        %v5188 = vcombine.high %v5162, %v5170
        %v5190 = vunpack.c.l.s4 1934713408
        %v5191 = vunpack.c.0.s8 %v5190
        %v5192 = vlaneseq
        %v5193 = vshrl.u32 %v5192, 7
        %v5194 = vsub.s32 %v5191, %v5193
        %v5195 = vrot.slane %v5187, %v5194
        %v5197 = vunpack.c.l.s4 1934713408
        %v5198 = vunpack.c.0.s8 %v5197
        %v5199 = vlaneseq
        %v5200 = vshrl.u32 %v5199, 7
        %v5201 = vsub.s32 %v5198, %v5200
        %v5202 = vrot.slane %v5188, %v5201
        %v5203 = vcombine.low %v5179, %v5195
        %v5204 = vcombine.high %v5179, %v5195
        %v5205 = vcombine.low %v5186, %v5202
        %v5206 = vcombine.high %v5186, %v5202
        %5209 = vrot.lane.b32.xlu0 %v5006, 120
        %v5210 = vpop.permute.xlu0 %5209
        %5211 = vrot.lane.b32.xlu0 %v5009, 120
        %v5212 = vpop.permute.xlu0 %5211
        %5215 = vrot.lane.b32.xlu0 %v5006, 112
        %v5216 = vpop.permute.xlu0 %5215
        %5217 = vrot.lane.b32.xlu0 %v5009, 112
        %v5218 = vpop.permute.xlu0 %5217
        %5221 = vrot.lane.b32.xlu0 %v5006, 104
        %v5222 = vpop.permute.xlu0 %5221
        %5223 = vrot.lane.b32.xlu0 %v5009, 104
        %v5224 = vpop.permute.xlu0 %5223
        %v5227 = vcombine.low %v5006, %v5216
        %v5228 = vcombine.high %v5006, %v5216
        %v5230 = vunpack.c.l.s4 1983009808
        %v5231 = vunpack.c.0.s8 %v5230
        %v5232 = vlaneseq
        %v5233 = vshrl.u32 %v5232, 7
        %v5234 = vsub.s32 %v5231, %v5233
        %v5235 = vrot.slane %v5227, %v5234
        %v5237 = vunpack.c.l.s4 1983009808
        %v5238 = vunpack.c.0.s8 %v5237
        %v5239 = vlaneseq
        %v5240 = vshrl.u32 %v5239, 7
        %v5241 = vsub.s32 %v5238, %v5240
        %v5242 = vrot.slane %v5228, %v5241
        %v5243 = vcombine.low %v5210, %v5222
        %v5244 = vcombine.high %v5210, %v5222
        %v5246 = vunpack.c.l.s4 1983009808
        %v5247 = vunpack.c.0.s8 %v5246
        %v5248 = vlaneseq
        %v5249 = vshrl.u32 %v5248, 7
        %v5250 = vsub.s32 %v5247, %v5249
        %v5251 = vrot.slane %v5243, %v5250
        %v5253 = vunpack.c.l.s4 1983009808
        %v5254 = vunpack.c.0.s8 %v5253
        %v5255 = vlaneseq
        %v5256 = vshrl.u32 %v5255, 7
        %v5257 = vsub.s32 %v5254, %v5256
        %v5258 = vrot.slane %v5244, %v5257
        %v5259 = vcombine.low %v5235, %v5251
        %v5260 = vcombine.high %v5235, %v5251
        %v5262 = vunpack.c.l.s4 1934713408
        %v5263 = vunpack.c.0.s8 %v5262
        %v5264 = vlaneseq
        %v5265 = vshrl.u32 %v5264, 7
        %v5266 = vsub.s32 %v5263, %v5265
        %v5267 = vrot.slane %v5259, %v5266
        %v5269 = vunpack.c.l.s4 1934713408
        %v5270 = vunpack.c.0.s8 %v5269
        %v5271 = vlaneseq
        %v5272 = vshrl.u32 %v5271, 7
        %v5273 = vsub.s32 %v5270, %v5272
        %v5274 = vrot.slane %v5260, %v5273
        %v5275 = vcombine.low %v5242, %v5258
        %v5276 = vcombine.high %v5242, %v5258
        %v5278 = vunpack.c.l.s4 1934713408
        %v5279 = vunpack.c.0.s8 %v5278
        %v5280 = vlaneseq
        %v5281 = vshrl.u32 %v5280, 7
        %v5282 = vsub.s32 %v5279, %v5281
        %v5283 = vrot.slane %v5275, %v5282
        %v5285 = vunpack.c.l.s4 1934713408
        %v5286 = vunpack.c.0.s8 %v5285
        %v5287 = vlaneseq
        %v5288 = vshrl.u32 %v5287, 7
        %v5289 = vsub.s32 %v5286, %v5288
        %v5290 = vrot.slane %v5276, %v5289
        %v5291 = vcombine.high %v5267, 0.0
        %v5292 = vcombine.high %v5274, 0.0
        %v5293 = vcombine.high %v5283, 0.0
        %v5294 = vcombine.high %v5290, 0.0
        %v5295 = vcombine.low %v5009, %v5218
        %v5296 = vcombine.high %v5009, %v5218
        %v5298 = vunpack.c.l.s4 1983009808
        %v5299 = vunpack.c.0.s8 %v5298
        %v5300 = vlaneseq
        %v5301 = vshrl.u32 %v5300, 7
        %v5302 = vsub.s32 %v5299, %v5301
        %v5303 = vrot.slane %v5295, %v5302
        %v5305 = vunpack.c.l.s4 1983009808
        %v5306 = vunpack.c.0.s8 %v5305
        %v5307 = vlaneseq
        %v5308 = vshrl.u32 %v5307, 7
        %v5309 = vsub.s32 %v5306, %v5308
        %v5310 = vrot.slane %v5296, %v5309
        %v5311 = vcombine.low %v5212, %v5224
        %v5312 = vcombine.high %v5212, %v5224
        %v5314 = vunpack.c.l.s4 1983009808
        %v5315 = vunpack.c.0.s8 %v5314
        %v5316 = vlaneseq
        %v5317 = vshrl.u32 %v5316, 7
        %v5318 = vsub.s32 %v5315, %v5317
        %v5319 = vrot.slane %v5311, %v5318
        %v5321 = vunpack.c.l.s4 1983009808
        %v5322 = vunpack.c.0.s8 %v5321
        %v5323 = vlaneseq
        %v5324 = vshrl.u32 %v5323, 7
        %v5325 = vsub.s32 %v5322, %v5324
        %v5326 = vrot.slane %v5312, %v5325
        %v5327 = vcombine.low %v5303, %v5319
        %v5328 = vcombine.high %v5303, %v5319
        %v5330 = vunpack.c.l.s4 1934713408
        %v5331 = vunpack.c.0.s8 %v5330
        %v5332 = vlaneseq
        %v5333 = vshrl.u32 %v5332, 7
        %v5334 = vsub.s32 %v5331, %v5333
        %v5335 = vrot.slane %v5327, %v5334
        %v5337 = vunpack.c.l.s4 1934713408
        %v5338 = vunpack.c.0.s8 %v5337
        %v5339 = vlaneseq
        %v5340 = vshrl.u32 %v5339, 7
        %v5341 = vsub.s32 %v5338, %v5340
        %v5342 = vrot.slane %v5328, %v5341
        %v5343 = vcombine.low %v5310, %v5326
        %v5344 = vcombine.high %v5310, %v5326
        %v5346 = vunpack.c.l.s4 1934713408
        %v5347 = vunpack.c.0.s8 %v5346
        %v5348 = vlaneseq
        %v5349 = vshrl.u32 %v5348, 7
        %v5350 = vsub.s32 %v5347, %v5349
        %v5351 = vrot.slane %v5343, %v5350
        %v5353 = vunpack.c.l.s4 1934713408
        %v5354 = vunpack.c.0.s8 %v5353
        %v5355 = vlaneseq
        %v5356 = vshrl.u32 %v5355, 7
        %v5357 = vsub.s32 %v5354, %v5356
        %v5358 = vrot.slane %v5344, %v5357
        %v5359 = vcombine.high %v5335, 0.0
        %v5360 = vcombine.high %v5342, 0.0
        %v5361 = vcombine.high %v5351, 0.0
        %v5362 = vcombine.high %v5358, 0.0
        %v5363 = vcombine.low %v5267, %v5274
        %v5365 = vunpack.c.l.s4 1983009808
        %v5366 = vunpack.c.0.s8 %v5365
        %v5367 = vlaneseq
        %v5368 = vshrl.u32 %v5367, 7
        %v5369 = vsub.s32 %v5366, %v5368
        %v5370 = vrot.slane %v5363, %v5369
        %v5371 = vcombine.low %v5291, %v5292
        %v5373 = vunpack.c.l.s4 1983009808
        %v5374 = vunpack.c.0.s8 %v5373
        %v5375 = vlaneseq
        %v5376 = vshrl.u32 %v5375, 7
        %v5377 = vsub.s32 %v5374, %v5376
        %v5378 = vrot.slane %v5371, %v5377
        %v5379 = vcombine.low %v5283, %v5290
        %v5381 = vunpack.c.l.s4 1983009808
        %v5382 = vunpack.c.0.s8 %v5381
        %v5383 = vlaneseq
        %v5384 = vshrl.u32 %v5383, 7
        %v5385 = vsub.s32 %v5382, %v5384
        %v5386 = vrot.slane %v5379, %v5385
        %v5387 = vcombine.low %v5293, %v5294
        %v5389 = vunpack.c.l.s4 1983009808
        %v5390 = vunpack.c.0.s8 %v5389
        %v5391 = vlaneseq
        %v5392 = vshrl.u32 %v5391, 7
        %v5393 = vsub.s32 %v5390, %v5392
        %v5394 = vrot.slane %v5387, %v5393
        %v5395 = vcombine.low %v5370, %v5378
        %v5396 = vcombine.high %v5370, %v5378
        %v5398 = vunpack.c.l.s4 1934713408
        %v5399 = vunpack.c.0.s8 %v5398
        %v5400 = vlaneseq
        %v5401 = vshrl.u32 %v5400, 7
        %v5402 = vsub.s32 %v5399, %v5401
        %v5403 = vrot.slane %v5395, %v5402
        %v5405 = vunpack.c.l.s4 1934713408
        %v5406 = vunpack.c.0.s8 %v5405
        %v5407 = vlaneseq
        %v5408 = vshrl.u32 %v5407, 7
        %v5409 = vsub.s32 %v5406, %v5408
        %v5410 = vrot.slane %v5396, %v5409
        %v5411 = vcombine.low %v5386, %v5394
        %v5412 = vcombine.high %v5386, %v5394
        %v5414 = vunpack.c.l.s4 1934713408
        %v5415 = vunpack.c.0.s8 %v5414
        %v5416 = vlaneseq
        %v5417 = vshrl.u32 %v5416, 7
        %v5418 = vsub.s32 %v5415, %v5417
        %v5419 = vrot.slane %v5411, %v5418
        %v5421 = vunpack.c.l.s4 1934713408
        %v5422 = vunpack.c.0.s8 %v5421
        %v5423 = vlaneseq
        %v5424 = vshrl.u32 %v5423, 7
        %v5425 = vsub.s32 %v5422, %v5424
        %v5426 = vrot.slane %v5412, %v5425
        %v5427 = vcombine.low %v5403, %v5419
        %v5428 = vcombine.high %v5403, %v5419
        %v5429 = vcombine.low %v5410, %v5426
        %v5430 = vcombine.high %v5410, %v5426
        %v5431 = vcombine.low %v5335, %v5342
        %v5433 = vunpack.c.l.s4 1983009808
        %v5434 = vunpack.c.0.s8 %v5433
        %v5435 = vlaneseq
        %v5436 = vshrl.u32 %v5435, 7
        %v5437 = vsub.s32 %v5434, %v5436
        %v5438 = vrot.slane %v5431, %v5437
        %v5439 = vcombine.low %v5359, %v5360
        %v5441 = vunpack.c.l.s4 1983009808
        %v5442 = vunpack.c.0.s8 %v5441
        %v5443 = vlaneseq
        %v5444 = vshrl.u32 %v5443, 7
        %v5445 = vsub.s32 %v5442, %v5444
        %v5446 = vrot.slane %v5439, %v5445
        %v5447 = vcombine.low %v5351, %v5358
        %v5449 = vunpack.c.l.s4 1983009808
        %v5450 = vunpack.c.0.s8 %v5449
        %v5451 = vlaneseq
        %v5452 = vshrl.u32 %v5451, 7
        %v5453 = vsub.s32 %v5450, %v5452
        %v5454 = vrot.slane %v5447, %v5453
        %v5455 = vcombine.low %v5361, %v5362
        %v5457 = vunpack.c.l.s4 1983009808
        %v5458 = vunpack.c.0.s8 %v5457
        %v5459 = vlaneseq
        %v5460 = vshrl.u32 %v5459, 7
        %v5461 = vsub.s32 %v5458, %v5460
        %v5462 = vrot.slane %v5455, %v5461
        %v5463 = vcombine.low %v5438, %v5446
        %v5464 = vcombine.high %v5438, %v5446
        %v5466 = vunpack.c.l.s4 1934713408
        %v5467 = vunpack.c.0.s8 %v5466
        %v5468 = vlaneseq
        %v5469 = vshrl.u32 %v5468, 7
        %v5470 = vsub.s32 %v5467, %v5469
        %v5471 = vrot.slane %v5463, %v5470
        %v5473 = vunpack.c.l.s4 1934713408
        %v5474 = vunpack.c.0.s8 %v5473
        %v5475 = vlaneseq
        %v5476 = vshrl.u32 %v5475, 7
        %v5477 = vsub.s32 %v5474, %v5476
        %v5478 = vrot.slane %v5464, %v5477
        %v5479 = vcombine.low %v5454, %v5462
        %v5480 = vcombine.high %v5454, %v5462
        %v5482 = vunpack.c.l.s4 1934713408
        %v5483 = vunpack.c.0.s8 %v5482
        %v5484 = vlaneseq
        %v5485 = vshrl.u32 %v5484, 7
        %v5486 = vsub.s32 %v5483, %v5485
        %v5487 = vrot.slane %v5479, %v5486
        %v5489 = vunpack.c.l.s4 1934713408
        %v5490 = vunpack.c.0.s8 %v5489
        %v5491 = vlaneseq
        %v5492 = vshrl.u32 %v5491, 7
        %v5493 = vsub.s32 %v5490, %v5492
        %v5494 = vrot.slane %v5480, %v5493
        %v5495 = vcombine.low %v5471, %v5487
        %v5496 = vcombine.high %v5471, %v5487
        %v5497 = vcombine.low %v5478, %v5494
        %v5498 = vcombine.high %v5478, %v5494
        %5501 = vrot.lane.b32.xlu0 %v5055, 120
        %v5502 = vpop.permute.xlu0 %5501
        %5503 = vrot.lane.b32.xlu0 %v5058, 120
        %v5504 = vpop.permute.xlu0 %5503
        %5507 = vrot.lane.b32.xlu0 %v5055, 112
        %v5508 = vpop.permute.xlu0 %5507
        %5509 = vrot.lane.b32.xlu0 %v5058, 112
        %v5510 = vpop.permute.xlu0 %5509
        %5513 = vrot.lane.b32.xlu0 %v5055, 104
        %v5514 = vpop.permute.xlu0 %5513
        %5515 = vrot.lane.b32.xlu0 %v5058, 104
        %v5516 = vpop.permute.xlu0 %5515
        %v5519 = vcombine.low %v5055, %v5508
        %v5520 = vcombine.high %v5055, %v5508
        %v5522 = vunpack.c.l.s4 1983009808
        %v5523 = vunpack.c.0.s8 %v5522
        %v5524 = vlaneseq
        %v5525 = vshrl.u32 %v5524, 7
        %v5526 = vsub.s32 %v5523, %v5525
        %v5527 = vrot.slane %v5519, %v5526
        %v5529 = vunpack.c.l.s4 1983009808
        %v5530 = vunpack.c.0.s8 %v5529
        %v5531 = vlaneseq
        %v5532 = vshrl.u32 %v5531, 7
        %v5533 = vsub.s32 %v5530, %v5532
        %v5534 = vrot.slane %v5520, %v5533
        %v5535 = vcombine.low %v5502, %v5514
        %v5536 = vcombine.high %v5502, %v5514
        %v5538 = vunpack.c.l.s4 1983009808
        %v5539 = vunpack.c.0.s8 %v5538
        %v5540 = vlaneseq
        %v5541 = vshrl.u32 %v5540, 7
        %v5542 = vsub.s32 %v5539, %v5541
        %v5543 = vrot.slane %v5535, %v5542
        %v5545 = vunpack.c.l.s4 1983009808
        %v5546 = vunpack.c.0.s8 %v5545
        %v5547 = vlaneseq
        %v5548 = vshrl.u32 %v5547, 7
        %v5549 = vsub.s32 %v5546, %v5548
        %v5550 = vrot.slane %v5536, %v5549
        %v5551 = vcombine.low %v5527, %v5543
        %v5552 = vcombine.high %v5527, %v5543
        %v5554 = vunpack.c.l.s4 1934713408
        %v5555 = vunpack.c.0.s8 %v5554
        %v5556 = vlaneseq
        %v5557 = vshrl.u32 %v5556, 7
        %v5558 = vsub.s32 %v5555, %v5557
        %v5559 = vrot.slane %v5551, %v5558
        %v5561 = vunpack.c.l.s4 1934713408
        %v5562 = vunpack.c.0.s8 %v5561
        %v5563 = vlaneseq
        %v5564 = vshrl.u32 %v5563, 7
        %v5565 = vsub.s32 %v5562, %v5564
        %v5566 = vrot.slane %v5552, %v5565
        %v5567 = vcombine.low %v5534, %v5550
        %v5568 = vcombine.high %v5534, %v5550
        %v5570 = vunpack.c.l.s4 1934713408
        %v5571 = vunpack.c.0.s8 %v5570
        %v5572 = vlaneseq
        %v5573 = vshrl.u32 %v5572, 7
        %v5574 = vsub.s32 %v5571, %v5573
        %v5575 = vrot.slane %v5567, %v5574
        %v5577 = vunpack.c.l.s4 1934713408
        %v5578 = vunpack.c.0.s8 %v5577
        %v5579 = vlaneseq
        %v5580 = vshrl.u32 %v5579, 7
        %v5581 = vsub.s32 %v5578, %v5580
        %v5582 = vrot.slane %v5568, %v5581
        %v5583 = vcombine.high %v5559, 0.0
        %v5584 = vcombine.high %v5566, 0.0
        %v5585 = vcombine.high %v5575, 0.0
        %v5586 = vcombine.high %v5582, 0.0
        %v5587 = vcombine.low %v5058, %v5510
        %v5588 = vcombine.high %v5058, %v5510
        %v5590 = vunpack.c.l.s4 1983009808
        %v5591 = vunpack.c.0.s8 %v5590
        %v5592 = vlaneseq
        %v5593 = vshrl.u32 %v5592, 7
        %v5594 = vsub.s32 %v5591, %v5593
        %v5595 = vrot.slane %v5587, %v5594
        %v5597 = vunpack.c.l.s4 1983009808
        %v5598 = vunpack.c.0.s8 %v5597
        %v5599 = vlaneseq
        %v5600 = vshrl.u32 %v5599, 7
        %v5601 = vsub.s32 %v5598, %v5600
        %v5602 = vrot.slane %v5588, %v5601
        %v5603 = vcombine.low %v5504, %v5516
        %v5604 = vcombine.high %v5504, %v5516
        %v5606 = vunpack.c.l.s4 1983009808
        %v5607 = vunpack.c.0.s8 %v5606
        %v5608 = vlaneseq
        %v5609 = vshrl.u32 %v5608, 7
        %v5610 = vsub.s32 %v5607, %v5609
        %v5611 = vrot.slane %v5603, %v5610
        %v5613 = vunpack.c.l.s4 1983009808
        %v5614 = vunpack.c.0.s8 %v5613
        %v5615 = vlaneseq
        %v5616 = vshrl.u32 %v5615, 7
        %v5617 = vsub.s32 %v5614, %v5616
        %v5618 = vrot.slane %v5604, %v5617
        %v5619 = vcombine.low %v5595, %v5611
        %v5620 = vcombine.high %v5595, %v5611
        %v5622 = vunpack.c.l.s4 1934713408
        %v5623 = vunpack.c.0.s8 %v5622
        %v5624 = vlaneseq
        %v5625 = vshrl.u32 %v5624, 7
        %v5626 = vsub.s32 %v5623, %v5625
        %v5627 = vrot.slane %v5619, %v5626
        %v5629 = vunpack.c.l.s4 1934713408
        %v5630 = vunpack.c.0.s8 %v5629
        %v5631 = vlaneseq
        %v5632 = vshrl.u32 %v5631, 7
        %v5633 = vsub.s32 %v5630, %v5632
        %v5634 = vrot.slane %v5620, %v5633
        %v5635 = vcombine.low %v5602, %v5618
        %v5636 = vcombine.high %v5602, %v5618
        %v5638 = vunpack.c.l.s4 1934713408
        %v5639 = vunpack.c.0.s8 %v5638
        %v5640 = vlaneseq
        %v5641 = vshrl.u32 %v5640, 7
        %v5642 = vsub.s32 %v5639, %v5641
        %v5643 = vrot.slane %v5635, %v5642
        %v5645 = vunpack.c.l.s4 1934713408
        %v5646 = vunpack.c.0.s8 %v5645
        %v5647 = vlaneseq
        %v5648 = vshrl.u32 %v5647, 7
        %v5649 = vsub.s32 %v5646, %v5648
        %v5650 = vrot.slane %v5636, %v5649
        %v5651 = vcombine.high %v5627, 0.0
        %v5652 = vcombine.high %v5634, 0.0
        %v5653 = vcombine.high %v5643, 0.0
        %v5654 = vcombine.high %v5650, 0.0
        %v5655 = vcombine.low %v5559, %v5566
        %v5657 = vunpack.c.l.s4 1983009808
        %v5658 = vunpack.c.0.s8 %v5657
        %v5659 = vlaneseq
        %v5660 = vshrl.u32 %v5659, 7
        %v5661 = vsub.s32 %v5658, %v5660
        %v5662 = vrot.slane %v5655, %v5661
        %v5663 = vcombine.low %v5583, %v5584
        %v5665 = vunpack.c.l.s4 1983009808
        %v5666 = vunpack.c.0.s8 %v5665
        %v5667 = vlaneseq
        %v5668 = vshrl.u32 %v5667, 7
        %v5669 = vsub.s32 %v5666, %v5668
        %v5670 = vrot.slane %v5663, %v5669
        %v5671 = vcombine.low %v5575, %v5582
        %v5673 = vunpack.c.l.s4 1983009808
        %v5674 = vunpack.c.0.s8 %v5673
        %v5675 = vlaneseq
        %v5676 = vshrl.u32 %v5675, 7
        %v5677 = vsub.s32 %v5674, %v5676
        %v5678 = vrot.slane %v5671, %v5677
        %v5679 = vcombine.low %v5585, %v5586
        %v5681 = vunpack.c.l.s4 1983009808
        %v5682 = vunpack.c.0.s8 %v5681
        %v5683 = vlaneseq
        %v5684 = vshrl.u32 %v5683, 7
        %v5685 = vsub.s32 %v5682, %v5684
        %v5686 = vrot.slane %v5679, %v5685
        %v5687 = vcombine.low %v5662, %v5670
        %v5688 = vcombine.high %v5662, %v5670
        %v5690 = vunpack.c.l.s4 1934713408
        %v5691 = vunpack.c.0.s8 %v5690
        %v5692 = vlaneseq
        %v5693 = vshrl.u32 %v5692, 7
        %v5694 = vsub.s32 %v5691, %v5693
        %v5695 = vrot.slane %v5687, %v5694
        %v5697 = vunpack.c.l.s4 1934713408
        %v5698 = vunpack.c.0.s8 %v5697
        %v5699 = vlaneseq
        %v5700 = vshrl.u32 %v5699, 7
        %v5701 = vsub.s32 %v5698, %v5700
        %v5702 = vrot.slane %v5688, %v5701
        %v5703 = vcombine.low %v5678, %v5686
        %v5704 = vcombine.high %v5678, %v5686
        %v5706 = vunpack.c.l.s4 1934713408
        %v5707 = vunpack.c.0.s8 %v5706
        %v5708 = vlaneseq
        %v5709 = vshrl.u32 %v5708, 7
        %v5710 = vsub.s32 %v5707, %v5709
        %v5711 = vrot.slane %v5703, %v5710
        %v5713 = vunpack.c.l.s4 1934713408
        %v5714 = vunpack.c.0.s8 %v5713
        %v5715 = vlaneseq
        %v5716 = vshrl.u32 %v5715, 7
        %v5717 = vsub.s32 %v5714, %v5716
        %v5718 = vrot.slane %v5704, %v5717
        %v5719 = vcombine.low %v5695, %v5711
        %v5720 = vcombine.high %v5695, %v5711
        %v5721 = vcombine.low %v5702, %v5718
        %v5722 = vcombine.high %v5702, %v5718
        %v5723 = vcombine.low %v5627, %v5634
        %v5725 = vunpack.c.l.s4 1983009808
        %v5726 = vunpack.c.0.s8 %v5725
        %v5727 = vlaneseq
        %v5728 = vshrl.u32 %v5727, 7
        %v5729 = vsub.s32 %v5726, %v5728
        %v5730 = vrot.slane %v5723, %v5729
        %v5731 = vcombine.low %v5651, %v5652
        %v5733 = vunpack.c.l.s4 1983009808
        %v5734 = vunpack.c.0.s8 %v5733
        %v5735 = vlaneseq
        %v5736 = vshrl.u32 %v5735, 7
        %v5737 = vsub.s32 %v5734, %v5736
        %v5738 = vrot.slane %v5731, %v5737
        %v5739 = vcombine.low %v5643, %v5650
        %v5741 = vunpack.c.l.s4 1983009808
        %v5742 = vunpack.c.0.s8 %v5741
        %v5743 = vlaneseq
        %v5744 = vshrl.u32 %v5743, 7
        %v5745 = vsub.s32 %v5742, %v5744
        %v5746 = vrot.slane %v5739, %v5745
        %v5747 = vcombine.low %v5653, %v5654
        %v5749 = vunpack.c.l.s4 1983009808
        %v5750 = vunpack.c.0.s8 %v5749
        %v5751 = vlaneseq
        %v5752 = vshrl.u32 %v5751, 7
        %v5753 = vsub.s32 %v5750, %v5752
        %v5754 = vrot.slane %v5747, %v5753
        %v5755 = vcombine.low %v5730, %v5738
        %v5756 = vcombine.high %v5730, %v5738
        %v5758 = vunpack.c.l.s4 1934713408
        %v5759 = vunpack.c.0.s8 %v5758
        %v5760 = vlaneseq
        %v5761 = vshrl.u32 %v5760, 7
        %v5762 = vsub.s32 %v5759, %v5761
        %v5763 = vrot.slane %v5755, %v5762
        %v5765 = vunpack.c.l.s4 1934713408
        %v5766 = vunpack.c.0.s8 %v5765
        %v5767 = vlaneseq
        %v5768 = vshrl.u32 %v5767, 7
        %v5769 = vsub.s32 %v5766, %v5768
        %v5770 = vrot.slane %v5756, %v5769
        %v5771 = vcombine.low %v5746, %v5754
        %v5772 = vcombine.high %v5746, %v5754
        %v5774 = vunpack.c.l.s4 1934713408
        %v5775 = vunpack.c.0.s8 %v5774
        %v5776 = vlaneseq
        %v5777 = vshrl.u32 %v5776, 7
        %v5778 = vsub.s32 %v5775, %v5777
        %v5779 = vrot.slane %v5771, %v5778
        %v5781 = vunpack.c.l.s4 1934713408
        %v5782 = vunpack.c.0.s8 %v5781
        %v5783 = vlaneseq
        %v5784 = vshrl.u32 %v5783, 7
        %v5785 = vsub.s32 %v5782, %v5784
        %v5786 = vrot.slane %v5772, %v5785
        %v5787 = vcombine.low %v5763, %v5779
        %v5788 = vcombine.high %v5763, %v5779
        %v5789 = vcombine.low %v5770, %v5786
        %v5790 = vcombine.high %v5770, %v5786
        %v5791 = vpack.c.bf16 %v5203, %v5203
        %v5792 = vpack.c.bf16 %v5204, %v5204
        %v5793 = vpack.c.bf16 %v5205, %v5205
        %v5794 = vpack.c.bf16 %v5206, %v5206
        %v5795 = vpack.c.bf16 %v5495, %v5427
        %v5796 = vpack.c.bf16 %v5496, %v5428
        %v5797 = vpack.c.bf16 %v5497, %v5429
        %v5798 = vpack.c.bf16 %v5498, %v5430
        %v5799 = vpack.c.bf16 %v5787, %v5719
        %v5800 = vpack.c.bf16 %v5788, %v5720
        %v5801 = vpack.c.bf16 %v5789, %v5721
        %v5802 = vpack.c.bf16 %v5790, %v5722
        %v5804 = vsel %vm1326, %v5791, 0
        %v5807 = vsel %vm1326, %v5795, 0
        %5809 = vmatprep.subr.bf16.mxu0 0
        %5810 = vmatpush1.bf16.xpose.msra.mxu0 %v5807
        %5811 = vmatprep.subr.bf16.mxu0 0
        %5812 = vmatpush1.bf16.xpose.msra.mxu0 0
        %5813 = vmatprep.subr.bf16.mxu0 0
        %5814 = vmatpush1.bf16.xpose.msra.mxu0 0
        %5815 = vmatprep.subr.bf16.mxu0 0
        %5816 = vmatpush1.bf16.xpose.msra.mxu0 0
        %5817 = vmatprep.subr.bf16.mxu0 0
        %5818 = vmatpush1.bf16.xpose.msra.mxu0 0
        %5819 = vmatprep.subr.bf16.mxu0 0
        %5820 = vmatpush1.bf16.xpose.msra.mxu0 0
        %5821 = vmatprep.subr.bf16.mxu0 0
        %5822 = vmatpush1.bf16.xpose.msra.mxu0 0
        %5823 = vmatprep.subr.bf16.mxu0 0
        %5824 = vmatpush1.bf16.xpose.msra.mxu0 0
        %5825 = vmatprep.subr.bf16.mxu0 0
        %5826 = vmatpush1.bf16.xpose.msra.mxu0 0
        %5827 = vmatprep.subr.bf16.mxu0 0
        %5828 = vmatpush1.bf16.xpose.msra.mxu0 0
        %5829 = vmatprep.subr.bf16.mxu0 0
        %5830 = vmatpush1.bf16.xpose.msra.mxu0 0
        %5831 = vmatprep.subr.bf16.mxu0 0
        %5832 = vmatpush1.bf16.xpose.msra.mxu0 0
        %5833 = vmatprep.subr.bf16.mxu0 0
        %5834 = vmatpush1.bf16.xpose.msra.mxu0 0
        %5835 = vmatprep.subr.bf16.mxu0 0
        %5836 = vmatpush1.bf16.xpose.msra.mxu0 0
        %5837 = vmatprep.subr.bf16.mxu0 0
        %5838 = vmatpush1.bf16.xpose.msra.mxu0 0
        %5839 = vmatprep.subr.bf16.mxu0 0
        %5840 = vmatpush1.bf16.xpose.msra.mxu0 0
        %5841 = vmatprep.mubr.bf16.mxu0 0
        %5842 = vmatmul.mubr.bf16.gmra.mrb[0].mxu0 %v5804
        %v5843 = vpop.f32.mrb[0].mxu0
        %v5844 = vadd.f32 0.0, %v5843
        %v5845 = vpop.f32.mrb[0].mxu0
        %v5846 = vpop.f32.mrb[0].mxu0
        %v5847 = vpop.f32.mrb[0].mxu0
        %5848 = vdwg.mxu0
        %v5850 = vsel %vm1326, %v5792, 0
        %v5853 = vsel %vm1326, %v5796, 0
        %5855 = vmatprep.subr.bf16.mxu0 0
        %5856 = vmatpush1.bf16.xpose.msra.mxu0 %v5853
        %5857 = vmatprep.subr.bf16.mxu0 0
        %5858 = vmatpush1.bf16.xpose.msra.mxu0 0
        %5859 = vmatprep.subr.bf16.mxu0 0
        %5860 = vmatpush1.bf16.xpose.msra.mxu0 0
        %5861 = vmatprep.subr.bf16.mxu0 0
        %5862 = vmatpush1.bf16.xpose.msra.mxu0 0
        %5863 = vmatprep.subr.bf16.mxu0 0
        %5864 = vmatpush1.bf16.xpose.msra.mxu0 0
        %5865 = vmatprep.subr.bf16.mxu0 0
        %5866 = vmatpush1.bf16.xpose.msra.mxu0 0
        %5867 = vmatprep.subr.bf16.mxu0 0
        %5868 = vmatpush1.bf16.xpose.msra.mxu0 0
        %5869 = vmatprep.subr.bf16.mxu0 0
        %5870 = vmatpush1.bf16.xpose.msra.mxu0 0
        %5871 = vmatprep.subr.bf16.mxu0 0
        %5872 = vmatpush1.bf16.xpose.msra.mxu0 0
        %5873 = vmatprep.subr.bf16.mxu0 0
        %5874 = vmatpush1.bf16.xpose.msra.mxu0 0
        %5875 = vmatprep.subr.bf16.mxu0 0
        %5876 = vmatpush1.bf16.xpose.msra.mxu0 0
        %5877 = vmatprep.subr.bf16.mxu0 0
        %5878 = vmatpush1.bf16.xpose.msra.mxu0 0
        %5879 = vmatprep.subr.bf16.mxu0 0
        %5880 = vmatpush1.bf16.xpose.msra.mxu0 0
        %5881 = vmatprep.subr.bf16.mxu0 0
        %5882 = vmatpush1.bf16.xpose.msra.mxu0 0
        %5883 = vmatprep.subr.bf16.mxu0 0
        %5884 = vmatpush1.bf16.xpose.msra.mxu0 0
        %5885 = vmatprep.subr.bf16.mxu0 0
        %5886 = vmatpush1.bf16.xpose.msra.mxu0 0
        %5887 = vmatprep.mubr.bf16.mxu0 0
        %5888 = vmatmul.mubr.bf16.gmra.mrb[0].mxu0 %v5850
        %v5889 = vpop.f32.mrb[0].mxu0
        %v5890 = vadd.f32 0.0, %v5889
        %v5891 = vpop.f32.mrb[0].mxu0
        %v5892 = vpop.f32.mrb[0].mxu0
        %v5893 = vpop.f32.mrb[0].mxu0
        %5894 = vdwg.mxu0
        %v5896 = vsel %vm1326, %v5793, 0
        %v5899 = vsel %vm1326, %v5797, 0
        %5901 = vmatprep.subr.bf16.mxu0 0
        %5902 = vmatpush1.bf16.xpose.msra.mxu0 %v5899
        %5903 = vmatprep.subr.bf16.mxu0 0
        %5904 = vmatpush1.bf16.xpose.msra.mxu0 0
        %5905 = vmatprep.subr.bf16.mxu0 0
        %5906 = vmatpush1.bf16.xpose.msra.mxu0 0
        %5907 = vmatprep.subr.bf16.mxu0 0
        %5908 = vmatpush1.bf16.xpose.msra.mxu0 0
        %5909 = vmatprep.subr.bf16.mxu0 0
        %5910 = vmatpush1.bf16.xpose.msra.mxu0 0
        %5911 = vmatprep.subr.bf16.mxu0 0
        %5912 = vmatpush1.bf16.xpose.msra.mxu0 0
        %5913 = vmatprep.subr.bf16.mxu0 0
        %5914 = vmatpush1.bf16.xpose.msra.mxu0 0
        %5915 = vmatprep.subr.bf16.mxu0 0
        %5916 = vmatpush1.bf16.xpose.msra.mxu0 0
        %5917 = vmatprep.subr.bf16.mxu0 0
        %5918 = vmatpush1.bf16.xpose.msra.mxu0 0
        %5919 = vmatprep.subr.bf16.mxu0 0
        %5920 = vmatpush1.bf16.xpose.msra.mxu0 0
        %5921 = vmatprep.subr.bf16.mxu0 0
        %5922 = vmatpush1.bf16.xpose.msra.mxu0 0
        %5923 = vmatprep.subr.bf16.mxu0 0
        %5924 = vmatpush1.bf16.xpose.msra.mxu0 0
        %5925 = vmatprep.subr.bf16.mxu0 0
        %5926 = vmatpush1.bf16.xpose.msra.mxu0 0
        %5927 = vmatprep.subr.bf16.mxu0 0
        %5928 = vmatpush1.bf16.xpose.msra.mxu0 0
        %5929 = vmatprep.subr.bf16.mxu0 0
        %5930 = vmatpush1.bf16.xpose.msra.mxu0 0
        %5931 = vmatprep.subr.bf16.mxu0 0
        %5932 = vmatpush1.bf16.xpose.msra.mxu0 0
        %5933 = vmatprep.mubr.bf16.mxu0 0
        %5934 = vmatmul.mubr.bf16.gmra.mrb[0].mxu0 %v5896
        %v5935 = vpop.f32.mrb[0].mxu0
        %v5936 = vadd.f32 0.0, %v5935
        %v5937 = vpop.f32.mrb[0].mxu0
        %v5938 = vpop.f32.mrb[0].mxu0
        %v5939 = vpop.f32.mrb[0].mxu0
        %5940 = vdwg.mxu0
        %v5942 = vsel %vm1326, %v5794, 0
        %v5945 = vsel %vm1326, %v5798, 0
        %5947 = vmatprep.subr.bf16.mxu0 0
        %5948 = vmatpush1.bf16.xpose.msra.mxu0 %v5945
        %5949 = vmatprep.subr.bf16.mxu0 0
        %5950 = vmatpush1.bf16.xpose.msra.mxu0 0
        %5951 = vmatprep.subr.bf16.mxu0 0
        %5952 = vmatpush1.bf16.xpose.msra.mxu0 0
        %5953 = vmatprep.subr.bf16.mxu0 0
        %5954 = vmatpush1.bf16.xpose.msra.mxu0 0
        %5955 = vmatprep.subr.bf16.mxu0 0
        %5956 = vmatpush1.bf16.xpose.msra.mxu0 0
        %5957 = vmatprep.subr.bf16.mxu0 0
        %5958 = vmatpush1.bf16.xpose.msra.mxu0 0
        %5959 = vmatprep.subr.bf16.mxu0 0
        %5960 = vmatpush1.bf16.xpose.msra.mxu0 0
        %5961 = vmatprep.subr.bf16.mxu0 0
        %5962 = vmatpush1.bf16.xpose.msra.mxu0 0
        %5963 = vmatprep.subr.bf16.mxu0 0
        %5964 = vmatpush1.bf16.xpose.msra.mxu0 0
        %5965 = vmatprep.subr.bf16.mxu0 0
        %5966 = vmatpush1.bf16.xpose.msra.mxu0 0
        %5967 = vmatprep.subr.bf16.mxu0 0
        %5968 = vmatpush1.bf16.xpose.msra.mxu0 0
        %5969 = vmatprep.subr.bf16.mxu0 0
        %5970 = vmatpush1.bf16.xpose.msra.mxu0 0
        %5971 = vmatprep.subr.bf16.mxu0 0
        %5972 = vmatpush1.bf16.xpose.msra.mxu0 0
        %5973 = vmatprep.subr.bf16.mxu0 0
        %5974 = vmatpush1.bf16.xpose.msra.mxu0 0
        %5975 = vmatprep.subr.bf16.mxu0 0
        %5976 = vmatpush1.bf16.xpose.msra.mxu0 0
        %5977 = vmatprep.subr.bf16.mxu0 0
        %5978 = vmatpush1.bf16.xpose.msra.mxu0 0
        %5979 = vmatprep.mubr.bf16.mxu0 0
        %5980 = vmatmul.mubr.bf16.gmra.mrb[0].mxu0 %v5942
        %v5981 = vpop.f32.mrb[0].mxu0
        %v5982 = vadd.f32 0.0, %v5981
        %v5983 = vpop.f32.mrb[0].mxu0
        %v5984 = vpop.f32.mrb[0].mxu0
        %v5985 = vpop.f32.mrb[0].mxu0
        %5986 = vdwg.mxu0
        %v5987 = vsel %vm1893, %v5844, -inf
        %5988 = vmax.xlane.f32.xlu0 %v5987
        %v5989 = vpop.xlane.xlu0 %5988
        %v5990 = vsel %vm1893, %v5890, -inf
        %5991 = vmax.xlane.f32.xlu0 %v5990
        %v5992 = vpop.xlane.xlu0 %5991
        %v5993 = vsel %vm1893, %v5936, -inf
        %5994 = vmax.xlane.f32.xlu0 %v5993
        %v5995 = vpop.xlane.xlu0 %5994
        %v5996 = vsel %vm1893, %v5982, -inf
        %5997 = vmax.xlane.f32.xlu0 %v5996
        %v5998 = vpop.xlane.xlu0 %5997
        %v5999 = vsub.f32 %v5844, %v5989
        %v6000 = vsub.f32 %v5890, %v5992
        %v6001 = vsub.f32 %v5936, %v5995
        %v6002 = vsub.f32 %v5982, %v5998
        %v6003 = vmul.f32 %v5999, 1.442695
        %v6004 = vpow.pop %v6003
        %v6005 = vmul.f32 %v6000, 1.442695
        %v6006 = vpow.pop %v6005
        %v6007 = vmul.f32 %v6001, 1.442695
        %v6008 = vpow.pop %v6007
        %v6009 = vmul.f32 %v6002, 1.442695
        %v6010 = vpow.pop %v6009
        %v6011 = vsel %vm1893, %v6004, 0.0
        %6012 = vadd.xlane.f32.xlu0 %v6011
        %v6013 = vpop.xlane.xlu0 %6012
        %v6014 = vsel %vm1893, %v6006, 0.0
        %6015 = vadd.xlane.f32.xlu0 %v6014
        %v6016 = vpop.xlane.xlu0 %6015
        %v6017 = vsel %vm1893, %v6008, 0.0
        %6018 = vadd.xlane.f32.xlu0 %v6017
        %v6019 = vpop.xlane.xlu0 %6018
        %v6020 = vsel %vm1893, %v6010, 0.0
        %6021 = vadd.xlane.f32.xlu0 %v6020
        %v6022 = vpop.xlane.xlu0 %6021
        %v6023 = vpack.c.bf16 %v6004, %v6004
        %v6024 = vpack.c.bf16 %v6006, %v6006
        %v6025 = vpack.c.bf16 %v6008, %v6008
        %v6026 = vpack.c.bf16 %v6010, %v6010
        %v6028 = vsel %vm1893, %v6023, 0
        %6030 = vmatprep.subr.bf16.mxu0 0
        %6031 = vmatpush1.bf16.msra.mxu0 %v5799
        %6032 = vmatprep.subr.bf16.mxu0 0
        %6033 = vmatpush1.bf16.msra.mxu0 0
        %6034 = vmatprep.subr.bf16.mxu0 0
        %6035 = vmatpush1.bf16.msra.mxu0 0
        %6036 = vmatprep.subr.bf16.mxu0 0
        %6037 = vmatpush1.bf16.msra.mxu0 0
        %6038 = vmatprep.subr.bf16.mxu0 0
        %6039 = vmatpush1.bf16.msra.mxu0 0
        %6040 = vmatprep.subr.bf16.mxu0 0
        %6041 = vmatpush1.bf16.msra.mxu0 0
        %6042 = vmatprep.subr.bf16.mxu0 0
        %6043 = vmatpush1.bf16.msra.mxu0 0
        %6044 = vmatprep.subr.bf16.mxu0 0
        %6045 = vmatpush1.bf16.msra.mxu0 0
        %6046 = vmatprep.subr.bf16.mxu0 0
        %6047 = vmatpush1.bf16.msra.mxu0 0
        %6048 = vmatprep.subr.bf16.mxu0 0
        %6049 = vmatpush1.bf16.msra.mxu0 0
        %6050 = vmatprep.subr.bf16.mxu0 0
        %6051 = vmatpush1.bf16.msra.mxu0 0
        %6052 = vmatprep.subr.bf16.mxu0 0
        %6053 = vmatpush1.bf16.msra.mxu0 0
        %6054 = vmatprep.subr.bf16.mxu0 0
        %6055 = vmatpush1.bf16.msra.mxu0 0
        %6056 = vmatprep.subr.bf16.mxu0 0
        %6057 = vmatpush1.bf16.msra.mxu0 0
        %6058 = vmatprep.subr.bf16.mxu0 0
        %6059 = vmatpush1.bf16.msra.mxu0 0
        %6060 = vmatprep.subr.bf16.mxu0 0
        %6061 = vmatpush1.bf16.msra.mxu0 0
        %6062 = vmatprep.mubr.bf16.mxu0 0
        %6063 = vmatmul.mubr.bf16.gmra.mrb[0].mxu0 %v6028
        %v6064 = vpop.f32.mrb[0].mxu0
        %v6065 = vadd.f32 0.0, %v6064
        %v6066 = vpop.f32.mrb[0].mxu0
        %v6067 = vpop.f32.mrb[0].mxu0
        %v6068 = vpop.f32.mrb[0].mxu0
        %6069 = vdwg.mxu0
        %v6071 = vsel %vm1893, %v6024, 0
        %6073 = vmatprep.subr.bf16.mxu0 0
        %6074 = vmatpush1.bf16.msra.mxu0 %v5800
        %6075 = vmatprep.subr.bf16.mxu0 0
        %6076 = vmatpush1.bf16.msra.mxu0 0
        %6077 = vmatprep.subr.bf16.mxu0 0
        %6078 = vmatpush1.bf16.msra.mxu0 0
        %6079 = vmatprep.subr.bf16.mxu0 0
        %6080 = vmatpush1.bf16.msra.mxu0 0
        %6081 = vmatprep.subr.bf16.mxu0 0
        %6082 = vmatpush1.bf16.msra.mxu0 0
        %6083 = vmatprep.subr.bf16.mxu0 0
        %6084 = vmatpush1.bf16.msra.mxu0 0
        %6085 = vmatprep.subr.bf16.mxu0 0
        %6086 = vmatpush1.bf16.msra.mxu0 0
        %6087 = vmatprep.subr.bf16.mxu0 0
        %6088 = vmatpush1.bf16.msra.mxu0 0
        %6089 = vmatprep.subr.bf16.mxu0 0
        %6090 = vmatpush1.bf16.msra.mxu0 0
        %6091 = vmatprep.subr.bf16.mxu0 0
        %6092 = vmatpush1.bf16.msra.mxu0 0
        %6093 = vmatprep.subr.bf16.mxu0 0
        %6094 = vmatpush1.bf16.msra.mxu0 0
        %6095 = vmatprep.subr.bf16.mxu0 0
        %6096 = vmatpush1.bf16.msra.mxu0 0
        %6097 = vmatprep.subr.bf16.mxu0 0
        %6098 = vmatpush1.bf16.msra.mxu0 0
        %6099 = vmatprep.subr.bf16.mxu0 0
        %6100 = vmatpush1.bf16.msra.mxu0 0
        %6101 = vmatprep.subr.bf16.mxu0 0
        %6102 = vmatpush1.bf16.msra.mxu0 0
        %6103 = vmatprep.subr.bf16.mxu0 0
        %6104 = vmatpush1.bf16.msra.mxu0 0
        %6105 = vmatprep.mubr.bf16.mxu0 0
        %6106 = vmatmul.mubr.bf16.gmra.mrb[0].mxu0 %v6071
        %v6107 = vpop.f32.mrb[0].mxu0
        %v6108 = vadd.f32 0.0, %v6107
        %v6109 = vpop.f32.mrb[0].mxu0
        %v6110 = vpop.f32.mrb[0].mxu0
        %v6111 = vpop.f32.mrb[0].mxu0
        %6112 = vdwg.mxu0
        %v6114 = vsel %vm1893, %v6025, 0
        %6116 = vmatprep.subr.bf16.mxu0 0
        %6117 = vmatpush1.bf16.msra.mxu0 %v5801
        %6118 = vmatprep.subr.bf16.mxu0 0
        %6119 = vmatpush1.bf16.msra.mxu0 0
        %6120 = vmatprep.subr.bf16.mxu0 0
        %6121 = vmatpush1.bf16.msra.mxu0 0
        %6122 = vmatprep.subr.bf16.mxu0 0
        %6123 = vmatpush1.bf16.msra.mxu0 0
        %6124 = vmatprep.subr.bf16.mxu0 0
        %6125 = vmatpush1.bf16.msra.mxu0 0
        %6126 = vmatprep.subr.bf16.mxu0 0
        %6127 = vmatpush1.bf16.msra.mxu0 0
        %6128 = vmatprep.subr.bf16.mxu0 0
        %6129 = vmatpush1.bf16.msra.mxu0 0
        %6130 = vmatprep.subr.bf16.mxu0 0
        %6131 = vmatpush1.bf16.msra.mxu0 0
        %6132 = vmatprep.subr.bf16.mxu0 0
        %6133 = vmatpush1.bf16.msra.mxu0 0
        %6134 = vmatprep.subr.bf16.mxu0 0
        %6135 = vmatpush1.bf16.msra.mxu0 0
        %6136 = vmatprep.subr.bf16.mxu0 0
        %6137 = vmatpush1.bf16.msra.mxu0 0
        %6138 = vmatprep.subr.bf16.mxu0 0
        %6139 = vmatpush1.bf16.msra.mxu0 0
        %6140 = vmatprep.subr.bf16.mxu0 0
        %6141 = vmatpush1.bf16.msra.mxu0 0
        %6142 = vmatprep.subr.bf16.mxu0 0
        %6143 = vmatpush1.bf16.msra.mxu0 0
        %6144 = vmatprep.subr.bf16.mxu0 0
        %6145 = vmatpush1.bf16.msra.mxu0 0
        %6146 = vmatprep.subr.bf16.mxu0 0
        %6147 = vmatpush1.bf16.msra.mxu0 0
        %6148 = vmatprep.mubr.bf16.mxu0 0
        %6149 = vmatmul.mubr.bf16.gmra.mrb[0].mxu0 %v6114
        %v6150 = vpop.f32.mrb[0].mxu0
        %v6151 = vadd.f32 0.0, %v6150
        %v6152 = vpop.f32.mrb[0].mxu0
        %v6153 = vpop.f32.mrb[0].mxu0
        %v6154 = vpop.f32.mrb[0].mxu0
        %6155 = vdwg.mxu0
        %v6157 = vsel %vm1893, %v6026, 0
        %6159 = vmatprep.subr.bf16.mxu0 0
        %6160 = vmatpush1.bf16.msra.mxu0 %v5802
        %6161 = vmatprep.subr.bf16.mxu0 0
        %6162 = vmatpush1.bf16.msra.mxu0 0
        %6163 = vmatprep.subr.bf16.mxu0 0
        %6164 = vmatpush1.bf16.msra.mxu0 0
        %6165 = vmatprep.subr.bf16.mxu0 0
        %6166 = vmatpush1.bf16.msra.mxu0 0
        %6167 = vmatprep.subr.bf16.mxu0 0
        %6168 = vmatpush1.bf16.msra.mxu0 0
        %6169 = vmatprep.subr.bf16.mxu0 0
        %6170 = vmatpush1.bf16.msra.mxu0 0
        %6171 = vmatprep.subr.bf16.mxu0 0
        %6172 = vmatpush1.bf16.msra.mxu0 0
        %6173 = vmatprep.subr.bf16.mxu0 0
        %6174 = vmatpush1.bf16.msra.mxu0 0
        %6175 = vmatprep.subr.bf16.mxu0 0
        %6176 = vmatpush1.bf16.msra.mxu0 0
        %6177 = vmatprep.subr.bf16.mxu0 0
        %6178 = vmatpush1.bf16.msra.mxu0 0
        %6179 = vmatprep.subr.bf16.mxu0 0
        %6180 = vmatpush1.bf16.msra.mxu0 0
        %6181 = vmatprep.subr.bf16.mxu0 0
        %6182 = vmatpush1.bf16.msra.mxu0 0
        %6183 = vmatprep.subr.bf16.mxu0 0
        %6184 = vmatpush1.bf16.msra.mxu0 0
        %6185 = vmatprep.subr.bf16.mxu0 0
        %6186 = vmatpush1.bf16.msra.mxu0 0
        %6187 = vmatprep.subr.bf16.mxu0 0
        %6188 = vmatpush1.bf16.msra.mxu0 0
        %6189 = vmatprep.subr.bf16.mxu0 0
        %6190 = vmatpush1.bf16.msra.mxu0 0
        %6191 = vmatprep.mubr.bf16.mxu0 0
        %6192 = vmatmul.mubr.bf16.gmra.mrb[0].mxu0 %v6157
        %v6193 = vpop.f32.mrb[0].mxu0
        %v6194 = vadd.f32 0.0, %v6193
        %v6195 = vpop.f32.mrb[0].mxu0
        %v6196 = vpop.f32.mrb[0].mxu0
        %v6197 = vpop.f32.mrb[0].mxu0
        %6198 = vdwg.mxu0
        %v6199 = vrcp.pop %v6013
        %v6200 = vrcp.pop %v6016
        %v6201 = vrcp.pop %v6019
        %v6202 = vrcp.pop %v6022
        %v6203 = vmul.f32 %v6065, %v6199
        %v6204 = vmul.f32 %v6108, %v6200
        %v6205 = vmul.f32 %v6151, %v6201
        %v6206 = vmul.f32 %v6194, %v6202
        %v6207 = vcombine.low %v6203, %v6205
        %v6208 = vcombine.high %v6203, %v6205
        %v6210 = vunpack.c.l.s4 1983009808
        %v6211 = vunpack.c.0.s8 %v6210
        %v6212 = vlaneseq
        %v6213 = vshrl.u32 %v6212, 7
        %v6214 = vsub.s32 %v6211, %v6213
        %v6215 = vrot.slane %v6207, %v6214
        %v6217 = vunpack.c.l.s4 1983009808
        %v6218 = vunpack.c.0.s8 %v6217
        %v6219 = vlaneseq
        %v6220 = vshrl.u32 %v6219, 7
        %v6221 = vsub.s32 %v6218, %v6220
        %v6222 = vrot.slane %v6208, %v6221
        %v6223 = vcombine.low %v6204, %v6206
        %v6224 = vcombine.high %v6204, %v6206
        %v6226 = vunpack.c.l.s4 1983009808
        %v6227 = vunpack.c.0.s8 %v6226
        %v6228 = vlaneseq
        %v6229 = vshrl.u32 %v6228, 7
        %v6230 = vsub.s32 %v6227, %v6229
        %v6231 = vrot.slane %v6223, %v6230
        %v6233 = vunpack.c.l.s4 1983009808
        %v6234 = vunpack.c.0.s8 %v6233
        %v6235 = vlaneseq
        %v6236 = vshrl.u32 %v6235, 7
        %v6237 = vsub.s32 %v6234, %v6236
        %v6238 = vrot.slane %v6224, %v6237
        %v6239 = vcombine.low %v6215, %v6231
        %v6240 = vcombine.high %v6215, %v6231
        %v6242 = vunpack.c.l.s4 1934713408
        %v6243 = vunpack.c.0.s8 %v6242
        %v6244 = vlaneseq
        %v6245 = vshrl.u32 %v6244, 7
        %v6246 = vsub.s32 %v6243, %v6245
        %v6247 = vrot.slane %v6239, %v6246
        %v6249 = vunpack.c.l.s4 1934713408
        %v6250 = vunpack.c.0.s8 %v6249
        %v6251 = vlaneseq
        %v6252 = vshrl.u32 %v6251, 7
        %v6253 = vsub.s32 %v6250, %v6252
        %v6254 = vrot.slane %v6240, %v6253
        %v6255 = vcombine.low %v6222, %v6238
        %v6256 = vcombine.high %v6222, %v6238
        %v6258 = vunpack.c.l.s4 1934713408
        %v6259 = vunpack.c.0.s8 %v6258
        %v6260 = vlaneseq
        %v6261 = vshrl.u32 %v6260, 7
        %v6262 = vsub.s32 %v6259, %v6261
        %v6263 = vrot.slane %v6255, %v6262
        %v6265 = vunpack.c.l.s4 1934713408
        %v6266 = vunpack.c.0.s8 %v6265
        %v6267 = vlaneseq
        %v6268 = vshrl.u32 %v6267, 7
        %v6269 = vsub.s32 %v6266, %v6268
        %v6270 = vrot.slane %v6256, %v6269
        %v6271 = vcombine.high %v6247, 0.0
        %v6272 = vcombine.high %v6254, 0.0
        %v6273 = vcombine.high %v6263, 0.0
        %v6274 = vcombine.high %v6270, 0.0
        %v6275 = vcombine.low %v6247, %v6254
        %v6277 = vunpack.c.l.s4 1983009808
        %v6278 = vunpack.c.0.s8 %v6277
        %v6279 = vlaneseq
        %v6280 = vshrl.u32 %v6279, 7
        %v6281 = vsub.s32 %v6278, %v6280
        %v6282 = vrot.slane %v6275, %v6281
        %v6283 = vcombine.low %v6271, %v6272
        %v6285 = vunpack.c.l.s4 1983009808
        %v6286 = vunpack.c.0.s8 %v6285
        %v6287 = vlaneseq
        %v6288 = vshrl.u32 %v6287, 7
        %v6289 = vsub.s32 %v6286, %v6288
        %v6290 = vrot.slane %v6283, %v6289
        %v6291 = vcombine.low %v6263, %v6270
        %v6293 = vunpack.c.l.s4 1983009808
        %v6294 = vunpack.c.0.s8 %v6293
        %v6295 = vlaneseq
        %v6296 = vshrl.u32 %v6295, 7
        %v6297 = vsub.s32 %v6294, %v6296
        %v6298 = vrot.slane %v6291, %v6297
        %v6299 = vcombine.low %v6273, %v6274
        %v6301 = vunpack.c.l.s4 1983009808
        %v6302 = vunpack.c.0.s8 %v6301
        %v6303 = vlaneseq
        %v6304 = vshrl.u32 %v6303, 7
        %v6305 = vsub.s32 %v6302, %v6304
        %v6306 = vrot.slane %v6299, %v6305
        %v6307 = vcombine.low %v6282, %v6290
        %v6308 = vcombine.high %v6282, %v6290
        %v6310 = vunpack.c.l.s4 1934713408
        %v6311 = vunpack.c.0.s8 %v6310
        %v6312 = vlaneseq
        %v6313 = vshrl.u32 %v6312, 7
        %v6314 = vsub.s32 %v6311, %v6313
        %v6315 = vrot.slane %v6307, %v6314
        %v6317 = vunpack.c.l.s4 1934713408
        %v6318 = vunpack.c.0.s8 %v6317
        %v6319 = vlaneseq
        %v6320 = vshrl.u32 %v6319, 7
        %v6321 = vsub.s32 %v6318, %v6320
        %v6322 = vrot.slane %v6308, %v6321
        %v6323 = vcombine.low %v6298, %v6306
        %v6324 = vcombine.high %v6298, %v6306
        %v6326 = vunpack.c.l.s4 1934713408
        %v6327 = vunpack.c.0.s8 %v6326
        %v6328 = vlaneseq
        %v6329 = vshrl.u32 %v6328, 7
        %v6330 = vsub.s32 %v6327, %v6329
        %v6331 = vrot.slane %v6323, %v6330
        %v6333 = vunpack.c.l.s4 1934713408
        %v6334 = vunpack.c.0.s8 %v6333
        %v6335 = vlaneseq
        %v6336 = vshrl.u32 %v6335, 7
        %v6337 = vsub.s32 %v6334, %v6336
        %v6338 = vrot.slane %v6324, %v6337
        %v6339 = vcombine.low %v6315, %v6331
        %v6340 = vcombine.high %v6315, %v6331
        %v6341 = vcombine.low %v6322, %v6338
        %v6342 = vcombine.high %v6322, %v6338
        %6344 = vrot.lane.b32.xlu0 %v6340, 8
        %v6345 = vpop.permute.xlu0 %6344
        %6348 = vrot.lane.b32.xlu0 %v6341, 16
        %v6349 = vpop.permute.xlu0 %6348
        %6352 = vrot.lane.b32.xlu0 %v6342, 24
        %v6353 = vpop.permute.xlu0 %6352
        %v6355 = vsel %vm1326, %v6339, %v6345
        %v6356 = vsel %vm1893, %v6355, %v6349
        %v6357 = vsel %vm1895, %v6356, %v6353
        %v6358 = vpack.c.bf16 %v6357, %v6357
        %v6360 = vsel %vm674, %v6358, 0
        %6362 = vmatprep.subr.bf16.mxu0 0
        %6363 = vmatpush1.bf16.msra.mxu0 %v3482
        %6364 = vmatprep.subr.bf16.mxu0 0
        %6365 = vmatpush1.bf16.msra.mxu0 %v3483
        %6366 = vmatprep.subr.bf16.mxu0 0
        %6367 = vmatpush1.bf16.msra.mxu0 0
        %6368 = vmatprep.subr.bf16.mxu0 0
        %6369 = vmatpush1.bf16.msra.mxu0 0
        %6370 = vmatprep.subr.bf16.mxu0 0
        %6371 = vmatpush1.bf16.msra.mxu0 0
        %6372 = vmatprep.subr.bf16.mxu0 0
        %6373 = vmatpush1.bf16.msra.mxu0 0
        %6374 = vmatprep.subr.bf16.mxu0 0
        %6375 = vmatpush1.bf16.msra.mxu0 0
        %6376 = vmatprep.subr.bf16.mxu0 0
        %6377 = vmatpush1.bf16.msra.mxu0 0
        %6378 = vmatprep.subr.bf16.mxu0 0
        %6379 = vmatpush1.bf16.msra.mxu0 0
        %6380 = vmatprep.subr.bf16.mxu0 0
        %6381 = vmatpush1.bf16.msra.mxu0 0
        %6382 = vmatprep.subr.bf16.mxu0 0
        %6383 = vmatpush1.bf16.msra.mxu0 0
        %6384 = vmatprep.subr.bf16.mxu0 0
        %6385 = vmatpush1.bf16.msra.mxu0 0
        %6386 = vmatprep.subr.bf16.mxu0 0
        %6387 = vmatpush1.bf16.msra.mxu0 0
        %6388 = vmatprep.subr.bf16.mxu0 0
        %6389 = vmatpush1.bf16.msra.mxu0 0
        %6390 = vmatprep.subr.bf16.mxu0 0
        %6391 = vmatpush1.bf16.msra.mxu0 0
        %6392 = vmatprep.subr.bf16.mxu0 0
        %6393 = vmatpush1.bf16.msra.mxu0 0
        %6394 = vmatprep.mubr.bf16.mxu0 0
        %6395 = vmatmul.mubr.bf16.gmra.mrb[0].mxu0 %v6360
        %v6396 = vpop.f32.mrb[0].mxu0
        %v6397 = vadd.f32 %v3473, %v6396
        %v6398 = vpop.f32.mrb[0].mxu0
        %v6399 = vpop.f32.mrb[0].mxu0
        %v6400 = vpop.f32.mrb[0].mxu0
        %6401 = vdwg.mxu0
        %v6402 = vadd.f32 %v4902, %v6397
        %v6403 = vsel %vm674, %v6402, 0.0
        %6404 = vadd.xlane.f32.xlu0 %v6403
        %v6405 = vpop.xlane.xlu0 %6404
        %v6406 = vmul.f32 %v6405, %v678
        %v6407 = vsub.f32 %v6402, %v6406
        %v6408 = vmul.f32 %v6407, %v6407
        %v6409 = vsel %vm674, %v6408, 0.0
        %6410 = vadd.xlane.f32.xlu0 %v6409
        %v6411 = vpop.xlane.xlu0 %6410
        %v6412 = vmul.f32 %v6411, %v678
        %v6413 = vadd.f32 %v6412, 1e-05
        %v6414 = vrsqrt.pop %v6413
        %v6415 = vmul.f32 %v6407, %v6414
        %v6416 = vmul.f32 %v6415, %v3546
        %v6417 = vadd.f32 %v6416, %v3551
        %v6418 = vpack.c.bf16 %v6417, %v6417
        %v6420 = vsel %vm674, %v6418, 0
        %6422 = vmatprep.subr.bf16.mxu0 0
        %6423 = vmatpush1.bf16.msra.mxu0 %v3568
        %6424 = vmatprep.subr.bf16.mxu0 0
        %6425 = vmatpush1.bf16.msra.mxu0 %v3569
        %6426 = vmatprep.subr.bf16.mxu0 0
        %6427 = vmatpush1.bf16.msra.mxu0 0
        %6428 = vmatprep.subr.bf16.mxu0 0
        %6429 = vmatpush1.bf16.msra.mxu0 0
        %6430 = vmatprep.subr.bf16.mxu0 0
        %6431 = vmatpush1.bf16.msra.mxu0 0
        %6432 = vmatprep.subr.bf16.mxu0 0
        %6433 = vmatpush1.bf16.msra.mxu0 0
        %6434 = vmatprep.subr.bf16.mxu0 0
        %6435 = vmatpush1.bf16.msra.mxu0 0
        %6436 = vmatprep.subr.bf16.mxu0 0
        %6437 = vmatpush1.bf16.msra.mxu0 0
        %6438 = vmatprep.subr.bf16.mxu0 0
        %6439 = vmatpush1.bf16.msra.mxu0 0
        %6440 = vmatprep.subr.bf16.mxu0 0
        %6441 = vmatpush1.bf16.msra.mxu0 0
        %6442 = vmatprep.subr.bf16.mxu0 0
        %6443 = vmatpush1.bf16.msra.mxu0 0
        %6444 = vmatprep.subr.bf16.mxu0 0
        %6445 = vmatpush1.bf16.msra.mxu0 0
        %6446 = vmatprep.subr.bf16.mxu0 0
        %6447 = vmatpush1.bf16.msra.mxu0 0
        %6448 = vmatprep.subr.bf16.mxu0 0
        %6449 = vmatpush1.bf16.msra.mxu0 0
        %6450 = vmatprep.subr.bf16.mxu0 0
        %6451 = vmatpush1.bf16.msra.mxu0 0
        %6452 = vmatprep.subr.bf16.mxu0 0
        %6453 = vmatpush1.bf16.msra.mxu0 0
        %6454 = vmatprep.mubr.bf16.mxu0 0
        %6455 = vmatmul.mubr.bf16.gmra.mrb[0].mxu0 %v6420
        %v6456 = vpop.f32.mrb[0].mxu0
        %v6457 = vadd.f32 %v3558, %v6456
        %v6458 = vpop.f32.mrb[0].mxu0
        %v6459 = vpop.f32.mrb[0].mxu0
        %v6460 = vpop.f32.mrb[0].mxu0
        %6461 = vdwg.mxu0
        %v6462 = vmax.f32 %v6457, 0.0
        %v6463 = vpack.c.bf16 %v6462, %v6462
        %v6465 = vsel %vm3645, %v6463, 0
        %6467 = vmatprep.subr.bf16.mxu0 0
        %6468 = vmatpush1.bf16.msra.mxu0 %v3637
        %6469 = vmatprep.subr.bf16.mxu0 0
        %6470 = vmatpush1.bf16.msra.mxu0 %v3638
        %6471 = vmatprep.subr.bf16.mxu0 0
        %6472 = vmatpush1.bf16.msra.mxu0 %v3639
        %6473 = vmatprep.subr.bf16.mxu0 0
        %6474 = vmatpush1.bf16.msra.mxu0 %v3640
        %6475 = vmatprep.subr.bf16.mxu0 0
        %6476 = vmatpush1.bf16.msra.mxu0 0
        %6477 = vmatprep.subr.bf16.mxu0 0
        %6478 = vmatpush1.bf16.msra.mxu0 0
        %6479 = vmatprep.subr.bf16.mxu0 0
        %6480 = vmatpush1.bf16.msra.mxu0 0
        %6481 = vmatprep.subr.bf16.mxu0 0
        %6482 = vmatpush1.bf16.msra.mxu0 0
        %6483 = vmatprep.subr.bf16.mxu0 0
        %6484 = vmatpush1.bf16.msra.mxu0 0
        %6485 = vmatprep.subr.bf16.mxu0 0
        %6486 = vmatpush1.bf16.msra.mxu0 0
        %6487 = vmatprep.subr.bf16.mxu0 0
        %6488 = vmatpush1.bf16.msra.mxu0 0
        %6489 = vmatprep.subr.bf16.mxu0 0
        %6490 = vmatpush1.bf16.msra.mxu0 0
        %6491 = vmatprep.subr.bf16.mxu0 0
        %6492 = vmatpush1.bf16.msra.mxu0 0
        %6493 = vmatprep.subr.bf16.mxu0 0
        %6494 = vmatpush1.bf16.msra.mxu0 0
        %6495 = vmatprep.subr.bf16.mxu0 0
        %6496 = vmatpush1.bf16.msra.mxu0 0
        %6497 = vmatprep.subr.bf16.mxu0 0
        %6498 = vmatpush1.bf16.msra.mxu0 0
        %6499 = vmatprep.mubr.bf16.mxu0 0
        %6500 = vmatmul.mubr.bf16.gmra.mrb[0].mxu0 %v6465
        %v6501 = vpop.f32.mrb[0].mxu0
        %v6502 = vadd.f32 %v3620, %v6501
        %v6503 = vpop.f32.mrb[0].mxu0
        %v6504 = vpop.f32.mrb[0].mxu0
        %v6505 = vpop.f32.mrb[0].mxu0
        %6506 = vdwg.mxu0
        %v6507 = vadd.f32 %v6402, %v6502
        %6508 = vst.msk [vmem:[#allocation2 + $0x8] sm:$0xff] %vm674, %v6507
        %v6509 = vld [vmem:[%s10] sm:$0x3]
        %p6510 = scmp.eq.s32.totalorder %s30, 1
        // Predicated region
        $region85: #{tpu_custom_call.1} parent=63 // pred_check
          %p6511 = pneg %p6510
        $region86: #{tpu_custom_call.1} parent=63 // pred_check_branch
          %6513 = sbr.rel (%p6511) target = $region88
        $region87: #{tpu_custom_call.1} parent=63 // pred_region
          %v6514 = vld [vmem:[#allocation2] sm:$0xff]
          %v6515 = vld [vmem:[#allocation2 + $0x8] sm:$0xff]
          %v6516 = vsel %vm674, %v6514, 0.0
          %6517 = vadd.xlane.f32.xlu0 %v6516
          %v6518 = vpop.xlane.xlu0 %6517
          %v6519 = vsel %vm674, %v6515, 0.0
          %6520 = vadd.xlane.f32.xlu0 %v6519
          %v6521 = vpop.xlane.xlu0 %6520
          %v6522 = vmul.f32 %v6518, %v678
          %v6523 = vmul.f32 %v6521, %v678
          %v6524 = vsub.f32 %v6514, %v6522
          %v6525 = vsub.f32 %v6515, %v6523
          %v6526 = vmul.f32 %v6524, %v6524
          %v6527 = vmul.f32 %v6525, %v6525
          %v6528 = vsel %vm674, %v6526, 0.0
          %6529 = vadd.xlane.f32.xlu0 %v6528
          %v6530 = vpop.xlane.xlu0 %6529
          %v6531 = vsel %vm674, %v6527, 0.0
          %6532 = vadd.xlane.f32.xlu0 %v6531
          %v6533 = vpop.xlane.xlu0 %6532
          %v6534 = vmul.f32 %v6530, %v678
          %v6535 = vmul.f32 %v6533, %v678
          %v6536 = vadd.f32 %v6534, 1e-05
          %v6537 = vadd.f32 %v6535, 1e-05
          %v6538 = vrsqrt.pop %v6536
          %v6539 = vrsqrt.pop %v6537
          %v6540 = vmul.f32 %v6524, %v6538
          %v6541 = vmul.f32 %v6525, %v6539
          %v6542 = vlaneseq
          %v6543 = vshrl.u32 %v6542, 7
          %v6544 = vsub.s32 0, %v6543
          %v6545 = vrot.slane %v6509, %v6544
          %v6546 = vmul.f32 %v6540, %v6545
          %v6547 = vmul.f32 %v6541, %v6545
          %v6548 = vlaneseq
          %v6549 = vshrl.u32 %v6548, 7
          %v6550 = vsub.s32 1, %v6549
          %v6551 = vrot.slane %v6509, %v6550
          %v6552 = vadd.f32 %v6546, %v6551
          %v6553 = vadd.f32 %v6547, %v6551
          %6554 = vst.msk [vmem:[#allocation10] sm:$0xff] %vm674, %v6552
          %6555 = vst.msk [vmem:[#allocation10 + $0x8] sm:$0xff] %vm674, %v6553
        $region88: #{tpu_custom_call.1} parent=63 // pred_fallthru
          _
        // Predicated region
        $region89: #{tpu_custom_call.1} parent=63 // pred_check
          %p6556 = pneg %p336
        $region90: #{tpu_custom_call.1} parent=63 // pred_check_branch
          %6558 = sbr.rel (%p6556) target = $region92
        $region91: #{tpu_custom_call.1} parent=63 // pred_region
          %s6559 = smul.u32 2, %s29
          %s6561 = ssub.s32 256, 256
          %6562 = vsyncadd [#allocation5], %s6561
          %s6563 = smul.addr %s6559, 128
          %s6564 = scalar_lea.hbm %s11, %s6563
          %s6565 = sshll.u32 [#allocation10], 4
          %s6566 = int_to_ptr.vmem [resolvable:$true] %s6565
          %6571 = dma.vmem_to_hbm [thread:$0]  %s6566, 256, %s6564, [#allocation5], 128, 128, 8
        $region92: #{tpu_custom_call.1} parent=63 // pred_fallthru
          _
        // Predicated region
        $region93: #{tpu_custom_call.1} parent=63 // pred_check
          %p6572 = pneg %p336
        $region94: #{tpu_custom_call.1} parent=63 // pred_check_branch
          %6574 = sbr.rel (%p6572) target = $region96
        $region95: #{tpu_custom_call.1} parent=63 // pred_region
          %6575 = dma.done [#allocation5], 256
        $region96: #{tpu_custom_call.1} parent=63 // pred_fallthru
          _
      $region64: #{tpu_custom_call.1} parent=5 // pred_fallthru
        _
      %p6576 = scmp.le.s32.totalorder 2, %s20
      // Predicated region
      $region97: #{tpu_custom_call.1} parent=5 // pred_check
        %p6577 = pneg %p6576
      $region98: #{tpu_custom_call.1} parent=5 // pred_check_branch
        %6579 = sbr.rel (%p6577) target = $region100
      $region99: #{tpu_custom_call.1} parent=5 // pred_region
        %s6580 = ssub.s32 %s20, 2
      $region100: #{tpu_custom_call.1} parent=5 // pred_fallthru
        _
    $region6: #{tpu_custom_call.1} parent=1 // loop_footer
      %s24 = sadd.s32 1, %s20
    $region7: #{tpu_custom_call.1} parent=1 // loop_footer_branch
      %19 = sbr.rel target = $region3
    $region8: #{tpu_custom_call.1} parent=1 // loop_exit
      _
    %6581 = vsyncpa [#allocation4], 1
    %s6582 = scalar_lea.sflag [#allocation4], 1
    %6583 = vsyncpa %s6582, 1
    %6584 = vsyncpa [#allocation7], 1
    %6585 = vsyncpa [#allocation5], 1
    %s6586 = scalar_lea.sflag [#allocation5], 1
    %6587 = vsyncpa %s6586, 1

</llo_original>
